<compile_context>
chip_gen: v7x
topology: tpu7x:2x2x1
jax: 0.10.0
libtpu: 0.0.40
codegen_flags: <defaults>
</compile_context>

<pallas_src>
import functools

import jax
import jax.numpy as jnp
from jax.experimental import pallas as pl
from jax.experimental.pallas import tpu as pltpu

VMEM = pl.BlockSpec(memory_space=pltpu.MemorySpace.VMEM)


# ----------------------------------------------------------------------------
# Shared LSTM cell: one fused [x,h] @ [Wih; Whh] MXU push, 2 EUP ops on the
# packed (B, 4H) gate block, per-gate 32-lane slices (PyTorch order i,f,g,o).
# ----------------------------------------------------------------------------
def _lstm_cell(xh, c, w_cat, bias, H):
    gates = jnp.dot(xh, w_cat, preferred_element_type=jnp.float32) + bias
    sg = jax.nn.sigmoid(gates)          # valid in the i / f / o sub-blocks
    tg = jnp.tanh(gates)                # valid in the g sub-block
    i = sg[:, 0 * H:1 * H]
    f = sg[:, 1 * H:2 * H]
    g = tg[:, 2 * H:3 * H]
    o = sg[:, 3 * H:4 * H]
    c_new = f * c + i * g
    return o * jnp.tanh(c_new), c_new


# ----------------------------------------------------------------------------
# Kernel 1: fused encoder (2-layer biLSTM over time) + atten_fc, time-major.
# ----------------------------------------------------------------------------
def _encoder_kernel(x_ref, w0f_ref, b0f_ref, w0b_ref, b0b_ref,
                    w1f_ref, b1f_ref, w1b_ref, b1b_ref, aw_ref, ab_ref,
                    enc_ref, whs_ref, h0_ref, c0_ref, o0_ref):
    S, B, _ = x_ref.shape
    H = h0_ref.shape[-1]

    # Weights loaded once; bias broadcasts hoisted out of the time loops.
    w0f = w0f_ref[...]
    w0b = w0b_ref[...]
    w1f = w1f_ref[...]
    w1b = w1b_ref[...]
    b0f = jnp.broadcast_to(b0f_ref[...], (B, 4 * H))
    b0b = jnp.broadcast_to(b0b_ref[...], (B, 4 * H))
    b1f = jnp.broadcast_to(b1f_ref[...], (B, 4 * H))
    b1b = jnp.broadcast_to(b1b_ref[...], (B, 4 * H))

    zero = jnp.zeros((B, H), jnp.float32)

    # Layer 0 forward (time loop fully unrolled: S is tiny & static).  Outputs
    # go to the LEFT half of the shared o0 scratch so the layer-1 input
    # [fwd, bwd] is one contiguous load (no per-step concatenate).
    h, c = zero, zero
    for t in range(S):
        h, c = _lstm_cell(jnp.concatenate([x_ref[t], h], axis=-1), c, w0f, b0f, H)
        o0_ref[t, :, 0:H] = h
    hf0, cf0 = h, c

    # Layer 0 backward -> RIGHT half of o0.
    h, c = zero, zero
    for t in range(S - 1, -1, -1):
        h, c = _lstm_cell(jnp.concatenate([x_ref[t], h], axis=-1), c, w0b, b0b, H)
        o0_ref[t, :, H:2 * H] = h
    hb0, cb0 = h, c

    # Decoder initial state: h_n[0] + h_n[1]  (layer-0 fwd + layer-0 bwd finals).
    h0_ref[...] = hf0 + hb0
    c0_ref[...] = cf0 + cb0

    # Layer 1 forward.
    h, c = zero, zero
    for t in range(S):
        h, c = _lstm_cell(jnp.concatenate([o0_ref[t], h], axis=-1), c, w1f, b1f, H)
        enc_ref[t] = h

    # Layer 1 backward, summed in place (== output[..., :H] + output[..., H:]).
    h, c = zero, zero
    for t in range(S - 1, -1, -1):
        h, c = _lstm_cell(jnp.concatenate([o0_ref[t], h], axis=-1), c, w1b, b1b, H)
        enc_ref[t] = enc_ref[t] + h

    # atten_fc(encoder_outputs), computed once (reused by every decode step).
    enc_all = enc_ref[...]
    whs = (jnp.dot(enc_all.reshape(S * B, H), aw_ref[...],
                   preferred_element_type=jnp.float32) + ab_ref[...])
    whs_ref[...] = whs.reshape(S, B, H)


# ----------------------------------------------------------------------------
# Kernel 2: fused greedy decoder (all T-1 steps, argmax + embedding in-kernel).
# enc / whs are consumed time-major (S, B, H) exactly as the encoder wrote them.
# ----------------------------------------------------------------------------
def _decoder_kernel(h0_ref, c0_ref, emb_ref, wdec_ref, bdec_ref,
                    whs_ref, enc_ref, dfcw_ref, dfcb_ref, outw_ref, outb_ref,
                    logits_ref, *, v_real, n_steps, start_token):
    S = enc_ref.shape[0]
    B, H = h0_ref.shape
    D = emb_ref.shape[1]
    Vp = outw_ref.shape[1]

    # Small weights / biases stay VMEM/vreg resident across the whole decode
    # loop; enc/whs slices are re-read from VMEM refs per use (cheap vld).
    emb = emb_ref[...]
    wdec = wdec_ref[...]
    bdec = jnp.broadcast_to(bdec_ref[...], (B, 4 * H))
    dfcw = dfcw_ref[...]
    dfcb = jnp.broadcast_to(dfcb_ref[...], (B, H))
    outw = outw_ref[...]
    outb = jnp.broadcast_to(outb_ref[...], (B, Vp))

    # Padding-neutrality invariant: padded out_fc columns (>= v_real) have zero
    # weights AND zero bias, and are masked to -inf before the argmax below.
    lane = jax.lax.broadcasted_iota(jnp.int32, (B, Vp), 1)
    valid = lane < v_real

    h = h0_ref[...]
    c = c0_ref[...]
    # Step-0 input is the embedding of `start_token` (the module hardcodes 0).
    x_t = jnp.broadcast_to(emb[start_token:start_token + 1, :], (B, D))

    for t in range(n_steps):
        # LSTMCell: one fused [x, h] @ [Wih; Whh] matmul.
        out_h, c = _lstm_cell(jnp.concatenate([x_t, h], axis=-1), c, wdec, bdec, H)

        # Attention on VPU + XLU (no MXU / no transposes on the serial path):
        #   score[b, s] = <out_h[b], whs[s, b]>, softmax over s, then
        #   context[b]  = sum_s attn[b, s] * enc[s, b].
        score = jnp.concatenate(
            [jnp.sum(out_h * whs_ref[s], axis=-1, keepdims=True) for s in range(S)],
            axis=-1)                                             # (B, S)
        score = score - jnp.max(score, axis=-1, keepdims=True)
        e = jnp.exp(score)
        attn = e * pl.reciprocal(jnp.sum(e, axis=-1, keepdims=True), approx=True)
        context = attn[:, 0:1] * enc_ref[0]
        for s in range(1, S):
            context = context + attn[:, s:s + 1] * enc_ref[s]    # (B, H)

        # decoder_fc(cat(context, out_h)) -> tanh (fed back as next h), out_fc.
        h = jnp.tanh(jnp.dot(jnp.concatenate([context, out_h], axis=-1), dfcw,
                             preferred_element_type=jnp.float32) + dfcb)
        logits = jnp.dot(h, outw, preferred_element_type=jnp.float32) + outb
        logits_ref[t] = logits

        # Greedy feedback: first-index argmax over the real vocab columns,
        # then embedding lookup as a one-hot matmul (tiny at Vp=128).
        masked = jnp.where(valid, logits, -jnp.inf)
        mx = jnp.max(masked, axis=-1, keepdims=True)
        idx = jnp.min(jnp.where(masked == mx, lane, Vp), axis=-1, keepdims=True)
        x_t = jnp.dot((lane == idx).astype(jnp.float32), emb,
                      preferred_element_type=jnp.float32)


# ----------------------------------------------------------------------------
# Parameter preparation: NO gate/hidden padding (4H = 128 lanes already); only
# the vocab axis is lane-padded with zeros for lane-dense logits stores.
# ----------------------------------------------------------------------------
def prepare_kernel_params(p, out_dim, vocab_pad):
    Vp = vocab_pad
    kp = {}
    kp['enc_emb'] = p['enc_emb']                                         # (in_dim, D)
    kp['dec_emb'] = jnp.pad(p['dec_emb'], ((0, Vp - out_dim), (0, 0)))   # (Vp, D)

    def lstm_cat(prefix):
        # Pre-stack [Wih; Whh] (both already transposed to (in, 4H)).
        w_cat = jnp.concatenate([p[prefix + '_wih'], p[prefix + '_whh']], axis=0)
        return w_cat, p[prefix + '_b']

    kp['w0f'], kp['b0f'] = lstm_cat('enc_l0_f')    # (D+H, 4H)
    kp['w0b'], kp['b0b'] = lstm_cat('enc_l0_b')
    kp['w1f'], kp['b1f'] = lstm_cat('enc_l1_f')    # (2H+H, 4H)
    kp['w1b'], kp['b1b'] = lstm_cat('enc_l1_b')
    kp['w_dec'], kp['b_dec'] = lstm_cat('dec')     # (D+H, 4H)

    kp['atten_w'] = p['atten_wt']                  # (H, H)
    kp['atten_b'] = p['atten_b']                   # (1, H)
    kp['dfc_w'] = p['dfc_wt']                      # (2H, H)
    kp['dfc_b'] = p['dfc_b']                       # (1, H)
    kp['out_w'] = jnp.pad(p['out_wt'], ((0, 0), (0, Vp - out_dim)))      # (H, Vp)
    kp['out_b'] = jnp.pad(p['out_b'], ((0, 0), (0, Vp - out_dim)))       # (1, Vp)
    return kp


# ----------------------------------------------------------------------------
# Forward wrapper (eval-mode greedy path of train_step)
# ----------------------------------------------------------------------------
def nmt_forward(kp, src_tokens, *, out_dim, n_steps, start_token=0):
    B, S = src_tokens.shape
    Bp = ((B + 7) // 8) * 8
    H = kp['atten_w'].shape[0]
    Vp = kp['out_w'].shape[1]

    # encode_embedding gather (one-time glue) + batch padding to full sublanes.
    # Padded batch rows never mix with real rows (all ops are batch-rowwise)
    # and are stripped at the end.
    src_p = jnp.pad(src_tokens, ((0, Bp - B), (0, 0)))
    x_tm = jnp.swapaxes(jnp.take(kp['enc_emb'], src_p, axis=0), 0, 1)    # (S, Bp, D)

    enc_tm, whs_tm, h0, c0 = pl.pallas_call(
        _encoder_kernel,
        out_shape=(jax.ShapeDtypeStruct((S, Bp, H), jnp.float32),
                   jax.ShapeDtypeStruct((S, Bp, H), jnp.float32),
                   jax.ShapeDtypeStruct((Bp, H), jnp.float32),
                   jax.ShapeDtypeStruct((Bp, H), jnp.float32)),
        in_specs=[VMEM] * 11,
        out_specs=(VMEM, VMEM, VMEM, VMEM),
        scratch_shapes=[pltpu.VMEM((S, Bp, 2 * H), jnp.float32)],
    )(x_tm, kp['w0f'], kp['b0f'], kp['w0b'], kp['b0b'],
      kp['w1f'], kp['b1f'], kp['w1b'], kp['b1b'],
      kp['atten_w'], kp['atten_b'])

    # No layout glue: enc / whs flow time-major (S, Bp, H) straight into the
    # decoder, which consumes them time-major.
    logits_tm = pl.pallas_call(
        functools.partial(_decoder_kernel, v_real=out_dim, n_steps=n_steps,
                          start_token=start_token),
        out_shape=jax.ShapeDtypeStruct((n_steps, Bp, Vp), jnp.float32),
        in_specs=[VMEM] * 11,
        out_specs=VMEM,
    )(h0, c0, kp['dec_emb'], kp['w_dec'], kp['b_dec'],
      whs_tm, enc_tm, kp['dfc_w'], kp['dfc_b'], kp['out_w'], kp['out_b'])

    # Strip batch / vocab padding -> (B, T-1, out_dim).
    return jnp.swapaxes(logits_tm, 0, 1)[:B, :, :out_dim]


# ----------------------------------------------------------------------------
# Pure-JAX reference (unpadded, mirrors the PyTorch module) for validation
# ----------------------------------------------------------------------------
def nmt_reference(p, src, *, n_steps, hidden):
    H = hidden
    x = jnp.take(p['enc_emb'], src, axis=0)

    def cell(x_t, h, c, wih, whh, b):
        gates = x_t @ wih + h @ whh + b
        i = jax.nn.sigmoid(gates[:, :H])
        f = jax.nn.sigmoid(gates[:, H:2 * H])
        g = jnp.tanh(gates[:, 2 * H:3 * H])
        o = jax.nn.sigmoid(gates[:, 3 * H:])
        c = f * c + i * g
        return o * jnp.tanh(c), c

    def run(xs, wih, whh, b, reverse):
        B, S, _ = xs.shape
        h = jnp.zeros((B, H), jnp.float32)
        c = jnp.zeros((B, H), jnp.float32)
        outs = [None] * S
        order = range(S - 1, -1, -1) if reverse else range(S)
        for t in order:
            h, c = cell(xs[:, t, :], h, c, wih, whh, b)
            outs[t] = h
        return jnp.stack(outs, axis=1), h, c

    f0, hf0, cf0 = run(x, p['enc_l0_f_wih'], p['enc_l0_f_whh'], p['enc_l0_f_b'], False)
    b0, hb0, cb0 = run(x, p['enc_l0_b_wih'], p['enc_l0_b_whh'], p['enc_l0_b_b'], True)
    x1 = jnp.concatenate([f0, b0], axis=-1)
    f1, _, _ = run(x1, p['enc_l1_f_wih'], p['enc_l1_f_whh'], p['enc_l1_f_b'], False)
    b1, _, _ = run(x1, p['enc_l1_b_wih'], p['enc_l1_b_whh'], p['enc_l1_b_b'], True)
    enc = f1 + b1
    h, c = hf0 + hb0, cf0 + cb0
    whs = jnp.einsum('bsh,hk->bsk', enc, p['atten_wt']) + p['atten_b']

    B = src.shape[0]
    x_t = jnp.take(p['dec_emb'], jnp.zeros((B,), jnp.int32), axis=0)
    outs = []
    for _ in range(n_steps):
        out_h, c = cell(x_t, h, c, p['dec_wih'], p['dec_whh'], p['dec_b'])
        score = jnp.einsum('bh,bsh->bs', out_h, whs)
        attn = jax.nn.softmax(score, axis=-1)
        context = jnp.einsum('bs,bsh->bh', attn, enc)
        h = jnp.tanh(jnp.concatenate([context, out_h], axis=-1) @ p['dfc_wt']
                     + p['dfc_b'])
        logits = h @ p['out_wt'] + p['out_b']
        outs.append(logits)
        idx = jnp.argmax(logits, axis=-1)
        x_t = jnp.take(p['dec_emb'], idx, axis=0)
    return jnp.stack(outs, axis=1)


# ----------------------------------------------------------------------------
# Deterministic parameter init (shapes follow NMT.__init__, pre-transposed)
# ----------------------------------------------------------------------------
def init_params(key, in_dim, out_dim, input_size, hidden_size):
    H = hidden_size
    ks = iter(jax.random.split(key, 64))

    def unif(shape, fan):
        bound = 1.0 / float(fan) ** 0.5
        return jax.random.uniform(next(ks), shape, jnp.float32, -bound, bound)

    p = {}
    p['enc_emb'] = jax.random.normal(next(ks), (in_dim, input_size), jnp.float32)
    p['dec_emb'] = jax.random.normal(next(ks), (out_dim, input_size), jnp.float32)

    def lstm(in_f):
        wih = unif((in_f, 4 * H), H)                       # weight_ih^T
        whh = unif((H, 4 * H), H)                          # weight_hh^T
        b = unif((1, 4 * H), H) + unif((1, 4 * H), H)      # b_ih + b_hh
        return wih, whh, b

    for name, in_f in [('enc_l0_f', input_size), ('enc_l0_b', input_size),
                       ('enc_l1_f', 2 * H), ('enc_l1_b', 2 * H),
                       ('dec', input_size)]:
        wih, whh, b = lstm(in_f)
        p[name + '_wih'], p[name + '_whh'], p[name + '_b'] = wih, whh, b

    p['atten_wt'] = unif((H, H), H)
    p['atten_b'] = unif((1, H), H)
    p['dfc_wt'] = unif((2 * H, H), 2 * H)
    p['dfc_b'] = unif((1, H), 2 * H)
    p['out_wt'] = unif((H, out_dim), H)
    p['out_b'] = unif((1, out_dim), H)
    return p


if __name__ == "__main__":
    in_dim, out_dim = 30, 20          # src / tgt vocab sizes
    input_size = hidden_size = 32     # module requires input_size == hidden_size
    B, S, T = 2, 8, 6                 # batch, src_len, tgt_len
    VP = 128                          # padded lane size for the vocab axis only

    key = jax.random.PRNGKey(0)
    kparam, ksrc, klab = jax.random.split(key, 3)
    params = init_params(kparam, in_dim, out_dim, input_size, hidden_size)
    kparams = prepare_kernel_params(params, out_dim, VP)

    src = jax.random.randint(ksrc, (B, S), 0, in_dim, dtype=jnp.int32)
    labels = jax.random.randint(klab, (B, T), 0, out_dim, dtype=jnp.int32)  # only length used (eval path)

    fwd = jax.jit(functools.partial(nmt_forward, kparams,
                                    out_dim=out_dim, n_steps=T - 1))
    out = fwd(src)
    jax.block_until_ready(out)

    assert out.shape == (B, T - 1, out_dim), out.shape
    assert bool(jnp.all(jnp.isfinite(out)))

    ref_fn = jax.jit(functools.partial(nmt_reference, params,
                                       n_steps=T - 1, hidden=hidden_size))
    ref = ref_fn(src)
    max_err = float(jnp.max(jnp.abs(out - ref)))
    assert max_err < 1e-2, max_err

    print("KERNEL_OK")
</pallas_src>

<mosaic_0001>
module attributes {stable_mosaic.version = 11 : i64} {
  func.func @_encoder_kernel(%arg0: memref<8x8x32xf32, #tpu.memory_space<vmem>>, %arg1: memref<64x128xf32, #tpu.memory_space<vmem>>, %arg2: memref<1x128xf32, #tpu.memory_space<vmem>>, %arg3: memref<64x128xf32, #tpu.memory_space<vmem>>, %arg4: memref<1x128xf32, #tpu.memory_space<vmem>>, %arg5: memref<96x128xf32, #tpu.memory_space<vmem>>, %arg6: memref<1x128xf32, #tpu.memory_space<vmem>>, %arg7: memref<96x128xf32, #tpu.memory_space<vmem>>, %arg8: memref<1x128xf32, #tpu.memory_space<vmem>>, %arg9: memref<32x32xf32, #tpu.memory_space<vmem>>, %arg10: memref<1x32xf32, #tpu.memory_space<vmem>>, %arg11: memref<8x8x32xf32, #tpu.memory_space<vmem>>, %arg12: memref<8x8x32xf32, #tpu.memory_space<vmem>>, %arg13: memref<8x32xf32, #tpu.memory_space<vmem>>, %arg14: memref<8x32xf32, #tpu.memory_space<vmem>>, %arg15: memref<8x8x64xf32, #tpu.memory_space<vmem>>) attributes {dimension_semantics = [], scalar_prefetch = 0 : i64, scratch_operands = 1 : i64, tpu.core_type = #tpu.core_type<tc>} {
    %c0 = arith.constant 0 : index
    %c0_0 = arith.constant 0 : index
    %0 = vector.load %arg1[%c0, %c0_0] : memref<64x128xf32, #tpu.memory_space<vmem>>, vector<64x128xf32>
    %c0_1 = arith.constant 0 : index
    %c0_2 = arith.constant 0 : index
    %1 = vector.load %arg3[%c0_1, %c0_2] : memref<64x128xf32, #tpu.memory_space<vmem>>, vector<64x128xf32>
    %c0_3 = arith.constant 0 : index
    %c0_4 = arith.constant 0 : index
    %2 = vector.load %arg5[%c0_3, %c0_4] : memref<96x128xf32, #tpu.memory_space<vmem>>, vector<96x128xf32>
    %c0_5 = arith.constant 0 : index
    %c0_6 = arith.constant 0 : index
    %3 = vector.load %arg7[%c0_5, %c0_6] : memref<96x128xf32, #tpu.memory_space<vmem>>, vector<96x128xf32>
    %c0_7 = arith.constant 0 : index
    %c0_8 = arith.constant 0 : index
    %4 = vector.load %arg2[%c0_7, %c0_8] : memref<1x128xf32, #tpu.memory_space<vmem>>, vector<1x128xf32>
    %5 = vector.shape_cast %4 : vector<1x128xf32> to vector<1x128xf32>
    %6 = vector.broadcast %5 : vector<1x128xf32> to vector<8x128xf32>
    %c0_9 = arith.constant 0 : index
    %c0_10 = arith.constant 0 : index
    %7 = vector.load %arg4[%c0_9, %c0_10] : memref<1x128xf32, #tpu.memory_space<vmem>>, vector<1x128xf32>
    %8 = vector.shape_cast %7 : vector<1x128xf32> to vector<1x128xf32>
    %9 = vector.broadcast %8 : vector<1x128xf32> to vector<8x128xf32>
    %c0_11 = arith.constant 0 : index
    %c0_12 = arith.constant 0 : index
    %10 = vector.load %arg6[%c0_11, %c0_12] : memref<1x128xf32, #tpu.memory_space<vmem>>, vector<1x128xf32>
    %11 = vector.shape_cast %10 : vector<1x128xf32> to vector<1x128xf32>
    %12 = vector.broadcast %11 : vector<1x128xf32> to vector<8x128xf32>
    %c0_13 = arith.constant 0 : index
    %c0_14 = arith.constant 0 : index
    %13 = vector.load %arg8[%c0_13, %c0_14] : memref<1x128xf32, #tpu.memory_space<vmem>>, vector<1x128xf32>
    %14 = vector.shape_cast %13 : vector<1x128xf32> to vector<1x128xf32>
    %15 = vector.broadcast %14 : vector<1x128xf32> to vector<8x128xf32>
    %cst = arith.constant 0.000000e+00 : f32
    %16 = vector.broadcast %cst : f32 to vector<8x32xf32>
    %c0_15 = arith.constant 0 : index
    %c0_16 = arith.constant 0 : index
    %c0_17 = arith.constant 0 : index
    %17 = vector.load %arg0[%c0_15, %c0_16, %c0_17] : memref<8x8x32xf32, #tpu.memory_space<vmem>>, vector<1x8x32xf32>
    %18 = vector.shape_cast %17 : vector<1x8x32xf32> to vector<8x32xf32>
    %19 = tpu.concatenate %18, %16 in 1 : vector<8x32xf32>, vector<8x32xf32> -> vector<8x64xf32>
    %cst_18 = arith.constant dense<0.000000e+00> : vector<8x128xf32>
    %20 = tpu.matmul %19, %0, %cst_18 {dimension_numbers = #tpu.dot_dimension_numbers<[1], [0], [0], [1], [0, 0, 1, 1], [], []>} : vector<8x64xf32>, vector<64x128xf32>, vector<8x128xf32> -> vector<8x128xf32>
    %21 = arith.addf %20, %6 : vector<8x128xf32>
    %22 = arith.negf %21 : vector<8x128xf32>
    %23 = math.exp %22 : vector<8x128xf32>
    %cst_19 = arith.constant 1.000000e+00 : f32
    %24 = vector.broadcast %cst_19 : f32 to vector<8x128xf32>
    %25 = arith.addf %24, %23 : vector<8x128xf32>
    %26 = arith.divf %24, %25 : vector<8x128xf32>
    %27 = math.tanh %21 : vector<8x128xf32>
    %28 = vector.extract_strided_slice %26 {offsets = [0, 0], sizes = [8, 32], strides = [1, 1]} : vector<8x128xf32> to vector<8x32xf32>
    %29 = vector.extract_strided_slice %26 {offsets = [0, 32], sizes = [8, 32], strides = [1, 1]} : vector<8x128xf32> to vector<8x32xf32>
    %30 = vector.extract_strided_slice %27 {offsets = [0, 64], sizes = [8, 32], strides = [1, 1]} : vector<8x128xf32> to vector<8x32xf32>
    %31 = vector.extract_strided_slice %26 {offsets = [0, 96], sizes = [8, 32], strides = [1, 1]} : vector<8x128xf32> to vector<8x32xf32>
    %32 = arith.mulf %29, %16 : vector<8x32xf32>
    %33 = arith.mulf %28, %30 : vector<8x32xf32>
    %34 = arith.addf %32, %33 : vector<8x32xf32>
    %35 = math.tanh %34 : vector<8x32xf32>
    %36 = arith.mulf %31, %35 : vector<8x32xf32>
    %c0_20 = arith.constant 0 : index
    %c0_21 = arith.constant 0 : index
    %c0_22 = arith.constant 0 : index
    %37 = vector.load %arg15[%c0_20, %c0_21, %c0_22] : memref<8x8x64xf32, #tpu.memory_space<vmem>>, vector<1x8x32xf32>
    %38 = vector.shape_cast %37 : vector<1x8x32xf32> to vector<8x32xf32>
    %39 = vector.shape_cast %36 : vector<8x32xf32> to vector<1x8x32xf32>
    tpu.vector_store %arg15[%c0_20, %c0_21, %c0_22], %39 {strides = array<i32>} : memref<8x8x64xf32, #tpu.memory_space<vmem>>, vector<1x8x32xf32>,
    %c1 = arith.constant 1 : index
    %c0_23 = arith.constant 0 : index
    %c0_24 = arith.constant 0 : index
    %40 = vector.load %arg0[%c1, %c0_23, %c0_24] : memref<8x8x32xf32, #tpu.memory_space<vmem>>, vector<1x8x32xf32>
    %41 = vector.shape_cast %40 : vector<1x8x32xf32> to vector<8x32xf32>
    %42 = tpu.concatenate %41, %36 in 1 : vector<8x32xf32>, vector<8x32xf32> -> vector<8x64xf32>
    %cst_25 = arith.constant dense<0.000000e+00> : vector<8x128xf32>
    %43 = tpu.matmul %42, %0, %cst_25 {dimension_numbers = #tpu.dot_dimension_numbers<[1], [0], [0], [1], [0, 0, 1, 1], [], []>} : vector<8x64xf32>, vector<64x128xf32>, vector<8x128xf32> -> vector<8x128xf32>
    %44 = arith.addf %43, %6 : vector<8x128xf32>
    %45 = arith.negf %44 : vector<8x128xf32>
    %46 = math.exp %45 : vector<8x128xf32>
    %cst_26 = arith.constant 1.000000e+00 : f32
    %47 = vector.broadcast %cst_26 : f32 to vector<8x128xf32>
    %48 = arith.addf %47, %46 : vector<8x128xf32>
    %49 = arith.divf %47, %48 : vector<8x128xf32>
    %50 = math.tanh %44 : vector<8x128xf32>
    %51 = vector.extract_strided_slice %49 {offsets = [0, 0], sizes = [8, 32], strides = [1, 1]} : vector<8x128xf32> to vector<8x32xf32>
    %52 = vector.extract_strided_slice %49 {offsets = [0, 32], sizes = [8, 32], strides = [1, 1]} : vector<8x128xf32> to vector<8x32xf32>
    %53 = vector.extract_strided_slice %50 {offsets = [0, 64], sizes = [8, 32], strides = [1, 1]} : vector<8x128xf32> to vector<8x32xf32>
    %54 = vector.extract_strided_slice %49 {offsets = [0, 96], sizes = [8, 32], strides = [1, 1]} : vector<8x128xf32> to vector<8x32xf32>
    %55 = arith.mulf %52, %34 : vector<8x32xf32>
    %56 = arith.mulf %51, %53 : vector<8x32xf32>
    %57 = arith.addf %55, %56 : vector<8x32xf32>
    %58 = math.tanh %57 : vector<8x32xf32>
    %59 = arith.mulf %54, %58 : vector<8x32xf32>
    %c1_27 = arith.constant 1 : index
    %c0_28 = arith.constant 0 : index
    %c0_29 = arith.constant 0 : index
    %60 = vector.load %arg15[%c1_27, %c0_28, %c0_29] : memref<8x8x64xf32, #tpu.memory_space<vmem>>, vector<1x8x32xf32>
    %61 = vector.shape_cast %60 : vector<1x8x32xf32> to vector<8x32xf32>
    %62 = vector.shape_cast %59 : vector<8x32xf32> to vector<1x8x32xf32>
    tpu.vector_store %arg15[%c1_27, %c0_28, %c0_29], %62 {strides = array<i32>} : memref<8x8x64xf32, #tpu.memory_space<vmem>>, vector<1x8x32xf32>,
    %c2 = arith.constant 2 : index
    %c0_30 = arith.constant 0 : index
    %c0_31 = arith.constant 0 : index
    %63 = vector.load %arg0[%c2, %c0_30, %c0_31] : memref<8x8x32xf32, #tpu.memory_space<vmem>>, vector<1x8x32xf32>
    %64 = vector.shape_cast %63 : vector<1x8x32xf32> to vector<8x32xf32>
    %65 = tpu.concatenate %64, %59 in 1 : vector<8x32xf32>, vector<8x32xf32> -> vector<8x64xf32>
    %cst_32 = arith.constant dense<0.000000e+00> : vector<8x128xf32>
    %66 = tpu.matmul %65, %0, %cst_32 {dimension_numbers = #tpu.dot_dimension_numbers<[1], [0], [0], [1], [0, 0, 1, 1], [], []>} : vector<8x64xf32>, vector<64x128xf32>, vector<8x128xf32> -> vector<8x128xf32>
    %67 = arith.addf %66, %6 : vector<8x128xf32>
    %68 = arith.negf %67 : vector<8x128xf32>
    %69 = math.exp %68 : vector<8x128xf32>
    %cst_33 = arith.constant 1.000000e+00 : f32
    %70 = vector.broadcast %cst_33 : f32 to vector<8x128xf32>
    %71 = arith.addf %70, %69 : vector<8x128xf32>
    %72 = arith.divf %70, %71 : vector<8x128xf32>
    %73 = math.tanh %67 : vector<8x128xf32>
    %74 = vector.extract_strided_slice %72 {offsets = [0, 0], sizes = [8, 32], strides = [1, 1]} : vector<8x128xf32> to vector<8x32xf32>
    %75 = vector.extract_strided_slice %72 {offsets = [0, 32], sizes = [8, 32], strides = [1, 1]} : vector<8x128xf32> to vector<8x32xf32>
    %76 = vector.extract_strided_slice %73 {offsets = [0, 64], sizes = [8, 32], strides = [1, 1]} : vector<8x128xf32> to vector<8x32xf32>
    %77 = vector.extract_strided_slice %72 {offsets = [0, 96], sizes = [8, 32], strides = [1, 1]} : vector<8x128xf32> to vector<8x32xf32>
    %78 = arith.mulf %75, %57 : vector<8x32xf32>
    %79 = arith.mulf %74, %76 : vector<8x32xf32>
    %80 = arith.addf %78, %79 : vector<8x32xf32>
    %81 = math.tanh %80 : vector<8x32xf32>
    %82 = arith.mulf %77, %81 : vector<8x32xf32>
    %c2_34 = arith.constant 2 : index
    %c0_35 = arith.constant 0 : index
    %c0_36 = arith.constant 0 : index
    %83 = vector.load %arg15[%c2_34, %c0_35, %c0_36] : memref<8x8x64xf32, #tpu.memory_space<vmem>>, vector<1x8x32xf32>
    %84 = vector.shape_cast %83 : vector<1x8x32xf32> to vector<8x32xf32>
    %85 = vector.shape_cast %82 : vector<8x32xf32> to vector<1x8x32xf32>
    tpu.vector_store %arg15[%c2_34, %c0_35, %c0_36], %85 {strides = array<i32>} : memref<8x8x64xf32, #tpu.memory_space<vmem>>, vector<1x8x32xf32>,
    %c3 = arith.constant 3 : index
    %c0_37 = arith.constant 0 : index
    %c0_38 = arith.constant 0 : index
    %86 = vector.load %arg0[%c3, %c0_37, %c0_38] : memref<8x8x32xf32, #tpu.memory_space<vmem>>, vector<1x8x32xf32>
    %87 = vector.shape_cast %86 : vector<1x8x32xf32> to vector<8x32xf32>
    %88 = tpu.concatenate %87, %82 in 1 : vector<8x32xf32>, vector<8x32xf32> -> vector<8x64xf32>
    %cst_39 = arith.constant dense<0.000000e+00> : vector<8x128xf32>
    %89 = tpu.matmul %88, %0, %cst_39 {dimension_numbers = #tpu.dot_dimension_numbers<[1], [0], [0], [1], [0, 0, 1, 1], [], []>} : vector<8x64xf32>, vector<64x128xf32>, vector<8x128xf32> -> vector<8x128xf32>
    %90 = arith.addf %89, %6 : vector<8x128xf32>
    %91 = arith.negf %90 : vector<8x128xf32>
    %92 = math.exp %91 : vector<8x128xf32>
    %cst_40 = arith.constant 1.000000e+00 : f32
    %93 = vector.broadcast %cst_40 : f32 to vector<8x128xf32>
    %94 = arith.addf %93, %92 : vector<8x128xf32>
    %95 = arith.divf %93, %94 : vector<8x128xf32>
    %96 = math.tanh %90 : vector<8x128xf32>
    %97 = vector.extract_strided_slice %95 {offsets = [0, 0], sizes = [8, 32], strides = [1, 1]} : vector<8x128xf32> to vector<8x32xf32>
    %98 = vector.extract_strided_slice %95 {offsets = [0, 32], sizes = [8, 32], strides = [1, 1]} : vector<8x128xf32> to vector<8x32xf32>
    %99 = vector.extract_strided_slice %96 {offsets = [0, 64], sizes = [8, 32], strides = [1, 1]} : vector<8x128xf32> to vector<8x32xf32>
    %100 = vector.extract_strided_slice %95 {offsets = [0, 96], sizes = [8, 32], strides = [1, 1]} : vector<8x128xf32> to vector<8x32xf32>
    %101 = arith.mulf %98, %80 : vector<8x32xf32>
    %102 = arith.mulf %97, %99 : vector<8x32xf32>
    %103 = arith.addf %101, %102 : vector<8x32xf32>
    %104 = math.tanh %103 : vector<8x32xf32>
    %105 = arith.mulf %100, %104 : vector<8x32xf32>
    %c3_41 = arith.constant 3 : index
    %c0_42 = arith.constant 0 : index
    %c0_43 = arith.constant 0 : index
    %106 = vector.load %arg15[%c3_41, %c0_42, %c0_43] : memref<8x8x64xf32, #tpu.memory_space<vmem>>, vector<1x8x32xf32>
    %107 = vector.shape_cast %106 : vector<1x8x32xf32> to vector<8x32xf32>
    %108 = vector.shape_cast %105 : vector<8x32xf32> to vector<1x8x32xf32>
    tpu.vector_store %arg15[%c3_41, %c0_42, %c0_43], %108 {strides = array<i32>} : memref<8x8x64xf32, #tpu.memory_space<vmem>>, vector<1x8x32xf32>,
    %c4 = arith.constant 4 : index
    %c0_44 = arith.constant 0 : index
    %c0_45 = arith.constant 0 : index
    %109 = vector.load %arg0[%c4, %c0_44, %c0_45] : memref<8x8x32xf32, #tpu.memory_space<vmem>>, vector<1x8x32xf32>
    %110 = vector.shape_cast %109 : vector<1x8x32xf32> to vector<8x32xf32>
    %111 = tpu.concatenate %110, %105 in 1 : vector<8x32xf32>, vector<8x32xf32> -> vector<8x64xf32>
    %cst_46 = arith.constant dense<0.000000e+00> : vector<8x128xf32>
    %112 = tpu.matmul %111, %0, %cst_46 {dimension_numbers = #tpu.dot_dimension_numbers<[1], [0], [0], [1], [0, 0, 1, 1], [], []>} : vector<8x64xf32>, vector<64x128xf32>, vector<8x128xf32> -> vector<8x128xf32>
    %113 = arith.addf %112, %6 : vector<8x128xf32>
    %114 = arith.negf %113 : vector<8x128xf32>
    %115 = math.exp %114 : vector<8x128xf32>
    %cst_47 = arith.constant 1.000000e+00 : f32
    %116 = vector.broadcast %cst_47 : f32 to vector<8x128xf32>
    %117 = arith.addf %116, %115 : vector<8x128xf32>
    %118 = arith.divf %116, %117 : vector<8x128xf32>
    %119 = math.tanh %113 : vector<8x128xf32>
    %120 = vector.extract_strided_slice %118 {offsets = [0, 0], sizes = [8, 32], strides = [1, 1]} : vector<8x128xf32> to vector<8x32xf32>
    %121 = vector.extract_strided_slice %118 {offsets = [0, 32], sizes = [8, 32], strides = [1, 1]} : vector<8x128xf32> to vector<8x32xf32>
    %122 = vector.extract_strided_slice %119 {offsets = [0, 64], sizes = [8, 32], strides = [1, 1]} : vector<8x128xf32> to vector<8x32xf32>
    %123 = vector.extract_strided_slice %118 {offsets = [0, 96], sizes = [8, 32], strides = [1, 1]} : vector<8x128xf32> to vector<8x32xf32>
    %124 = arith.mulf %121, %103 : vector<8x32xf32>
    %125 = arith.mulf %120, %122 : vector<8x32xf32>
    %126 = arith.addf %124, %125 : vector<8x32xf32>
    %127 = math.tanh %126 : vector<8x32xf32>
    %128 = arith.mulf %123, %127 : vector<8x32xf32>
    %c4_48 = arith.constant 4 : index
    %c0_49 = arith.constant 0 : index
    %c0_50 = arith.constant 0 : index
    %129 = vector.load %arg15[%c4_48, %c0_49, %c0_50] : memref<8x8x64xf32, #tpu.memory_space<vmem>>, vector<1x8x32xf32>
    %130 = vector.shape_cast %129 : vector<1x8x32xf32> to vector<8x32xf32>
    %131 = vector.shape_cast %128 : vector<8x32xf32> to vector<1x8x32xf32>
    tpu.vector_store %arg15[%c4_48, %c0_49, %c0_50], %131 {strides = array<i32>} : memref<8x8x64xf32, #tpu.memory_space<vmem>>, vector<1x8x32xf32>,
    %c5 = arith.constant 5 : index
    %c0_51 = arith.constant 0 : index
    %c0_52 = arith.constant 0 : index
    %132 = vector.load %arg0[%c5, %c0_51, %c0_52] : memref<8x8x32xf32, #tpu.memory_space<vmem>>, vector<1x8x32xf32>
    %133 = vector.shape_cast %132 : vector<1x8x32xf32> to vector<8x32xf32>
    %134 = tpu.concatenate %133, %128 in 1 : vector<8x32xf32>, vector<8x32xf32> -> vector<8x64xf32>
    %cst_53 = arith.constant dense<0.000000e+00> : vector<8x128xf32>
    %135 = tpu.matmul %134, %0, %cst_53 {dimension_numbers = #tpu.dot_dimension_numbers<[1], [0], [0], [1], [0, 0, 1, 1], [], []>} : vector<8x64xf32>, vector<64x128xf32>, vector<8x128xf32> -> vector<8x128xf32>
    %136 = arith.addf %135, %6 : vector<8x128xf32>
    %137 = arith.negf %136 : vector<8x128xf32>
    %138 = math.exp %137 : vector<8x128xf32>
    %cst_54 = arith.constant 1.000000e+00 : f32
    %139 = vector.broadcast %cst_54 : f32 to vector<8x128xf32>
    %140 = arith.addf %139, %138 : vector<8x128xf32>
    %141 = arith.divf %139, %140 : vector<8x128xf32>
    %142 = math.tanh %136 : vector<8x128xf32>
    %143 = vector.extract_strided_slice %141 {offsets = [0, 0], sizes = [8, 32], strides = [1, 1]} : vector<8x128xf32> to vector<8x32xf32>
    %144 = vector.extract_strided_slice %141 {offsets = [0, 32], sizes = [8, 32], strides = [1, 1]} : vector<8x128xf32> to vector<8x32xf32>
    %145 = vector.extract_strided_slice %142 {offsets = [0, 64], sizes = [8, 32], strides = [1, 1]} : vector<8x128xf32> to vector<8x32xf32>
    %146 = vector.extract_strided_slice %141 {offsets = [0, 96], sizes = [8, 32], strides = [1, 1]} : vector<8x128xf32> to vector<8x32xf32>
    %147 = arith.mulf %144, %126 : vector<8x32xf32>
    %148 = arith.mulf %143, %145 : vector<8x32xf32>
    %149 = arith.addf %147, %148 : vector<8x32xf32>
    %150 = math.tanh %149 : vector<8x32xf32>
    %151 = arith.mulf %146, %150 : vector<8x32xf32>
    %c5_55 = arith.constant 5 : index
    %c0_56 = arith.constant 0 : index
    %c0_57 = arith.constant 0 : index
    %152 = vector.load %arg15[%c5_55, %c0_56, %c0_57] : memref<8x8x64xf32, #tpu.memory_space<vmem>>, vector<1x8x32xf32>
    %153 = vector.shape_cast %152 : vector<1x8x32xf32> to vector<8x32xf32>
    %154 = vector.shape_cast %151 : vector<8x32xf32> to vector<1x8x32xf32>
    tpu.vector_store %arg15[%c5_55, %c0_56, %c0_57], %154 {strides = array<i32>} : memref<8x8x64xf32, #tpu.memory_space<vmem>>, vector<1x8x32xf32>,
    %c6 = arith.constant 6 : index
    %c0_58 = arith.constant 0 : index
    %c0_59 = arith.constant 0 : index
    %155 = vector.load %arg0[%c6, %c0_58, %c0_59] : memref<8x8x32xf32, #tpu.memory_space<vmem>>, vector<1x8x32xf32>
    %156 = vector.shape_cast %155 : vector<1x8x32xf32> to vector<8x32xf32>
    %157 = tpu.concatenate %156, %151 in 1 : vector<8x32xf32>, vector<8x32xf32> -> vector<8x64xf32>
    %cst_60 = arith.constant dense<0.000000e+00> : vector<8x128xf32>
    %158 = tpu.matmul %157, %0, %cst_60 {dimension_numbers = #tpu.dot_dimension_numbers<[1], [0], [0], [1], [0, 0, 1, 1], [], []>} : vector<8x64xf32>, vector<64x128xf32>, vector<8x128xf32> -> vector<8x128xf32>
    %159 = arith.addf %158, %6 : vector<8x128xf32>
    %160 = arith.negf %159 : vector<8x128xf32>
    %161 = math.exp %160 : vector<8x128xf32>
    %cst_61 = arith.constant 1.000000e+00 : f32
    %162 = vector.broadcast %cst_61 : f32 to vector<8x128xf32>
    %163 = arith.addf %162, %161 : vector<8x128xf32>
    %164 = arith.divf %162, %163 : vector<8x128xf32>
    %165 = math.tanh %159 : vector<8x128xf32>
    %166 = vector.extract_strided_slice %164 {offsets = [0, 0], sizes = [8, 32], strides = [1, 1]} : vector<8x128xf32> to vector<8x32xf32>
    %167 = vector.extract_strided_slice %164 {offsets = [0, 32], sizes = [8, 32], strides = [1, 1]} : vector<8x128xf32> to vector<8x32xf32>
    %168 = vector.extract_strided_slice %165 {offsets = [0, 64], sizes = [8, 32], strides = [1, 1]} : vector<8x128xf32> to vector<8x32xf32>
    %169 = vector.extract_strided_slice %164 {offsets = [0, 96], sizes = [8, 32], strides = [1, 1]} : vector<8x128xf32> to vector<8x32xf32>
    %170 = arith.mulf %167, %149 : vector<8x32xf32>
    %171 = arith.mulf %166, %168 : vector<8x32xf32>
    %172 = arith.addf %170, %171 : vector<8x32xf32>
    %173 = math.tanh %172 : vector<8x32xf32>
    %174 = arith.mulf %169, %173 : vector<8x32xf32>
    %c6_62 = arith.constant 6 : index
    %c0_63 = arith.constant 0 : index
    %c0_64 = arith.constant 0 : index
    %175 = vector.load %arg15[%c6_62, %c0_63, %c0_64] : memref<8x8x64xf32, #tpu.memory_space<vmem>>, vector<1x8x32xf32>
    %176 = vector.shape_cast %175 : vector<1x8x32xf32> to vector<8x32xf32>
    %177 = vector.shape_cast %174 : vector<8x32xf32> to vector<1x8x32xf32>
    tpu.vector_store %arg15[%c6_62, %c0_63, %c0_64], %177 {strides = array<i32>} : memref<8x8x64xf32, #tpu.memory_space<vmem>>, vector<1x8x32xf32>,
    %c7 = arith.constant 7 : index
    %c0_65 = arith.constant 0 : index
    %c0_66 = arith.constant 0 : index
    %178 = vector.load %arg0[%c7, %c0_65, %c0_66] : memref<8x8x32xf32, #tpu.memory_space<vmem>>, vector<1x8x32xf32>
    %179 = vector.shape_cast %178 : vector<1x8x32xf32> to vector<8x32xf32>
    %180 = tpu.concatenate %179, %174 in 1 : vector<8x32xf32>, vector<8x32xf32> -> vector<8x64xf32>
    %cst_67 = arith.constant dense<0.000000e+00> : vector<8x128xf32>
    %181 = tpu.matmul %180, %0, %cst_67 {dimension_numbers = #tpu.dot_dimension_numbers<[1], [0], [0], [1], [0, 0, 1, 1], [], []>} : vector<8x64xf32>, vector<64x128xf32>, vector<8x128xf32> -> vector<8x128xf32>
    %182 = arith.addf %181, %6 : vector<8x128xf32>
    %183 = arith.negf %182 : vector<8x128xf32>
    %184 = math.exp %183 : vector<8x128xf32>
    %cst_68 = arith.constant 1.000000e+00 : f32
    %185 = vector.broadcast %cst_68 : f32 to vector<8x128xf32>
    %186 = arith.addf %185, %184 : vector<8x128xf32>
    %187 = arith.divf %185, %186 : vector<8x128xf32>
    %188 = math.tanh %182 : vector<8x128xf32>
    %189 = vector.extract_strided_slice %187 {offsets = [0, 0], sizes = [8, 32], strides = [1, 1]} : vector<8x128xf32> to vector<8x32xf32>
    %190 = vector.extract_strided_slice %187 {offsets = [0, 32], sizes = [8, 32], strides = [1, 1]} : vector<8x128xf32> to vector<8x32xf32>
    %191 = vector.extract_strided_slice %188 {offsets = [0, 64], sizes = [8, 32], strides = [1, 1]} : vector<8x128xf32> to vector<8x32xf32>
    %192 = vector.extract_strided_slice %187 {offsets = [0, 96], sizes = [8, 32], strides = [1, 1]} : vector<8x128xf32> to vector<8x32xf32>
    %193 = arith.mulf %190, %172 : vector<8x32xf32>
    %194 = arith.mulf %189, %191 : vector<8x32xf32>
    %195 = arith.addf %193, %194 : vector<8x32xf32>
    %196 = math.tanh %195 : vector<8x32xf32>
    %197 = arith.mulf %192, %196 : vector<8x32xf32>
    %c7_69 = arith.constant 7 : index
    %c0_70 = arith.constant 0 : index
    %c0_71 = arith.constant 0 : index
    %198 = vector.load %arg15[%c7_69, %c0_70, %c0_71] : memref<8x8x64xf32, #tpu.memory_space<vmem>>, vector<1x8x32xf32>
    %199 = vector.shape_cast %198 : vector<1x8x32xf32> to vector<8x32xf32>
    %200 = vector.shape_cast %197 : vector<8x32xf32> to vector<1x8x32xf32>
    tpu.vector_store %arg15[%c7_69, %c0_70, %c0_71], %200 {strides = array<i32>} : memref<8x8x64xf32, #tpu.memory_space<vmem>>, vector<1x8x32xf32>,
    %c7_72 = arith.constant 7 : index
    %c0_73 = arith.constant 0 : index
    %c0_74 = arith.constant 0 : index
    %201 = vector.load %arg0[%c7_72, %c0_73, %c0_74] : memref<8x8x32xf32, #tpu.memory_space<vmem>>, vector<1x8x32xf32>
    %202 = vector.shape_cast %201 : vector<1x8x32xf32> to vector<8x32xf32>
    %203 = tpu.concatenate %202, %16 in 1 : vector<8x32xf32>, vector<8x32xf32> -> vector<8x64xf32>
    %cst_75 = arith.constant dense<0.000000e+00> : vector<8x128xf32>
    %204 = tpu.matmul %203, %1, %cst_75 {dimension_numbers = #tpu.dot_dimension_numbers<[1], [0], [0], [1], [0, 0, 1, 1], [], []>} : vector<8x64xf32>, vector<64x128xf32>, vector<8x128xf32> -> vector<8x128xf32>
    %205 = arith.addf %204, %9 : vector<8x128xf32>
    %206 = arith.negf %205 : vector<8x128xf32>
    %207 = math.exp %206 : vector<8x128xf32>
    %cst_76 = arith.constant 1.000000e+00 : f32
    %208 = vector.broadcast %cst_76 : f32 to vector<8x128xf32>
    %209 = arith.addf %208, %207 : vector<8x128xf32>
    %210 = arith.divf %208, %209 : vector<8x128xf32>
    %211 = math.tanh %205 : vector<8x128xf32>
    %212 = vector.extract_strided_slice %210 {offsets = [0, 0], sizes = [8, 32], strides = [1, 1]} : vector<8x128xf32> to vector<8x32xf32>
    %213 = vector.extract_strided_slice %210 {offsets = [0, 32], sizes = [8, 32], strides = [1, 1]} : vector<8x128xf32> to vector<8x32xf32>
    %214 = vector.extract_strided_slice %211 {offsets = [0, 64], sizes = [8, 32], strides = [1, 1]} : vector<8x128xf32> to vector<8x32xf32>
    %215 = vector.extract_strided_slice %210 {offsets = [0, 96], sizes = [8, 32], strides = [1, 1]} : vector<8x128xf32> to vector<8x32xf32>
    %216 = arith.mulf %213, %16 : vector<8x32xf32>
    %217 = arith.mulf %212, %214 : vector<8x32xf32>
    %218 = arith.addf %216, %217 : vector<8x32xf32>
    %219 = math.tanh %218 : vector<8x32xf32>
    %220 = arith.mulf %215, %219 : vector<8x32xf32>
    %c7_77 = arith.constant 7 : index
    %c0_78 = arith.constant 0 : index
    %c32 = arith.constant 32 : index
    %221 = vector.load %arg15[%c7_77, %c0_78, %c32] : memref<8x8x64xf32, #tpu.memory_space<vmem>>, vector<1x8x32xf32>
    %222 = vector.shape_cast %221 : vector<1x8x32xf32> to vector<8x32xf32>
    %223 = vector.shape_cast %220 : vector<8x32xf32> to vector<1x8x32xf32>
    tpu.vector_store %arg15[%c7_77, %c0_78, %c32], %223 {strides = array<i32>} : memref<8x8x64xf32, #tpu.memory_space<vmem>>, vector<1x8x32xf32>,
    %c6_79 = arith.constant 6 : index
    %c0_80 = arith.constant 0 : index
    %c0_81 = arith.constant 0 : index
    %224 = vector.load %arg0[%c6_79, %c0_80, %c0_81] : memref<8x8x32xf32, #tpu.memory_space<vmem>>, vector<1x8x32xf32>
    %225 = vector.shape_cast %224 : vector<1x8x32xf32> to vector<8x32xf32>
    %226 = tpu.concatenate %225, %220 in 1 : vector<8x32xf32>, vector<8x32xf32> -> vector<8x64xf32>
    %cst_82 = arith.constant dense<0.000000e+00> : vector<8x128xf32>
    %227 = tpu.matmul %226, %1, %cst_82 {dimension_numbers = #tpu.dot_dimension_numbers<[1], [0], [0], [1], [0, 0, 1, 1], [], []>} : vector<8x64xf32>, vector<64x128xf32>, vector<8x128xf32> -> vector<8x128xf32>
    %228 = arith.addf %227, %9 : vector<8x128xf32>
    %229 = arith.negf %228 : vector<8x128xf32>
    %230 = math.exp %229 : vector<8x128xf32>
    %cst_83 = arith.constant 1.000000e+00 : f32
    %231 = vector.broadcast %cst_83 : f32 to vector<8x128xf32>
    %232 = arith.addf %231, %230 : vector<8x128xf32>
    %233 = arith.divf %231, %232 : vector<8x128xf32>
    %234 = math.tanh %228 : vector<8x128xf32>
    %235 = vector.extract_strided_slice %233 {offsets = [0, 0], sizes = [8, 32], strides = [1, 1]} : vector<8x128xf32> to vector<8x32xf32>
    %236 = vector.extract_strided_slice %233 {offsets = [0, 32], sizes = [8, 32], strides = [1, 1]} : vector<8x128xf32> to vector<8x32xf32>
    %237 = vector.extract_strided_slice %234 {offsets = [0, 64], sizes = [8, 32], strides = [1, 1]} : vector<8x128xf32> to vector<8x32xf32>
    %238 = vector.extract_strided_slice %233 {offsets = [0, 96], sizes = [8, 32], strides = [1, 1]} : vector<8x128xf32> to vector<8x32xf32>
    %239 = arith.mulf %236, %218 : vector<8x32xf32>
    %240 = arith.mulf %235, %237 : vector<8x32xf32>
    %241 = arith.addf %239, %240 : vector<8x32xf32>
    %242 = math.tanh %241 : vector<8x32xf32>
    %243 = arith.mulf %238, %242 : vector<8x32xf32>
    %c6_84 = arith.constant 6 : index
    %c0_85 = arith.constant 0 : index
    %c32_86 = arith.constant 32 : index
    %244 = vector.load %arg15[%c6_84, %c0_85, %c32_86] : memref<8x8x64xf32, #tpu.memory_space<vmem>>, vector<1x8x32xf32>
    %245 = vector.shape_cast %244 : vector<1x8x32xf32> to vector<8x32xf32>
    %246 = vector.shape_cast %243 : vector<8x32xf32> to vector<1x8x32xf32>
    tpu.vector_store %arg15[%c6_84, %c0_85, %c32_86], %246 {strides = array<i32>} : memref<8x8x64xf32, #tpu.memory_space<vmem>>, vector<1x8x32xf32>,
    %c5_87 = arith.constant 5 : index
    %c0_88 = arith.constant 0 : index
    %c0_89 = arith.constant 0 : index
    %247 = vector.load %arg0[%c5_87, %c0_88, %c0_89] : memref<8x8x32xf32, #tpu.memory_space<vmem>>, vector<1x8x32xf32>
    %248 = vector.shape_cast %247 : vector<1x8x32xf32> to vector<8x32xf32>
    %249 = tpu.concatenate %248, %243 in 1 : vector<8x32xf32>, vector<8x32xf32> -> vector<8x64xf32>
    %cst_90 = arith.constant dense<0.000000e+00> : vector<8x128xf32>
    %250 = tpu.matmul %249, %1, %cst_90 {dimension_numbers = #tpu.dot_dimension_numbers<[1], [0], [0], [1], [0, 0, 1, 1], [], []>} : vector<8x64xf32>, vector<64x128xf32>, vector<8x128xf32> -> vector<8x128xf32>
    %251 = arith.addf %250, %9 : vector<8x128xf32>
    %252 = arith.negf %251 : vector<8x128xf32>
    %253 = math.exp %252 : vector<8x128xf32>
    %cst_91 = arith.constant 1.000000e+00 : f32
    %254 = vector.broadcast %cst_91 : f32 to vector<8x128xf32>
    %255 = arith.addf %254, %253 : vector<8x128xf32>
    %256 = arith.divf %254, %255 : vector<8x128xf32>
    %257 = math.tanh %251 : vector<8x128xf32>
    %258 = vector.extract_strided_slice %256 {offsets = [0, 0], sizes = [8, 32], strides = [1, 1]} : vector<8x128xf32> to vector<8x32xf32>
    %259 = vector.extract_strided_slice %256 {offsets = [0, 32], sizes = [8, 32], strides = [1, 1]} : vector<8x128xf32> to vector<8x32xf32>
    %260 = vector.extract_strided_slice %257 {offsets = [0, 64], sizes = [8, 32], strides = [1, 1]} : vector<8x128xf32> to vector<8x32xf32>
    %261 = vector.extract_strided_slice %256 {offsets = [0, 96], sizes = [8, 32], strides = [1, 1]} : vector<8x128xf32> to vector<8x32xf32>
    %262 = arith.mulf %259, %241 : vector<8x32xf32>
    %263 = arith.mulf %258, %260 : vector<8x32xf32>
    %264 = arith.addf %262, %263 : vector<8x32xf32>
    %265 = math.tanh %264 : vector<8x32xf32>
    %266 = arith.mulf %261, %265 : vector<8x32xf32>
    %c5_92 = arith.constant 5 : index
    %c0_93 = arith.constant 0 : index
    %c32_94 = arith.constant 32 : index
    %267 = vector.load %arg15[%c5_92, %c0_93, %c32_94] : memref<8x8x64xf32, #tpu.memory_space<vmem>>, vector<1x8x32xf32>
    %268 = vector.shape_cast %267 : vector<1x8x32xf32> to vector<8x32xf32>
    %269 = vector.shape_cast %266 : vector<8x32xf32> to vector<1x8x32xf32>
    tpu.vector_store %arg15[%c5_92, %c0_93, %c32_94], %269 {strides = array<i32>} : memref<8x8x64xf32, #tpu.memory_space<vmem>>, vector<1x8x32xf32>,
    %c4_95 = arith.constant 4 : index
    %c0_96 = arith.constant 0 : index
    %c0_97 = arith.constant 0 : index
    %270 = vector.load %arg0[%c4_95, %c0_96, %c0_97] : memref<8x8x32xf32, #tpu.memory_space<vmem>>, vector<1x8x32xf32>
    %271 = vector.shape_cast %270 : vector<1x8x32xf32> to vector<8x32xf32>
    %272 = tpu.concatenate %271, %266 in 1 : vector<8x32xf32>, vector<8x32xf32> -> vector<8x64xf32>
    %cst_98 = arith.constant dense<0.000000e+00> : vector<8x128xf32>
    %273 = tpu.matmul %272, %1, %cst_98 {dimension_numbers = #tpu.dot_dimension_numbers<[1], [0], [0], [1], [0, 0, 1, 1], [], []>} : vector<8x64xf32>, vector<64x128xf32>, vector<8x128xf32> -> vector<8x128xf32>
    %274 = arith.addf %273, %9 : vector<8x128xf32>
    %275 = arith.negf %274 : vector<8x128xf32>
    %276 = math.exp %275 : vector<8x128xf32>
    %cst_99 = arith.constant 1.000000e+00 : f32
    %277 = vector.broadcast %cst_99 : f32 to vector<8x128xf32>
    %278 = arith.addf %277, %276 : vector<8x128xf32>
    %279 = arith.divf %277, %278 : vector<8x128xf32>
    %280 = math.tanh %274 : vector<8x128xf32>
    %281 = vector.extract_strided_slice %279 {offsets = [0, 0], sizes = [8, 32], strides = [1, 1]} : vector<8x128xf32> to vector<8x32xf32>
    %282 = vector.extract_strided_slice %279 {offsets = [0, 32], sizes = [8, 32], strides = [1, 1]} : vector<8x128xf32> to vector<8x32xf32>
    %283 = vector.extract_strided_slice %280 {offsets = [0, 64], sizes = [8, 32], strides = [1, 1]} : vector<8x128xf32> to vector<8x32xf32>
    %284 = vector.extract_strided_slice %279 {offsets = [0, 96], sizes = [8, 32], strides = [1, 1]} : vector<8x128xf32> to vector<8x32xf32>
    %285 = arith.mulf %282, %264 : vector<8x32xf32>
    %286 = arith.mulf %281, %283 : vector<8x32xf32>
    %287 = arith.addf %285, %286 : vector<8x32xf32>
    %288 = math.tanh %287 : vector<8x32xf32>
    %289 = arith.mulf %284, %288 : vector<8x32xf32>
    %c4_100 = arith.constant 4 : index
    %c0_101 = arith.constant 0 : index
    %c32_102 = arith.constant 32 : index
    %290 = vector.load %arg15[%c4_100, %c0_101, %c32_102] : memref<8x8x64xf32, #tpu.memory_space<vmem>>, vector<1x8x32xf32>
    %291 = vector.shape_cast %290 : vector<1x8x32xf32> to vector<8x32xf32>
    %292 = vector.shape_cast %289 : vector<8x32xf32> to vector<1x8x32xf32>
    tpu.vector_store %arg15[%c4_100, %c0_101, %c32_102], %292 {strides = array<i32>} : memref<8x8x64xf32, #tpu.memory_space<vmem>>, vector<1x8x32xf32>,
    %c3_103 = arith.constant 3 : index
    %c0_104 = arith.constant 0 : index
    %c0_105 = arith.constant 0 : index
    %293 = vector.load %arg0[%c3_103, %c0_104, %c0_105] : memref<8x8x32xf32, #tpu.memory_space<vmem>>, vector<1x8x32xf32>
    %294 = vector.shape_cast %293 : vector<1x8x32xf32> to vector<8x32xf32>
    %295 = tpu.concatenate %294, %289 in 1 : vector<8x32xf32>, vector<8x32xf32> -> vector<8x64xf32>
    %cst_106 = arith.constant dense<0.000000e+00> : vector<8x128xf32>
    %296 = tpu.matmul %295, %1, %cst_106 {dimension_numbers = #tpu.dot_dimension_numbers<[1], [0], [0], [1], [0, 0, 1, 1], [], []>} : vector<8x64xf32>, vector<64x128xf32>, vector<8x128xf32> -> vector<8x128xf32>
    %297 = arith.addf %296, %9 : vector<8x128xf32>
    %298 = arith.negf %297 : vector<8x128xf32>
    %299 = math.exp %298 : vector<8x128xf32>
    %cst_107 = arith.constant 1.000000e+00 : f32
    %300 = vector.broadcast %cst_107 : f32 to vector<8x128xf32>
    %301 = arith.addf %300, %299 : vector<8x128xf32>
    %302 = arith.divf %300, %301 : vector<8x128xf32>
    %303 = math.tanh %297 : vector<8x128xf32>
    %304 = vector.extract_strided_slice %302 {offsets = [0, 0], sizes = [8, 32], strides = [1, 1]} : vector<8x128xf32> to vector<8x32xf32>
    %305 = vector.extract_strided_slice %302 {offsets = [0, 32], sizes = [8, 32], strides = [1, 1]} : vector<8x128xf32> to vector<8x32xf32>
    %306 = vector.extract_strided_slice %303 {offsets = [0, 64], sizes = [8, 32], strides = [1, 1]} : vector<8x128xf32> to vector<8x32xf32>
    %307 = vector.extract_strided_slice %302 {offsets = [0, 96], sizes = [8, 32], strides = [1, 1]} : vector<8x128xf32> to vector<8x32xf32>
    %308 = arith.mulf %305, %287 : vector<8x32xf32>
    %309 = arith.mulf %304, %306 : vector<8x32xf32>
    %310 = arith.addf %308, %309 : vector<8x32xf32>
    %311 = math.tanh %310 : vector<8x32xf32>
    %312 = arith.mulf %307, %311 : vector<8x32xf32>
    %c3_108 = arith.constant 3 : index
    %c0_109 = arith.constant 0 : index
    %c32_110 = arith.constant 32 : index
    %313 = vector.load %arg15[%c3_108, %c0_109, %c32_110] : memref<8x8x64xf32, #tpu.memory_space<vmem>>, vector<1x8x32xf32>
    %314 = vector.shape_cast %313 : vector<1x8x32xf32> to vector<8x32xf32>
    %315 = vector.shape_cast %312 : vector<8x32xf32> to vector<1x8x32xf32>
    tpu.vector_store %arg15[%c3_108, %c0_109, %c32_110], %315 {strides = array<i32>} : memref<8x8x64xf32, #tpu.memory_space<vmem>>, vector<1x8x32xf32>,
    %c2_111 = arith.constant 2 : index
    %c0_112 = arith.constant 0 : index
    %c0_113 = arith.constant 0 : index
    %316 = vector.load %arg0[%c2_111, %c0_112, %c0_113] : memref<8x8x32xf32, #tpu.memory_space<vmem>>, vector<1x8x32xf32>
    %317 = vector.shape_cast %316 : vector<1x8x32xf32> to vector<8x32xf32>
    %318 = tpu.concatenate %317, %312 in 1 : vector<8x32xf32>, vector<8x32xf32> -> vector<8x64xf32>
    %cst_114 = arith.constant dense<0.000000e+00> : vector<8x128xf32>
    %319 = tpu.matmul %318, %1, %cst_114 {dimension_numbers = #tpu.dot_dimension_numbers<[1], [0], [0], [1], [0, 0, 1, 1], [], []>} : vector<8x64xf32>, vector<64x128xf32>, vector<8x128xf32> -> vector<8x128xf32>
    %320 = arith.addf %319, %9 : vector<8x128xf32>
    %321 = arith.negf %320 : vector<8x128xf32>
    %322 = math.exp %321 : vector<8x128xf32>
    %cst_115 = arith.constant 1.000000e+00 : f32
    %323 = vector.broadcast %cst_115 : f32 to vector<8x128xf32>
    %324 = arith.addf %323, %322 : vector<8x128xf32>
    %325 = arith.divf %323, %324 : vector<8x128xf32>
    %326 = math.tanh %320 : vector<8x128xf32>
    %327 = vector.extract_strided_slice %325 {offsets = [0, 0], sizes = [8, 32], strides = [1, 1]} : vector<8x128xf32> to vector<8x32xf32>
    %328 = vector.extract_strided_slice %325 {offsets = [0, 32], sizes = [8, 32], strides = [1, 1]} : vector<8x128xf32> to vector<8x32xf32>
    %329 = vector.extract_strided_slice %326 {offsets = [0, 64], sizes = [8, 32], strides = [1, 1]} : vector<8x128xf32> to vector<8x32xf32>
    %330 = vector.extract_strided_slice %325 {offsets = [0, 96], sizes = [8, 32], strides = [1, 1]} : vector<8x128xf32> to vector<8x32xf32>
    %331 = arith.mulf %328, %310 : vector<8x32xf32>
    %332 = arith.mulf %327, %329 : vector<8x32xf32>
    %333 = arith.addf %331, %332 : vector<8x32xf32>
    %334 = math.tanh %333 : vector<8x32xf32>
    %335 = arith.mulf %330, %334 : vector<8x32xf32>
    %c2_116 = arith.constant 2 : index
    %c0_117 = arith.constant 0 : index
    %c32_118 = arith.constant 32 : index
    %336 = vector.load %arg15[%c2_116, %c0_117, %c32_118] : memref<8x8x64xf32, #tpu.memory_space<vmem>>, vector<1x8x32xf32>
    %337 = vector.shape_cast %336 : vector<1x8x32xf32> to vector<8x32xf32>
    %338 = vector.shape_cast %335 : vector<8x32xf32> to vector<1x8x32xf32>
    tpu.vector_store %arg15[%c2_116, %c0_117, %c32_118], %338 {strides = array<i32>} : memref<8x8x64xf32, #tpu.memory_space<vmem>>, vector<1x8x32xf32>,
    %c1_119 = arith.constant 1 : index
    %c0_120 = arith.constant 0 : index
    %c0_121 = arith.constant 0 : index
    %339 = vector.load %arg0[%c1_119, %c0_120, %c0_121] : memref<8x8x32xf32, #tpu.memory_space<vmem>>, vector<1x8x32xf32>
    %340 = vector.shape_cast %339 : vector<1x8x32xf32> to vector<8x32xf32>
    %341 = tpu.concatenate %340, %335 in 1 : vector<8x32xf32>, vector<8x32xf32> -> vector<8x64xf32>
    %cst_122 = arith.constant dense<0.000000e+00> : vector<8x128xf32>
    %342 = tpu.matmul %341, %1, %cst_122 {dimension_numbers = #tpu.dot_dimension_numbers<[1], [0], [0], [1], [0, 0, 1, 1], [], []>} : vector<8x64xf32>, vector<64x128xf32>, vector<8x128xf32> -> vector<8x128xf32>
    %343 = arith.addf %342, %9 : vector<8x128xf32>
    %344 = arith.negf %343 : vector<8x128xf32>
    %345 = math.exp %344 : vector<8x128xf32>
    %cst_123 = arith.constant 1.000000e+00 : f32
    %346 = vector.broadcast %cst_123 : f32 to vector<8x128xf32>
    %347 = arith.addf %346, %345 : vector<8x128xf32>
    %348 = arith.divf %346, %347 : vector<8x128xf32>
    %349 = math.tanh %343 : vector<8x128xf32>
    %350 = vector.extract_strided_slice %348 {offsets = [0, 0], sizes = [8, 32], strides = [1, 1]} : vector<8x128xf32> to vector<8x32xf32>
    %351 = vector.extract_strided_slice %348 {offsets = [0, 32], sizes = [8, 32], strides = [1, 1]} : vector<8x128xf32> to vector<8x32xf32>
    %352 = vector.extract_strided_slice %349 {offsets = [0, 64], sizes = [8, 32], strides = [1, 1]} : vector<8x128xf32> to vector<8x32xf32>
    %353 = vector.extract_strided_slice %348 {offsets = [0, 96], sizes = [8, 32], strides = [1, 1]} : vector<8x128xf32> to vector<8x32xf32>
    %354 = arith.mulf %351, %333 : vector<8x32xf32>
    %355 = arith.mulf %350, %352 : vector<8x32xf32>
    %356 = arith.addf %354, %355 : vector<8x32xf32>
    %357 = math.tanh %356 : vector<8x32xf32>
    %358 = arith.mulf %353, %357 : vector<8x32xf32>
    %c1_124 = arith.constant 1 : index
    %c0_125 = arith.constant 0 : index
    %c32_126 = arith.constant 32 : index
    %359 = vector.load %arg15[%c1_124, %c0_125, %c32_126] : memref<8x8x64xf32, #tpu.memory_space<vmem>>, vector<1x8x32xf32>
    %360 = vector.shape_cast %359 : vector<1x8x32xf32> to vector<8x32xf32>
    %361 = vector.shape_cast %358 : vector<8x32xf32> to vector<1x8x32xf32>
    tpu.vector_store %arg15[%c1_124, %c0_125, %c32_126], %361 {strides = array<i32>} : memref<8x8x64xf32, #tpu.memory_space<vmem>>, vector<1x8x32xf32>,
    %c0_127 = arith.constant 0 : index
    %c0_128 = arith.constant 0 : index
    %c0_129 = arith.constant 0 : index
    %362 = vector.load %arg0[%c0_127, %c0_128, %c0_129] : memref<8x8x32xf32, #tpu.memory_space<vmem>>, vector<1x8x32xf32>
    %363 = vector.shape_cast %362 : vector<1x8x32xf32> to vector<8x32xf32>
    %364 = tpu.concatenate %363, %358 in 1 : vector<8x32xf32>, vector<8x32xf32> -> vector<8x64xf32>
    %cst_130 = arith.constant dense<0.000000e+00> : vector<8x128xf32>
    %365 = tpu.matmul %364, %1, %cst_130 {dimension_numbers = #tpu.dot_dimension_numbers<[1], [0], [0], [1], [0, 0, 1, 1], [], []>} : vector<8x64xf32>, vector<64x128xf32>, vector<8x128xf32> -> vector<8x128xf32>
    %366 = arith.addf %365, %9 : vector<8x128xf32>
    %367 = arith.negf %366 : vector<8x128xf32>
    %368 = math.exp %367 : vector<8x128xf32>
    %cst_131 = arith.constant 1.000000e+00 : f32
    %369 = vector.broadcast %cst_131 : f32 to vector<8x128xf32>
    %370 = arith.addf %369, %368 : vector<8x128xf32>
    %371 = arith.divf %369, %370 : vector<8x128xf32>
    %372 = math.tanh %366 : vector<8x128xf32>
    %373 = vector.extract_strided_slice %371 {offsets = [0, 0], sizes = [8, 32], strides = [1, 1]} : vector<8x128xf32> to vector<8x32xf32>
    %374 = vector.extract_strided_slice %371 {offsets = [0, 32], sizes = [8, 32], strides = [1, 1]} : vector<8x128xf32> to vector<8x32xf32>
    %375 = vector.extract_strided_slice %372 {offsets = [0, 64], sizes = [8, 32], strides = [1, 1]} : vector<8x128xf32> to vector<8x32xf32>
    %376 = vector.extract_strided_slice %371 {offsets = [0, 96], sizes = [8, 32], strides = [1, 1]} : vector<8x128xf32> to vector<8x32xf32>
    %377 = arith.mulf %374, %356 : vector<8x32xf32>
    %378 = arith.mulf %373, %375 : vector<8x32xf32>
    %379 = arith.addf %377, %378 : vector<8x32xf32>
    %380 = math.tanh %379 : vector<8x32xf32>
    %381 = arith.mulf %376, %380 : vector<8x32xf32>
    %c0_132 = arith.constant 0 : index
    %c0_133 = arith.constant 0 : index
    %c32_134 = arith.constant 32 : index
    %382 = vector.load %arg15[%c0_132, %c0_133, %c32_134] : memref<8x8x64xf32, #tpu.memory_space<vmem>>, vector<1x8x32xf32>
    %383 = vector.shape_cast %382 : vector<1x8x32xf32> to vector<8x32xf32>
    %384 = vector.shape_cast %381 : vector<8x32xf32> to vector<1x8x32xf32>
    tpu.vector_store %arg15[%c0_132, %c0_133, %c32_134], %384 {strides = array<i32>} : memref<8x8x64xf32, #tpu.memory_space<vmem>>, vector<1x8x32xf32>,
    %385 = arith.addf %197, %381 : vector<8x32xf32>
    %c0_135 = arith.constant 0 : index
    %c0_136 = arith.constant 0 : index
    %386 = vector.load %arg13[%c0_135, %c0_136] : memref<8x32xf32, #tpu.memory_space<vmem>>, vector<8x32xf32>
    tpu.vector_store %arg13[%c0_135, %c0_136], %385 {strides = array<i32>} : memref<8x32xf32, #tpu.memory_space<vmem>>, vector<8x32xf32>,
    %387 = arith.addf %195, %379 : vector<8x32xf32>
    %c0_137 = arith.constant 0 : index
    %c0_138 = arith.constant 0 : index
    %388 = vector.load %arg14[%c0_137, %c0_138] : memref<8x32xf32, #tpu.memory_space<vmem>>, vector<8x32xf32>
    tpu.vector_store %arg14[%c0_137, %c0_138], %387 {strides = array<i32>} : memref<8x32xf32, #tpu.memory_space<vmem>>, vector<8x32xf32>,
    %c0_139 = arith.constant 0 : index
    %c0_140 = arith.constant 0 : index
    %c0_141 = arith.constant 0 : index
    %389 = vector.load %arg15[%c0_139, %c0_140, %c0_141] : memref<8x8x64xf32, #tpu.memory_space<vmem>>, vector<1x8x64xf32>
    %390 = vector.shape_cast %389 : vector<1x8x64xf32> to vector<8x64xf32>
    %391 = tpu.concatenate %390, %16 in 1 : vector<8x64xf32>, vector<8x32xf32> -> vector<8x96xf32>
    %cst_142 = arith.constant dense<0.000000e+00> : vector<8x128xf32>
    %392 = tpu.matmul %391, %2, %cst_142 {dimension_numbers = #tpu.dot_dimension_numbers<[1], [0], [0], [1], [0, 0, 1, 1], [], []>} : vector<8x96xf32>, vector<96x128xf32>, vector<8x128xf32> -> vector<8x128xf32>
    %393 = arith.addf %392, %12 : vector<8x128xf32>
    %394 = arith.negf %393 : vector<8x128xf32>
    %395 = math.exp %394 : vector<8x128xf32>
    %cst_143 = arith.constant 1.000000e+00 : f32
    %396 = vector.broadcast %cst_143 : f32 to vector<8x128xf32>
    %397 = arith.addf %396, %395 : vector<8x128xf32>
    %398 = arith.divf %396, %397 : vector<8x128xf32>
    %399 = math.tanh %393 : vector<8x128xf32>
    %400 = vector.extract_strided_slice %398 {offsets = [0, 0], sizes = [8, 32], strides = [1, 1]} : vector<8x128xf32> to vector<8x32xf32>
    %401 = vector.extract_strided_slice %398 {offsets = [0, 32], sizes = [8, 32], strides = [1, 1]} : vector<8x128xf32> to vector<8x32xf32>
    %402 = vector.extract_strided_slice %399 {offsets = [0, 64], sizes = [8, 32], strides = [1, 1]} : vector<8x128xf32> to vector<8x32xf32>
    %403 = vector.extract_strided_slice %398 {offsets = [0, 96], sizes = [8, 32], strides = [1, 1]} : vector<8x128xf32> to vector<8x32xf32>
    %404 = arith.mulf %401, %16 : vector<8x32xf32>
    %405 = arith.mulf %400, %402 : vector<8x32xf32>
    %406 = arith.addf %404, %405 : vector<8x32xf32>
    %407 = math.tanh %406 : vector<8x32xf32>
    %408 = arith.mulf %403, %407 : vector<8x32xf32>
    %c0_144 = arith.constant 0 : index
    %c0_145 = arith.constant 0 : index
    %c0_146 = arith.constant 0 : index
    %409 = vector.load %arg11[%c0_144, %c0_145, %c0_146] : memref<8x8x32xf32, #tpu.memory_space<vmem>>, vector<1x8x32xf32>
    %410 = vector.shape_cast %409 : vector<1x8x32xf32> to vector<8x32xf32>
    %411 = vector.shape_cast %408 : vector<8x32xf32> to vector<1x8x32xf32>
    tpu.vector_store %arg11[%c0_144, %c0_145, %c0_146], %411 {strides = array<i32>} : memref<8x8x32xf32, #tpu.memory_space<vmem>>, vector<1x8x32xf32>,
    %c1_147 = arith.constant 1 : index
    %c0_148 = arith.constant 0 : index
    %c0_149 = arith.constant 0 : index
    %412 = vector.load %arg15[%c1_147, %c0_148, %c0_149] : memref<8x8x64xf32, #tpu.memory_space<vmem>>, vector<1x8x64xf32>
    %413 = vector.shape_cast %412 : vector<1x8x64xf32> to vector<8x64xf32>
    %414 = tpu.concatenate %413, %408 in 1 : vector<8x64xf32>, vector<8x32xf32> -> vector<8x96xf32>
    %cst_150 = arith.constant dense<0.000000e+00> : vector<8x128xf32>
    %415 = tpu.matmul %414, %2, %cst_150 {dimension_numbers = #tpu.dot_dimension_numbers<[1], [0], [0], [1], [0, 0, 1, 1], [], []>} : vector<8x96xf32>, vector<96x128xf32>, vector<8x128xf32> -> vector<8x128xf32>
    %416 = arith.addf %415, %12 : vector<8x128xf32>
    %417 = arith.negf %416 : vector<8x128xf32>
    %418 = math.exp %417 : vector<8x128xf32>
    %cst_151 = arith.constant 1.000000e+00 : f32
    %419 = vector.broadcast %cst_151 : f32 to vector<8x128xf32>
    %420 = arith.addf %419, %418 : vector<8x128xf32>
    %421 = arith.divf %419, %420 : vector<8x128xf32>
    %422 = math.tanh %416 : vector<8x128xf32>
    %423 = vector.extract_strided_slice %421 {offsets = [0, 0], sizes = [8, 32], strides = [1, 1]} : vector<8x128xf32> to vector<8x32xf32>
    %424 = vector.extract_strided_slice %421 {offsets = [0, 32], sizes = [8, 32], strides = [1, 1]} : vector<8x128xf32> to vector<8x32xf32>
    %425 = vector.extract_strided_slice %422 {offsets = [0, 64], sizes = [8, 32], strides = [1, 1]} : vector<8x128xf32> to vector<8x32xf32>
    %426 = vector.extract_strided_slice %421 {offsets = [0, 96], sizes = [8, 32], strides = [1, 1]} : vector<8x128xf32> to vector<8x32xf32>
    %427 = arith.mulf %424, %406 : vector<8x32xf32>
    %428 = arith.mulf %423, %425 : vector<8x32xf32>
    %429 = arith.addf %427, %428 : vector<8x32xf32>
    %430 = math.tanh %429 : vector<8x32xf32>
    %431 = arith.mulf %426, %430 : vector<8x32xf32>
    %c1_152 = arith.constant 1 : index
    %c0_153 = arith.constant 0 : index
    %c0_154 = arith.constant 0 : index
    %432 = vector.load %arg11[%c1_152, %c0_153, %c0_154] : memref<8x8x32xf32, #tpu.memory_space<vmem>>, vector<1x8x32xf32>
    %433 = vector.shape_cast %432 : vector<1x8x32xf32> to vector<8x32xf32>
    %434 = vector.shape_cast %431 : vector<8x32xf32> to vector<1x8x32xf32>
    tpu.vector_store %arg11[%c1_152, %c0_153, %c0_154], %434 {strides = array<i32>} : memref<8x8x32xf32, #tpu.memory_space<vmem>>, vector<1x8x32xf32>,
    %c2_155 = arith.constant 2 : index
    %c0_156 = arith.constant 0 : index
    %c0_157 = arith.constant 0 : index
    %435 = vector.load %arg15[%c2_155, %c0_156, %c0_157] : memref<8x8x64xf32, #tpu.memory_space<vmem>>, vector<1x8x64xf32>
    %436 = vector.shape_cast %435 : vector<1x8x64xf32> to vector<8x64xf32>
    %437 = tpu.concatenate %436, %431 in 1 : vector<8x64xf32>, vector<8x32xf32> -> vector<8x96xf32>
    %cst_158 = arith.constant dense<0.000000e+00> : vector<8x128xf32>
    %438 = tpu.matmul %437, %2, %cst_158 {dimension_numbers = #tpu.dot_dimension_numbers<[1], [0], [0], [1], [0, 0, 1, 1], [], []>} : vector<8x96xf32>, vector<96x128xf32>, vector<8x128xf32> -> vector<8x128xf32>
    %439 = arith.addf %438, %12 : vector<8x128xf32>
    %440 = arith.negf %439 : vector<8x128xf32>
    %441 = math.exp %440 : vector<8x128xf32>
    %cst_159 = arith.constant 1.000000e+00 : f32
    %442 = vector.broadcast %cst_159 : f32 to vector<8x128xf32>
    %443 = arith.addf %442, %441 : vector<8x128xf32>
    %444 = arith.divf %442, %443 : vector<8x128xf32>
    %445 = math.tanh %439 : vector<8x128xf32>
    %446 = vector.extract_strided_slice %444 {offsets = [0, 0], sizes = [8, 32], strides = [1, 1]} : vector<8x128xf32> to vector<8x32xf32>
    %447 = vector.extract_strided_slice %444 {offsets = [0, 32], sizes = [8, 32], strides = [1, 1]} : vector<8x128xf32> to vector<8x32xf32>
    %448 = vector.extract_strided_slice %445 {offsets = [0, 64], sizes = [8, 32], strides = [1, 1]} : vector<8x128xf32> to vector<8x32xf32>
    %449 = vector.extract_strided_slice %444 {offsets = [0, 96], sizes = [8, 32], strides = [1, 1]} : vector<8x128xf32> to vector<8x32xf32>
    %450 = arith.mulf %447, %429 : vector<8x32xf32>
    %451 = arith.mulf %446, %448 : vector<8x32xf32>
    %452 = arith.addf %450, %451 : vector<8x32xf32>
    %453 = math.tanh %452 : vector<8x32xf32>
    %454 = arith.mulf %449, %453 : vector<8x32xf32>
    %c2_160 = arith.constant 2 : index
    %c0_161 = arith.constant 0 : index
    %c0_162 = arith.constant 0 : index
    %455 = vector.load %arg11[%c2_160, %c0_161, %c0_162] : memref<8x8x32xf32, #tpu.memory_space<vmem>>, vector<1x8x32xf32>
    %456 = vector.shape_cast %455 : vector<1x8x32xf32> to vector<8x32xf32>
    %457 = vector.shape_cast %454 : vector<8x32xf32> to vector<1x8x32xf32>
    tpu.vector_store %arg11[%c2_160, %c0_161, %c0_162], %457 {strides = array<i32>} : memref<8x8x32xf32, #tpu.memory_space<vmem>>, vector<1x8x32xf32>,
    %c3_163 = arith.constant 3 : index
    %c0_164 = arith.constant 0 : index
    %c0_165 = arith.constant 0 : index
    %458 = vector.load %arg15[%c3_163, %c0_164, %c0_165] : memref<8x8x64xf32, #tpu.memory_space<vmem>>, vector<1x8x64xf32>
    %459 = vector.shape_cast %458 : vector<1x8x64xf32> to vector<8x64xf32>
    %460 = tpu.concatenate %459, %454 in 1 : vector<8x64xf32>, vector<8x32xf32> -> vector<8x96xf32>
    %cst_166 = arith.constant dense<0.000000e+00> : vector<8x128xf32>
    %461 = tpu.matmul %460, %2, %cst_166 {dimension_numbers = #tpu.dot_dimension_numbers<[1], [0], [0], [1], [0, 0, 1, 1], [], []>} : vector<8x96xf32>, vector<96x128xf32>, vector<8x128xf32> -> vector<8x128xf32>
    %462 = arith.addf %461, %12 : vector<8x128xf32>
    %463 = arith.negf %462 : vector<8x128xf32>
    %464 = math.exp %463 : vector<8x128xf32>
    %cst_167 = arith.constant 1.000000e+00 : f32
    %465 = vector.broadcast %cst_167 : f32 to vector<8x128xf32>
    %466 = arith.addf %465, %464 : vector<8x128xf32>
    %467 = arith.divf %465, %466 : vector<8x128xf32>
    %468 = math.tanh %462 : vector<8x128xf32>
    %469 = vector.extract_strided_slice %467 {offsets = [0, 0], sizes = [8, 32], strides = [1, 1]} : vector<8x128xf32> to vector<8x32xf32>
    %470 = vector.extract_strided_slice %467 {offsets = [0, 32], sizes = [8, 32], strides = [1, 1]} : vector<8x128xf32> to vector<8x32xf32>
    %471 = vector.extract_strided_slice %468 {offsets = [0, 64], sizes = [8, 32], strides = [1, 1]} : vector<8x128xf32> to vector<8x32xf32>
    %472 = vector.extract_strided_slice %467 {offsets = [0, 96], sizes = [8, 32], strides = [1, 1]} : vector<8x128xf32> to vector<8x32xf32>
    %473 = arith.mulf %470, %452 : vector<8x32xf32>
    %474 = arith.mulf %469, %471 : vector<8x32xf32>
    %475 = arith.addf %473, %474 : vector<8x32xf32>
    %476 = math.tanh %475 : vector<8x32xf32>
    %477 = arith.mulf %472, %476 : vector<8x32xf32>
    %c3_168 = arith.constant 3 : index
    %c0_169 = arith.constant 0 : index
    %c0_170 = arith.constant 0 : index
    %478 = vector.load %arg11[%c3_168, %c0_169, %c0_170] : memref<8x8x32xf32, #tpu.memory_space<vmem>>, vector<1x8x32xf32>
    %479 = vector.shape_cast %478 : vector<1x8x32xf32> to vector<8x32xf32>
    %480 = vector.shape_cast %477 : vector<8x32xf32> to vector<1x8x32xf32>
    tpu.vector_store %arg11[%c3_168, %c0_169, %c0_170], %480 {strides = array<i32>} : memref<8x8x32xf32, #tpu.memory_space<vmem>>, vector<1x8x32xf32>,
    %c4_171 = arith.constant 4 : index
    %c0_172 = arith.constant 0 : index
    %c0_173 = arith.constant 0 : index
    %481 = vector.load %arg15[%c4_171, %c0_172, %c0_173] : memref<8x8x64xf32, #tpu.memory_space<vmem>>, vector<1x8x64xf32>
    %482 = vector.shape_cast %481 : vector<1x8x64xf32> to vector<8x64xf32>
    %483 = tpu.concatenate %482, %477 in 1 : vector<8x64xf32>, vector<8x32xf32> -> vector<8x96xf32>
    %cst_174 = arith.constant dense<0.000000e+00> : vector<8x128xf32>
    %484 = tpu.matmul %483, %2, %cst_174 {dimension_numbers = #tpu.dot_dimension_numbers<[1], [0], [0], [1], [0, 0, 1, 1], [], []>} : vector<8x96xf32>, vector<96x128xf32>, vector<8x128xf32> -> vector<8x128xf32>
    %485 = arith.addf %484, %12 : vector<8x128xf32>
    %486 = arith.negf %485 : vector<8x128xf32>
    %487 = math.exp %486 : vector<8x128xf32>
    %cst_175 = arith.constant 1.000000e+00 : f32
    %488 = vector.broadcast %cst_175 : f32 to vector<8x128xf32>
    %489 = arith.addf %488, %487 : vector<8x128xf32>
    %490 = arith.divf %488, %489 : vector<8x128xf32>
    %491 = math.tanh %485 : vector<8x128xf32>
    %492 = vector.extract_strided_slice %490 {offsets = [0, 0], sizes = [8, 32], strides = [1, 1]} : vector<8x128xf32> to vector<8x32xf32>
    %493 = vector.extract_strided_slice %490 {offsets = [0, 32], sizes = [8, 32], strides = [1, 1]} : vector<8x128xf32> to vector<8x32xf32>
    %494 = vector.extract_strided_slice %491 {offsets = [0, 64], sizes = [8, 32], strides = [1, 1]} : vector<8x128xf32> to vector<8x32xf32>
    %495 = vector.extract_strided_slice %490 {offsets = [0, 96], sizes = [8, 32], strides = [1, 1]} : vector<8x128xf32> to vector<8x32xf32>
    %496 = arith.mulf %493, %475 : vector<8x32xf32>
    %497 = arith.mulf %492, %494 : vector<8x32xf32>
    %498 = arith.addf %496, %497 : vector<8x32xf32>
    %499 = math.tanh %498 : vector<8x32xf32>
    %500 = arith.mulf %495, %499 : vector<8x32xf32>
    %c4_176 = arith.constant 4 : index
    %c0_177 = arith.constant 0 : index
    %c0_178 = arith.constant 0 : index
    %501 = vector.load %arg11[%c4_176, %c0_177, %c0_178] : memref<8x8x32xf32, #tpu.memory_space<vmem>>, vector<1x8x32xf32>
    %502 = vector.shape_cast %501 : vector<1x8x32xf32> to vector<8x32xf32>
    %503 = vector.shape_cast %500 : vector<8x32xf32> to vector<1x8x32xf32>
    tpu.vector_store %arg11[%c4_176, %c0_177, %c0_178], %503 {strides = array<i32>} : memref<8x8x32xf32, #tpu.memory_space<vmem>>, vector<1x8x32xf32>,
    %c5_179 = arith.constant 5 : index
    %c0_180 = arith.constant 0 : index
    %c0_181 = arith.constant 0 : index
    %504 = vector.load %arg15[%c5_179, %c0_180, %c0_181] : memref<8x8x64xf32, #tpu.memory_space<vmem>>, vector<1x8x64xf32>
    %505 = vector.shape_cast %504 : vector<1x8x64xf32> to vector<8x64xf32>
    %506 = tpu.concatenate %505, %500 in 1 : vector<8x64xf32>, vector<8x32xf32> -> vector<8x96xf32>
    %cst_182 = arith.constant dense<0.000000e+00> : vector<8x128xf32>
    %507 = tpu.matmul %506, %2, %cst_182 {dimension_numbers = #tpu.dot_dimension_numbers<[1], [0], [0], [1], [0, 0, 1, 1], [], []>} : vector<8x96xf32>, vector<96x128xf32>, vector<8x128xf32> -> vector<8x128xf32>
    %508 = arith.addf %507, %12 : vector<8x128xf32>
    %509 = arith.negf %508 : vector<8x128xf32>
    %510 = math.exp %509 : vector<8x128xf32>
    %cst_183 = arith.constant 1.000000e+00 : f32
    %511 = vector.broadcast %cst_183 : f32 to vector<8x128xf32>
    %512 = arith.addf %511, %510 : vector<8x128xf32>
    %513 = arith.divf %511, %512 : vector<8x128xf32>
    %514 = math.tanh %508 : vector<8x128xf32>
    %515 = vector.extract_strided_slice %513 {offsets = [0, 0], sizes = [8, 32], strides = [1, 1]} : vector<8x128xf32> to vector<8x32xf32>
    %516 = vector.extract_strided_slice %513 {offsets = [0, 32], sizes = [8, 32], strides = [1, 1]} : vector<8x128xf32> to vector<8x32xf32>
    %517 = vector.extract_strided_slice %514 {offsets = [0, 64], sizes = [8, 32], strides = [1, 1]} : vector<8x128xf32> to vector<8x32xf32>
    %518 = vector.extract_strided_slice %513 {offsets = [0, 96], sizes = [8, 32], strides = [1, 1]} : vector<8x128xf32> to vector<8x32xf32>
    %519 = arith.mulf %516, %498 : vector<8x32xf32>
    %520 = arith.mulf %515, %517 : vector<8x32xf32>
    %521 = arith.addf %519, %520 : vector<8x32xf32>
    %522 = math.tanh %521 : vector<8x32xf32>
    %523 = arith.mulf %518, %522 : vector<8x32xf32>
    %c5_184 = arith.constant 5 : index
    %c0_185 = arith.constant 0 : index
    %c0_186 = arith.constant 0 : index
    %524 = vector.load %arg11[%c5_184, %c0_185, %c0_186] : memref<8x8x32xf32, #tpu.memory_space<vmem>>, vector<1x8x32xf32>
    %525 = vector.shape_cast %524 : vector<1x8x32xf32> to vector<8x32xf32>
    %526 = vector.shape_cast %523 : vector<8x32xf32> to vector<1x8x32xf32>
    tpu.vector_store %arg11[%c5_184, %c0_185, %c0_186], %526 {strides = array<i32>} : memref<8x8x32xf32, #tpu.memory_space<vmem>>, vector<1x8x32xf32>,
    %c6_187 = arith.constant 6 : index
    %c0_188 = arith.constant 0 : index
    %c0_189 = arith.constant 0 : index
    %527 = vector.load %arg15[%c6_187, %c0_188, %c0_189] : memref<8x8x64xf32, #tpu.memory_space<vmem>>, vector<1x8x64xf32>
    %528 = vector.shape_cast %527 : vector<1x8x64xf32> to vector<8x64xf32>
    %529 = tpu.concatenate %528, %523 in 1 : vector<8x64xf32>, vector<8x32xf32> -> vector<8x96xf32>
    %cst_190 = arith.constant dense<0.000000e+00> : vector<8x128xf32>
    %530 = tpu.matmul %529, %2, %cst_190 {dimension_numbers = #tpu.dot_dimension_numbers<[1], [0], [0], [1], [0, 0, 1, 1], [], []>} : vector<8x96xf32>, vector<96x128xf32>, vector<8x128xf32> -> vector<8x128xf32>
    %531 = arith.addf %530, %12 : vector<8x128xf32>
    %532 = arith.negf %531 : vector<8x128xf32>
    %533 = math.exp %532 : vector<8x128xf32>
    %cst_191 = arith.constant 1.000000e+00 : f32
    %534 = vector.broadcast %cst_191 : f32 to vector<8x128xf32>
    %535 = arith.addf %534, %533 : vector<8x128xf32>
    %536 = arith.divf %534, %535 : vector<8x128xf32>
    %537 = math.tanh %531 : vector<8x128xf32>
    %538 = vector.extract_strided_slice %536 {offsets = [0, 0], sizes = [8, 32], strides = [1, 1]} : vector<8x128xf32> to vector<8x32xf32>
    %539 = vector.extract_strided_slice %536 {offsets = [0, 32], sizes = [8, 32], strides = [1, 1]} : vector<8x128xf32> to vector<8x32xf32>
    %540 = vector.extract_strided_slice %537 {offsets = [0, 64], sizes = [8, 32], strides = [1, 1]} : vector<8x128xf32> to vector<8x32xf32>
    %541 = vector.extract_strided_slice %536 {offsets = [0, 96], sizes = [8, 32], strides = [1, 1]} : vector<8x128xf32> to vector<8x32xf32>
    %542 = arith.mulf %539, %521 : vector<8x32xf32>
    %543 = arith.mulf %538, %540 : vector<8x32xf32>
    %544 = arith.addf %542, %543 : vector<8x32xf32>
    %545 = math.tanh %544 : vector<8x32xf32>
    %546 = arith.mulf %541, %545 : vector<8x32xf32>
    %c6_192 = arith.constant 6 : index
    %c0_193 = arith.constant 0 : index
    %c0_194 = arith.constant 0 : index
    %547 = vector.load %arg11[%c6_192, %c0_193, %c0_194] : memref<8x8x32xf32, #tpu.memory_space<vmem>>, vector<1x8x32xf32>
    %548 = vector.shape_cast %547 : vector<1x8x32xf32> to vector<8x32xf32>
    %549 = vector.shape_cast %546 : vector<8x32xf32> to vector<1x8x32xf32>
    tpu.vector_store %arg11[%c6_192, %c0_193, %c0_194], %549 {strides = array<i32>} : memref<8x8x32xf32, #tpu.memory_space<vmem>>, vector<1x8x32xf32>,
    %c7_195 = arith.constant 7 : index
    %c0_196 = arith.constant 0 : index
    %c0_197 = arith.constant 0 : index
    %550 = vector.load %arg15[%c7_195, %c0_196, %c0_197] : memref<8x8x64xf32, #tpu.memory_space<vmem>>, vector<1x8x64xf32>
    %551 = vector.shape_cast %550 : vector<1x8x64xf32> to vector<8x64xf32>
    %552 = tpu.concatenate %551, %546 in 1 : vector<8x64xf32>, vector<8x32xf32> -> vector<8x96xf32>
    %cst_198 = arith.constant dense<0.000000e+00> : vector<8x128xf32>
    %553 = tpu.matmul %552, %2, %cst_198 {dimension_numbers = #tpu.dot_dimension_numbers<[1], [0], [0], [1], [0, 0, 1, 1], [], []>} : vector<8x96xf32>, vector<96x128xf32>, vector<8x128xf32> -> vector<8x128xf32>
    %554 = arith.addf %553, %12 : vector<8x128xf32>
    %555 = arith.negf %554 : vector<8x128xf32>
    %556 = math.exp %555 : vector<8x128xf32>
    %cst_199 = arith.constant 1.000000e+00 : f32
    %557 = vector.broadcast %cst_199 : f32 to vector<8x128xf32>
    %558 = arith.addf %557, %556 : vector<8x128xf32>
    %559 = arith.divf %557, %558 : vector<8x128xf32>
    %560 = math.tanh %554 : vector<8x128xf32>
    %561 = vector.extract_strided_slice %559 {offsets = [0, 0], sizes = [8, 32], strides = [1, 1]} : vector<8x128xf32> to vector<8x32xf32>
    %562 = vector.extract_strided_slice %559 {offsets = [0, 32], sizes = [8, 32], strides = [1, 1]} : vector<8x128xf32> to vector<8x32xf32>
    %563 = vector.extract_strided_slice %560 {offsets = [0, 64], sizes = [8, 32], strides = [1, 1]} : vector<8x128xf32> to vector<8x32xf32>
    %564 = vector.extract_strided_slice %559 {offsets = [0, 96], sizes = [8, 32], strides = [1, 1]} : vector<8x128xf32> to vector<8x32xf32>
    %565 = arith.mulf %562, %544 : vector<8x32xf32>
    %566 = arith.mulf %561, %563 : vector<8x32xf32>
    %567 = arith.addf %565, %566 : vector<8x32xf32>
    %568 = math.tanh %567 : vector<8x32xf32>
    %569 = arith.mulf %564, %568 : vector<8x32xf32>
    %c7_200 = arith.constant 7 : index
    %c0_201 = arith.constant 0 : index
    %c0_202 = arith.constant 0 : index
    %570 = vector.load %arg11[%c7_200, %c0_201, %c0_202] : memref<8x8x32xf32, #tpu.memory_space<vmem>>, vector<1x8x32xf32>
    %571 = vector.shape_cast %570 : vector<1x8x32xf32> to vector<8x32xf32>
    %572 = vector.shape_cast %569 : vector<8x32xf32> to vector<1x8x32xf32>
    tpu.vector_store %arg11[%c7_200, %c0_201, %c0_202], %572 {strides = array<i32>} : memref<8x8x32xf32, #tpu.memory_space<vmem>>, vector<1x8x32xf32>,
    %c7_203 = arith.constant 7 : index
    %c0_204 = arith.constant 0 : index
    %c0_205 = arith.constant 0 : index
    %573 = vector.load %arg15[%c7_203, %c0_204, %c0_205] : memref<8x8x64xf32, #tpu.memory_space<vmem>>, vector<1x8x64xf32>
    %574 = vector.shape_cast %573 : vector<1x8x64xf32> to vector<8x64xf32>
    %575 = tpu.concatenate %574, %16 in 1 : vector<8x64xf32>, vector<8x32xf32> -> vector<8x96xf32>
    %cst_206 = arith.constant dense<0.000000e+00> : vector<8x128xf32>
    %576 = tpu.matmul %575, %3, %cst_206 {dimension_numbers = #tpu.dot_dimension_numbers<[1], [0], [0], [1], [0, 0, 1, 1], [], []>} : vector<8x96xf32>, vector<96x128xf32>, vector<8x128xf32> -> vector<8x128xf32>
    %577 = arith.addf %576, %15 : vector<8x128xf32>
    %578 = arith.negf %577 : vector<8x128xf32>
    %579 = math.exp %578 : vector<8x128xf32>
    %cst_207 = arith.constant 1.000000e+00 : f32
    %580 = vector.broadcast %cst_207 : f32 to vector<8x128xf32>
    %581 = arith.addf %580, %579 : vector<8x128xf32>
    %582 = arith.divf %580, %581 : vector<8x128xf32>
    %583 = math.tanh %577 : vector<8x128xf32>
    %584 = vector.extract_strided_slice %582 {offsets = [0, 0], sizes = [8, 32], strides = [1, 1]} : vector<8x128xf32> to vector<8x32xf32>
    %585 = vector.extract_strided_slice %582 {offsets = [0, 32], sizes = [8, 32], strides = [1, 1]} : vector<8x128xf32> to vector<8x32xf32>
    %586 = vector.extract_strided_slice %583 {offsets = [0, 64], sizes = [8, 32], strides = [1, 1]} : vector<8x128xf32> to vector<8x32xf32>
    %587 = vector.extract_strided_slice %582 {offsets = [0, 96], sizes = [8, 32], strides = [1, 1]} : vector<8x128xf32> to vector<8x32xf32>
    %588 = arith.mulf %585, %16 : vector<8x32xf32>
    %589 = arith.mulf %584, %586 : vector<8x32xf32>
    %590 = arith.addf %588, %589 : vector<8x32xf32>
    %591 = math.tanh %590 : vector<8x32xf32>
    %592 = arith.mulf %587, %591 : vector<8x32xf32>
    %c7_208 = arith.constant 7 : index
    %c0_209 = arith.constant 0 : index
    %c0_210 = arith.constant 0 : index
    %593 = vector.load %arg11[%c7_208, %c0_209, %c0_210] : memref<8x8x32xf32, #tpu.memory_space<vmem>>, vector<1x8x32xf32>
    %594 = vector.shape_cast %593 : vector<1x8x32xf32> to vector<8x32xf32>
    %595 = arith.addf %594, %592 : vector<8x32xf32>
    %c7_211 = arith.constant 7 : index
    %c0_212 = arith.constant 0 : index
    %c0_213 = arith.constant 0 : index
    %596 = vector.load %arg11[%c7_211, %c0_212, %c0_213] : memref<8x8x32xf32, #tpu.memory_space<vmem>>, vector<1x8x32xf32>
    %597 = vector.shape_cast %596 : vector<1x8x32xf32> to vector<8x32xf32>
    %598 = vector.shape_cast %595 : vector<8x32xf32> to vector<1x8x32xf32>
    tpu.vector_store %arg11[%c7_211, %c0_212, %c0_213], %598 {strides = array<i32>} : memref<8x8x32xf32, #tpu.memory_space<vmem>>, vector<1x8x32xf32>,
    %c6_214 = arith.constant 6 : index
    %c0_215 = arith.constant 0 : index
    %c0_216 = arith.constant 0 : index
    %599 = vector.load %arg15[%c6_214, %c0_215, %c0_216] : memref<8x8x64xf32, #tpu.memory_space<vmem>>, vector<1x8x64xf32>
    %600 = vector.shape_cast %599 : vector<1x8x64xf32> to vector<8x64xf32>
    %601 = tpu.concatenate %600, %592 in 1 : vector<8x64xf32>, vector<8x32xf32> -> vector<8x96xf32>
    %cst_217 = arith.constant dense<0.000000e+00> : vector<8x128xf32>
    %602 = tpu.matmul %601, %3, %cst_217 {dimension_numbers = #tpu.dot_dimension_numbers<[1], [0], [0], [1], [0, 0, 1, 1], [], []>} : vector<8x96xf32>, vector<96x128xf32>, vector<8x128xf32> -> vector<8x128xf32>
    %603 = arith.addf %602, %15 : vector<8x128xf32>
    %604 = arith.negf %603 : vector<8x128xf32>
    %605 = math.exp %604 : vector<8x128xf32>
    %cst_218 = arith.constant 1.000000e+00 : f32
    %606 = vector.broadcast %cst_218 : f32 to vector<8x128xf32>
    %607 = arith.addf %606, %605 : vector<8x128xf32>
    %608 = arith.divf %606, %607 : vector<8x128xf32>
    %609 = math.tanh %603 : vector<8x128xf32>
    %610 = vector.extract_strided_slice %608 {offsets = [0, 0], sizes = [8, 32], strides = [1, 1]} : vector<8x128xf32> to vector<8x32xf32>
    %611 = vector.extract_strided_slice %608 {offsets = [0, 32], sizes = [8, 32], strides = [1, 1]} : vector<8x128xf32> to vector<8x32xf32>
    %612 = vector.extract_strided_slice %609 {offsets = [0, 64], sizes = [8, 32], strides = [1, 1]} : vector<8x128xf32> to vector<8x32xf32>
    %613 = vector.extract_strided_slice %608 {offsets = [0, 96], sizes = [8, 32], strides = [1, 1]} : vector<8x128xf32> to vector<8x32xf32>
    %614 = arith.mulf %611, %590 : vector<8x32xf32>
    %615 = arith.mulf %610, %612 : vector<8x32xf32>
    %616 = arith.addf %614, %615 : vector<8x32xf32>
    %617 = math.tanh %616 : vector<8x32xf32>
    %618 = arith.mulf %613, %617 : vector<8x32xf32>
    %c6_219 = arith.constant 6 : index
    %c0_220 = arith.constant 0 : index
    %c0_221 = arith.constant 0 : index
    %619 = vector.load %arg11[%c6_219, %c0_220, %c0_221] : memref<8x8x32xf32, #tpu.memory_space<vmem>>, vector<1x8x32xf32>
    %620 = vector.shape_cast %619 : vector<1x8x32xf32> to vector<8x32xf32>
    %621 = arith.addf %620, %618 : vector<8x32xf32>
    %c6_222 = arith.constant 6 : index
    %c0_223 = arith.constant 0 : index
    %c0_224 = arith.constant 0 : index
    %622 = vector.load %arg11[%c6_222, %c0_223, %c0_224] : memref<8x8x32xf32, #tpu.memory_space<vmem>>, vector<1x8x32xf32>
    %623 = vector.shape_cast %622 : vector<1x8x32xf32> to vector<8x32xf32>
    %624 = vector.shape_cast %621 : vector<8x32xf32> to vector<1x8x32xf32>
    tpu.vector_store %arg11[%c6_222, %c0_223, %c0_224], %624 {strides = array<i32>} : memref<8x8x32xf32, #tpu.memory_space<vmem>>, vector<1x8x32xf32>,
    %c5_225 = arith.constant 5 : index
    %c0_226 = arith.constant 0 : index
    %c0_227 = arith.constant 0 : index
    %625 = vector.load %arg15[%c5_225, %c0_226, %c0_227] : memref<8x8x64xf32, #tpu.memory_space<vmem>>, vector<1x8x64xf32>
    %626 = vector.shape_cast %625 : vector<1x8x64xf32> to vector<8x64xf32>
    %627 = tpu.concatenate %626, %618 in 1 : vector<8x64xf32>, vector<8x32xf32> -> vector<8x96xf32>
    %cst_228 = arith.constant dense<0.000000e+00> : vector<8x128xf32>
    %628 = tpu.matmul %627, %3, %cst_228 {dimension_numbers = #tpu.dot_dimension_numbers<[1], [0], [0], [1], [0, 0, 1, 1], [], []>} : vector<8x96xf32>, vector<96x128xf32>, vector<8x128xf32> -> vector<8x128xf32>
    %629 = arith.addf %628, %15 : vector<8x128xf32>
    %630 = arith.negf %629 : vector<8x128xf32>
    %631 = math.exp %630 : vector<8x128xf32>
    %cst_229 = arith.constant 1.000000e+00 : f32
    %632 = vector.broadcast %cst_229 : f32 to vector<8x128xf32>
    %633 = arith.addf %632, %631 : vector<8x128xf32>
    %634 = arith.divf %632, %633 : vector<8x128xf32>
    %635 = math.tanh %629 : vector<8x128xf32>
    %636 = vector.extract_strided_slice %634 {offsets = [0, 0], sizes = [8, 32], strides = [1, 1]} : vector<8x128xf32> to vector<8x32xf32>
    %637 = vector.extract_strided_slice %634 {offsets = [0, 32], sizes = [8, 32], strides = [1, 1]} : vector<8x128xf32> to vector<8x32xf32>
    %638 = vector.extract_strided_slice %635 {offsets = [0, 64], sizes = [8, 32], strides = [1, 1]} : vector<8x128xf32> to vector<8x32xf32>
    %639 = vector.extract_strided_slice %634 {offsets = [0, 96], sizes = [8, 32], strides = [1, 1]} : vector<8x128xf32> to vector<8x32xf32>
    %640 = arith.mulf %637, %616 : vector<8x32xf32>
    %641 = arith.mulf %636, %638 : vector<8x32xf32>
    %642 = arith.addf %640, %641 : vector<8x32xf32>
    %643 = math.tanh %642 : vector<8x32xf32>
    %644 = arith.mulf %639, %643 : vector<8x32xf32>
    %c5_230 = arith.constant 5 : index
    %c0_231 = arith.constant 0 : index
    %c0_232 = arith.constant 0 : index
    %645 = vector.load %arg11[%c5_230, %c0_231, %c0_232] : memref<8x8x32xf32, #tpu.memory_space<vmem>>, vector<1x8x32xf32>
    %646 = vector.shape_cast %645 : vector<1x8x32xf32> to vector<8x32xf32>
    %647 = arith.addf %646, %644 : vector<8x32xf32>
    %c5_233 = arith.constant 5 : index
    %c0_234 = arith.constant 0 : index
    %c0_235 = arith.constant 0 : index
    %648 = vector.load %arg11[%c5_233, %c0_234, %c0_235] : memref<8x8x32xf32, #tpu.memory_space<vmem>>, vector<1x8x32xf32>
    %649 = vector.shape_cast %648 : vector<1x8x32xf32> to vector<8x32xf32>
    %650 = vector.shape_cast %647 : vector<8x32xf32> to vector<1x8x32xf32>
    tpu.vector_store %arg11[%c5_233, %c0_234, %c0_235], %650 {strides = array<i32>} : memref<8x8x32xf32, #tpu.memory_space<vmem>>, vector<1x8x32xf32>,
    %c4_236 = arith.constant 4 : index
    %c0_237 = arith.constant 0 : index
    %c0_238 = arith.constant 0 : index
    %651 = vector.load %arg15[%c4_236, %c0_237, %c0_238] : memref<8x8x64xf32, #tpu.memory_space<vmem>>, vector<1x8x64xf32>
    %652 = vector.shape_cast %651 : vector<1x8x64xf32> to vector<8x64xf32>
    %653 = tpu.concatenate %652, %644 in 1 : vector<8x64xf32>, vector<8x32xf32> -> vector<8x96xf32>
    %cst_239 = arith.constant dense<0.000000e+00> : vector<8x128xf32>
    %654 = tpu.matmul %653, %3, %cst_239 {dimension_numbers = #tpu.dot_dimension_numbers<[1], [0], [0], [1], [0, 0, 1, 1], [], []>} : vector<8x96xf32>, vector<96x128xf32>, vector<8x128xf32> -> vector<8x128xf32>
    %655 = arith.addf %654, %15 : vector<8x128xf32>
    %656 = arith.negf %655 : vector<8x128xf32>
    %657 = math.exp %656 : vector<8x128xf32>
    %cst_240 = arith.constant 1.000000e+00 : f32
    %658 = vector.broadcast %cst_240 : f32 to vector<8x128xf32>
    %659 = arith.addf %658, %657 : vector<8x128xf32>
    %660 = arith.divf %658, %659 : vector<8x128xf32>
    %661 = math.tanh %655 : vector<8x128xf32>
    %662 = vector.extract_strided_slice %660 {offsets = [0, 0], sizes = [8, 32], strides = [1, 1]} : vector<8x128xf32> to vector<8x32xf32>
    %663 = vector.extract_strided_slice %660 {offsets = [0, 32], sizes = [8, 32], strides = [1, 1]} : vector<8x128xf32> to vector<8x32xf32>
    %664 = vector.extract_strided_slice %661 {offsets = [0, 64], sizes = [8, 32], strides = [1, 1]} : vector<8x128xf32> to vector<8x32xf32>
    %665 = vector.extract_strided_slice %660 {offsets = [0, 96], sizes = [8, 32], strides = [1, 1]} : vector<8x128xf32> to vector<8x32xf32>
    %666 = arith.mulf %663, %642 : vector<8x32xf32>
    %667 = arith.mulf %662, %664 : vector<8x32xf32>
    %668 = arith.addf %666, %667 : vector<8x32xf32>
    %669 = math.tanh %668 : vector<8x32xf32>
    %670 = arith.mulf %665, %669 : vector<8x32xf32>
    %c4_241 = arith.constant 4 : index
    %c0_242 = arith.constant 0 : index
    %c0_243 = arith.constant 0 : index
    %671 = vector.load %arg11[%c4_241, %c0_242, %c0_243] : memref<8x8x32xf32, #tpu.memory_space<vmem>>, vector<1x8x32xf32>
    %672 = vector.shape_cast %671 : vector<1x8x32xf32> to vector<8x32xf32>
    %673 = arith.addf %672, %670 : vector<8x32xf32>
    %c4_244 = arith.constant 4 : index
    %c0_245 = arith.constant 0 : index
    %c0_246 = arith.constant 0 : index
    %674 = vector.load %arg11[%c4_244, %c0_245, %c0_246] : memref<8x8x32xf32, #tpu.memory_space<vmem>>, vector<1x8x32xf32>
    %675 = vector.shape_cast %674 : vector<1x8x32xf32> to vector<8x32xf32>
    %676 = vector.shape_cast %673 : vector<8x32xf32> to vector<1x8x32xf32>
    tpu.vector_store %arg11[%c4_244, %c0_245, %c0_246], %676 {strides = array<i32>} : memref<8x8x32xf32, #tpu.memory_space<vmem>>, vector<1x8x32xf32>,
    %c3_247 = arith.constant 3 : index
    %c0_248 = arith.constant 0 : index
    %c0_249 = arith.constant 0 : index
    %677 = vector.load %arg15[%c3_247, %c0_248, %c0_249] : memref<8x8x64xf32, #tpu.memory_space<vmem>>, vector<1x8x64xf32>
    %678 = vector.shape_cast %677 : vector<1x8x64xf32> to vector<8x64xf32>
    %679 = tpu.concatenate %678, %670 in 1 : vector<8x64xf32>, vector<8x32xf32> -> vector<8x96xf32>
    %cst_250 = arith.constant dense<0.000000e+00> : vector<8x128xf32>
    %680 = tpu.matmul %679, %3, %cst_250 {dimension_numbers = #tpu.dot_dimension_numbers<[1], [0], [0], [1], [0, 0, 1, 1], [], []>} : vector<8x96xf32>, vector<96x128xf32>, vector<8x128xf32> -> vector<8x128xf32>
    %681 = arith.addf %680, %15 : vector<8x128xf32>
    %682 = arith.negf %681 : vector<8x128xf32>
    %683 = math.exp %682 : vector<8x128xf32>
    %cst_251 = arith.constant 1.000000e+00 : f32
    %684 = vector.broadcast %cst_251 : f32 to vector<8x128xf32>
    %685 = arith.addf %684, %683 : vector<8x128xf32>
    %686 = arith.divf %684, %685 : vector<8x128xf32>
    %687 = math.tanh %681 : vector<8x128xf32>
    %688 = vector.extract_strided_slice %686 {offsets = [0, 0], sizes = [8, 32], strides = [1, 1]} : vector<8x128xf32> to vector<8x32xf32>
    %689 = vector.extract_strided_slice %686 {offsets = [0, 32], sizes = [8, 32], strides = [1, 1]} : vector<8x128xf32> to vector<8x32xf32>
    %690 = vector.extract_strided_slice %687 {offsets = [0, 64], sizes = [8, 32], strides = [1, 1]} : vector<8x128xf32> to vector<8x32xf32>
    %691 = vector.extract_strided_slice %686 {offsets = [0, 96], sizes = [8, 32], strides = [1, 1]} : vector<8x128xf32> to vector<8x32xf32>
    %692 = arith.mulf %689, %668 : vector<8x32xf32>
    %693 = arith.mulf %688, %690 : vector<8x32xf32>
    %694 = arith.addf %692, %693 : vector<8x32xf32>
    %695 = math.tanh %694 : vector<8x32xf32>
    %696 = arith.mulf %691, %695 : vector<8x32xf32>
    %c3_252 = arith.constant 3 : index
    %c0_253 = arith.constant 0 : index
    %c0_254 = arith.constant 0 : index
    %697 = vector.load %arg11[%c3_252, %c0_253, %c0_254] : memref<8x8x32xf32, #tpu.memory_space<vmem>>, vector<1x8x32xf32>
    %698 = vector.shape_cast %697 : vector<1x8x32xf32> to vector<8x32xf32>
    %699 = arith.addf %698, %696 : vector<8x32xf32>
    %c3_255 = arith.constant 3 : index
    %c0_256 = arith.constant 0 : index
    %c0_257 = arith.constant 0 : index
    %700 = vector.load %arg11[%c3_255, %c0_256, %c0_257] : memref<8x8x32xf32, #tpu.memory_space<vmem>>, vector<1x8x32xf32>
    %701 = vector.shape_cast %700 : vector<1x8x32xf32> to vector<8x32xf32>
    %702 = vector.shape_cast %699 : vector<8x32xf32> to vector<1x8x32xf32>
    tpu.vector_store %arg11[%c3_255, %c0_256, %c0_257], %702 {strides = array<i32>} : memref<8x8x32xf32, #tpu.memory_space<vmem>>, vector<1x8x32xf32>,
    %c2_258 = arith.constant 2 : index
    %c0_259 = arith.constant 0 : index
    %c0_260 = arith.constant 0 : index
    %703 = vector.load %arg15[%c2_258, %c0_259, %c0_260] : memref<8x8x64xf32, #tpu.memory_space<vmem>>, vector<1x8x64xf32>
    %704 = vector.shape_cast %703 : vector<1x8x64xf32> to vector<8x64xf32>
    %705 = tpu.concatenate %704, %696 in 1 : vector<8x64xf32>, vector<8x32xf32> -> vector<8x96xf32>
    %cst_261 = arith.constant dense<0.000000e+00> : vector<8x128xf32>
    %706 = tpu.matmul %705, %3, %cst_261 {dimension_numbers = #tpu.dot_dimension_numbers<[1], [0], [0], [1], [0, 0, 1, 1], [], []>} : vector<8x96xf32>, vector<96x128xf32>, vector<8x128xf32> -> vector<8x128xf32>
    %707 = arith.addf %706, %15 : vector<8x128xf32>
    %708 = arith.negf %707 : vector<8x128xf32>
    %709 = math.exp %708 : vector<8x128xf32>
    %cst_262 = arith.constant 1.000000e+00 : f32
    %710 = vector.broadcast %cst_262 : f32 to vector<8x128xf32>
    %711 = arith.addf %710, %709 : vector<8x128xf32>
    %712 = arith.divf %710, %711 : vector<8x128xf32>
    %713 = math.tanh %707 : vector<8x128xf32>
    %714 = vector.extract_strided_slice %712 {offsets = [0, 0], sizes = [8, 32], strides = [1, 1]} : vector<8x128xf32> to vector<8x32xf32>
    %715 = vector.extract_strided_slice %712 {offsets = [0, 32], sizes = [8, 32], strides = [1, 1]} : vector<8x128xf32> to vector<8x32xf32>
    %716 = vector.extract_strided_slice %713 {offsets = [0, 64], sizes = [8, 32], strides = [1, 1]} : vector<8x128xf32> to vector<8x32xf32>
    %717 = vector.extract_strided_slice %712 {offsets = [0, 96], sizes = [8, 32], strides = [1, 1]} : vector<8x128xf32> to vector<8x32xf32>
    %718 = arith.mulf %715, %694 : vector<8x32xf32>
    %719 = arith.mulf %714, %716 : vector<8x32xf32>
    %720 = arith.addf %718, %719 : vector<8x32xf32>
    %721 = math.tanh %720 : vector<8x32xf32>
    %722 = arith.mulf %717, %721 : vector<8x32xf32>
    %c2_263 = arith.constant 2 : index
    %c0_264 = arith.constant 0 : index
    %c0_265 = arith.constant 0 : index
    %723 = vector.load %arg11[%c2_263, %c0_264, %c0_265] : memref<8x8x32xf32, #tpu.memory_space<vmem>>, vector<1x8x32xf32>
    %724 = vector.shape_cast %723 : vector<1x8x32xf32> to vector<8x32xf32>
    %725 = arith.addf %724, %722 : vector<8x32xf32>
    %c2_266 = arith.constant 2 : index
    %c0_267 = arith.constant 0 : index
    %c0_268 = arith.constant 0 : index
    %726 = vector.load %arg11[%c2_266, %c0_267, %c0_268] : memref<8x8x32xf32, #tpu.memory_space<vmem>>, vector<1x8x32xf32>
    %727 = vector.shape_cast %726 : vector<1x8x32xf32> to vector<8x32xf32>
    %728 = vector.shape_cast %725 : vector<8x32xf32> to vector<1x8x32xf32>
    tpu.vector_store %arg11[%c2_266, %c0_267, %c0_268], %728 {strides = array<i32>} : memref<8x8x32xf32, #tpu.memory_space<vmem>>, vector<1x8x32xf32>,
    %c1_269 = arith.constant 1 : index
    %c0_270 = arith.constant 0 : index
    %c0_271 = arith.constant 0 : index
    %729 = vector.load %arg15[%c1_269, %c0_270, %c0_271] : memref<8x8x64xf32, #tpu.memory_space<vmem>>, vector<1x8x64xf32>
    %730 = vector.shape_cast %729 : vector<1x8x64xf32> to vector<8x64xf32>
    %731 = tpu.concatenate %730, %722 in 1 : vector<8x64xf32>, vector<8x32xf32> -> vector<8x96xf32>
    %cst_272 = arith.constant dense<0.000000e+00> : vector<8x128xf32>
    %732 = tpu.matmul %731, %3, %cst_272 {dimension_numbers = #tpu.dot_dimension_numbers<[1], [0], [0], [1], [0, 0, 1, 1], [], []>} : vector<8x96xf32>, vector<96x128xf32>, vector<8x128xf32> -> vector<8x128xf32>
    %733 = arith.addf %732, %15 : vector<8x128xf32>
    %734 = arith.negf %733 : vector<8x128xf32>
    %735 = math.exp %734 : vector<8x128xf32>
    %cst_273 = arith.constant 1.000000e+00 : f32
    %736 = vector.broadcast %cst_273 : f32 to vector<8x128xf32>
    %737 = arith.addf %736, %735 : vector<8x128xf32>
    %738 = arith.divf %736, %737 : vector<8x128xf32>
    %739 = math.tanh %733 : vector<8x128xf32>
    %740 = vector.extract_strided_slice %738 {offsets = [0, 0], sizes = [8, 32], strides = [1, 1]} : vector<8x128xf32> to vector<8x32xf32>
    %741 = vector.extract_strided_slice %738 {offsets = [0, 32], sizes = [8, 32], strides = [1, 1]} : vector<8x128xf32> to vector<8x32xf32>
    %742 = vector.extract_strided_slice %739 {offsets = [0, 64], sizes = [8, 32], strides = [1, 1]} : vector<8x128xf32> to vector<8x32xf32>
    %743 = vector.extract_strided_slice %738 {offsets = [0, 96], sizes = [8, 32], strides = [1, 1]} : vector<8x128xf32> to vector<8x32xf32>
    %744 = arith.mulf %741, %720 : vector<8x32xf32>
    %745 = arith.mulf %740, %742 : vector<8x32xf32>
    %746 = arith.addf %744, %745 : vector<8x32xf32>
    %747 = math.tanh %746 : vector<8x32xf32>
    %748 = arith.mulf %743, %747 : vector<8x32xf32>
    %c1_274 = arith.constant 1 : index
    %c0_275 = arith.constant 0 : index
    %c0_276 = arith.constant 0 : index
    %749 = vector.load %arg11[%c1_274, %c0_275, %c0_276] : memref<8x8x32xf32, #tpu.memory_space<vmem>>, vector<1x8x32xf32>
    %750 = vector.shape_cast %749 : vector<1x8x32xf32> to vector<8x32xf32>
    %751 = arith.addf %750, %748 : vector<8x32xf32>
    %c1_277 = arith.constant 1 : index
    %c0_278 = arith.constant 0 : index
    %c0_279 = arith.constant 0 : index
    %752 = vector.load %arg11[%c1_277, %c0_278, %c0_279] : memref<8x8x32xf32, #tpu.memory_space<vmem>>, vector<1x8x32xf32>
    %753 = vector.shape_cast %752 : vector<1x8x32xf32> to vector<8x32xf32>
    %754 = vector.shape_cast %751 : vector<8x32xf32> to vector<1x8x32xf32>
    tpu.vector_store %arg11[%c1_277, %c0_278, %c0_279], %754 {strides = array<i32>} : memref<8x8x32xf32, #tpu.memory_space<vmem>>, vector<1x8x32xf32>,
    %c0_280 = arith.constant 0 : index
    %c0_281 = arith.constant 0 : index
    %c0_282 = arith.constant 0 : index
    %755 = vector.load %arg15[%c0_280, %c0_281, %c0_282] : memref<8x8x64xf32, #tpu.memory_space<vmem>>, vector<1x8x64xf32>
    %756 = vector.shape_cast %755 : vector<1x8x64xf32> to vector<8x64xf32>
    %757 = tpu.concatenate %756, %748 in 1 : vector<8x64xf32>, vector<8x32xf32> -> vector<8x96xf32>
    %cst_283 = arith.constant dense<0.000000e+00> : vector<8x128xf32>
    %758 = tpu.matmul %757, %3, %cst_283 {dimension_numbers = #tpu.dot_dimension_numbers<[1], [0], [0], [1], [0, 0, 1, 1], [], []>} : vector<8x96xf32>, vector<96x128xf32>, vector<8x128xf32> -> vector<8x128xf32>
    %759 = arith.addf %758, %15 : vector<8x128xf32>
    %760 = arith.negf %759 : vector<8x128xf32>
    %761 = math.exp %760 : vector<8x128xf32>
    %cst_284 = arith.constant 1.000000e+00 : f32
    %762 = vector.broadcast %cst_284 : f32 to vector<8x128xf32>
    %763 = arith.addf %762, %761 : vector<8x128xf32>
    %764 = arith.divf %762, %763 : vector<8x128xf32>
    %765 = math.tanh %759 : vector<8x128xf32>
    %766 = vector.extract_strided_slice %764 {offsets = [0, 0], sizes = [8, 32], strides = [1, 1]} : vector<8x128xf32> to vector<8x32xf32>
    %767 = vector.extract_strided_slice %764 {offsets = [0, 32], sizes = [8, 32], strides = [1, 1]} : vector<8x128xf32> to vector<8x32xf32>
    %768 = vector.extract_strided_slice %765 {offsets = [0, 64], sizes = [8, 32], strides = [1, 1]} : vector<8x128xf32> to vector<8x32xf32>
    %769 = vector.extract_strided_slice %764 {offsets = [0, 96], sizes = [8, 32], strides = [1, 1]} : vector<8x128xf32> to vector<8x32xf32>
    %770 = arith.mulf %767, %746 : vector<8x32xf32>
    %771 = arith.mulf %766, %768 : vector<8x32xf32>
    %772 = arith.addf %770, %771 : vector<8x32xf32>
    %773 = math.tanh %772 : vector<8x32xf32>
    %774 = arith.mulf %769, %773 : vector<8x32xf32>
    %c0_285 = arith.constant 0 : index
    %c0_286 = arith.constant 0 : index
    %c0_287 = arith.constant 0 : index
    %775 = vector.load %arg11[%c0_285, %c0_286, %c0_287] : memref<8x8x32xf32, #tpu.memory_space<vmem>>, vector<1x8x32xf32>
    %776 = vector.shape_cast %775 : vector<1x8x32xf32> to vector<8x32xf32>
    %777 = arith.addf %776, %774 : vector<8x32xf32>
    %c0_288 = arith.constant 0 : index
    %c0_289 = arith.constant 0 : index
    %c0_290 = arith.constant 0 : index
    %778 = vector.load %arg11[%c0_288, %c0_289, %c0_290] : memref<8x8x32xf32, #tpu.memory_space<vmem>>, vector<1x8x32xf32>
    %779 = vector.shape_cast %778 : vector<1x8x32xf32> to vector<8x32xf32>
    %780 = vector.shape_cast %777 : vector<8x32xf32> to vector<1x8x32xf32>
    tpu.vector_store %arg11[%c0_288, %c0_289, %c0_290], %780 {strides = array<i32>} : memref<8x8x32xf32, #tpu.memory_space<vmem>>, vector<1x8x32xf32>,
    %c0_291 = arith.constant 0 : index
    %c0_292 = arith.constant 0 : index
    %c0_293 = arith.constant 0 : index
    %781 = vector.load %arg11[%c0_291, %c0_292, %c0_293] : memref<8x8x32xf32, #tpu.memory_space<vmem>>, vector<8x8x32xf32>
    %782 = vector.shape_cast %781 : vector<8x8x32xf32> to vector<64x32xf32>
    %c0_294 = arith.constant 0 : index
    %c0_295 = arith.constant 0 : index
    %783 = vector.load %arg9[%c0_294, %c0_295] : memref<32x32xf32, #tpu.memory_space<vmem>>, vector<32x32xf32>
    %cst_296 = arith.constant dense<0.000000e+00> : vector<64x32xf32>
    %784 = tpu.matmul %782, %783, %cst_296 {dimension_numbers = #tpu.dot_dimension_numbers<[1], [0], [0], [1], [0, 0, 1, 1], [], []>} : vector<64x32xf32>, vector<32x32xf32>, vector<64x32xf32> -> vector<64x32xf32>
    %c0_297 = arith.constant 0 : index
    %c0_298 = arith.constant 0 : index
    %785 = vector.load %arg10[%c0_297, %c0_298] : memref<1x32xf32, #tpu.memory_space<vmem>>, vector<1x32xf32>
    %786 = vector.broadcast %785 : vector<1x32xf32> to vector<64x32xf32>
    %787 = arith.addf %784, %786 : vector<64x32xf32>
    %788 = vector.shape_cast %787 : vector<64x32xf32> to vector<8x8x32xf32>
    %c0_299 = arith.constant 0 : index
    %c0_300 = arith.constant 0 : index
    %c0_301 = arith.constant 0 : index
    %789 = vector.load %arg12[%c0_299, %c0_300, %c0_301] : memref<8x8x32xf32, #tpu.memory_space<vmem>>, vector<8x8x32xf32>
    tpu.vector_store %arg12[%c0_299, %c0_300, %c0_301], %788 {strides = array<i32>} : memref<8x8x32xf32, #tpu.memory_space<vmem>>, vector<8x8x32xf32>,
    return
  }
}

module attributes {stable_mosaic.version = 11 : i64} {
  func.func @_decoder_kernel(%arg0: memref<8x32xf32, #tpu.memory_space<vmem>>, %arg1: memref<8x32xf32, #tpu.memory_space<vmem>>, %arg2: memref<128x32xf32, #tpu.memory_space<vmem>>, %arg3: memref<64x128xf32, #tpu.memory_space<vmem>>, %arg4: memref<1x128xf32, #tpu.memory_space<vmem>>, %arg5: memref<8x8x32xf32, #tpu.memory_space<vmem>>, %arg6: memref<8x8x32xf32, #tpu.memory_space<vmem>>, %arg7: memref<64x32xf32, #tpu.memory_space<vmem>>, %arg8: memref<1x32xf32, #tpu.memory_space<vmem>>, %arg9: memref<32x128xf32, #tpu.memory_space<vmem>>, %arg10: memref<1x128xf32, #tpu.memory_space<vmem>>, %arg11: memref<5x8x128xf32, #tpu.memory_space<vmem>>) attributes {dimension_semantics = [], scalar_prefetch = 0 : i64, scratch_operands = 0 : i64, tpu.core_type = #tpu.core_type<tc>} {
    %c0 = arith.constant 0 : index
    %c0_0 = arith.constant 0 : index
    %0 = vector.load %arg2[%c0, %c0_0] : memref<128x32xf32, #tpu.memory_space<vmem>>, vector<128x32xf32>
    %c0_1 = arith.constant 0 : index
    %c0_2 = arith.constant 0 : index
    %1 = vector.load %arg3[%c0_1, %c0_2] : memref<64x128xf32, #tpu.memory_space<vmem>>, vector<64x128xf32>
    %c0_3 = arith.constant 0 : index
    %c0_4 = arith.constant 0 : index
    %2 = vector.load %arg4[%c0_3, %c0_4] : memref<1x128xf32, #tpu.memory_space<vmem>>, vector<1x128xf32>
    %3 = vector.shape_cast %2 : vector<1x128xf32> to vector<1x128xf32>
    %4 = vector.broadcast %3 : vector<1x128xf32> to vector<8x128xf32>
    %c0_5 = arith.constant 0 : index
    %c0_6 = arith.constant 0 : index
    %5 = vector.load %arg7[%c0_5, %c0_6] : memref<64x32xf32, #tpu.memory_space<vmem>>, vector<64x32xf32>
    %c0_7 = arith.constant 0 : index
    %c0_8 = arith.constant 0 : index
    %6 = vector.load %arg8[%c0_7, %c0_8] : memref<1x32xf32, #tpu.memory_space<vmem>>, vector<1x32xf32>
    %7 = vector.shape_cast %6 : vector<1x32xf32> to vector<1x32xf32>
    %8 = vector.broadcast %7 : vector<1x32xf32> to vector<8x32xf32>
    %c0_9 = arith.constant 0 : index
    %c0_10 = arith.constant 0 : index
    %9 = vector.load %arg9[%c0_9, %c0_10] : memref<32x128xf32, #tpu.memory_space<vmem>>, vector<32x128xf32>
    %c0_11 = arith.constant 0 : index
    %c0_12 = arith.constant 0 : index
    %10 = vector.load %arg10[%c0_11, %c0_12] : memref<1x128xf32, #tpu.memory_space<vmem>>, vector<1x128xf32>
    %11 = vector.shape_cast %10 : vector<1x128xf32> to vector<1x128xf32>
    %12 = vector.broadcast %11 : vector<1x128xf32> to vector<8x128xf32>
    %13 = tpu.iota {dimensions = array<i32: 1>} : vector<8x128xi32>
    %c20_i32 = arith.constant 20 : i32
    %14 = vector.broadcast %c20_i32 : i32 to vector<8x128xi32>
    %15 = arith.cmpi slt, %13, %14 : vector<8x128xi32>
    %c0_13 = arith.constant 0 : index
    %c0_14 = arith.constant 0 : index
    %16 = vector.load %arg0[%c0_13, %c0_14] : memref<8x32xf32, #tpu.memory_space<vmem>>, vector<8x32xf32>
    %c0_15 = arith.constant 0 : index
    %c0_16 = arith.constant 0 : index
    %17 = vector.load %arg1[%c0_15, %c0_16] : memref<8x32xf32, #tpu.memory_space<vmem>>, vector<8x32xf32>
    %18 = vector.extract_strided_slice %0 {offsets = [0, 0], sizes = [1, 32], strides = [1, 1]} : vector<128x32xf32> to vector<1x32xf32>
    %19 = vector.shape_cast %18 : vector<1x32xf32> to vector<1x32xf32>
    %20 = vector.broadcast %19 : vector<1x32xf32> to vector<8x32xf32>
    %21 = tpu.concatenate %20, %16 in 1 : vector<8x32xf32>, vector<8x32xf32> -> vector<8x64xf32>
    %cst = arith.constant dense<0.000000e+00> : vector<8x128xf32>
    %22 = tpu.matmul %21, %1, %cst {dimension_numbers = #tpu.dot_dimension_numbers<[1], [0], [0], [1], [0, 0, 1, 1], [], []>} : vector<8x64xf32>, vector<64x128xf32>, vector<8x128xf32> -> vector<8x128xf32>
    %23 = arith.addf %22, %4 : vector<8x128xf32>
    %24 = arith.negf %23 : vector<8x128xf32>
    %25 = math.exp %24 : vector<8x128xf32>
    %cst_17 = arith.constant 1.000000e+00 : f32
    %26 = vector.broadcast %cst_17 : f32 to vector<8x128xf32>
    %27 = arith.addf %26, %25 : vector<8x128xf32>
    %28 = arith.divf %26, %27 : vector<8x128xf32>
    %29 = math.tanh %23 : vector<8x128xf32>
    %30 = vector.extract_strided_slice %28 {offsets = [0, 0], sizes = [8, 32], strides = [1, 1]} : vector<8x128xf32> to vector<8x32xf32>
    %31 = vector.extract_strided_slice %28 {offsets = [0, 32], sizes = [8, 32], strides = [1, 1]} : vector<8x128xf32> to vector<8x32xf32>
    %32 = vector.extract_strided_slice %29 {offsets = [0, 64], sizes = [8, 32], strides = [1, 1]} : vector<8x128xf32> to vector<8x32xf32>
    %33 = vector.extract_strided_slice %28 {offsets = [0, 96], sizes = [8, 32], strides = [1, 1]} : vector<8x128xf32> to vector<8x32xf32>
    %34 = arith.mulf %31, %17 : vector<8x32xf32>
    %35 = arith.mulf %30, %32 : vector<8x32xf32>
    %36 = arith.addf %34, %35 : vector<8x32xf32>
    %37 = math.tanh %36 : vector<8x32xf32>
    %38 = arith.mulf %33, %37 : vector<8x32xf32>
    %c0_18 = arith.constant 0 : index
    %c0_19 = arith.constant 0 : index
    %c0_20 = arith.constant 0 : index
    %39 = vector.load %arg5[%c0_18, %c0_19, %c0_20] : memref<8x8x32xf32, #tpu.memory_space<vmem>>, vector<1x8x32xf32>
    %40 = vector.shape_cast %39 : vector<1x8x32xf32> to vector<8x32xf32>
    %41 = arith.mulf %38, %40 : vector<8x32xf32>
    %cst_21 = arith.constant dense<0.000000e+00> : vector<8xf32>
    %42 = vector.multi_reduction <add>, %41, %cst_21 [1] : vector<8x32xf32> to vector<8xf32>
    %43 = vector.shape_cast %42 : vector<8xf32> to vector<8x1xf32>
    %c1 = arith.constant 1 : index
    %c0_22 = arith.constant 0 : index
    %c0_23 = arith.constant 0 : index
    %44 = vector.load %arg5[%c1, %c0_22, %c0_23] : memref<8x8x32xf32, #tpu.memory_space<vmem>>, vector<1x8x32xf32>
    %45 = vector.shape_cast %44 : vector<1x8x32xf32> to vector<8x32xf32>
    %46 = arith.mulf %38, %45 : vector<8x32xf32>
    %cst_24 = arith.constant dense<0.000000e+00> : vector<8xf32>
    %47 = vector.multi_reduction <add>, %46, %cst_24 [1] : vector<8x32xf32> to vector<8xf32>
    %48 = vector.shape_cast %47 : vector<8xf32> to vector<8x1xf32>
    %c2 = arith.constant 2 : index
    %c0_25 = arith.constant 0 : index
    %c0_26 = arith.constant 0 : index
    %49 = vector.load %arg5[%c2, %c0_25, %c0_26] : memref<8x8x32xf32, #tpu.memory_space<vmem>>, vector<1x8x32xf32>
    %50 = vector.shape_cast %49 : vector<1x8x32xf32> to vector<8x32xf32>
    %51 = arith.mulf %38, %50 : vector<8x32xf32>
    %cst_27 = arith.constant dense<0.000000e+00> : vector<8xf32>
    %52 = vector.multi_reduction <add>, %51, %cst_27 [1] : vector<8x32xf32> to vector<8xf32>
    %53 = vector.shape_cast %52 : vector<8xf32> to vector<8x1xf32>
    %c3 = arith.constant 3 : index
    %c0_28 = arith.constant 0 : index
    %c0_29 = arith.constant 0 : index
    %54 = vector.load %arg5[%c3, %c0_28, %c0_29] : memref<8x8x32xf32, #tpu.memory_space<vmem>>, vector<1x8x32xf32>
    %55 = vector.shape_cast %54 : vector<1x8x32xf32> to vector<8x32xf32>
    %56 = arith.mulf %38, %55 : vector<8x32xf32>
    %cst_30 = arith.constant dense<0.000000e+00> : vector<8xf32>
    %57 = vector.multi_reduction <add>, %56, %cst_30 [1] : vector<8x32xf32> to vector<8xf32>
    %58 = vector.shape_cast %57 : vector<8xf32> to vector<8x1xf32>
    %c4 = arith.constant 4 : index
    %c0_31 = arith.constant 0 : index
    %c0_32 = arith.constant 0 : index
    %59 = vector.load %arg5[%c4, %c0_31, %c0_32] : memref<8x8x32xf32, #tpu.memory_space<vmem>>, vector<1x8x32xf32>
    %60 = vector.shape_cast %59 : vector<1x8x32xf32> to vector<8x32xf32>
    %61 = arith.mulf %38, %60 : vector<8x32xf32>
    %cst_33 = arith.constant dense<0.000000e+00> : vector<8xf32>
    %62 = vector.multi_reduction <add>, %61, %cst_33 [1] : vector<8x32xf32> to vector<8xf32>
    %63 = vector.shape_cast %62 : vector<8xf32> to vector<8x1xf32>
    %c5 = arith.constant 5 : index
    %c0_34 = arith.constant 0 : index
    %c0_35 = arith.constant 0 : index
    %64 = vector.load %arg5[%c5, %c0_34, %c0_35] : memref<8x8x32xf32, #tpu.memory_space<vmem>>, vector<1x8x32xf32>
    %65 = vector.shape_cast %64 : vector<1x8x32xf32> to vector<8x32xf32>
    %66 = arith.mulf %38, %65 : vector<8x32xf32>
    %cst_36 = arith.constant dense<0.000000e+00> : vector<8xf32>
    %67 = vector.multi_reduction <add>, %66, %cst_36 [1] : vector<8x32xf32> to vector<8xf32>
    %68 = vector.shape_cast %67 : vector<8xf32> to vector<8x1xf32>
    %c6 = arith.constant 6 : index
    %c0_37 = arith.constant 0 : index
    %c0_38 = arith.constant 0 : index
    %69 = vector.load %arg5[%c6, %c0_37, %c0_38] : memref<8x8x32xf32, #tpu.memory_space<vmem>>, vector<1x8x32xf32>
    %70 = vector.shape_cast %69 : vector<1x8x32xf32> to vector<8x32xf32>
    %71 = arith.mulf %38, %70 : vector<8x32xf32>
    %cst_39 = arith.constant dense<0.000000e+00> : vector<8xf32>
    %72 = vector.multi_reduction <add>, %71, %cst_39 [1] : vector<8x32xf32> to vector<8xf32>
    %73 = vector.shape_cast %72 : vector<8xf32> to vector<8x1xf32>
    %c7 = arith.constant 7 : index
    %c0_40 = arith.constant 0 : index
    %c0_41 = arith.constant 0 : index
    %74 = vector.load %arg5[%c7, %c0_40, %c0_41] : memref<8x8x32xf32, #tpu.memory_space<vmem>>, vector<1x8x32xf32>
    %75 = vector.shape_cast %74 : vector<1x8x32xf32> to vector<8x32xf32>
    %76 = arith.mulf %38, %75 : vector<8x32xf32>
    %cst_42 = arith.constant dense<0.000000e+00> : vector<8xf32>
    %77 = vector.multi_reduction <add>, %76, %cst_42 [1] : vector<8x32xf32> to vector<8xf32>
    %78 = vector.shape_cast %77 : vector<8xf32> to vector<8x1xf32>
    %79 = tpu.concatenate %43, %48, %53, %58, %63, %68, %73, %78 in 1 : vector<8x1xf32>, vector<8x1xf32>, vector<8x1xf32>, vector<8x1xf32>, vector<8x1xf32>, vector<8x1xf32>, vector<8x1xf32>, vector<8x1xf32> -> vector<8x8xf32>
    %cst_43 = arith.constant dense<0xFF800000> : vector<8xf32>
    %80 = vector.multi_reduction <maximumf>, %79, %cst_43 [1] : vector<8x8xf32> to vector<8xf32>
    %81 = vector.shape_cast %80 : vector<8xf32> to vector<8x1xf32>
    %82 = vector.broadcast %81 : vector<8x1xf32> to vector<8x8xf32>
    %83 = arith.subf %79, %82 : vector<8x8xf32>
    %84 = math.exp %83 : vector<8x8xf32>
    %cst_44 = arith.constant dense<0.000000e+00> : vector<8xf32>
    %85 = vector.multi_reduction <add>, %84, %cst_44 [1] : vector<8x8xf32> to vector<8xf32>
    %86 = vector.shape_cast %85 : vector<8xf32> to vector<8x1xf32>
    %87 = tpu.reciprocal %86 {approx = true} : vector<8x1xf32> -> vector<8x1xf32>
    %88 = vector.broadcast %87 : vector<8x1xf32> to vector<8x8xf32>
    %89 = arith.mulf %84, %88 : vector<8x8xf32>
    %90 = vector.extract_strided_slice %89 {offsets = [0, 0], sizes = [8, 1], strides = [1, 1]} : vector<8x8xf32> to vector<8x1xf32>
    %c0_45 = arith.constant 0 : index
    %c0_46 = arith.constant 0 : index
    %c0_47 = arith.constant 0 : index
    %91 = vector.load %arg6[%c0_45, %c0_46, %c0_47] : memref<8x8x32xf32, #tpu.memory_space<vmem>>, vector<1x8x32xf32>
    %92 = vector.shape_cast %91 : vector<1x8x32xf32> to vector<8x32xf32>
    %93 = vector.broadcast %90 : vector<8x1xf32> to vector<8x32xf32>
    %94 = arith.mulf %93, %92 : vector<8x32xf32>
    %95 = vector.extract_strided_slice %89 {offsets = [0, 1], sizes = [8, 1], strides = [1, 1]} : vector<8x8xf32> to vector<8x1xf32>
    %c1_48 = arith.constant 1 : index
    %c0_49 = arith.constant 0 : index
    %c0_50 = arith.constant 0 : index
    %96 = vector.load %arg6[%c1_48, %c0_49, %c0_50] : memref<8x8x32xf32, #tpu.memory_space<vmem>>, vector<1x8x32xf32>
    %97 = vector.shape_cast %96 : vector<1x8x32xf32> to vector<8x32xf32>
    %98 = vector.broadcast %95 : vector<8x1xf32> to vector<8x32xf32>
    %99 = arith.mulf %98, %97 : vector<8x32xf32>
    %100 = arith.addf %94, %99 : vector<8x32xf32>
    %101 = vector.extract_strided_slice %89 {offsets = [0, 2], sizes = [8, 1], strides = [1, 1]} : vector<8x8xf32> to vector<8x1xf32>
    %c2_51 = arith.constant 2 : index
    %c0_52 = arith.constant 0 : index
    %c0_53 = arith.constant 0 : index
    %102 = vector.load %arg6[%c2_51, %c0_52, %c0_53] : memref<8x8x32xf32, #tpu.memory_space<vmem>>, vector<1x8x32xf32>
    %103 = vector.shape_cast %102 : vector<1x8x32xf32> to vector<8x32xf32>
    %104 = vector.broadcast %101 : vector<8x1xf32> to vector<8x32xf32>
    %105 = arith.mulf %104, %103 : vector<8x32xf32>
    %106 = arith.addf %100, %105 : vector<8x32xf32>
    %107 = vector.extract_strided_slice %89 {offsets = [0, 3], sizes = [8, 1], strides = [1, 1]} : vector<8x8xf32> to vector<8x1xf32>
    %c3_54 = arith.constant 3 : index
    %c0_55 = arith.constant 0 : index
    %c0_56 = arith.constant 0 : index
    %108 = vector.load %arg6[%c3_54, %c0_55, %c0_56] : memref<8x8x32xf32, #tpu.memory_space<vmem>>, vector<1x8x32xf32>
    %109 = vector.shape_cast %108 : vector<1x8x32xf32> to vector<8x32xf32>
    %110 = vector.broadcast %107 : vector<8x1xf32> to vector<8x32xf32>
    %111 = arith.mulf %110, %109 : vector<8x32xf32>
    %112 = arith.addf %106, %111 : vector<8x32xf32>
    %113 = vector.extract_strided_slice %89 {offsets = [0, 4], sizes = [8, 1], strides = [1, 1]} : vector<8x8xf32> to vector<8x1xf32>
    %c4_57 = arith.constant 4 : index
    %c0_58 = arith.constant 0 : index
    %c0_59 = arith.constant 0 : index
    %114 = vector.load %arg6[%c4_57, %c0_58, %c0_59] : memref<8x8x32xf32, #tpu.memory_space<vmem>>, vector<1x8x32xf32>
    %115 = vector.shape_cast %114 : vector<1x8x32xf32> to vector<8x32xf32>
    %116 = vector.broadcast %113 : vector<8x1xf32> to vector<8x32xf32>
    %117 = arith.mulf %116, %115 : vector<8x32xf32>
    %118 = arith.addf %112, %117 : vector<8x32xf32>
    %119 = vector.extract_strided_slice %89 {offsets = [0, 5], sizes = [8, 1], strides = [1, 1]} : vector<8x8xf32> to vector<8x1xf32>
    %c5_60 = arith.constant 5 : index
    %c0_61 = arith.constant 0 : index
    %c0_62 = arith.constant 0 : index
    %120 = vector.load %arg6[%c5_60, %c0_61, %c0_62] : memref<8x8x32xf32, #tpu.memory_space<vmem>>, vector<1x8x32xf32>
    %121 = vector.shape_cast %120 : vector<1x8x32xf32> to vector<8x32xf32>
    %122 = vector.broadcast %119 : vector<8x1xf32> to vector<8x32xf32>
    %123 = arith.mulf %122, %121 : vector<8x32xf32>
    %124 = arith.addf %118, %123 : vector<8x32xf32>
    %125 = vector.extract_strided_slice %89 {offsets = [0, 6], sizes = [8, 1], strides = [1, 1]} : vector<8x8xf32> to vector<8x1xf32>
    %c6_63 = arith.constant 6 : index
    %c0_64 = arith.constant 0 : index
    %c0_65 = arith.constant 0 : index
    %126 = vector.load %arg6[%c6_63, %c0_64, %c0_65] : memref<8x8x32xf32, #tpu.memory_space<vmem>>, vector<1x8x32xf32>
    %127 = vector.shape_cast %126 : vector<1x8x32xf32> to vector<8x32xf32>
    %128 = vector.broadcast %125 : vector<8x1xf32> to vector<8x32xf32>
    %129 = arith.mulf %128, %127 : vector<8x32xf32>
    %130 = arith.addf %124, %129 : vector<8x32xf32>
    %131 = vector.extract_strided_slice %89 {offsets = [0, 7], sizes = [8, 1], strides = [1, 1]} : vector<8x8xf32> to vector<8x1xf32>
    %c7_66 = arith.constant 7 : index
    %c0_67 = arith.constant 0 : index
    %c0_68 = arith.constant 0 : index
    %132 = vector.load %arg6[%c7_66, %c0_67, %c0_68] : memref<8x8x32xf32, #tpu.memory_space<vmem>>, vector<1x8x32xf32>
    %133 = vector.shape_cast %132 : vector<1x8x32xf32> to vector<8x32xf32>
    %134 = vector.broadcast %131 : vector<8x1xf32> to vector<8x32xf32>
    %135 = arith.mulf %134, %133 : vector<8x32xf32>
    %136 = arith.addf %130, %135 : vector<8x32xf32>
    %137 = tpu.concatenate %136, %38 in 1 : vector<8x32xf32>, vector<8x32xf32> -> vector<8x64xf32>
    %cst_69 = arith.constant dense<0.000000e+00> : vector<8x32xf32>
    %138 = tpu.matmul %137, %5, %cst_69 {dimension_numbers = #tpu.dot_dimension_numbers<[1], [0], [0], [1], [0, 0, 1, 1], [], []>} : vector<8x64xf32>, vector<64x32xf32>, vector<8x32xf32> -> vector<8x32xf32>
    %139 = arith.addf %138, %8 : vector<8x32xf32>
    %140 = math.tanh %139 : vector<8x32xf32>
    %cst_70 = arith.constant dense<0.000000e+00> : vector<8x128xf32>
    %141 = tpu.matmul %140, %9, %cst_70 {dimension_numbers = #tpu.dot_dimension_numbers<[1], [0], [0], [1], [0, 0, 1, 1], [], []>} : vector<8x32xf32>, vector<32x128xf32>, vector<8x128xf32> -> vector<8x128xf32>
    %142 = arith.addf %141, %12 : vector<8x128xf32>
    %c0_71 = arith.constant 0 : index
    %c0_72 = arith.constant 0 : index
    %c0_73 = arith.constant 0 : index
    %143 = vector.load %arg11[%c0_71, %c0_72, %c0_73] : memref<5x8x128xf32, #tpu.memory_space<vmem>>, vector<1x8x128xf32>
    %144 = vector.shape_cast %143 : vector<1x8x128xf32> to vector<8x128xf32>
    %145 = vector.shape_cast %142 : vector<8x128xf32> to vector<1x8x128xf32>
    tpu.vector_store %arg11[%c0_71, %c0_72, %c0_73], %145 {strides = array<i32>} : memref<5x8x128xf32, #tpu.memory_space<vmem>>, vector<1x8x128xf32>,
    %cst_74 = arith.constant 0xFF800000 : f32
    %146 = vector.broadcast %cst_74 : f32 to vector<8x128xf32>
    %147 = arith.select %15, %142, %146 : vector<8x128xi1>, vector<8x128xf32>
    %cst_75 = arith.constant dense<0xFF800000> : vector<8xf32>
    %148 = vector.multi_reduction <maximumf>, %147, %cst_75 [1] : vector<8x128xf32> to vector<8xf32>
    %149 = vector.shape_cast %148 : vector<8xf32> to vector<8x1xf32>
    %150 = vector.broadcast %149 : vector<8x1xf32> to vector<8x128xf32>
    %151 = arith.cmpf oeq, %147, %150 : vector<8x128xf32>
    %c128_i32 = arith.constant 128 : i32
    %152 = vector.broadcast %c128_i32 : i32 to vector<8x128xi32>
    %153 = arith.select %151, %13, %152 : vector<8x128xi1>, vector<8x128xi32>
    %cst_76 = arith.constant dense<2147483647> : vector<8xi32>
    %154 = vector.multi_reduction <minsi>, %153, %cst_76 [1] : vector<8x128xi32> to vector<8xi32>
    %155 = vector.shape_cast %154 : vector<8xi32> to vector<8x1xi32>
    %156 = vector.broadcast %155 : vector<8x1xi32> to vector<8x128xi32>
    %157 = arith.cmpi eq, %13, %156 : vector<8x128xi32>
    %158 = arith.extui %157 : vector<8x128xi1> to vector<8x128xi32>
    %159 = arith.sitofp %158 : vector<8x128xi32> to vector<8x128xf32>
    %cst_77 = arith.constant dense<0.000000e+00> : vector<8x32xf32>
    %160 = tpu.matmul %159, %0, %cst_77 {dimension_numbers = #tpu.dot_dimension_numbers<[1], [0], [0], [1], [0, 0, 1, 1], [], []>} : vector<8x128xf32>, vector<128x32xf32>, vector<8x32xf32> -> vector<8x32xf32>
    %161 = tpu.concatenate %160, %140 in 1 : vector<8x32xf32>, vector<8x32xf32> -> vector<8x64xf32>
    %cst_78 = arith.constant dense<0.000000e+00> : vector<8x128xf32>
    %162 = tpu.matmul %161, %1, %cst_78 {dimension_numbers = #tpu.dot_dimension_numbers<[1], [0], [0], [1], [0, 0, 1, 1], [], []>} : vector<8x64xf32>, vector<64x128xf32>, vector<8x128xf32> -> vector<8x128xf32>
    %163 = arith.addf %162, %4 : vector<8x128xf32>
    %164 = arith.negf %163 : vector<8x128xf32>
    %165 = math.exp %164 : vector<8x128xf32>
    %cst_79 = arith.constant 1.000000e+00 : f32
    %166 = vector.broadcast %cst_79 : f32 to vector<8x128xf32>
    %167 = arith.addf %166, %165 : vector<8x128xf32>
    %168 = arith.divf %166, %167 : vector<8x128xf32>
    %169 = math.tanh %163 : vector<8x128xf32>
    %170 = vector.extract_strided_slice %168 {offsets = [0, 0], sizes = [8, 32], strides = [1, 1]} : vector<8x128xf32> to vector<8x32xf32>
    %171 = vector.extract_strided_slice %168 {offsets = [0, 32], sizes = [8, 32], strides = [1, 1]} : vector<8x128xf32> to vector<8x32xf32>
    %172 = vector.extract_strided_slice %169 {offsets = [0, 64], sizes = [8, 32], strides = [1, 1]} : vector<8x128xf32> to vector<8x32xf32>
    %173 = vector.extract_strided_slice %168 {offsets = [0, 96], sizes = [8, 32], strides = [1, 1]} : vector<8x128xf32> to vector<8x32xf32>
    %174 = arith.mulf %171, %36 : vector<8x32xf32>
    %175 = arith.mulf %170, %172 : vector<8x32xf32>
    %176 = arith.addf %174, %175 : vector<8x32xf32>
    %177 = math.tanh %176 : vector<8x32xf32>
    %178 = arith.mulf %173, %177 : vector<8x32xf32>
    %c0_80 = arith.constant 0 : index
    %c0_81 = arith.constant 0 : index
    %c0_82 = arith.constant 0 : index
    %179 = vector.load %arg5[%c0_80, %c0_81, %c0_82] : memref<8x8x32xf32, #tpu.memory_space<vmem>>, vector<1x8x32xf32>
    %180 = vector.shape_cast %179 : vector<1x8x32xf32> to vector<8x32xf32>
    %181 = arith.mulf %178, %180 : vector<8x32xf32>
    %cst_83 = arith.constant dense<0.000000e+00> : vector<8xf32>
    %182 = vector.multi_reduction <add>, %181, %cst_83 [1] : vector<8x32xf32> to vector<8xf32>
    %183 = vector.shape_cast %182 : vector<8xf32> to vector<8x1xf32>
    %c1_84 = arith.constant 1 : index
    %c0_85 = arith.constant 0 : index
    %c0_86 = arith.constant 0 : index
    %184 = vector.load %arg5[%c1_84, %c0_85, %c0_86] : memref<8x8x32xf32, #tpu.memory_space<vmem>>, vector<1x8x32xf32>
    %185 = vector.shape_cast %184 : vector<1x8x32xf32> to vector<8x32xf32>
    %186 = arith.mulf %178, %185 : vector<8x32xf32>
    %cst_87 = arith.constant dense<0.000000e+00> : vector<8xf32>
    %187 = vector.multi_reduction <add>, %186, %cst_87 [1] : vector<8x32xf32> to vector<8xf32>
    %188 = vector.shape_cast %187 : vector<8xf32> to vector<8x1xf32>
    %c2_88 = arith.constant 2 : index
    %c0_89 = arith.constant 0 : index
    %c0_90 = arith.constant 0 : index
    %189 = vector.load %arg5[%c2_88, %c0_89, %c0_90] : memref<8x8x32xf32, #tpu.memory_space<vmem>>, vector<1x8x32xf32>
    %190 = vector.shape_cast %189 : vector<1x8x32xf32> to vector<8x32xf32>
    %191 = arith.mulf %178, %190 : vector<8x32xf32>
    %cst_91 = arith.constant dense<0.000000e+00> : vector<8xf32>
    %192 = vector.multi_reduction <add>, %191, %cst_91 [1] : vector<8x32xf32> to vector<8xf32>
    %193 = vector.shape_cast %192 : vector<8xf32> to vector<8x1xf32>
    %c3_92 = arith.constant 3 : index
    %c0_93 = arith.constant 0 : index
    %c0_94 = arith.constant 0 : index
    %194 = vector.load %arg5[%c3_92, %c0_93, %c0_94] : memref<8x8x32xf32, #tpu.memory_space<vmem>>, vector<1x8x32xf32>
    %195 = vector.shape_cast %194 : vector<1x8x32xf32> to vector<8x32xf32>
    %196 = arith.mulf %178, %195 : vector<8x32xf32>
    %cst_95 = arith.constant dense<0.000000e+00> : vector<8xf32>
    %197 = vector.multi_reduction <add>, %196, %cst_95 [1] : vector<8x32xf32> to vector<8xf32>
    %198 = vector.shape_cast %197 : vector<8xf32> to vector<8x1xf32>
    %c4_96 = arith.constant 4 : index
    %c0_97 = arith.constant 0 : index
    %c0_98 = arith.constant 0 : index
    %199 = vector.load %arg5[%c4_96, %c0_97, %c0_98] : memref<8x8x32xf32, #tpu.memory_space<vmem>>, vector<1x8x32xf32>
    %200 = vector.shape_cast %199 : vector<1x8x32xf32> to vector<8x32xf32>
    %201 = arith.mulf %178, %200 : vector<8x32xf32>
    %cst_99 = arith.constant dense<0.000000e+00> : vector<8xf32>
    %202 = vector.multi_reduction <add>, %201, %cst_99 [1] : vector<8x32xf32> to vector<8xf32>
    %203 = vector.shape_cast %202 : vector<8xf32> to vector<8x1xf32>
    %c5_100 = arith.constant 5 : index
    %c0_101 = arith.constant 0 : index
    %c0_102 = arith.constant 0 : index
    %204 = vector.load %arg5[%c5_100, %c0_101, %c0_102] : memref<8x8x32xf32, #tpu.memory_space<vmem>>, vector<1x8x32xf32>
    %205 = vector.shape_cast %204 : vector<1x8x32xf32> to vector<8x32xf32>
    %206 = arith.mulf %178, %205 : vector<8x32xf32>
    %cst_103 = arith.constant dense<0.000000e+00> : vector<8xf32>
    %207 = vector.multi_reduction <add>, %206, %cst_103 [1] : vector<8x32xf32> to vector<8xf32>
    %208 = vector.shape_cast %207 : vector<8xf32> to vector<8x1xf32>
    %c6_104 = arith.constant 6 : index
    %c0_105 = arith.constant 0 : index
    %c0_106 = arith.constant 0 : index
    %209 = vector.load %arg5[%c6_104, %c0_105, %c0_106] : memref<8x8x32xf32, #tpu.memory_space<vmem>>, vector<1x8x32xf32>
    %210 = vector.shape_cast %209 : vector<1x8x32xf32> to vector<8x32xf32>
    %211 = arith.mulf %178, %210 : vector<8x32xf32>
    %cst_107 = arith.constant dense<0.000000e+00> : vector<8xf32>
    %212 = vector.multi_reduction <add>, %211, %cst_107 [1] : vector<8x32xf32> to vector<8xf32>
    %213 = vector.shape_cast %212 : vector<8xf32> to vector<8x1xf32>
    %c7_108 = arith.constant 7 : index
    %c0_109 = arith.constant 0 : index
    %c0_110 = arith.constant 0 : index
    %214 = vector.load %arg5[%c7_108, %c0_109, %c0_110] : memref<8x8x32xf32, #tpu.memory_space<vmem>>, vector<1x8x32xf32>
    %215 = vector.shape_cast %214 : vector<1x8x32xf32> to vector<8x32xf32>
    %216 = arith.mulf %178, %215 : vector<8x32xf32>
    %cst_111 = arith.constant dense<0.000000e+00> : vector<8xf32>
    %217 = vector.multi_reduction <add>, %216, %cst_111 [1] : vector<8x32xf32> to vector<8xf32>
    %218 = vector.shape_cast %217 : vector<8xf32> to vector<8x1xf32>
    %219 = tpu.concatenate %183, %188, %193, %198, %203, %208, %213, %218 in 1 : vector<8x1xf32>, vector<8x1xf32>, vector<8x1xf32>, vector<8x1xf32>, vector<8x1xf32>, vector<8x1xf32>, vector<8x1xf32>, vector<8x1xf32> -> vector<8x8xf32>
    %cst_112 = arith.constant dense<0xFF800000> : vector<8xf32>
    %220 = vector.multi_reduction <maximumf>, %219, %cst_112 [1] : vector<8x8xf32> to vector<8xf32>
    %221 = vector.shape_cast %220 : vector<8xf32> to vector<8x1xf32>
    %222 = vector.broadcast %221 : vector<8x1xf32> to vector<8x8xf32>
    %223 = arith.subf %219, %222 : vector<8x8xf32>
    %224 = math.exp %223 : vector<8x8xf32>
    %cst_113 = arith.constant dense<0.000000e+00> : vector<8xf32>
    %225 = vector.multi_reduction <add>, %224, %cst_113 [1] : vector<8x8xf32> to vector<8xf32>
    %226 = vector.shape_cast %225 : vector<8xf32> to vector<8x1xf32>
    %227 = tpu.reciprocal %226 {approx = true} : vector<8x1xf32> -> vector<8x1xf32>
    %228 = vector.broadcast %227 : vector<8x1xf32> to vector<8x8xf32>
    %229 = arith.mulf %224, %228 : vector<8x8xf32>
    %230 = vector.extract_strided_slice %229 {offsets = [0, 0], sizes = [8, 1], strides = [1, 1]} : vector<8x8xf32> to vector<8x1xf32>
    %c0_114 = arith.constant 0 : index
    %c0_115 = arith.constant 0 : index
    %c0_116 = arith.constant 0 : index
    %231 = vector.load %arg6[%c0_114, %c0_115, %c0_116] : memref<8x8x32xf32, #tpu.memory_space<vmem>>, vector<1x8x32xf32>
    %232 = vector.shape_cast %231 : vector<1x8x32xf32> to vector<8x32xf32>
    %233 = vector.broadcast %230 : vector<8x1xf32> to vector<8x32xf32>
    %234 = arith.mulf %233, %232 : vector<8x32xf32>
    %235 = vector.extract_strided_slice %229 {offsets = [0, 1], sizes = [8, 1], strides = [1, 1]} : vector<8x8xf32> to vector<8x1xf32>
    %c1_117 = arith.constant 1 : index
    %c0_118 = arith.constant 0 : index
    %c0_119 = arith.constant 0 : index
    %236 = vector.load %arg6[%c1_117, %c0_118, %c0_119] : memref<8x8x32xf32, #tpu.memory_space<vmem>>, vector<1x8x32xf32>
    %237 = vector.shape_cast %236 : vector<1x8x32xf32> to vector<8x32xf32>
    %238 = vector.broadcast %235 : vector<8x1xf32> to vector<8x32xf32>
    %239 = arith.mulf %238, %237 : vector<8x32xf32>
    %240 = arith.addf %234, %239 : vector<8x32xf32>
    %241 = vector.extract_strided_slice %229 {offsets = [0, 2], sizes = [8, 1], strides = [1, 1]} : vector<8x8xf32> to vector<8x1xf32>
    %c2_120 = arith.constant 2 : index
    %c0_121 = arith.constant 0 : index
    %c0_122 = arith.constant 0 : index
    %242 = vector.load %arg6[%c2_120, %c0_121, %c0_122] : memref<8x8x32xf32, #tpu.memory_space<vmem>>, vector<1x8x32xf32>
    %243 = vector.shape_cast %242 : vector<1x8x32xf32> to vector<8x32xf32>
    %244 = vector.broadcast %241 : vector<8x1xf32> to vector<8x32xf32>
    %245 = arith.mulf %244, %243 : vector<8x32xf32>
    %246 = arith.addf %240, %245 : vector<8x32xf32>
    %247 = vector.extract_strided_slice %229 {offsets = [0, 3], sizes = [8, 1], strides = [1, 1]} : vector<8x8xf32> to vector<8x1xf32>
    %c3_123 = arith.constant 3 : index
    %c0_124 = arith.constant 0 : index
    %c0_125 = arith.constant 0 : index
    %248 = vector.load %arg6[%c3_123, %c0_124, %c0_125] : memref<8x8x32xf32, #tpu.memory_space<vmem>>, vector<1x8x32xf32>
    %249 = vector.shape_cast %248 : vector<1x8x32xf32> to vector<8x32xf32>
    %250 = vector.broadcast %247 : vector<8x1xf32> to vector<8x32xf32>
    %251 = arith.mulf %250, %249 : vector<8x32xf32>
    %252 = arith.addf %246, %251 : vector<8x32xf32>
    %253 = vector.extract_strided_slice %229 {offsets = [0, 4], sizes = [8, 1], strides = [1, 1]} : vector<8x8xf32> to vector<8x1xf32>
    %c4_126 = arith.constant 4 : index
    %c0_127 = arith.constant 0 : index
    %c0_128 = arith.constant 0 : index
    %254 = vector.load %arg6[%c4_126, %c0_127, %c0_128] : memref<8x8x32xf32, #tpu.memory_space<vmem>>, vector<1x8x32xf32>
    %255 = vector.shape_cast %254 : vector<1x8x32xf32> to vector<8x32xf32>
    %256 = vector.broadcast %253 : vector<8x1xf32> to vector<8x32xf32>
    %257 = arith.mulf %256, %255 : vector<8x32xf32>
    %258 = arith.addf %252, %257 : vector<8x32xf32>
    %259 = vector.extract_strided_slice %229 {offsets = [0, 5], sizes = [8, 1], strides = [1, 1]} : vector<8x8xf32> to vector<8x1xf32>
    %c5_129 = arith.constant 5 : index
    %c0_130 = arith.constant 0 : index
    %c0_131 = arith.constant 0 : index
    %260 = vector.load %arg6[%c5_129, %c0_130, %c0_131] : memref<8x8x32xf32, #tpu.memory_space<vmem>>, vector<1x8x32xf32>
    %261 = vector.shape_cast %260 : vector<1x8x32xf32> to vector<8x32xf32>
    %262 = vector.broadcast %259 : vector<8x1xf32> to vector<8x32xf32>
    %263 = arith.mulf %262, %261 : vector<8x32xf32>
    %264 = arith.addf %258, %263 : vector<8x32xf32>
    %265 = vector.extract_strided_slice %229 {offsets = [0, 6], sizes = [8, 1], strides = [1, 1]} : vector<8x8xf32> to vector<8x1xf32>
    %c6_132 = arith.constant 6 : index
    %c0_133 = arith.constant 0 : index
    %c0_134 = arith.constant 0 : index
    %266 = vector.load %arg6[%c6_132, %c0_133, %c0_134] : memref<8x8x32xf32, #tpu.memory_space<vmem>>, vector<1x8x32xf32>
    %267 = vector.shape_cast %266 : vector<1x8x32xf32> to vector<8x32xf32>
    %268 = vector.broadcast %265 : vector<8x1xf32> to vector<8x32xf32>
    %269 = arith.mulf %268, %267 : vector<8x32xf32>
    %270 = arith.addf %264, %269 : vector<8x32xf32>
    %271 = vector.extract_strided_slice %229 {offsets = [0, 7], sizes = [8, 1], strides = [1, 1]} : vector<8x8xf32> to vector<8x1xf32>
    %c7_135 = arith.constant 7 : index
    %c0_136 = arith.constant 0 : index
    %c0_137 = arith.constant 0 : index
    %272 = vector.load %arg6[%c7_135, %c0_136, %c0_137] : memref<8x8x32xf32, #tpu.memory_space<vmem>>, vector<1x8x32xf32>
    %273 = vector.shape_cast %272 : vector<1x8x32xf32> to vector<8x32xf32>
    %274 = vector.broadcast %271 : vector<8x1xf32> to vector<8x32xf32>
    %275 = arith.mulf %274, %273 : vector<8x32xf32>
    %276 = arith.addf %270, %275 : vector<8x32xf32>
    %277 = tpu.concatenate %276, %178 in 1 : vector<8x32xf32>, vector<8x32xf32> -> vector<8x64xf32>
    %cst_138 = arith.constant dense<0.000000e+00> : vector<8x32xf32>
    %278 = tpu.matmul %277, %5, %cst_138 {dimension_numbers = #tpu.dot_dimension_numbers<[1], [0], [0], [1], [0, 0, 1, 1], [], []>} : vector<8x64xf32>, vector<64x32xf32>, vector<8x32xf32> -> vector<8x32xf32>
    %279 = arith.addf %278, %8 : vector<8x32xf32>
    %280 = math.tanh %279 : vector<8x32xf32>
    %cst_139 = arith.constant dense<0.000000e+00> : vector<8x128xf32>
    %281 = tpu.matmul %280, %9, %cst_139 {dimension_numbers = #tpu.dot_dimension_numbers<[1], [0], [0], [1], [0, 0, 1, 1], [], []>} : vector<8x32xf32>, vector<32x128xf32>, vector<8x128xf32> -> vector<8x128xf32>
    %282 = arith.addf %281, %12 : vector<8x128xf32>
    %c1_140 = arith.constant 1 : index
    %c0_141 = arith.constant 0 : index
    %c0_142 = arith.constant 0 : index
    %283 = vector.load %arg11[%c1_140, %c0_141, %c0_142] : memref<5x8x128xf32, #tpu.memory_space<vmem>>, vector<1x8x128xf32>
    %284 = vector.shape_cast %283 : vector<1x8x128xf32> to vector<8x128xf32>
    %285 = vector.shape_cast %282 : vector<8x128xf32> to vector<1x8x128xf32>
    tpu.vector_store %arg11[%c1_140, %c0_141, %c0_142], %285 {strides = array<i32>} : memref<5x8x128xf32, #tpu.memory_space<vmem>>, vector<1x8x128xf32>,
    %cst_143 = arith.constant 0xFF800000 : f32
    %286 = vector.broadcast %cst_143 : f32 to vector<8x128xf32>
    %287 = arith.select %15, %282, %286 : vector<8x128xi1>, vector<8x128xf32>
    %cst_144 = arith.constant dense<0xFF800000> : vector<8xf32>
    %288 = vector.multi_reduction <maximumf>, %287, %cst_144 [1] : vector<8x128xf32> to vector<8xf32>
    %289 = vector.shape_cast %288 : vector<8xf32> to vector<8x1xf32>
    %290 = vector.broadcast %289 : vector<8x1xf32> to vector<8x128xf32>
    %291 = arith.cmpf oeq, %287, %290 : vector<8x128xf32>
    %c128_i32_145 = arith.constant 128 : i32
    %292 = vector.broadcast %c128_i32_145 : i32 to vector<8x128xi32>
    %293 = arith.select %291, %13, %292 : vector<8x128xi1>, vector<8x128xi32>
    %cst_146 = arith.constant dense<2147483647> : vector<8xi32>
    %294 = vector.multi_reduction <minsi>, %293, %cst_146 [1] : vector<8x128xi32> to vector<8xi32>
    %295 = vector.shape_cast %294 : vector<8xi32> to vector<8x1xi32>
    %296 = vector.broadcast %295 : vector<8x1xi32> to vector<8x128xi32>
    %297 = arith.cmpi eq, %13, %296 : vector<8x128xi32>
    %298 = arith.extui %297 : vector<8x128xi1> to vector<8x128xi32>
    %299 = arith.sitofp %298 : vector<8x128xi32> to vector<8x128xf32>
    %cst_147 = arith.constant dense<0.000000e+00> : vector<8x32xf32>
    %300 = tpu.matmul %299, %0, %cst_147 {dimension_numbers = #tpu.dot_dimension_numbers<[1], [0], [0], [1], [0, 0, 1, 1], [], []>} : vector<8x128xf32>, vector<128x32xf32>, vector<8x32xf32> -> vector<8x32xf32>
    %301 = tpu.concatenate %300, %280 in 1 : vector<8x32xf32>, vector<8x32xf32> -> vector<8x64xf32>
    %cst_148 = arith.constant dense<0.000000e+00> : vector<8x128xf32>
    %302 = tpu.matmul %301, %1, %cst_148 {dimension_numbers = #tpu.dot_dimension_numbers<[1], [0], [0], [1], [0, 0, 1, 1], [], []>} : vector<8x64xf32>, vector<64x128xf32>, vector<8x128xf32> -> vector<8x128xf32>
    %303 = arith.addf %302, %4 : vector<8x128xf32>
    %304 = arith.negf %303 : vector<8x128xf32>
    %305 = math.exp %304 : vector<8x128xf32>
    %cst_149 = arith.constant 1.000000e+00 : f32
    %306 = vector.broadcast %cst_149 : f32 to vector<8x128xf32>
    %307 = arith.addf %306, %305 : vector<8x128xf32>
    %308 = arith.divf %306, %307 : vector<8x128xf32>
    %309 = math.tanh %303 : vector<8x128xf32>
    %310 = vector.extract_strided_slice %308 {offsets = [0, 0], sizes = [8, 32], strides = [1, 1]} : vector<8x128xf32> to vector<8x32xf32>
    %311 = vector.extract_strided_slice %308 {offsets = [0, 32], sizes = [8, 32], strides = [1, 1]} : vector<8x128xf32> to vector<8x32xf32>
    %312 = vector.extract_strided_slice %309 {offsets = [0, 64], sizes = [8, 32], strides = [1, 1]} : vector<8x128xf32> to vector<8x32xf32>
    %313 = vector.extract_strided_slice %308 {offsets = [0, 96], sizes = [8, 32], strides = [1, 1]} : vector<8x128xf32> to vector<8x32xf32>
    %314 = arith.mulf %311, %176 : vector<8x32xf32>
    %315 = arith.mulf %310, %312 : vector<8x32xf32>
    %316 = arith.addf %314, %315 : vector<8x32xf32>
    %317 = math.tanh %316 : vector<8x32xf32>
    %318 = arith.mulf %313, %317 : vector<8x32xf32>
    %c0_150 = arith.constant 0 : index
    %c0_151 = arith.constant 0 : index
    %c0_152 = arith.constant 0 : index
    %319 = vector.load %arg5[%c0_150, %c0_151, %c0_152] : memref<8x8x32xf32, #tpu.memory_space<vmem>>, vector<1x8x32xf32>
    %320 = vector.shape_cast %319 : vector<1x8x32xf32> to vector<8x32xf32>
    %321 = arith.mulf %318, %320 : vector<8x32xf32>
    %cst_153 = arith.constant dense<0.000000e+00> : vector<8xf32>
    %322 = vector.multi_reduction <add>, %321, %cst_153 [1] : vector<8x32xf32> to vector<8xf32>
    %323 = vector.shape_cast %322 : vector<8xf32> to vector<8x1xf32>
    %c1_154 = arith.constant 1 : index
    %c0_155 = arith.constant 0 : index
    %c0_156 = arith.constant 0 : index
    %324 = vector.load %arg5[%c1_154, %c0_155, %c0_156] : memref<8x8x32xf32, #tpu.memory_space<vmem>>, vector<1x8x32xf32>
    %325 = vector.shape_cast %324 : vector<1x8x32xf32> to vector<8x32xf32>
    %326 = arith.mulf %318, %325 : vector<8x32xf32>
    %cst_157 = arith.constant dense<0.000000e+00> : vector<8xf32>
    %327 = vector.multi_reduction <add>, %326, %cst_157 [1] : vector<8x32xf32> to vector<8xf32>
    %328 = vector.shape_cast %327 : vector<8xf32> to vector<8x1xf32>
    %c2_158 = arith.constant 2 : index
    %c0_159 = arith.constant 0 : index
    %c0_160 = arith.constant 0 : index
    %329 = vector.load %arg5[%c2_158, %c0_159, %c0_160] : memref<8x8x32xf32, #tpu.memory_space<vmem>>, vector<1x8x32xf32>
    %330 = vector.shape_cast %329 : vector<1x8x32xf32> to vector<8x32xf32>
    %331 = arith.mulf %318, %330 : vector<8x32xf32>
    %cst_161 = arith.constant dense<0.000000e+00> : vector<8xf32>
    %332 = vector.multi_reduction <add>, %331, %cst_161 [1] : vector<8x32xf32> to vector<8xf32>
    %333 = vector.shape_cast %332 : vector<8xf32> to vector<8x1xf32>
    %c3_162 = arith.constant 3 : index
    %c0_163 = arith.constant 0 : index
    %c0_164 = arith.constant 0 : index
    %334 = vector.load %arg5[%c3_162, %c0_163, %c0_164] : memref<8x8x32xf32, #tpu.memory_space<vmem>>, vector<1x8x32xf32>
    %335 = vector.shape_cast %334 : vector<1x8x32xf32> to vector<8x32xf32>
    %336 = arith.mulf %318, %335 : vector<8x32xf32>
    %cst_165 = arith.constant dense<0.000000e+00> : vector<8xf32>
    %337 = vector.multi_reduction <add>, %336, %cst_165 [1] : vector<8x32xf32> to vector<8xf32>
    %338 = vector.shape_cast %337 : vector<8xf32> to vector<8x1xf32>
    %c4_166 = arith.constant 4 : index
    %c0_167 = arith.constant 0 : index
    %c0_168 = arith.constant 0 : index
    %339 = vector.load %arg5[%c4_166, %c0_167, %c0_168] : memref<8x8x32xf32, #tpu.memory_space<vmem>>, vector<1x8x32xf32>
    %340 = vector.shape_cast %339 : vector<1x8x32xf32> to vector<8x32xf32>
    %341 = arith.mulf %318, %340 : vector<8x32xf32>
    %cst_169 = arith.constant dense<0.000000e+00> : vector<8xf32>
    %342 = vector.multi_reduction <add>, %341, %cst_169 [1] : vector<8x32xf32> to vector<8xf32>
    %343 = vector.shape_cast %342 : vector<8xf32> to vector<8x1xf32>
    %c5_170 = arith.constant 5 : index
    %c0_171 = arith.constant 0 : index
    %c0_172 = arith.constant 0 : index
    %344 = vector.load %arg5[%c5_170, %c0_171, %c0_172] : memref<8x8x32xf32, #tpu.memory_space<vmem>>, vector<1x8x32xf32>
    %345 = vector.shape_cast %344 : vector<1x8x32xf32> to vector<8x32xf32>
    %346 = arith.mulf %318, %345 : vector<8x32xf32>
    %cst_173 = arith.constant dense<0.000000e+00> : vector<8xf32>
    %347 = vector.multi_reduction <add>, %346, %cst_173 [1] : vector<8x32xf32> to vector<8xf32>
    %348 = vector.shape_cast %347 : vector<8xf32> to vector<8x1xf32>
    %c6_174 = arith.constant 6 : index
    %c0_175 = arith.constant 0 : index
    %c0_176 = arith.constant 0 : index
    %349 = vector.load %arg5[%c6_174, %c0_175, %c0_176] : memref<8x8x32xf32, #tpu.memory_space<vmem>>, vector<1x8x32xf32>
    %350 = vector.shape_cast %349 : vector<1x8x32xf32> to vector<8x32xf32>
    %351 = arith.mulf %318, %350 : vector<8x32xf32>
    %cst_177 = arith.constant dense<0.000000e+00> : vector<8xf32>
    %352 = vector.multi_reduction <add>, %351, %cst_177 [1] : vector<8x32xf32> to vector<8xf32>
    %353 = vector.shape_cast %352 : vector<8xf32> to vector<8x1xf32>
    %c7_178 = arith.constant 7 : index
    %c0_179 = arith.constant 0 : index
    %c0_180 = arith.constant 0 : index
    %354 = vector.load %arg5[%c7_178, %c0_179, %c0_180] : memref<8x8x32xf32, #tpu.memory_space<vmem>>, vector<1x8x32xf32>
    %355 = vector.shape_cast %354 : vector<1x8x32xf32> to vector<8x32xf32>
    %356 = arith.mulf %318, %355 : vector<8x32xf32>
    %cst_181 = arith.constant dense<0.000000e+00> : vector<8xf32>
    %357 = vector.multi_reduction <add>, %356, %cst_181 [1] : vector<8x32xf32> to vector<8xf32>
    %358 = vector.shape_cast %357 : vector<8xf32> to vector<8x1xf32>
    %359 = tpu.concatenate %323, %328, %333, %338, %343, %348, %353, %358 in 1 : vector<8x1xf32>, vector<8x1xf32>, vector<8x1xf32>, vector<8x1xf32>, vector<8x1xf32>, vector<8x1xf32>, vector<8x1xf32>, vector<8x1xf32> -> vector<8x8xf32>
    %cst_182 = arith.constant dense<0xFF800000> : vector<8xf32>
    %360 = vector.multi_reduction <maximumf>, %359, %cst_182 [1] : vector<8x8xf32> to vector<8xf32>
    %361 = vector.shape_cast %360 : vector<8xf32> to vector<8x1xf32>
    %362 = vector.broadcast %361 : vector<8x1xf32> to vector<8x8xf32>
    %363 = arith.subf %359, %362 : vector<8x8xf32>
    %364 = math.exp %363 : vector<8x8xf32>
    %cst_183 = arith.constant dense<0.000000e+00> : vector<8xf32>
    %365 = vector.multi_reduction <add>, %364, %cst_183 [1] : vector<8x8xf32> to vector<8xf32>
    %366 = vector.shape_cast %365 : vector<8xf32> to vector<8x1xf32>
    %367 = tpu.reciprocal %366 {approx = true} : vector<8x1xf32> -> vector<8x1xf32>
    %368 = vector.broadcast %367 : vector<8x1xf32> to vector<8x8xf32>
    %369 = arith.mulf %364, %368 : vector<8x8xf32>
    %370 = vector.extract_strided_slice %369 {offsets = [0, 0], sizes = [8, 1], strides = [1, 1]} : vector<8x8xf32> to vector<8x1xf32>
    %c0_184 = arith.constant 0 : index
    %c0_185 = arith.constant 0 : index
    %c0_186 = arith.constant 0 : index
    %371 = vector.load %arg6[%c0_184, %c0_185, %c0_186] : memref<8x8x32xf32, #tpu.memory_space<vmem>>, vector<1x8x32xf32>
    %372 = vector.shape_cast %371 : vector<1x8x32xf32> to vector<8x32xf32>
    %373 = vector.broadcast %370 : vector<8x1xf32> to vector<8x32xf32>
    %374 = arith.mulf %373, %372 : vector<8x32xf32>
    %375 = vector.extract_strided_slice %369 {offsets = [0, 1], sizes = [8, 1], strides = [1, 1]} : vector<8x8xf32> to vector<8x1xf32>
    %c1_187 = arith.constant 1 : index
    %c0_188 = arith.constant 0 : index
    %c0_189 = arith.constant 0 : index
    %376 = vector.load %arg6[%c1_187, %c0_188, %c0_189] : memref<8x8x32xf32, #tpu.memory_space<vmem>>, vector<1x8x32xf32>
    %377 = vector.shape_cast %376 : vector<1x8x32xf32> to vector<8x32xf32>
    %378 = vector.broadcast %375 : vector<8x1xf32> to vector<8x32xf32>
    %379 = arith.mulf %378, %377 : vector<8x32xf32>
    %380 = arith.addf %374, %379 : vector<8x32xf32>
    %381 = vector.extract_strided_slice %369 {offsets = [0, 2], sizes = [8, 1], strides = [1, 1]} : vector<8x8xf32> to vector<8x1xf32>
    %c2_190 = arith.constant 2 : index
    %c0_191 = arith.constant 0 : index
    %c0_192 = arith.constant 0 : index
    %382 = vector.load %arg6[%c2_190, %c0_191, %c0_192] : memref<8x8x32xf32, #tpu.memory_space<vmem>>, vector<1x8x32xf32>
    %383 = vector.shape_cast %382 : vector<1x8x32xf32> to vector<8x32xf32>
    %384 = vector.broadcast %381 : vector<8x1xf32> to vector<8x32xf32>
    %385 = arith.mulf %384, %383 : vector<8x32xf32>
    %386 = arith.addf %380, %385 : vector<8x32xf32>
    %387 = vector.extract_strided_slice %369 {offsets = [0, 3], sizes = [8, 1], strides = [1, 1]} : vector<8x8xf32> to vector<8x1xf32>
    %c3_193 = arith.constant 3 : index
    %c0_194 = arith.constant 0 : index
    %c0_195 = arith.constant 0 : index
    %388 = vector.load %arg6[%c3_193, %c0_194, %c0_195] : memref<8x8x32xf32, #tpu.memory_space<vmem>>, vector<1x8x32xf32>
    %389 = vector.shape_cast %388 : vector<1x8x32xf32> to vector<8x32xf32>
    %390 = vector.broadcast %387 : vector<8x1xf32> to vector<8x32xf32>
    %391 = arith.mulf %390, %389 : vector<8x32xf32>
    %392 = arith.addf %386, %391 : vector<8x32xf32>
    %393 = vector.extract_strided_slice %369 {offsets = [0, 4], sizes = [8, 1], strides = [1, 1]} : vector<8x8xf32> to vector<8x1xf32>
    %c4_196 = arith.constant 4 : index
    %c0_197 = arith.constant 0 : index
    %c0_198 = arith.constant 0 : index
    %394 = vector.load %arg6[%c4_196, %c0_197, %c0_198] : memref<8x8x32xf32, #tpu.memory_space<vmem>>, vector<1x8x32xf32>
    %395 = vector.shape_cast %394 : vector<1x8x32xf32> to vector<8x32xf32>
    %396 = vector.broadcast %393 : vector<8x1xf32> to vector<8x32xf32>
    %397 = arith.mulf %396, %395 : vector<8x32xf32>
    %398 = arith.addf %392, %397 : vector<8x32xf32>
    %399 = vector.extract_strided_slice %369 {offsets = [0, 5], sizes = [8, 1], strides = [1, 1]} : vector<8x8xf32> to vector<8x1xf32>
    %c5_199 = arith.constant 5 : index
    %c0_200 = arith.constant 0 : index
    %c0_201 = arith.constant 0 : index
    %400 = vector.load %arg6[%c5_199, %c0_200, %c0_201] : memref<8x8x32xf32, #tpu.memory_space<vmem>>, vector<1x8x32xf32>
    %401 = vector.shape_cast %400 : vector<1x8x32xf32> to vector<8x32xf32>
    %402 = vector.broadcast %399 : vector<8x1xf32> to vector<8x32xf32>
    %403 = arith.mulf %402, %401 : vector<8x32xf32>
    %404 = arith.addf %398, %403 : vector<8x32xf32>
    %405 = vector.extract_strided_slice %369 {offsets = [0, 6], sizes = [8, 1], strides = [1, 1]} : vector<8x8xf32> to vector<8x1xf32>
    %c6_202 = arith.constant 6 : index
    %c0_203 = arith.constant 0 : index
    %c0_204 = arith.constant 0 : index
    %406 = vector.load %arg6[%c6_202, %c0_203, %c0_204] : memref<8x8x32xf32, #tpu.memory_space<vmem>>, vector<1x8x32xf32>
    %407 = vector.shape_cast %406 : vector<1x8x32xf32> to vector<8x32xf32>
    %408 = vector.broadcast %405 : vector<8x1xf32> to vector<8x32xf32>
    %409 = arith.mulf %408, %407 : vector<8x32xf32>
    %410 = arith.addf %404, %409 : vector<8x32xf32>
    %411 = vector.extract_strided_slice %369 {offsets = [0, 7], sizes = [8, 1], strides = [1, 1]} : vector<8x8xf32> to vector<8x1xf32>
    %c7_205 = arith.constant 7 : index
    %c0_206 = arith.constant 0 : index
    %c0_207 = arith.constant 0 : index
    %412 = vector.load %arg6[%c7_205, %c0_206, %c0_207] : memref<8x8x32xf32, #tpu.memory_space<vmem>>, vector<1x8x32xf32>
    %413 = vector.shape_cast %412 : vector<1x8x32xf32> to vector<8x32xf32>
    %414 = vector.broadcast %411 : vector<8x1xf32> to vector<8x32xf32>
    %415 = arith.mulf %414, %413 : vector<8x32xf32>
    %416 = arith.addf %410, %415 : vector<8x32xf32>
    %417 = tpu.concatenate %416, %318 in 1 : vector<8x32xf32>, vector<8x32xf32> -> vector<8x64xf32>
    %cst_208 = arith.constant dense<0.000000e+00> : vector<8x32xf32>
    %418 = tpu.matmul %417, %5, %cst_208 {dimension_numbers = #tpu.dot_dimension_numbers<[1], [0], [0], [1], [0, 0, 1, 1], [], []>} : vector<8x64xf32>, vector<64x32xf32>, vector<8x32xf32> -> vector<8x32xf32>
    %419 = arith.addf %418, %8 : vector<8x32xf32>
    %420 = math.tanh %419 : vector<8x32xf32>
    %cst_209 = arith.constant dense<0.000000e+00> : vector<8x128xf32>
    %421 = tpu.matmul %420, %9, %cst_209 {dimension_numbers = #tpu.dot_dimension_numbers<[1], [0], [0], [1], [0, 0, 1, 1], [], []>} : vector<8x32xf32>, vector<32x128xf32>, vector<8x128xf32> -> vector<8x128xf32>
    %422 = arith.addf %421, %12 : vector<8x128xf32>
    %c2_210 = arith.constant 2 : index
    %c0_211 = arith.constant 0 : index
    %c0_212 = arith.constant 0 : index
    %423 = vector.load %arg11[%c2_210, %c0_211, %c0_212] : memref<5x8x128xf32, #tpu.memory_space<vmem>>, vector<1x8x128xf32>
    %424 = vector.shape_cast %423 : vector<1x8x128xf32> to vector<8x128xf32>
    %425 = vector.shape_cast %422 : vector<8x128xf32> to vector<1x8x128xf32>
    tpu.vector_store %arg11[%c2_210, %c0_211, %c0_212], %425 {strides = array<i32>} : memref<5x8x128xf32, #tpu.memory_space<vmem>>, vector<1x8x128xf32>,
    %cst_213 = arith.constant 0xFF800000 : f32
    %426 = vector.broadcast %cst_213 : f32 to vector<8x128xf32>
    %427 = arith.select %15, %422, %426 : vector<8x128xi1>, vector<8x128xf32>
    %cst_214 = arith.constant dense<0xFF800000> : vector<8xf32>
    %428 = vector.multi_reduction <maximumf>, %427, %cst_214 [1] : vector<8x128xf32> to vector<8xf32>
    %429 = vector.shape_cast %428 : vector<8xf32> to vector<8x1xf32>
    %430 = vector.broadcast %429 : vector<8x1xf32> to vector<8x128xf32>
    %431 = arith.cmpf oeq, %427, %430 : vector<8x128xf32>
    %c128_i32_215 = arith.constant 128 : i32
    %432 = vector.broadcast %c128_i32_215 : i32 to vector<8x128xi32>
    %433 = arith.select %431, %13, %432 : vector<8x128xi1>, vector<8x128xi32>
    %cst_216 = arith.constant dense<2147483647> : vector<8xi32>
    %434 = vector.multi_reduction <minsi>, %433, %cst_216 [1] : vector<8x128xi32> to vector<8xi32>
    %435 = vector.shape_cast %434 : vector<8xi32> to vector<8x1xi32>
    %436 = vector.broadcast %435 : vector<8x1xi32> to vector<8x128xi32>
    %437 = arith.cmpi eq, %13, %436 : vector<8x128xi32>
    %438 = arith.extui %437 : vector<8x128xi1> to vector<8x128xi32>
    %439 = arith.sitofp %438 : vector<8x128xi32> to vector<8x128xf32>
    %cst_217 = arith.constant dense<0.000000e+00> : vector<8x32xf32>
    %440 = tpu.matmul %439, %0, %cst_217 {dimension_numbers = #tpu.dot_dimension_numbers<[1], [0], [0], [1], [0, 0, 1, 1], [], []>} : vector<8x128xf32>, vector<128x32xf32>, vector<8x32xf32> -> vector<8x32xf32>
    %441 = tpu.concatenate %440, %420 in 1 : vector<8x32xf32>, vector<8x32xf32> -> vector<8x64xf32>
    %cst_218 = arith.constant dense<0.000000e+00> : vector<8x128xf32>
    %442 = tpu.matmul %441, %1, %cst_218 {dimension_numbers = #tpu.dot_dimension_numbers<[1], [0], [0], [1], [0, 0, 1, 1], [], []>} : vector<8x64xf32>, vector<64x128xf32>, vector<8x128xf32> -> vector<8x128xf32>
    %443 = arith.addf %442, %4 : vector<8x128xf32>
    %444 = arith.negf %443 : vector<8x128xf32>
    %445 = math.exp %444 : vector<8x128xf32>
    %cst_219 = arith.constant 1.000000e+00 : f32
    %446 = vector.broadcast %cst_219 : f32 to vector<8x128xf32>
    %447 = arith.addf %446, %445 : vector<8x128xf32>
    %448 = arith.divf %446, %447 : vector<8x128xf32>
    %449 = math.tanh %443 : vector<8x128xf32>
    %450 = vector.extract_strided_slice %448 {offsets = [0, 0], sizes = [8, 32], strides = [1, 1]} : vector<8x128xf32> to vector<8x32xf32>
    %451 = vector.extract_strided_slice %448 {offsets = [0, 32], sizes = [8, 32], strides = [1, 1]} : vector<8x128xf32> to vector<8x32xf32>
    %452 = vector.extract_strided_slice %449 {offsets = [0, 64], sizes = [8, 32], strides = [1, 1]} : vector<8x128xf32> to vector<8x32xf32>
    %453 = vector.extract_strided_slice %448 {offsets = [0, 96], sizes = [8, 32], strides = [1, 1]} : vector<8x128xf32> to vector<8x32xf32>
    %454 = arith.mulf %451, %316 : vector<8x32xf32>
    %455 = arith.mulf %450, %452 : vector<8x32xf32>
    %456 = arith.addf %454, %455 : vector<8x32xf32>
    %457 = math.tanh %456 : vector<8x32xf32>
    %458 = arith.mulf %453, %457 : vector<8x32xf32>
    %c0_220 = arith.constant 0 : index
    %c0_221 = arith.constant 0 : index
    %c0_222 = arith.constant 0 : index
    %459 = vector.load %arg5[%c0_220, %c0_221, %c0_222] : memref<8x8x32xf32, #tpu.memory_space<vmem>>, vector<1x8x32xf32>
    %460 = vector.shape_cast %459 : vector<1x8x32xf32> to vector<8x32xf32>
    %461 = arith.mulf %458, %460 : vector<8x32xf32>
    %cst_223 = arith.constant dense<0.000000e+00> : vector<8xf32>
    %462 = vector.multi_reduction <add>, %461, %cst_223 [1] : vector<8x32xf32> to vector<8xf32>
    %463 = vector.shape_cast %462 : vector<8xf32> to vector<8x1xf32>
    %c1_224 = arith.constant 1 : index
    %c0_225 = arith.constant 0 : index
    %c0_226 = arith.constant 0 : index
    %464 = vector.load %arg5[%c1_224, %c0_225, %c0_226] : memref<8x8x32xf32, #tpu.memory_space<vmem>>, vector<1x8x32xf32>
    %465 = vector.shape_cast %464 : vector<1x8x32xf32> to vector<8x32xf32>
    %466 = arith.mulf %458, %465 : vector<8x32xf32>
    %cst_227 = arith.constant dense<0.000000e+00> : vector<8xf32>
    %467 = vector.multi_reduction <add>, %466, %cst_227 [1] : vector<8x32xf32> to vector<8xf32>
    %468 = vector.shape_cast %467 : vector<8xf32> to vector<8x1xf32>
    %c2_228 = arith.constant 2 : index
    %c0_229 = arith.constant 0 : index
    %c0_230 = arith.constant 0 : index
    %469 = vector.load %arg5[%c2_228, %c0_229, %c0_230] : memref<8x8x32xf32, #tpu.memory_space<vmem>>, vector<1x8x32xf32>
    %470 = vector.shape_cast %469 : vector<1x8x32xf32> to vector<8x32xf32>
    %471 = arith.mulf %458, %470 : vector<8x32xf32>
    %cst_231 = arith.constant dense<0.000000e+00> : vector<8xf32>
    %472 = vector.multi_reduction <add>, %471, %cst_231 [1] : vector<8x32xf32> to vector<8xf32>
    %473 = vector.shape_cast %472 : vector<8xf32> to vector<8x1xf32>
    %c3_232 = arith.constant 3 : index
    %c0_233 = arith.constant 0 : index
    %c0_234 = arith.constant 0 : index
    %474 = vector.load %arg5[%c3_232, %c0_233, %c0_234] : memref<8x8x32xf32, #tpu.memory_space<vmem>>, vector<1x8x32xf32>
    %475 = vector.shape_cast %474 : vector<1x8x32xf32> to vector<8x32xf32>
    %476 = arith.mulf %458, %475 : vector<8x32xf32>
    %cst_235 = arith.constant dense<0.000000e+00> : vector<8xf32>
    %477 = vector.multi_reduction <add>, %476, %cst_235 [1] : vector<8x32xf32> to vector<8xf32>
    %478 = vector.shape_cast %477 : vector<8xf32> to vector<8x1xf32>
    %c4_236 = arith.constant 4 : index
    %c0_237 = arith.constant 0 : index
    %c0_238 = arith.constant 0 : index
    %479 = vector.load %arg5[%c4_236, %c0_237, %c0_238] : memref<8x8x32xf32, #tpu.memory_space<vmem>>, vector<1x8x32xf32>
    %480 = vector.shape_cast %479 : vector<1x8x32xf32> to vector<8x32xf32>
    %481 = arith.mulf %458, %480 : vector<8x32xf32>
    %cst_239 = arith.constant dense<0.000000e+00> : vector<8xf32>
    %482 = vector.multi_reduction <add>, %481, %cst_239 [1] : vector<8x32xf32> to vector<8xf32>
    %483 = vector.shape_cast %482 : vector<8xf32> to vector<8x1xf32>
    %c5_240 = arith.constant 5 : index
    %c0_241 = arith.constant 0 : index
    %c0_242 = arith.constant 0 : index
    %484 = vector.load %arg5[%c5_240, %c0_241, %c0_242] : memref<8x8x32xf32, #tpu.memory_space<vmem>>, vector<1x8x32xf32>
    %485 = vector.shape_cast %484 : vector<1x8x32xf32> to vector<8x32xf32>
    %486 = arith.mulf %458, %485 : vector<8x32xf32>
    %cst_243 = arith.constant dense<0.000000e+00> : vector<8xf32>
    %487 = vector.multi_reduction <add>, %486, %cst_243 [1] : vector<8x32xf32> to vector<8xf32>
    %488 = vector.shape_cast %487 : vector<8xf32> to vector<8x1xf32>
    %c6_244 = arith.constant 6 : index
    %c0_245 = arith.constant 0 : index
    %c0_246 = arith.constant 0 : index
    %489 = vector.load %arg5[%c6_244, %c0_245, %c0_246] : memref<8x8x32xf32, #tpu.memory_space<vmem>>, vector<1x8x32xf32>
    %490 = vector.shape_cast %489 : vector<1x8x32xf32> to vector<8x32xf32>
    %491 = arith.mulf %458, %490 : vector<8x32xf32>
    %cst_247 = arith.constant dense<0.000000e+00> : vector<8xf32>
    %492 = vector.multi_reduction <add>, %491, %cst_247 [1] : vector<8x32xf32> to vector<8xf32>
    %493 = vector.shape_cast %492 : vector<8xf32> to vector<8x1xf32>
    %c7_248 = arith.constant 7 : index
    %c0_249 = arith.constant 0 : index
    %c0_250 = arith.constant 0 : index
    %494 = vector.load %arg5[%c7_248, %c0_249, %c0_250] : memref<8x8x32xf32, #tpu.memory_space<vmem>>, vector<1x8x32xf32>
    %495 = vector.shape_cast %494 : vector<1x8x32xf32> to vector<8x32xf32>
    %496 = arith.mulf %458, %495 : vector<8x32xf32>
    %cst_251 = arith.constant dense<0.000000e+00> : vector<8xf32>
    %497 = vector.multi_reduction <add>, %496, %cst_251 [1] : vector<8x32xf32> to vector<8xf32>
    %498 = vector.shape_cast %497 : vector<8xf32> to vector<8x1xf32>
    %499 = tpu.concatenate %463, %468, %473, %478, %483, %488, %493, %498 in 1 : vector<8x1xf32>, vector<8x1xf32>, vector<8x1xf32>, vector<8x1xf32>, vector<8x1xf32>, vector<8x1xf32>, vector<8x1xf32>, vector<8x1xf32> -> vector<8x8xf32>
    %cst_252 = arith.constant dense<0xFF800000> : vector<8xf32>
    %500 = vector.multi_reduction <maximumf>, %499, %cst_252 [1] : vector<8x8xf32> to vector<8xf32>
    %501 = vector.shape_cast %500 : vector<8xf32> to vector<8x1xf32>
    %502 = vector.broadcast %501 : vector<8x1xf32> to vector<8x8xf32>
    %503 = arith.subf %499, %502 : vector<8x8xf32>
    %504 = math.exp %503 : vector<8x8xf32>
    %cst_253 = arith.constant dense<0.000000e+00> : vector<8xf32>
    %505 = vector.multi_reduction <add>, %504, %cst_253 [1] : vector<8x8xf32> to vector<8xf32>
    %506 = vector.shape_cast %505 : vector<8xf32> to vector<8x1xf32>
    %507 = tpu.reciprocal %506 {approx = true} : vector<8x1xf32> -> vector<8x1xf32>
    %508 = vector.broadcast %507 : vector<8x1xf32> to vector<8x8xf32>
    %509 = arith.mulf %504, %508 : vector<8x8xf32>
    %510 = vector.extract_strided_slice %509 {offsets = [0, 0], sizes = [8, 1], strides = [1, 1]} : vector<8x8xf32> to vector<8x1xf32>
    %c0_254 = arith.constant 0 : index
    %c0_255 = arith.constant 0 : index
    %c0_256 = arith.constant 0 : index
    %511 = vector.load %arg6[%c0_254, %c0_255, %c0_256] : memref<8x8x32xf32, #tpu.memory_space<vmem>>, vector<1x8x32xf32>
    %512 = vector.shape_cast %511 : vector<1x8x32xf32> to vector<8x32xf32>
    %513 = vector.broadcast %510 : vector<8x1xf32> to vector<8x32xf32>
    %514 = arith.mulf %513, %512 : vector<8x32xf32>
    %515 = vector.extract_strided_slice %509 {offsets = [0, 1], sizes = [8, 1], strides = [1, 1]} : vector<8x8xf32> to vector<8x1xf32>
    %c1_257 = arith.constant 1 : index
    %c0_258 = arith.constant 0 : index
    %c0_259 = arith.constant 0 : index
    %516 = vector.load %arg6[%c1_257, %c0_258, %c0_259] : memref<8x8x32xf32, #tpu.memory_space<vmem>>, vector<1x8x32xf32>
    %517 = vector.shape_cast %516 : vector<1x8x32xf32> to vector<8x32xf32>
    %518 = vector.broadcast %515 : vector<8x1xf32> to vector<8x32xf32>
    %519 = arith.mulf %518, %517 : vector<8x32xf32>
    %520 = arith.addf %514, %519 : vector<8x32xf32>
    %521 = vector.extract_strided_slice %509 {offsets = [0, 2], sizes = [8, 1], strides = [1, 1]} : vector<8x8xf32> to vector<8x1xf32>
    %c2_260 = arith.constant 2 : index
    %c0_261 = arith.constant 0 : index
    %c0_262 = arith.constant 0 : index
    %522 = vector.load %arg6[%c2_260, %c0_261, %c0_262] : memref<8x8x32xf32, #tpu.memory_space<vmem>>, vector<1x8x32xf32>
    %523 = vector.shape_cast %522 : vector<1x8x32xf32> to vector<8x32xf32>
    %524 = vector.broadcast %521 : vector<8x1xf32> to vector<8x32xf32>
    %525 = arith.mulf %524, %523 : vector<8x32xf32>
    %526 = arith.addf %520, %525 : vector<8x32xf32>
    %527 = vector.extract_strided_slice %509 {offsets = [0, 3], sizes = [8, 1], strides = [1, 1]} : vector<8x8xf32> to vector<8x1xf32>
    %c3_263 = arith.constant 3 : index
    %c0_264 = arith.constant 0 : index
    %c0_265 = arith.constant 0 : index
    %528 = vector.load %arg6[%c3_263, %c0_264, %c0_265] : memref<8x8x32xf32, #tpu.memory_space<vmem>>, vector<1x8x32xf32>
    %529 = vector.shape_cast %528 : vector<1x8x32xf32> to vector<8x32xf32>
    %530 = vector.broadcast %527 : vector<8x1xf32> to vector<8x32xf32>
    %531 = arith.mulf %530, %529 : vector<8x32xf32>
    %532 = arith.addf %526, %531 : vector<8x32xf32>
    %533 = vector.extract_strided_slice %509 {offsets = [0, 4], sizes = [8, 1], strides = [1, 1]} : vector<8x8xf32> to vector<8x1xf32>
    %c4_266 = arith.constant 4 : index
    %c0_267 = arith.constant 0 : index
    %c0_268 = arith.constant 0 : index
    %534 = vector.load %arg6[%c4_266, %c0_267, %c0_268] : memref<8x8x32xf32, #tpu.memory_space<vmem>>, vector<1x8x32xf32>
    %535 = vector.shape_cast %534 : vector<1x8x32xf32> to vector<8x32xf32>
    %536 = vector.broadcast %533 : vector<8x1xf32> to vector<8x32xf32>
    %537 = arith.mulf %536, %535 : vector<8x32xf32>
    %538 = arith.addf %532, %537 : vector<8x32xf32>
    %539 = vector.extract_strided_slice %509 {offsets = [0, 5], sizes = [8, 1], strides = [1, 1]} : vector<8x8xf32> to vector<8x1xf32>
    %c5_269 = arith.constant 5 : index
    %c0_270 = arith.constant 0 : index
    %c0_271 = arith.constant 0 : index
    %540 = vector.load %arg6[%c5_269, %c0_270, %c0_271] : memref<8x8x32xf32, #tpu.memory_space<vmem>>, vector<1x8x32xf32>
    %541 = vector.shape_cast %540 : vector<1x8x32xf32> to vector<8x32xf32>
    %542 = vector.broadcast %539 : vector<8x1xf32> to vector<8x32xf32>
    %543 = arith.mulf %542, %541 : vector<8x32xf32>
    %544 = arith.addf %538, %543 : vector<8x32xf32>
    %545 = vector.extract_strided_slice %509 {offsets = [0, 6], sizes = [8, 1], strides = [1, 1]} : vector<8x8xf32> to vector<8x1xf32>
    %c6_272 = arith.constant 6 : index
    %c0_273 = arith.constant 0 : index
    %c0_274 = arith.constant 0 : index
    %546 = vector.load %arg6[%c6_272, %c0_273, %c0_274] : memref<8x8x32xf32, #tpu.memory_space<vmem>>, vector<1x8x32xf32>
    %547 = vector.shape_cast %546 : vector<1x8x32xf32> to vector<8x32xf32>
    %548 = vector.broadcast %545 : vector<8x1xf32> to vector<8x32xf32>
    %549 = arith.mulf %548, %547 : vector<8x32xf32>
    %550 = arith.addf %544, %549 : vector<8x32xf32>
    %551 = vector.extract_strided_slice %509 {offsets = [0, 7], sizes = [8, 1], strides = [1, 1]} : vector<8x8xf32> to vector<8x1xf32>
    %c7_275 = arith.constant 7 : index
    %c0_276 = arith.constant 0 : index
    %c0_277 = arith.constant 0 : index
    %552 = vector.load %arg6[%c7_275, %c0_276, %c0_277] : memref<8x8x32xf32, #tpu.memory_space<vmem>>, vector<1x8x32xf32>
    %553 = vector.shape_cast %552 : vector<1x8x32xf32> to vector<8x32xf32>
    %554 = vector.broadcast %551 : vector<8x1xf32> to vector<8x32xf32>
    %555 = arith.mulf %554, %553 : vector<8x32xf32>
    %556 = arith.addf %550, %555 : vector<8x32xf32>
    %557 = tpu.concatenate %556, %458 in 1 : vector<8x32xf32>, vector<8x32xf32> -> vector<8x64xf32>
    %cst_278 = arith.constant dense<0.000000e+00> : vector<8x32xf32>
    %558 = tpu.matmul %557, %5, %cst_278 {dimension_numbers = #tpu.dot_dimension_numbers<[1], [0], [0], [1], [0, 0, 1, 1], [], []>} : vector<8x64xf32>, vector<64x32xf32>, vector<8x32xf32> -> vector<8x32xf32>
    %559 = arith.addf %558, %8 : vector<8x32xf32>
    %560 = math.tanh %559 : vector<8x32xf32>
    %cst_279 = arith.constant dense<0.000000e+00> : vector<8x128xf32>
    %561 = tpu.matmul %560, %9, %cst_279 {dimension_numbers = #tpu.dot_dimension_numbers<[1], [0], [0], [1], [0, 0, 1, 1], [], []>} : vector<8x32xf32>, vector<32x128xf32>, vector<8x128xf32> -> vector<8x128xf32>
    %562 = arith.addf %561, %12 : vector<8x128xf32>
    %c3_280 = arith.constant 3 : index
    %c0_281 = arith.constant 0 : index
    %c0_282 = arith.constant 0 : index
    %563 = vector.load %arg11[%c3_280, %c0_281, %c0_282] : memref<5x8x128xf32, #tpu.memory_space<vmem>>, vector<1x8x128xf32>
    %564 = vector.shape_cast %563 : vector<1x8x128xf32> to vector<8x128xf32>
    %565 = vector.shape_cast %562 : vector<8x128xf32> to vector<1x8x128xf32>
    tpu.vector_store %arg11[%c3_280, %c0_281, %c0_282], %565 {strides = array<i32>} : memref<5x8x128xf32, #tpu.memory_space<vmem>>, vector<1x8x128xf32>,
    %cst_283 = arith.constant 0xFF800000 : f32
    %566 = vector.broadcast %cst_283 : f32 to vector<8x128xf32>
    %567 = arith.select %15, %562, %566 : vector<8x128xi1>, vector<8x128xf32>
    %cst_284 = arith.constant dense<0xFF800000> : vector<8xf32>
    %568 = vector.multi_reduction <maximumf>, %567, %cst_284 [1] : vector<8x128xf32> to vector<8xf32>
    %569 = vector.shape_cast %568 : vector<8xf32> to vector<8x1xf32>
    %570 = vector.broadcast %569 : vector<8x1xf32> to vector<8x128xf32>
    %571 = arith.cmpf oeq, %567, %570 : vector<8x128xf32>
    %c128_i32_285 = arith.constant 128 : i32
    %572 = vector.broadcast %c128_i32_285 : i32 to vector<8x128xi32>
    %573 = arith.select %571, %13, %572 : vector<8x128xi1>, vector<8x128xi32>
    %cst_286 = arith.constant dense<2147483647> : vector<8xi32>
    %574 = vector.multi_reduction <minsi>, %573, %cst_286 [1] : vector<8x128xi32> to vector<8xi32>
    %575 = vector.shape_cast %574 : vector<8xi32> to vector<8x1xi32>
    %576 = vector.broadcast %575 : vector<8x1xi32> to vector<8x128xi32>
    %577 = arith.cmpi eq, %13, %576 : vector<8x128xi32>
    %578 = arith.extui %577 : vector<8x128xi1> to vector<8x128xi32>
    %579 = arith.sitofp %578 : vector<8x128xi32> to vector<8x128xf32>
    %cst_287 = arith.constant dense<0.000000e+00> : vector<8x32xf32>
    %580 = tpu.matmul %579, %0, %cst_287 {dimension_numbers = #tpu.dot_dimension_numbers<[1], [0], [0], [1], [0, 0, 1, 1], [], []>} : vector<8x128xf32>, vector<128x32xf32>, vector<8x32xf32> -> vector<8x32xf32>
    %581 = tpu.concatenate %580, %560 in 1 : vector<8x32xf32>, vector<8x32xf32> -> vector<8x64xf32>
    %cst_288 = arith.constant dense<0.000000e+00> : vector<8x128xf32>
    %582 = tpu.matmul %581, %1, %cst_288 {dimension_numbers = #tpu.dot_dimension_numbers<[1], [0], [0], [1], [0, 0, 1, 1], [], []>} : vector<8x64xf32>, vector<64x128xf32>, vector<8x128xf32> -> vector<8x128xf32>
    %583 = arith.addf %582, %4 : vector<8x128xf32>
    %584 = arith.negf %583 : vector<8x128xf32>
    %585 = math.exp %584 : vector<8x128xf32>
    %cst_289 = arith.constant 1.000000e+00 : f32
    %586 = vector.broadcast %cst_289 : f32 to vector<8x128xf32>
    %587 = arith.addf %586, %585 : vector<8x128xf32>
    %588 = arith.divf %586, %587 : vector<8x128xf32>
    %589 = math.tanh %583 : vector<8x128xf32>
    %590 = vector.extract_strided_slice %588 {offsets = [0, 0], sizes = [8, 32], strides = [1, 1]} : vector<8x128xf32> to vector<8x32xf32>
    %591 = vector.extract_strided_slice %588 {offsets = [0, 32], sizes = [8, 32], strides = [1, 1]} : vector<8x128xf32> to vector<8x32xf32>
    %592 = vector.extract_strided_slice %589 {offsets = [0, 64], sizes = [8, 32], strides = [1, 1]} : vector<8x128xf32> to vector<8x32xf32>
    %593 = vector.extract_strided_slice %588 {offsets = [0, 96], sizes = [8, 32], strides = [1, 1]} : vector<8x128xf32> to vector<8x32xf32>
    %594 = arith.mulf %591, %456 : vector<8x32xf32>
    %595 = arith.mulf %590, %592 : vector<8x32xf32>
    %596 = arith.addf %594, %595 : vector<8x32xf32>
    %597 = math.tanh %596 : vector<8x32xf32>
    %598 = arith.mulf %593, %597 : vector<8x32xf32>
    %c0_290 = arith.constant 0 : index
    %c0_291 = arith.constant 0 : index
    %c0_292 = arith.constant 0 : index
    %599 = vector.load %arg5[%c0_290, %c0_291, %c0_292] : memref<8x8x32xf32, #tpu.memory_space<vmem>>, vector<1x8x32xf32>
    %600 = vector.shape_cast %599 : vector<1x8x32xf32> to vector<8x32xf32>
    %601 = arith.mulf %598, %600 : vector<8x32xf32>
    %cst_293 = arith.constant dense<0.000000e+00> : vector<8xf32>
    %602 = vector.multi_reduction <add>, %601, %cst_293 [1] : vector<8x32xf32> to vector<8xf32>
    %603 = vector.shape_cast %602 : vector<8xf32> to vector<8x1xf32>
    %c1_294 = arith.constant 1 : index
    %c0_295 = arith.constant 0 : index
    %c0_296 = arith.constant 0 : index
    %604 = vector.load %arg5[%c1_294, %c0_295, %c0_296] : memref<8x8x32xf32, #tpu.memory_space<vmem>>, vector<1x8x32xf32>
    %605 = vector.shape_cast %604 : vector<1x8x32xf32> to vector<8x32xf32>
    %606 = arith.mulf %598, %605 : vector<8x32xf32>
    %cst_297 = arith.constant dense<0.000000e+00> : vector<8xf32>
    %607 = vector.multi_reduction <add>, %606, %cst_297 [1] : vector<8x32xf32> to vector<8xf32>
    %608 = vector.shape_cast %607 : vector<8xf32> to vector<8x1xf32>
    %c2_298 = arith.constant 2 : index
    %c0_299 = arith.constant 0 : index
    %c0_300 = arith.constant 0 : index
    %609 = vector.load %arg5[%c2_298, %c0_299, %c0_300] : memref<8x8x32xf32, #tpu.memory_space<vmem>>, vector<1x8x32xf32>
    %610 = vector.shape_cast %609 : vector<1x8x32xf32> to vector<8x32xf32>
    %611 = arith.mulf %598, %610 : vector<8x32xf32>
    %cst_301 = arith.constant dense<0.000000e+00> : vector<8xf32>
    %612 = vector.multi_reduction <add>, %611, %cst_301 [1] : vector<8x32xf32> to vector<8xf32>
    %613 = vector.shape_cast %612 : vector<8xf32> to vector<8x1xf32>
    %c3_302 = arith.constant 3 : index
    %c0_303 = arith.constant 0 : index
    %c0_304 = arith.constant 0 : index
    %614 = vector.load %arg5[%c3_302, %c0_303, %c0_304] : memref<8x8x32xf32, #tpu.memory_space<vmem>>, vector<1x8x32xf32>
    %615 = vector.shape_cast %614 : vector<1x8x32xf32> to vector<8x32xf32>
    %616 = arith.mulf %598, %615 : vector<8x32xf32>
    %cst_305 = arith.constant dense<0.000000e+00> : vector<8xf32>
    %617 = vector.multi_reduction <add>, %616, %cst_305 [1] : vector<8x32xf32> to vector<8xf32>
    %618 = vector.shape_cast %617 : vector<8xf32> to vector<8x1xf32>
    %c4_306 = arith.constant 4 : index
    %c0_307 = arith.constant 0 : index
    %c0_308 = arith.constant 0 : index
    %619 = vector.load %arg5[%c4_306, %c0_307, %c0_308] : memref<8x8x32xf32, #tpu.memory_space<vmem>>, vector<1x8x32xf32>
    %620 = vector.shape_cast %619 : vector<1x8x32xf32> to vector<8x32xf32>
    %621 = arith.mulf %598, %620 : vector<8x32xf32>
    %cst_309 = arith.constant dense<0.000000e+00> : vector<8xf32>
    %622 = vector.multi_reduction <add>, %621, %cst_309 [1] : vector<8x32xf32> to vector<8xf32>
    %623 = vector.shape_cast %622 : vector<8xf32> to vector<8x1xf32>
    %c5_310 = arith.constant 5 : index
    %c0_311 = arith.constant 0 : index
    %c0_312 = arith.constant 0 : index
    %624 = vector.load %arg5[%c5_310, %c0_311, %c0_312] : memref<8x8x32xf32, #tpu.memory_space<vmem>>, vector<1x8x32xf32>
    %625 = vector.shape_cast %624 : vector<1x8x32xf32> to vector<8x32xf32>
    %626 = arith.mulf %598, %625 : vector<8x32xf32>
    %cst_313 = arith.constant dense<0.000000e+00> : vector<8xf32>
    %627 = vector.multi_reduction <add>, %626, %cst_313 [1] : vector<8x32xf32> to vector<8xf32>
    %628 = vector.shape_cast %627 : vector<8xf32> to vector<8x1xf32>
    %c6_314 = arith.constant 6 : index
    %c0_315 = arith.constant 0 : index
    %c0_316 = arith.constant 0 : index
    %629 = vector.load %arg5[%c6_314, %c0_315, %c0_316] : memref<8x8x32xf32, #tpu.memory_space<vmem>>, vector<1x8x32xf32>
    %630 = vector.shape_cast %629 : vector<1x8x32xf32> to vector<8x32xf32>
    %631 = arith.mulf %598, %630 : vector<8x32xf32>
    %cst_317 = arith.constant dense<0.000000e+00> : vector<8xf32>
    %632 = vector.multi_reduction <add>, %631, %cst_317 [1] : vector<8x32xf32> to vector<8xf32>
    %633 = vector.shape_cast %632 : vector<8xf32> to vector<8x1xf32>
    %c7_318 = arith.constant 7 : index
    %c0_319 = arith.constant 0 : index
    %c0_320 = arith.constant 0 : index
    %634 = vector.load %arg5[%c7_318, %c0_319, %c0_320] : memref<8x8x32xf32, #tpu.memory_space<vmem>>, vector<1x8x32xf32>
    %635 = vector.shape_cast %634 : vector<1x8x32xf32> to vector<8x32xf32>
    %636 = arith.mulf %598, %635 : vector<8x32xf32>
    %cst_321 = arith.constant dense<0.000000e+00> : vector<8xf32>
    %637 = vector.multi_reduction <add>, %636, %cst_321 [1] : vector<8x32xf32> to vector<8xf32>
    %638 = vector.shape_cast %637 : vector<8xf32> to vector<8x1xf32>
    %639 = tpu.concatenate %603, %608, %613, %618, %623, %628, %633, %638 in 1 : vector<8x1xf32>, vector<8x1xf32>, vector<8x1xf32>, vector<8x1xf32>, vector<8x1xf32>, vector<8x1xf32>, vector<8x1xf32>, vector<8x1xf32> -> vector<8x8xf32>
    %cst_322 = arith.constant dense<0xFF800000> : vector<8xf32>
    %640 = vector.multi_reduction <maximumf>, %639, %cst_322 [1] : vector<8x8xf32> to vector<8xf32>
    %641 = vector.shape_cast %640 : vector<8xf32> to vector<8x1xf32>
    %642 = vector.broadcast %641 : vector<8x1xf32> to vector<8x8xf32>
    %643 = arith.subf %639, %642 : vector<8x8xf32>
    %644 = math.exp %643 : vector<8x8xf32>
    %cst_323 = arith.constant dense<0.000000e+00> : vector<8xf32>
    %645 = vector.multi_reduction <add>, %644, %cst_323 [1] : vector<8x8xf32> to vector<8xf32>
    %646 = vector.shape_cast %645 : vector<8xf32> to vector<8x1xf32>
    %647 = tpu.reciprocal %646 {approx = true} : vector<8x1xf32> -> vector<8x1xf32>
    %648 = vector.broadcast %647 : vector<8x1xf32> to vector<8x8xf32>
    %649 = arith.mulf %644, %648 : vector<8x8xf32>
    %650 = vector.extract_strided_slice %649 {offsets = [0, 0], sizes = [8, 1], strides = [1, 1]} : vector<8x8xf32> to vector<8x1xf32>
    %c0_324 = arith.constant 0 : index
    %c0_325 = arith.constant 0 : index
    %c0_326 = arith.constant 0 : index
    %651 = vector.load %arg6[%c0_324, %c0_325, %c0_326] : memref<8x8x32xf32, #tpu.memory_space<vmem>>, vector<1x8x32xf32>
    %652 = vector.shape_cast %651 : vector<1x8x32xf32> to vector<8x32xf32>
    %653 = vector.broadcast %650 : vector<8x1xf32> to vector<8x32xf32>
    %654 = arith.mulf %653, %652 : vector<8x32xf32>
    %655 = vector.extract_strided_slice %649 {offsets = [0, 1], sizes = [8, 1], strides = [1, 1]} : vector<8x8xf32> to vector<8x1xf32>
    %c1_327 = arith.constant 1 : index
    %c0_328 = arith.constant 0 : index
    %c0_329 = arith.constant 0 : index
    %656 = vector.load %arg6[%c1_327, %c0_328, %c0_329] : memref<8x8x32xf32, #tpu.memory_space<vmem>>, vector<1x8x32xf32>
    %657 = vector.shape_cast %656 : vector<1x8x32xf32> to vector<8x32xf32>
    %658 = vector.broadcast %655 : vector<8x1xf32> to vector<8x32xf32>
    %659 = arith.mulf %658, %657 : vector<8x32xf32>
    %660 = arith.addf %654, %659 : vector<8x32xf32>
    %661 = vector.extract_strided_slice %649 {offsets = [0, 2], sizes = [8, 1], strides = [1, 1]} : vector<8x8xf32> to vector<8x1xf32>
    %c2_330 = arith.constant 2 : index
    %c0_331 = arith.constant 0 : index
    %c0_332 = arith.constant 0 : index
    %662 = vector.load %arg6[%c2_330, %c0_331, %c0_332] : memref<8x8x32xf32, #tpu.memory_space<vmem>>, vector<1x8x32xf32>
    %663 = vector.shape_cast %662 : vector<1x8x32xf32> to vector<8x32xf32>
    %664 = vector.broadcast %661 : vector<8x1xf32> to vector<8x32xf32>
    %665 = arith.mulf %664, %663 : vector<8x32xf32>
    %666 = arith.addf %660, %665 : vector<8x32xf32>
    %667 = vector.extract_strided_slice %649 {offsets = [0, 3], sizes = [8, 1], strides = [1, 1]} : vector<8x8xf32> to vector<8x1xf32>
    %c3_333 = arith.constant 3 : index
    %c0_334 = arith.constant 0 : index
    %c0_335 = arith.constant 0 : index
    %668 = vector.load %arg6[%c3_333, %c0_334, %c0_335] : memref<8x8x32xf32, #tpu.memory_space<vmem>>, vector<1x8x32xf32>
    %669 = vector.shape_cast %668 : vector<1x8x32xf32> to vector<8x32xf32>
    %670 = vector.broadcast %667 : vector<8x1xf32> to vector<8x32xf32>
    %671 = arith.mulf %670, %669 : vector<8x32xf32>
    %672 = arith.addf %666, %671 : vector<8x32xf32>
    %673 = vector.extract_strided_slice %649 {offsets = [0, 4], sizes = [8, 1], strides = [1, 1]} : vector<8x8xf32> to vector<8x1xf32>
    %c4_336 = arith.constant 4 : index
    %c0_337 = arith.constant 0 : index
    %c0_338 = arith.constant 0 : index
    %674 = vector.load %arg6[%c4_336, %c0_337, %c0_338] : memref<8x8x32xf32, #tpu.memory_space<vmem>>, vector<1x8x32xf32>
    %675 = vector.shape_cast %674 : vector<1x8x32xf32> to vector<8x32xf32>
    %676 = vector.broadcast %673 : vector<8x1xf32> to vector<8x32xf32>
    %677 = arith.mulf %676, %675 : vector<8x32xf32>
    %678 = arith.addf %672, %677 : vector<8x32xf32>
    %679 = vector.extract_strided_slice %649 {offsets = [0, 5], sizes = [8, 1], strides = [1, 1]} : vector<8x8xf32> to vector<8x1xf32>
    %c5_339 = arith.constant 5 : index
    %c0_340 = arith.constant 0 : index
    %c0_341 = arith.constant 0 : index
    %680 = vector.load %arg6[%c5_339, %c0_340, %c0_341] : memref<8x8x32xf32, #tpu.memory_space<vmem>>, vector<1x8x32xf32>
    %681 = vector.shape_cast %680 : vector<1x8x32xf32> to vector<8x32xf32>
    %682 = vector.broadcast %679 : vector<8x1xf32> to vector<8x32xf32>
    %683 = arith.mulf %682, %681 : vector<8x32xf32>
    %684 = arith.addf %678, %683 : vector<8x32xf32>
    %685 = vector.extract_strided_slice %649 {offsets = [0, 6], sizes = [8, 1], strides = [1, 1]} : vector<8x8xf32> to vector<8x1xf32>
    %c6_342 = arith.constant 6 : index
    %c0_343 = arith.constant 0 : index
    %c0_344 = arith.constant 0 : index
    %686 = vector.load %arg6[%c6_342, %c0_343, %c0_344] : memref<8x8x32xf32, #tpu.memory_space<vmem>>, vector<1x8x32xf32>
    %687 = vector.shape_cast %686 : vector<1x8x32xf32> to vector<8x32xf32>
    %688 = vector.broadcast %685 : vector<8x1xf32> to vector<8x32xf32>
    %689 = arith.mulf %688, %687 : vector<8x32xf32>
    %690 = arith.addf %684, %689 : vector<8x32xf32>
    %691 = vector.extract_strided_slice %649 {offsets = [0, 7], sizes = [8, 1], strides = [1, 1]} : vector<8x8xf32> to vector<8x1xf32>
    %c7_345 = arith.constant 7 : index
    %c0_346 = arith.constant 0 : index
    %c0_347 = arith.constant 0 : index
    %692 = vector.load %arg6[%c7_345, %c0_346, %c0_347] : memref<8x8x32xf32, #tpu.memory_space<vmem>>, vector<1x8x32xf32>
    %693 = vector.shape_cast %692 : vector<1x8x32xf32> to vector<8x32xf32>
    %694 = vector.broadcast %691 : vector<8x1xf32> to vector<8x32xf32>
    %695 = arith.mulf %694, %693 : vector<8x32xf32>
    %696 = arith.addf %690, %695 : vector<8x32xf32>
    %697 = tpu.concatenate %696, %598 in 1 : vector<8x32xf32>, vector<8x32xf32> -> vector<8x64xf32>
    %cst_348 = arith.constant dense<0.000000e+00> : vector<8x32xf32>
    %698 = tpu.matmul %697, %5, %cst_348 {dimension_numbers = #tpu.dot_dimension_numbers<[1], [0], [0], [1], [0, 0, 1, 1], [], []>} : vector<8x64xf32>, vector<64x32xf32>, vector<8x32xf32> -> vector<8x32xf32>
    %699 = arith.addf %698, %8 : vector<8x32xf32>
    %700 = math.tanh %699 : vector<8x32xf32>
    %cst_349 = arith.constant dense<0.000000e+00> : vector<8x128xf32>
    %701 = tpu.matmul %700, %9, %cst_349 {dimension_numbers = #tpu.dot_dimension_numbers<[1], [0], [0], [1], [0, 0, 1, 1], [], []>} : vector<8x32xf32>, vector<32x128xf32>, vector<8x128xf32> -> vector<8x128xf32>
    %702 = arith.addf %701, %12 : vector<8x128xf32>
    %c4_350 = arith.constant 4 : index
    %c0_351 = arith.constant 0 : index
    %c0_352 = arith.constant 0 : index
    %703 = vector.load %arg11[%c4_350, %c0_351, %c0_352] : memref<5x8x128xf32, #tpu.memory_space<vmem>>, vector<1x8x128xf32>
    %704 = vector.shape_cast %703 : vector<1x8x128xf32> to vector<8x128xf32>
    %705 = vector.shape_cast %702 : vector<8x128xf32> to vector<1x8x128xf32>
    tpu.vector_store %arg11[%c4_350, %c0_351, %c0_352], %705 {strides = array<i32>} : memref<5x8x128xf32, #tpu.memory_space<vmem>>, vector<1x8x128xf32>,
    return
  }
}

</mosaic_0001>

<llo_original>
// kernel: nmt_forward.3
$region0: #{nmt_forward.3}
  #allocation0 [shape = 'u32[]', space=smem, size = 0x4, offset = 0x4, fixed_abs, tag = 'smem constant byte address 0x4 - core index']
  #allocation1 [shape = 'u32[144,128]{1,0:T(1,128)}', space=vmem, size = 0x12000, scoped, tag = 'internal scratch']
  %s0 = inlined_call_operand.vmem [shape: f32[8,32], index: 0, kind: input, shape index: {}]
  %s1 = inlined_call_operand.vmem [shape: f32[8,32], index: 1, kind: input, shape index: {}]
  %s2 = inlined_call_operand.vmem [shape: f32[128,32], index: 2, kind: input, shape index: {}]
  %s3 = inlined_call_operand.vmem [shape: f32[64,128], index: 3, kind: input, shape index: {}]
  %s4 = inlined_call_operand.vmem [shape: f32[1,128], index: 4, kind: input, shape index: {}]
  %s5 = inlined_call_operand.vmem [shape: f32[8,8,32], index: 5, kind: input, shape index: {}]
  %s6 = inlined_call_operand.vmem [shape: f32[8,8,32], index: 6, kind: input, shape index: {}]
  %s7 = inlined_call_operand.vmem [shape: f32[64,32], index: 7, kind: input, shape index: {}]
  %s8 = inlined_call_operand.vmem [shape: f32[1,32], index: 8, kind: input, shape index: {}]
  %s9 = inlined_call_operand.vmem [shape: f32[32,128], index: 9, kind: input, shape index: {}]
  %s10 = inlined_call_operand.vmem [shape: f32[1,128], index: 10, kind: input, shape index: {}]
  %s11 = inlined_call_operand.vmem [shape: f32[5,8,128], index: 11, kind: output, shape index: {}]
  %s12 = sld [smem:[#allocation0]]
  $region54: #{nmt_forward.3} parent=0
    _
  %s14 = ssub.s32 1, %s12
  %s15 = scalar_select 0, %s14, %s12
  // Predicated region
  $region2: #{nmt_forward.3} parent=0 // pred_check
    _
  $region3: #{nmt_forward.3} parent=0 // pred_check_branch
    %17 = sbr.rel (0) target = $region5
  $region4: #{nmt_forward.3} parent=0 // pred_region
    _
  $region5: #{nmt_forward.3} parent=0 // pred_fallthru
    _
  // Predicated region
  $region6: #{nmt_forward.3} parent=0 // pred_check
    _
  $region7: #{nmt_forward.3} parent=0 // pred_check_branch
    %19 = sbr.rel (0) target = $region9
  $region8: #{nmt_forward.3} parent=0 // pred_region
    _
  $region9: #{nmt_forward.3} parent=0 // pred_fallthru
    _
  // Predicated region
  $region10: #{nmt_forward.3} parent=0 // pred_check
    _
  $region11: #{nmt_forward.3} parent=0 // pred_check_branch
    %21 = sbr.rel (0) target = $region13
  $region12: #{nmt_forward.3} parent=0 // pred_region
    _
  $region13: #{nmt_forward.3} parent=0 // pred_fallthru
    _
  // Predicated region
  $region14: #{nmt_forward.3} parent=0 // pred_check
    _
  $region15: #{nmt_forward.3} parent=0 // pred_check_branch
    %23 = sbr.rel (0) target = $region17
  $region16: #{nmt_forward.3} parent=0 // pred_region
    _
  $region17: #{nmt_forward.3} parent=0 // pred_fallthru
    _
  // Predicated region
  $region18: #{nmt_forward.3} parent=0 // pred_check
    _
  $region19: #{nmt_forward.3} parent=0 // pred_check_branch
    %25 = sbr.rel (0) target = $region21
  $region20: #{nmt_forward.3} parent=0 // pred_region
    _
  $region21: #{nmt_forward.3} parent=0 // pred_fallthru
    _
  // Predicated region
  $region22: #{nmt_forward.3} parent=0 // pred_check
    _
  $region23: #{nmt_forward.3} parent=0 // pred_check_branch
    %27 = sbr.rel (0) target = $region25
  $region24: #{nmt_forward.3} parent=0 // pred_region
    _
  $region25: #{nmt_forward.3} parent=0 // pred_fallthru
    _
  // Predicated region
  $region26: #{nmt_forward.3} parent=0 // pred_check
    _
  $region27: #{nmt_forward.3} parent=0 // pred_check_branch
    %29 = sbr.rel (0) target = $region29
  $region28: #{nmt_forward.3} parent=0 // pred_region
    _
  $region29: #{nmt_forward.3} parent=0 // pred_fallthru
    _
  // Predicated region
  $region30: #{nmt_forward.3} parent=0 // pred_check
    _
  $region31: #{nmt_forward.3} parent=0 // pred_check_branch
    %31 = sbr.rel (0) target = $region33
  $region32: #{nmt_forward.3} parent=0 // pred_region
    _
  $region33: #{nmt_forward.3} parent=0 // pred_fallthru
    _
  // Predicated region
  $region34: #{nmt_forward.3} parent=0 // pred_check
    _
  $region35: #{nmt_forward.3} parent=0 // pred_check_branch
    %33 = sbr.rel (0) target = $region37
  $region36: #{nmt_forward.3} parent=0 // pred_region
    _
  $region37: #{nmt_forward.3} parent=0 // pred_fallthru
    _
  // Predicated region
  $region38: #{nmt_forward.3} parent=0 // pred_check
    _
  $region39: #{nmt_forward.3} parent=0 // pred_check_branch
    %35 = sbr.rel (0) target = $region41
  $region40: #{nmt_forward.3} parent=0 // pred_region
    _
  $region41: #{nmt_forward.3} parent=0 // pred_fallthru
    _
  // Predicated region
  $region42: #{nmt_forward.3} parent=0 // pred_check
    _
  $region43: #{nmt_forward.3} parent=0 // pred_check_branch
    %37 = sbr.rel (0) target = $region45
  $region44: #{nmt_forward.3} parent=0 // pred_region
    _
  $region45: #{nmt_forward.3} parent=0 // pred_fallthru
    _
  %v38 = vld [vmem:[%s2] sm:$0xff]
  %v39 = vld [vmem:[%s2 + $0x8] sm:$0xff]
  %v40 = vld [vmem:[%s2 + $0x10] sm:$0xff]
  %v41 = vld [vmem:[%s2 + $0x18] sm:$0xff]
  %v42 = vld [vmem:[%s2 + $0x20] sm:$0xff]
  %v43 = vld [vmem:[%s2 + $0x28] sm:$0xff]
  %v44 = vld [vmem:[%s2 + $0x30] sm:$0xff]
  %v45 = vld [vmem:[%s2 + $0x38] sm:$0xff]
  %v46 = vld [vmem:[%s2 + $0x40] sm:$0xff]
  %v47 = vld [vmem:[%s2 + $0x48] sm:$0xff]
  %v48 = vld [vmem:[%s2 + $0x50] sm:$0xff]
  %v49 = vld [vmem:[%s2 + $0x58] sm:$0xff]
  %v50 = vld [vmem:[%s2 + $0x60] sm:$0xff]
  %v51 = vld [vmem:[%s2 + $0x68] sm:$0xff]
  %v52 = vld [vmem:[%s2 + $0x70] sm:$0xff]
  %v53 = vld [vmem:[%s2 + $0x78] sm:$0xff]
  %v54 = vld [vmem:[%s3] sm:$0xff]
  %v55 = vld [vmem:[%s3 + $0x8] sm:$0xff]
  %v56 = vld [vmem:[%s3 + $0x10] sm:$0xff]
  %v57 = vld [vmem:[%s3 + $0x18] sm:$0xff]
  %v58 = vld [vmem:[%s3 + $0x20] sm:$0xff]
  %v59 = vld [vmem:[%s3 + $0x28] sm:$0xff]
  %v60 = vld [vmem:[%s3 + $0x30] sm:$0xff]
  %v61 = vld [vmem:[%s3 + $0x38] sm:$0xff]
  %v62 = vld [vmem:[%s4] sm:$0x1]
  %v64 = vlaneseq
  %v65 = vshrl.u32 %v64, 7
  %v66 = vsub.s32 0, %v65
  %v67 = vrot.slane %v62, %v66
  %v69 = vld [vmem:[%s7] sm:$0xff]
  %v70 = vld [vmem:[%s7 + $0x8] sm:$0xff]
  %v71 = vld [vmem:[%s7 + $0x10] sm:$0xff]
  %v72 = vld [vmem:[%s7 + $0x18] sm:$0xff]
  %v73 = vld [vmem:[%s7 + $0x20] sm:$0xff]
  %v74 = vld [vmem:[%s7 + $0x28] sm:$0xff]
  %v75 = vld [vmem:[%s7 + $0x30] sm:$0xff]
  %v76 = vld [vmem:[%s7 + $0x38] sm:$0xff]
  %v77 = vld [vmem:[%s8] sm:$0x1]
  %v79 = vlaneseq
  %v80 = vshrl.u32 %v79, 7
  %v81 = vsub.s32 0, %v80
  %v82 = vrot.slane %v77, %v81
  %v84 = vld [vmem:[%s9] sm:$0xff]
  %v85 = vld [vmem:[%s9 + $0x8] sm:$0xff]
  %v86 = vld [vmem:[%s9 + $0x10] sm:$0xff]
  %v87 = vld [vmem:[%s9 + $0x18] sm:$0xff]
  %v88 = vld [vmem:[%s10] sm:$0x1]
  %v90 = vlaneseq
  %v91 = vshrl.u32 %v90, 7
  %v92 = vsub.s32 0, %v91
  %v93 = vrot.slane %v88, %v92
  %v95 = vlaneseq
  %v96 = vand.u32 %v95, 127
  %vm97 = vcmp.lt.s32.totalorder %v96, 20
  %v98 = vld [vmem:[%s0] sm:$0xff]
  %v99 = vld [vmem:[%s1] sm:$0xff]
  %v100 = vlaneseq
  %v101 = vshrl.u32 %v100, 7
  %v102 = vsub.s32 0, %v101
  %v103 = vrot.slane %v38, %v102
  %105 = vrot.lane.b32.xlu0 %v98, 32
  %v106 = vpop.permute.xlu0 %105
  %vm108 = vcmask 261120
  %v109 = vsel %vm108, %v103, %v106
  %vm110 = vcmask 523264
  %v112 = vsel %vm110, %v109, 0
  %114 = vmatprep.subr.mxu0 0.0
  %115 = vmatpush1.msra.mxu0 %v54
  %116 = vmatprep.subr.mxu0 0.0
  %117 = vmatpush1.msra.mxu0 %v55
  %118 = vmatprep.subr.mxu0 0.0
  %119 = vmatpush1.msra.mxu0 %v56
  %120 = vmatprep.subr.mxu0 0.0
  %121 = vmatpush1.msra.mxu0 %v57
  %122 = vmatprep.subr.mxu0 0.0
  %123 = vmatpush1.msra.mxu0 %v58
  %124 = vmatprep.subr.mxu0 0.0
  %125 = vmatpush1.msra.mxu0 %v59
  %126 = vmatprep.subr.mxu0 0.0
  %127 = vmatpush1.msra.mxu0 %v60
  %128 = vmatprep.subr.mxu0 0.0
  %129 = vmatpush1.msra.mxu0 %v61
  %130 = vmatprep.subr.mxu0 0.0
  %131 = vmatpush1.msra.mxu0 0.0
  %132 = vmatprep.subr.mxu0 0.0
  %133 = vmatpush1.msra.mxu0 0.0
  %134 = vmatprep.subr.mxu0 0.0
  %135 = vmatpush1.msra.mxu0 0.0
  %136 = vmatprep.subr.mxu0 0.0
  %137 = vmatpush1.msra.mxu0 0.0
  %138 = vmatprep.subr.mxu0 0.0
  %139 = vmatpush1.msra.mxu0 0.0
  %140 = vmatprep.subr.mxu0 0.0
  %141 = vmatpush1.msra.mxu0 0.0
  %142 = vmatprep.subr.mxu0 0.0
  %143 = vmatpush1.msra.mxu0 0.0
  %144 = vmatprep.subr.mxu0 0.0
  %145 = vmatpush1.msra.mxu0 0.0
  %146 = vmatprep.subr.mxu0 0.0
  %147 = vmatpush1.msra.mxu0 0.0
  %148 = vmatprep.subr.mxu0 0.0
  %149 = vmatpush1.msra.mxu0 0.0
  %150 = vmatprep.subr.mxu0 0.0
  %151 = vmatpush1.msra.mxu0 0.0
  %152 = vmatprep.subr.mxu0 0.0
  %153 = vmatpush1.msra.mxu0 0.0
  %154 = vmatprep.subr.mxu0 0.0
  %155 = vmatpush1.msra.mxu0 0.0
  %156 = vmatprep.subr.mxu0 0.0
  %157 = vmatpush1.msra.mxu0 0.0
  %158 = vmatprep.subr.mxu0 0.0
  %159 = vmatpush1.msra.mxu0 0.0
  %160 = vmatprep.subr.mxu0 0.0
  %161 = vmatpush1.msra.mxu0 0.0
  %162 = vmatprep.subr.mxu0 0.0
  %163 = vmatpush1.msra.mxu0 0.0
  %164 = vmatprep.subr.mxu0 0.0
  %165 = vmatpush1.msra.mxu0 0.0
  %166 = vmatprep.subr.mxu0 0.0
  %167 = vmatpush1.msra.mxu0 0.0
  %168 = vmatprep.subr.mxu0 0.0
  %169 = vmatpush1.msra.mxu0 0.0
  %170 = vmatprep.subr.mxu0 0.0
  %171 = vmatpush1.msra.mxu0 0.0
  %172 = vmatprep.subr.mxu0 0.0
  %173 = vmatpush1.msra.mxu0 0.0
  %174 = vmatprep.subr.mxu0 0.0
  %175 = vmatpush1.msra.mxu0 0.0
  %176 = vmatprep.subr.mxu0 0.0
  %177 = vmatpush1.msra.mxu0 0.0
  %178 = vmatprep.mubr.f32.mxu0 0.0
  %179 = vmatmul.mubr.f32.gmra.mrb[0].mxu0 %v112
  %v180 = vpop.f32.mrb[0].mxu0
  %v181 = vadd.f32 %v67, %v180
  %v182 = vpop.f32.mrb[0].mxu0
  %183 = vdwg.mxu0
  %v184 = vxor.u32 %v181, 2147483648
  %v185 = vmul.f32 %v184, 1.442695
  %v186 = vpow.pop %v185
  %v187 = vadd.f32 %v186, 1.0
  %v188 = vrcp.pop %v187
  %v189 = vmul.f32 1.0, %v188
  %v190 = vtanh.pop %v181
  %192 = vrot.lane.b32.xlu0 %v99, 32
  %v193 = vpop.permute.xlu0 %192
  %v195 = vmul.f32 %v189, %v193
  %197 = vrot.lane.b32.xlu0 %v190, 64
  %v198 = vpop.permute.xlu0 %197
  %v200 = vmul.f32 %v189, %v198
  %202 = vrot.lane.b32.xlu0 %v200, 32
  %v203 = vpop.permute.xlu0 %202
  %v205 = vadd.f32 %v195, %v203
  %v206 = vtanh.pop %v205
  %208 = vrot.lane.b32.xlu0 %v206, 64
  %v209 = vpop.permute.xlu0 %208
  %v211 = vmul.f32 %v189, %v209
  %v212 = vld [vmem:[%s5] sm:$0xff]
  %214 = vrot.lane.b32.xlu0 %v212, 96
  %v215 = vpop.permute.xlu0 %214
  %v217 = vmul.f32 %v211, %v215
  %219 = vrot.lane.b32.xlu0 %v217, 32
  %v220 = vpop.permute.xlu0 %219
  %v222 = vsel %vm108, %v220, 0.0
  %223 = vadd.xlane.f32.xlu0 %v222
  %v224 = vpop.xlane.xlu0 %223
  %s225 = scalar_lea.vmem %s5, 8
  %v226 = vld [vmem:[%s225] sm:$0xff]
  %228 = vrot.lane.b32.xlu0 %v226, 96
  %v229 = vpop.permute.xlu0 %228
  %v231 = vmul.f32 %v211, %v229
  %233 = vrot.lane.b32.xlu0 %v231, 32
  %v234 = vpop.permute.xlu0 %233
  %v236 = vsel %vm108, %v234, 0.0
  %237 = vadd.xlane.f32.xlu0 %v236
  %v238 = vpop.xlane.xlu0 %237
  %s239 = scalar_lea.vmem %s5, 16
  %v240 = vld [vmem:[%s239] sm:$0xff]
  %242 = vrot.lane.b32.xlu0 %v240, 96
  %v243 = vpop.permute.xlu0 %242
  %v245 = vmul.f32 %v211, %v243
  %247 = vrot.lane.b32.xlu0 %v245, 32
  %v248 = vpop.permute.xlu0 %247
  %v250 = vsel %vm108, %v248, 0.0
  %251 = vadd.xlane.f32.xlu0 %v250
  %v252 = vpop.xlane.xlu0 %251
  %s253 = scalar_lea.vmem %s5, 24
  %v254 = vld [vmem:[%s253] sm:$0xff]
  %256 = vrot.lane.b32.xlu0 %v254, 96
  %v257 = vpop.permute.xlu0 %256
  %v259 = vmul.f32 %v211, %v257
  %261 = vrot.lane.b32.xlu0 %v259, 32
  %v262 = vpop.permute.xlu0 %261
  %v264 = vsel %vm108, %v262, 0.0
  %265 = vadd.xlane.f32.xlu0 %v264
  %v266 = vpop.xlane.xlu0 %265
  %s267 = scalar_lea.vmem %s5, 32
  %v268 = vld [vmem:[%s267] sm:$0xff]
  %270 = vrot.lane.b32.xlu0 %v268, 96
  %v271 = vpop.permute.xlu0 %270
  %v273 = vmul.f32 %v211, %v271
  %275 = vrot.lane.b32.xlu0 %v273, 32
  %v276 = vpop.permute.xlu0 %275
  %v278 = vsel %vm108, %v276, 0.0
  %279 = vadd.xlane.f32.xlu0 %v278
  %v280 = vpop.xlane.xlu0 %279
  %s281 = scalar_lea.vmem %s5, 40
  %v282 = vld [vmem:[%s281] sm:$0xff]
  %284 = vrot.lane.b32.xlu0 %v282, 96
  %v285 = vpop.permute.xlu0 %284
  %v287 = vmul.f32 %v211, %v285
  %289 = vrot.lane.b32.xlu0 %v287, 32
  %v290 = vpop.permute.xlu0 %289
  %v292 = vsel %vm108, %v290, 0.0
  %293 = vadd.xlane.f32.xlu0 %v292
  %v294 = vpop.xlane.xlu0 %293
  %s295 = scalar_lea.vmem %s5, 48
  %v296 = vld [vmem:[%s295] sm:$0xff]
  %298 = vrot.lane.b32.xlu0 %v296, 96
  %v299 = vpop.permute.xlu0 %298
  %v301 = vmul.f32 %v211, %v299
  %303 = vrot.lane.b32.xlu0 %v301, 32
  %v304 = vpop.permute.xlu0 %303
  %v306 = vsel %vm108, %v304, 0.0
  %307 = vadd.xlane.f32.xlu0 %v306
  %v308 = vpop.xlane.xlu0 %307
  %s309 = scalar_lea.vmem %s5, 56
  %v310 = vld [vmem:[%s309] sm:$0xff]
  %312 = vrot.lane.b32.xlu0 %v310, 96
  %v313 = vpop.permute.xlu0 %312
  %v315 = vmul.f32 %v211, %v313
  %317 = vrot.lane.b32.xlu0 %v315, 32
  %v318 = vpop.permute.xlu0 %317
  %v320 = vsel %vm108, %v318, 0.0
  %321 = vadd.xlane.f32.xlu0 %v320
  %v322 = vpop.xlane.xlu0 %321
  %vm323 = vcmask 7168
  %v324 = vsel %vm323, %v224, %v238
  %vm325 = vcmask 15360
  %v326 = vsel %vm325, %v324, %v252
  %vm327 = vcmask 23552
  %v328 = vsel %vm327, %v326, %v266
  %vm329 = vcmask 31744
  %v330 = vsel %vm329, %v328, %v280
  %vm331 = vcmask 39936
  %v332 = vsel %vm331, %v330, %v294
  %vm333 = vcmask 48128
  %v334 = vsel %vm333, %v332, %v308
  %vm335 = vcmask 56320
  %v336 = vsel %vm335, %v334, %v322
  %vm337 = vcmask 64512
  %v338 = vsel %vm337, %v336, -inf
  %339 = vmax.xlane.f32.xlu0 %v338
  %v340 = vpop.xlane.xlu0 %339
  %v341 = vsub.f32 %v336, %v340
  %v342 = vmul.f32 %v341, 1.442695
  %v343 = vpow.pop %v342
  %v344 = vsel %vm337, %v343, 0.0
  %345 = vadd.xlane.f32.xlu0 %v344
  %v346 = vpop.xlane.xlu0 %345
  %v347 = vrcp.pop %v346
  %v348 = vmul.f32 %v343, %v347
  %v349 = vld [vmem:[%s6] sm:$0xff]
  %351 = vset.pattern.permute.xlu0 0
  %352 = vperm.xlu0 %351, %v348
  %v353 = vpop.permute.xlu0 %352
  %v355 = vmul.f32 %v353, %v349
  %s356 = scalar_lea.vmem %s6, 8
  %v357 = vld [vmem:[%s356] sm:$0xff]
  %358 = vset.pattern.permute.xlu0 1
  %359 = vperm.xlu0 %358, %v348
  %v360 = vpop.permute.xlu0 %359
  %v362 = vmul.f32 %v360, %v357
  %v363 = vadd.f32 %v355, %v362
  %s364 = scalar_lea.vmem %s6, 16
  %v365 = vld [vmem:[%s364] sm:$0xff]
  %366 = vset.pattern.permute.xlu0 2
  %367 = vperm.xlu0 %366, %v348
  %v368 = vpop.permute.xlu0 %367
  %v370 = vmul.f32 %v368, %v365
  %v371 = vadd.f32 %v363, %v370
  %s372 = scalar_lea.vmem %s6, 24
  %v373 = vld [vmem:[%s372] sm:$0xff]
  %374 = vset.pattern.permute.xlu0 3
  %375 = vperm.xlu0 %374, %v348
  %v376 = vpop.permute.xlu0 %375
  %v378 = vmul.f32 %v376, %v373
  %v379 = vadd.f32 %v371, %v378
  %s380 = scalar_lea.vmem %s6, 32
  %v381 = vld [vmem:[%s380] sm:$0xff]
  %382 = vset.pattern.permute.xlu0 4
  %383 = vperm.xlu0 %382, %v348
  %v384 = vpop.permute.xlu0 %383
  %v386 = vmul.f32 %v384, %v381
  %v387 = vadd.f32 %v379, %v386
  %s388 = scalar_lea.vmem %s6, 40
  %v389 = vld [vmem:[%s388] sm:$0xff]
  %390 = vset.pattern.permute.xlu0 5
  %391 = vperm.xlu0 %390, %v348
  %v392 = vpop.permute.xlu0 %391
  %v394 = vmul.f32 %v392, %v389
  %v395 = vadd.f32 %v387, %v394
  %s396 = scalar_lea.vmem %s6, 48
  %v397 = vld [vmem:[%s396] sm:$0xff]
  %398 = vset.pattern.permute.xlu0 6
  %399 = vperm.xlu0 %398, %v348
  %v400 = vpop.permute.xlu0 %399
  %v402 = vmul.f32 %v400, %v397
  %v403 = vadd.f32 %v395, %v402
  %s404 = scalar_lea.vmem %s6, 56
  %v405 = vld [vmem:[%s404] sm:$0xff]
  %406 = vset.pattern.permute.xlu0 7
  %407 = vperm.xlu0 %406, %v348
  %v408 = vpop.permute.xlu0 %407
  %v410 = vmul.f32 %v408, %v405
  %v411 = vadd.f32 %v403, %v410
  %413 = vrot.lane.b32.xlu0 %v211, 64
  %v414 = vpop.permute.xlu0 %413
  %v416 = vsel %vm108, %v411, %v414
  %v418 = vsel %vm110, %v416, 0
  %420 = vmatprep.subr.mxu0 0.0
  %421 = vmatpush1.msra.mxu0 %v69
  %422 = vmatprep.subr.mxu0 0.0
  %423 = vmatpush1.msra.mxu0 %v70
  %424 = vmatprep.subr.mxu0 0.0
  %425 = vmatpush1.msra.mxu0 %v71
  %426 = vmatprep.subr.mxu0 0.0
  %427 = vmatpush1.msra.mxu0 %v72
  %428 = vmatprep.subr.mxu0 0.0
  %429 = vmatpush1.msra.mxu0 %v73
  %430 = vmatprep.subr.mxu0 0.0
  %431 = vmatpush1.msra.mxu0 %v74
  %432 = vmatprep.subr.mxu0 0.0
  %433 = vmatpush1.msra.mxu0 %v75
  %434 = vmatprep.subr.mxu0 0.0
  %435 = vmatpush1.msra.mxu0 %v76
  %436 = vmatprep.subr.mxu0 0.0
  %437 = vmatpush1.msra.mxu0 0.0
  %438 = vmatprep.subr.mxu0 0.0
  %439 = vmatpush1.msra.mxu0 0.0
  %440 = vmatprep.subr.mxu0 0.0
  %441 = vmatpush1.msra.mxu0 0.0
  %442 = vmatprep.subr.mxu0 0.0
  %443 = vmatpush1.msra.mxu0 0.0
  %444 = vmatprep.subr.mxu0 0.0
  %445 = vmatpush1.msra.mxu0 0.0
  %446 = vmatprep.subr.mxu0 0.0
  %447 = vmatpush1.msra.mxu0 0.0
  %448 = vmatprep.subr.mxu0 0.0
  %449 = vmatpush1.msra.mxu0 0.0
  %450 = vmatprep.subr.mxu0 0.0
  %451 = vmatpush1.msra.mxu0 0.0
  %452 = vmatprep.subr.mxu0 0.0
  %453 = vmatpush1.msra.mxu0 0.0
  %454 = vmatprep.subr.mxu0 0.0
  %455 = vmatpush1.msra.mxu0 0.0
  %456 = vmatprep.subr.mxu0 0.0
  %457 = vmatpush1.msra.mxu0 0.0
  %458 = vmatprep.subr.mxu0 0.0
  %459 = vmatpush1.msra.mxu0 0.0
  %460 = vmatprep.subr.mxu0 0.0
  %461 = vmatpush1.msra.mxu0 0.0
  %462 = vmatprep.subr.mxu0 0.0
  %463 = vmatpush1.msra.mxu0 0.0
  %464 = vmatprep.subr.mxu0 0.0
  %465 = vmatpush1.msra.mxu0 0.0
  %466 = vmatprep.subr.mxu0 0.0
  %467 = vmatpush1.msra.mxu0 0.0
  %468 = vmatprep.subr.mxu0 0.0
  %469 = vmatpush1.msra.mxu0 0.0
  %470 = vmatprep.subr.mxu0 0.0
  %471 = vmatpush1.msra.mxu0 0.0
  %472 = vmatprep.subr.mxu0 0.0
  %473 = vmatpush1.msra.mxu0 0.0
  %474 = vmatprep.subr.mxu0 0.0
  %475 = vmatpush1.msra.mxu0 0.0
  %476 = vmatprep.subr.mxu0 0.0
  %477 = vmatpush1.msra.mxu0 0.0
  %478 = vmatprep.subr.mxu0 0.0
  %479 = vmatpush1.msra.mxu0 0.0
  %480 = vmatprep.subr.mxu0 0.0
  %481 = vmatpush1.msra.mxu0 0.0
  %482 = vmatprep.subr.mxu0 0.0
  %483 = vmatpush1.msra.mxu0 0.0
  %484 = vmatprep.mubr.f32.mxu0 0.0
  %485 = vmatmul.mubr.f32.gmra.mrb[0].mxu0 %v418
  %v486 = vpop.f32.mrb[0].mxu0
  %v487 = vadd.f32 %v82, %v486
  %v488 = vpop.f32.mrb[0].mxu0
  %489 = vdwg.mxu0
  %v490 = vtanh.pop %v487
  %v492 = vsel %vm108, %v490, 0
  %494 = vmatprep.subr.mxu0 0.0
  %495 = vmatpush1.msra.mxu0 %v84
  %496 = vmatprep.subr.mxu0 0.0
  %497 = vmatpush1.msra.mxu0 %v85
  %498 = vmatprep.subr.mxu0 0.0
  %499 = vmatpush1.msra.mxu0 %v86
  %500 = vmatprep.subr.mxu0 0.0
  %501 = vmatpush1.msra.mxu0 %v87
  %502 = vmatprep.subr.mxu0 0.0
  %503 = vmatpush1.msra.mxu0 0.0
  %504 = vmatprep.subr.mxu0 0.0
  %505 = vmatpush1.msra.mxu0 0.0
  %506 = vmatprep.subr.mxu0 0.0
  %507 = vmatpush1.msra.mxu0 0.0
  %508 = vmatprep.subr.mxu0 0.0
  %509 = vmatpush1.msra.mxu0 0.0
  %510 = vmatprep.subr.mxu0 0.0
  %511 = vmatpush1.msra.mxu0 0.0
  %512 = vmatprep.subr.mxu0 0.0
  %513 = vmatpush1.msra.mxu0 0.0
  %514 = vmatprep.subr.mxu0 0.0
  %515 = vmatpush1.msra.mxu0 0.0
  %516 = vmatprep.subr.mxu0 0.0
  %517 = vmatpush1.msra.mxu0 0.0
  %518 = vmatprep.subr.mxu0 0.0
  %519 = vmatpush1.msra.mxu0 0.0
  %520 = vmatprep.subr.mxu0 0.0
  %521 = vmatpush1.msra.mxu0 0.0
  %522 = vmatprep.subr.mxu0 0.0
  %523 = vmatpush1.msra.mxu0 0.0
  %524 = vmatprep.subr.mxu0 0.0
  %525 = vmatpush1.msra.mxu0 0.0
  %526 = vmatprep.subr.mxu0 0.0
  %527 = vmatpush1.msra.mxu0 0.0
  %528 = vmatprep.subr.mxu0 0.0
  %529 = vmatpush1.msra.mxu0 0.0
  %530 = vmatprep.subr.mxu0 0.0
  %531 = vmatpush1.msra.mxu0 0.0
  %532 = vmatprep.subr.mxu0 0.0
  %533 = vmatpush1.msra.mxu0 0.0
  %534 = vmatprep.subr.mxu0 0.0
  %535 = vmatpush1.msra.mxu0 0.0
  %536 = vmatprep.subr.mxu0 0.0
  %537 = vmatpush1.msra.mxu0 0.0
  %538 = vmatprep.subr.mxu0 0.0
  %539 = vmatpush1.msra.mxu0 0.0
  %540 = vmatprep.subr.mxu0 0.0
  %541 = vmatpush1.msra.mxu0 0.0
  %542 = vmatprep.subr.mxu0 0.0
  %543 = vmatpush1.msra.mxu0 0.0
  %544 = vmatprep.subr.mxu0 0.0
  %545 = vmatpush1.msra.mxu0 0.0
  %546 = vmatprep.subr.mxu0 0.0
  %547 = vmatpush1.msra.mxu0 0.0
  %548 = vmatprep.subr.mxu0 0.0
  %549 = vmatpush1.msra.mxu0 0.0
  %550 = vmatprep.subr.mxu0 0.0
  %551 = vmatpush1.msra.mxu0 0.0
  %552 = vmatprep.subr.mxu0 0.0
  %553 = vmatpush1.msra.mxu0 0.0
  %554 = vmatprep.subr.mxu0 0.0
  %555 = vmatpush1.msra.mxu0 0.0
  %556 = vmatprep.subr.mxu0 0.0
  %557 = vmatpush1.msra.mxu0 0.0
  %558 = vmatprep.mubr.f32.mxu0 0.0
  %559 = vmatmul.mubr.f32.gmra.mrb[0].mxu0 %v492
  %v560 = vpop.f32.mrb[0].mxu0
  %v561 = vadd.f32 %v93, %v560
  %v562 = vpop.f32.mrb[0].mxu0
  %563 = vdwg.mxu0
  %564 = vst [vmem:[%s11] sm:$0xff] %v561
  %v565 = vsel %vm97, %v561, -inf
  %566 = vmax.xlane.f32.xlu0 %v565
  %v567 = vpop.xlane.xlu0 %566
  %vm568 = vcmp.eq.f32.partialorder %v565, %v567
  %v569 = vsel %vm568, %v96, 128
  %v570 = vand.u32 %v569, 65535
  %v571 = vshra.s32 %v569, 16
  %v572 = vcvt.s32.f32 %v570
  %v573 = vcvt.s32.f32 %v571
  %574 = vmin.xlane.f32.xlu0 %v573
  %v575 = vpop.xlane.xlu0 %574
  %vm576 = vcmp.eq.f32.partialorder %v573, %v575
  %v577 = vsel %vm576, %v572, inf
  %578 = vmin.xlane.f32.xlu0 %v577
  %v579 = vpop.xlane.xlu0 %578
  %v580 = vcvt.f32.s32 %v579
  %v581 = vcvt.f32.s32 %v575
  %v582 = vshll.u32 %v581, 16
  %v583 = vadd.s32 %v582, %v580
  %vm584 = vcmp.eq.s32.totalorder %v96, %v583
  %v585 = vsel %vm584, 1, 0
  %v586 = vcvt.s32.f32 %v585
  %587 = vmatprep.subr.mxu0 0.0
  %588 = vmatpush1.msra.mxu0 %v38
  %589 = vmatprep.subr.mxu0 0.0
  %590 = vmatpush1.msra.mxu0 %v39
  %591 = vmatprep.subr.mxu0 0.0
  %592 = vmatpush1.msra.mxu0 %v40
  %593 = vmatprep.subr.mxu0 0.0
  %594 = vmatpush1.msra.mxu0 %v41
  %595 = vmatprep.subr.mxu0 0.0
  %596 = vmatpush1.msra.mxu0 %v42
  %597 = vmatprep.subr.mxu0 0.0
  %598 = vmatpush1.msra.mxu0 %v43
  %599 = vmatprep.subr.mxu0 0.0
  %600 = vmatpush1.msra.mxu0 %v44
  %601 = vmatprep.subr.mxu0 0.0
  %602 = vmatpush1.msra.mxu0 %v45
  %603 = vmatprep.subr.mxu0 0.0
  %604 = vmatpush1.msra.mxu0 %v46
  %605 = vmatprep.subr.mxu0 0.0
  %606 = vmatpush1.msra.mxu0 %v47
  %607 = vmatprep.subr.mxu0 0.0
  %608 = vmatpush1.msra.mxu0 %v48
  %609 = vmatprep.subr.mxu0 0.0
  %610 = vmatpush1.msra.mxu0 %v49
  %611 = vmatprep.subr.mxu0 0.0
  %612 = vmatpush1.msra.mxu0 %v50
  %613 = vmatprep.subr.mxu0 0.0
  %614 = vmatpush1.msra.mxu0 %v51
  %615 = vmatprep.subr.mxu0 0.0
  %616 = vmatpush1.msra.mxu0 %v52
  %617 = vmatprep.subr.mxu0 0.0
  %618 = vmatpush1.msra.mxu0 %v53
  %619 = vmatprep.subr.mxu0 0.0
  %620 = vmatpush1.msra.mxu0 0.0
  %621 = vmatprep.subr.mxu0 0.0
  %622 = vmatpush1.msra.mxu0 0.0
  %623 = vmatprep.subr.mxu0 0.0
  %624 = vmatpush1.msra.mxu0 0.0
  %625 = vmatprep.subr.mxu0 0.0
  %626 = vmatpush1.msra.mxu0 0.0
  %627 = vmatprep.subr.mxu0 0.0
  %628 = vmatpush1.msra.mxu0 0.0
  %629 = vmatprep.subr.mxu0 0.0
  %630 = vmatpush1.msra.mxu0 0.0
  %631 = vmatprep.subr.mxu0 0.0
  %632 = vmatpush1.msra.mxu0 0.0
  %633 = vmatprep.subr.mxu0 0.0
  %634 = vmatpush1.msra.mxu0 0.0
  %635 = vmatprep.subr.mxu0 0.0
  %636 = vmatpush1.msra.mxu0 0.0
  %637 = vmatprep.subr.mxu0 0.0
  %638 = vmatpush1.msra.mxu0 0.0
  %639 = vmatprep.subr.mxu0 0.0
  %640 = vmatpush1.msra.mxu0 0.0
  %641 = vmatprep.subr.mxu0 0.0
  %642 = vmatpush1.msra.mxu0 0.0
  %643 = vmatprep.subr.mxu0 0.0
  %644 = vmatpush1.msra.mxu0 0.0
  %645 = vmatprep.subr.mxu0 0.0
  %646 = vmatpush1.msra.mxu0 0.0
  %647 = vmatprep.subr.mxu0 0.0
  %648 = vmatpush1.msra.mxu0 0.0
  %649 = vmatprep.subr.mxu0 0.0
  %650 = vmatpush1.msra.mxu0 0.0
  %651 = vmatprep.mubr.f32.mxu0 0.0
  %652 = vmatmul.mubr.f32.gmra.mrb[0].mxu0 %v586
  %v653 = vpop.f32.mrb[0].mxu0
  %v654 = vadd.f32 0.0, %v653
  %v655 = vpop.f32.mrb[0].mxu0
  %656 = vdwg.mxu0
  %657 = vrot.lane.b32.xlu0 %v490, 32
  %v658 = vpop.permute.xlu0 %657
  %v660 = vsel %vm108, %v654, %v658
  %v662 = vsel %vm110, %v660, 0
  %664 = vmatprep.subr.mxu0 0.0
  %665 = vmatpush1.msra.mxu0 %v54
  %666 = vmatprep.subr.mxu0 0.0
  %667 = vmatpush1.msra.mxu0 %v55
  %668 = vmatprep.subr.mxu0 0.0
  %669 = vmatpush1.msra.mxu0 %v56
  %670 = vmatprep.subr.mxu0 0.0
  %671 = vmatpush1.msra.mxu0 %v57
  %672 = vmatprep.subr.mxu0 0.0
  %673 = vmatpush1.msra.mxu0 %v58
  %674 = vmatprep.subr.mxu0 0.0
  %675 = vmatpush1.msra.mxu0 %v59
  %676 = vmatprep.subr.mxu0 0.0
  %677 = vmatpush1.msra.mxu0 %v60
  %678 = vmatprep.subr.mxu0 0.0
  %679 = vmatpush1.msra.mxu0 %v61
  %680 = vmatprep.subr.mxu0 0.0
  %681 = vmatpush1.msra.mxu0 0.0
  %682 = vmatprep.subr.mxu0 0.0
  %683 = vmatpush1.msra.mxu0 0.0
  %684 = vmatprep.subr.mxu0 0.0
  %685 = vmatpush1.msra.mxu0 0.0
  %686 = vmatprep.subr.mxu0 0.0
  %687 = vmatpush1.msra.mxu0 0.0
  %688 = vmatprep.subr.mxu0 0.0
  %689 = vmatpush1.msra.mxu0 0.0
  %690 = vmatprep.subr.mxu0 0.0
  %691 = vmatpush1.msra.mxu0 0.0
  %692 = vmatprep.subr.mxu0 0.0
  %693 = vmatpush1.msra.mxu0 0.0
  %694 = vmatprep.subr.mxu0 0.0
  %695 = vmatpush1.msra.mxu0 0.0
  %696 = vmatprep.subr.mxu0 0.0
  %697 = vmatpush1.msra.mxu0 0.0
  %698 = vmatprep.subr.mxu0 0.0
  %699 = vmatpush1.msra.mxu0 0.0
  %700 = vmatprep.subr.mxu0 0.0
  %701 = vmatpush1.msra.mxu0 0.0
  %702 = vmatprep.subr.mxu0 0.0
  %703 = vmatpush1.msra.mxu0 0.0
  %704 = vmatprep.subr.mxu0 0.0
  %705 = vmatpush1.msra.mxu0 0.0
  %706 = vmatprep.subr.mxu0 0.0
  %707 = vmatpush1.msra.mxu0 0.0
  %708 = vmatprep.subr.mxu0 0.0
  %709 = vmatpush1.msra.mxu0 0.0
  %710 = vmatprep.subr.mxu0 0.0
  %711 = vmatpush1.msra.mxu0 0.0
  %712 = vmatprep.subr.mxu0 0.0
  %713 = vmatpush1.msra.mxu0 0.0
  %714 = vmatprep.subr.mxu0 0.0
  %715 = vmatpush1.msra.mxu0 0.0
  %716 = vmatprep.subr.mxu0 0.0
  %717 = vmatpush1.msra.mxu0 0.0
  %718 = vmatprep.subr.mxu0 0.0
  %719 = vmatpush1.msra.mxu0 0.0
  %720 = vmatprep.subr.mxu0 0.0
  %721 = vmatpush1.msra.mxu0 0.0
  %722 = vmatprep.subr.mxu0 0.0
  %723 = vmatpush1.msra.mxu0 0.0
  %724 = vmatprep.subr.mxu0 0.0
  %725 = vmatpush1.msra.mxu0 0.0
  %726 = vmatprep.subr.mxu0 0.0
  %727 = vmatpush1.msra.mxu0 0.0
  %728 = vmatprep.mubr.f32.mxu0 0.0
  %729 = vmatmul.mubr.f32.gmra.mrb[0].mxu0 %v662
  %v730 = vpop.f32.mrb[0].mxu0
  %v731 = vadd.f32 %v67, %v730
  %v732 = vpop.f32.mrb[0].mxu0
  %733 = vdwg.mxu0
  %v734 = vxor.u32 %v731, 2147483648
  %v735 = vmul.f32 %v734, 1.442695
  %v736 = vpow.pop %v735
  %v737 = vadd.f32 %v736, 1.0
  %v738 = vrcp.pop %v737
  %v739 = vmul.f32 1.0, %v738
  %v740 = vtanh.pop %v731
  %v741 = vmul.f32 %v739, %v205
  %743 = vrot.lane.b32.xlu0 %v740, 64
  %v744 = vpop.permute.xlu0 %743
  %v746 = vmul.f32 %v739, %v744
  %748 = vrot.lane.b32.xlu0 %v746, 32
  %v749 = vpop.permute.xlu0 %748
  %v751 = vadd.f32 %v741, %v749
  %v752 = vtanh.pop %v751
  %754 = vrot.lane.b32.xlu0 %v752, 64
  %v755 = vpop.permute.xlu0 %754
  %v757 = vmul.f32 %v739, %v755
  %v758 = vld [vmem:[%s5] sm:$0xff]
  %760 = vrot.lane.b32.xlu0 %v758, 96
  %v761 = vpop.permute.xlu0 %760
  %v763 = vmul.f32 %v757, %v761
  %765 = vrot.lane.b32.xlu0 %v763, 32
  %v766 = vpop.permute.xlu0 %765
  %v768 = vsel %vm108, %v766, 0.0
  %769 = vadd.xlane.f32.xlu0 %v768
  %v770 = vpop.xlane.xlu0 %769
  %v771 = vld [vmem:[%s225] sm:$0xff]
  %773 = vrot.lane.b32.xlu0 %v771, 96
  %v774 = vpop.permute.xlu0 %773
  %v776 = vmul.f32 %v757, %v774
  %778 = vrot.lane.b32.xlu0 %v776, 32
  %v779 = vpop.permute.xlu0 %778
  %v781 = vsel %vm108, %v779, 0.0
  %782 = vadd.xlane.f32.xlu0 %v781
  %v783 = vpop.xlane.xlu0 %782
  %v784 = vld [vmem:[%s239] sm:$0xff]
  %786 = vrot.lane.b32.xlu0 %v784, 96
  %v787 = vpop.permute.xlu0 %786
  %v789 = vmul.f32 %v757, %v787
  %791 = vrot.lane.b32.xlu0 %v789, 32
  %v792 = vpop.permute.xlu0 %791
  %v794 = vsel %vm108, %v792, 0.0
  %795 = vadd.xlane.f32.xlu0 %v794
  %v796 = vpop.xlane.xlu0 %795
  %v797 = vld [vmem:[%s253] sm:$0xff]
  %799 = vrot.lane.b32.xlu0 %v797, 96
  %v800 = vpop.permute.xlu0 %799
  %v802 = vmul.f32 %v757, %v800
  %804 = vrot.lane.b32.xlu0 %v802, 32
  %v805 = vpop.permute.xlu0 %804
  %v807 = vsel %vm108, %v805, 0.0
  %808 = vadd.xlane.f32.xlu0 %v807
  %v809 = vpop.xlane.xlu0 %808
  %v810 = vld [vmem:[%s267] sm:$0xff]
  %812 = vrot.lane.b32.xlu0 %v810, 96
  %v813 = vpop.permute.xlu0 %812
  %v815 = vmul.f32 %v757, %v813
  %817 = vrot.lane.b32.xlu0 %v815, 32
  %v818 = vpop.permute.xlu0 %817
  %v820 = vsel %vm108, %v818, 0.0
  %821 = vadd.xlane.f32.xlu0 %v820
  %v822 = vpop.xlane.xlu0 %821
  %v823 = vld [vmem:[%s281] sm:$0xff]
  %825 = vrot.lane.b32.xlu0 %v823, 96
  %v826 = vpop.permute.xlu0 %825
  %v828 = vmul.f32 %v757, %v826
  %830 = vrot.lane.b32.xlu0 %v828, 32
  %v831 = vpop.permute.xlu0 %830
  %v833 = vsel %vm108, %v831, 0.0
  %834 = vadd.xlane.f32.xlu0 %v833
  %v835 = vpop.xlane.xlu0 %834
  %v836 = vld [vmem:[%s295] sm:$0xff]
  %838 = vrot.lane.b32.xlu0 %v836, 96
  %v839 = vpop.permute.xlu0 %838
  %v841 = vmul.f32 %v757, %v839
  %843 = vrot.lane.b32.xlu0 %v841, 32
  %v844 = vpop.permute.xlu0 %843
  %v846 = vsel %vm108, %v844, 0.0
  %847 = vadd.xlane.f32.xlu0 %v846
  %v848 = vpop.xlane.xlu0 %847
  %v849 = vld [vmem:[%s309] sm:$0xff]
  %851 = vrot.lane.b32.xlu0 %v849, 96
  %v852 = vpop.permute.xlu0 %851
  %v854 = vmul.f32 %v757, %v852
  %856 = vrot.lane.b32.xlu0 %v854, 32
  %v857 = vpop.permute.xlu0 %856
  %v859 = vsel %vm108, %v857, 0.0
  %860 = vadd.xlane.f32.xlu0 %v859
  %v861 = vpop.xlane.xlu0 %860
  %v862 = vsel %vm323, %v770, %v783
  %v863 = vsel %vm325, %v862, %v796
  %v864 = vsel %vm327, %v863, %v809
  %v865 = vsel %vm329, %v864, %v822
  %v866 = vsel %vm331, %v865, %v835
  %v867 = vsel %vm333, %v866, %v848
  %v868 = vsel %vm335, %v867, %v861
  %v869 = vsel %vm337, %v868, -inf
  %870 = vmax.xlane.f32.xlu0 %v869
  %v871 = vpop.xlane.xlu0 %870
  %v872 = vsub.f32 %v868, %v871
  %v873 = vmul.f32 %v872, 1.442695
  %v874 = vpow.pop %v873
  %v875 = vsel %vm337, %v874, 0.0
  %876 = vadd.xlane.f32.xlu0 %v875
  %v877 = vpop.xlane.xlu0 %876
  %v878 = vrcp.pop %v877
  %v879 = vmul.f32 %v874, %v878
  %v880 = vld [vmem:[%s6] sm:$0xff]
  %882 = vset.pattern.permute.xlu0 0
  %883 = vperm.xlu0 %882, %v879
  %v884 = vpop.permute.xlu0 %883
  %v886 = vmul.f32 %v884, %v880
  %v887 = vld [vmem:[%s356] sm:$0xff]
  %888 = vset.pattern.permute.xlu0 1
  %889 = vperm.xlu0 %888, %v879
  %v890 = vpop.permute.xlu0 %889
  %v892 = vmul.f32 %v890, %v887
  %v893 = vadd.f32 %v886, %v892
  %v894 = vld [vmem:[%s364] sm:$0xff]
  %895 = vset.pattern.permute.xlu0 2
  %896 = vperm.xlu0 %895, %v879
  %v897 = vpop.permute.xlu0 %896
  %v899 = vmul.f32 %v897, %v894
  %v900 = vadd.f32 %v893, %v899
  %v901 = vld [vmem:[%s372] sm:$0xff]
  %902 = vset.pattern.permute.xlu0 3
  %903 = vperm.xlu0 %902, %v879
  %v904 = vpop.permute.xlu0 %903
  %v906 = vmul.f32 %v904, %v901
  %v907 = vadd.f32 %v900, %v906
  %v908 = vld [vmem:[%s380] sm:$0xff]
  %909 = vset.pattern.permute.xlu0 4
  %910 = vperm.xlu0 %909, %v879
  %v911 = vpop.permute.xlu0 %910
  %v913 = vmul.f32 %v911, %v908
  %v914 = vadd.f32 %v907, %v913
  %v915 = vld [vmem:[%s388] sm:$0xff]
  %916 = vset.pattern.permute.xlu0 5
  %917 = vperm.xlu0 %916, %v879
  %v918 = vpop.permute.xlu0 %917
  %v920 = vmul.f32 %v918, %v915
  %v921 = vadd.f32 %v914, %v920
  %v922 = vld [vmem:[%s396] sm:$0xff]
  %923 = vset.pattern.permute.xlu0 6
  %924 = vperm.xlu0 %923, %v879
  %v925 = vpop.permute.xlu0 %924
  %v927 = vmul.f32 %v925, %v922
  %v928 = vadd.f32 %v921, %v927
  %v929 = vld [vmem:[%s404] sm:$0xff]
  %930 = vset.pattern.permute.xlu0 7
  %931 = vperm.xlu0 %930, %v879
  %v932 = vpop.permute.xlu0 %931
  %v934 = vmul.f32 %v932, %v929
  %v935 = vadd.f32 %v928, %v934
  %937 = vrot.lane.b32.xlu0 %v757, 64
  %v938 = vpop.permute.xlu0 %937
  %v940 = vsel %vm108, %v935, %v938
  %v942 = vsel %vm110, %v940, 0
  %944 = vmatprep.subr.mxu0 0.0
  %945 = vmatpush1.msra.mxu0 %v69
  %946 = vmatprep.subr.mxu0 0.0
  %947 = vmatpush1.msra.mxu0 %v70
  %948 = vmatprep.subr.mxu0 0.0
  %949 = vmatpush1.msra.mxu0 %v71
  %950 = vmatprep.subr.mxu0 0.0
  %951 = vmatpush1.msra.mxu0 %v72
  %952 = vmatprep.subr.mxu0 0.0
  %953 = vmatpush1.msra.mxu0 %v73
  %954 = vmatprep.subr.mxu0 0.0
  %955 = vmatpush1.msra.mxu0 %v74
  %956 = vmatprep.subr.mxu0 0.0
  %957 = vmatpush1.msra.mxu0 %v75
  %958 = vmatprep.subr.mxu0 0.0
  %959 = vmatpush1.msra.mxu0 %v76
  %960 = vmatprep.subr.mxu0 0.0
  %961 = vmatpush1.msra.mxu0 0.0
  %962 = vmatprep.subr.mxu0 0.0
  %963 = vmatpush1.msra.mxu0 0.0
  %964 = vmatprep.subr.mxu0 0.0
  %965 = vmatpush1.msra.mxu0 0.0
  %966 = vmatprep.subr.mxu0 0.0
  %967 = vmatpush1.msra.mxu0 0.0
  %968 = vmatprep.subr.mxu0 0.0
  %969 = vmatpush1.msra.mxu0 0.0
  %970 = vmatprep.subr.mxu0 0.0
  %971 = vmatpush1.msra.mxu0 0.0
  %972 = vmatprep.subr.mxu0 0.0
  %973 = vmatpush1.msra.mxu0 0.0
  %974 = vmatprep.subr.mxu0 0.0
  %975 = vmatpush1.msra.mxu0 0.0
  %976 = vmatprep.subr.mxu0 0.0
  %977 = vmatpush1.msra.mxu0 0.0
  %978 = vmatprep.subr.mxu0 0.0
  %979 = vmatpush1.msra.mxu0 0.0
  %980 = vmatprep.subr.mxu0 0.0
  %981 = vmatpush1.msra.mxu0 0.0
  %982 = vmatprep.subr.mxu0 0.0
  %983 = vmatpush1.msra.mxu0 0.0
  %984 = vmatprep.subr.mxu0 0.0
  %985 = vmatpush1.msra.mxu0 0.0
  %986 = vmatprep.subr.mxu0 0.0
  %987 = vmatpush1.msra.mxu0 0.0
  %988 = vmatprep.subr.mxu0 0.0
  %989 = vmatpush1.msra.mxu0 0.0
  %990 = vmatprep.subr.mxu0 0.0
  %991 = vmatpush1.msra.mxu0 0.0
  %992 = vmatprep.subr.mxu0 0.0
  %993 = vmatpush1.msra.mxu0 0.0
  %994 = vmatprep.subr.mxu0 0.0
  %995 = vmatpush1.msra.mxu0 0.0
  %996 = vmatprep.subr.mxu0 0.0
  %997 = vmatpush1.msra.mxu0 0.0
  %998 = vmatprep.subr.mxu0 0.0
  %999 = vmatpush1.msra.mxu0 0.0
  %1000 = vmatprep.subr.mxu0 0.0
  %1001 = vmatpush1.msra.mxu0 0.0
  %1002 = vmatprep.subr.mxu0 0.0
  %1003 = vmatpush1.msra.mxu0 0.0
  %1004 = vmatprep.subr.mxu0 0.0
  %1005 = vmatpush1.msra.mxu0 0.0
  %1006 = vmatprep.subr.mxu0 0.0
  %1007 = vmatpush1.msra.mxu0 0.0
  %1008 = vmatprep.mubr.f32.mxu0 0.0
  %1009 = vmatmul.mubr.f32.gmra.mrb[0].mxu0 %v942
  %v1010 = vpop.f32.mrb[0].mxu0
  %v1011 = vadd.f32 %v82, %v1010
  %v1012 = vpop.f32.mrb[0].mxu0
  %1013 = vdwg.mxu0
  %v1014 = vtanh.pop %v1011
  %v1016 = vsel %vm108, %v1014, 0
  %1018 = vmatprep.subr.mxu0 0.0
  %1019 = vmatpush1.msra.mxu0 %v84
  %1020 = vmatprep.subr.mxu0 0.0
  %1021 = vmatpush1.msra.mxu0 %v85
  %1022 = vmatprep.subr.mxu0 0.0
  %1023 = vmatpush1.msra.mxu0 %v86
  %1024 = vmatprep.subr.mxu0 0.0
  %1025 = vmatpush1.msra.mxu0 %v87
  %1026 = vmatprep.subr.mxu0 0.0
  %1027 = vmatpush1.msra.mxu0 0.0
  %1028 = vmatprep.subr.mxu0 0.0
  %1029 = vmatpush1.msra.mxu0 0.0
  %1030 = vmatprep.subr.mxu0 0.0
  %1031 = vmatpush1.msra.mxu0 0.0
  %1032 = vmatprep.subr.mxu0 0.0
  %1033 = vmatpush1.msra.mxu0 0.0
  %1034 = vmatprep.subr.mxu0 0.0
  %1035 = vmatpush1.msra.mxu0 0.0
  %1036 = vmatprep.subr.mxu0 0.0
  %1037 = vmatpush1.msra.mxu0 0.0
  %1038 = vmatprep.subr.mxu0 0.0
  %1039 = vmatpush1.msra.mxu0 0.0
  %1040 = vmatprep.subr.mxu0 0.0
  %1041 = vmatpush1.msra.mxu0 0.0
  %1042 = vmatprep.subr.mxu0 0.0
  %1043 = vmatpush1.msra.mxu0 0.0
  %1044 = vmatprep.subr.mxu0 0.0
  %1045 = vmatpush1.msra.mxu0 0.0
  %1046 = vmatprep.subr.mxu0 0.0
  %1047 = vmatpush1.msra.mxu0 0.0
  %1048 = vmatprep.subr.mxu0 0.0
  %1049 = vmatpush1.msra.mxu0 0.0
  %1050 = vmatprep.subr.mxu0 0.0
  %1051 = vmatpush1.msra.mxu0 0.0
  %1052 = vmatprep.subr.mxu0 0.0
  %1053 = vmatpush1.msra.mxu0 0.0
  %1054 = vmatprep.subr.mxu0 0.0
  %1055 = vmatpush1.msra.mxu0 0.0
  %1056 = vmatprep.subr.mxu0 0.0
  %1057 = vmatpush1.msra.mxu0 0.0
  %1058 = vmatprep.subr.mxu0 0.0
  %1059 = vmatpush1.msra.mxu0 0.0
  %1060 = vmatprep.subr.mxu0 0.0
  %1061 = vmatpush1.msra.mxu0 0.0
  %1062 = vmatprep.subr.mxu0 0.0
  %1063 = vmatpush1.msra.mxu0 0.0
  %1064 = vmatprep.subr.mxu0 0.0
  %1065 = vmatpush1.msra.mxu0 0.0
  %1066 = vmatprep.subr.mxu0 0.0
  %1067 = vmatpush1.msra.mxu0 0.0
  %1068 = vmatprep.subr.mxu0 0.0
  %1069 = vmatpush1.msra.mxu0 0.0
  %1070 = vmatprep.subr.mxu0 0.0
  %1071 = vmatpush1.msra.mxu0 0.0
  %1072 = vmatprep.subr.mxu0 0.0
  %1073 = vmatpush1.msra.mxu0 0.0
  %1074 = vmatprep.subr.mxu0 0.0
  %1075 = vmatpush1.msra.mxu0 0.0
  %1076 = vmatprep.subr.mxu0 0.0
  %1077 = vmatpush1.msra.mxu0 0.0
  %1078 = vmatprep.subr.mxu0 0.0
  %1079 = vmatpush1.msra.mxu0 0.0
  %1080 = vmatprep.subr.mxu0 0.0
  %1081 = vmatpush1.msra.mxu0 0.0
  %1082 = vmatprep.mubr.f32.mxu0 0.0
  %1083 = vmatmul.mubr.f32.gmra.mrb[0].mxu0 %v1016
  %v1084 = vpop.f32.mrb[0].mxu0
  %v1085 = vadd.f32 %v93, %v1084
  %v1086 = vpop.f32.mrb[0].mxu0
  %1087 = vdwg.mxu0
  %s1088 = scalar_lea.vmem %s11, 8
  %1089 = vst [vmem:[%s1088] sm:$0xff] %v1085
  %v1090 = vsel %vm97, %v1085, -inf
  %1091 = vmax.xlane.f32.xlu0 %v1090
  %v1092 = vpop.xlane.xlu0 %1091
  %vm1093 = vcmp.eq.f32.partialorder %v1090, %v1092
  %v1094 = vsel %vm1093, %v96, 128
  %v1095 = vand.u32 %v1094, 65535
  %v1096 = vshra.s32 %v1094, 16
  %v1097 = vcvt.s32.f32 %v1095
  %v1098 = vcvt.s32.f32 %v1096
  %1099 = vmin.xlane.f32.xlu0 %v1098
  %v1100 = vpop.xlane.xlu0 %1099
  %vm1101 = vcmp.eq.f32.partialorder %v1098, %v1100
  %v1102 = vsel %vm1101, %v1097, inf
  %1103 = vmin.xlane.f32.xlu0 %v1102
  %v1104 = vpop.xlane.xlu0 %1103
  %v1105 = vcvt.f32.s32 %v1104
  %v1106 = vcvt.f32.s32 %v1100
  %v1107 = vshll.u32 %v1106, 16
  %v1108 = vadd.s32 %v1107, %v1105
  %vm1109 = vcmp.eq.s32.totalorder %v96, %v1108
  %v1110 = vsel %vm1109, 1, 0
  %v1111 = vcvt.s32.f32 %v1110
  %1112 = vmatprep.subr.mxu0 0.0
  %1113 = vmatpush1.msra.mxu0 %v38
  %1114 = vmatprep.subr.mxu0 0.0
  %1115 = vmatpush1.msra.mxu0 %v39
  %1116 = vmatprep.subr.mxu0 0.0
  %1117 = vmatpush1.msra.mxu0 %v40
  %1118 = vmatprep.subr.mxu0 0.0
  %1119 = vmatpush1.msra.mxu0 %v41
  %1120 = vmatprep.subr.mxu0 0.0
  %1121 = vmatpush1.msra.mxu0 %v42
  %1122 = vmatprep.subr.mxu0 0.0
  %1123 = vmatpush1.msra.mxu0 %v43
  %1124 = vmatprep.subr.mxu0 0.0
  %1125 = vmatpush1.msra.mxu0 %v44
  %1126 = vmatprep.subr.mxu0 0.0
  %1127 = vmatpush1.msra.mxu0 %v45
  %1128 = vmatprep.subr.mxu0 0.0
  %1129 = vmatpush1.msra.mxu0 %v46
  %1130 = vmatprep.subr.mxu0 0.0
  %1131 = vmatpush1.msra.mxu0 %v47
  %1132 = vmatprep.subr.mxu0 0.0
  %1133 = vmatpush1.msra.mxu0 %v48
  %1134 = vmatprep.subr.mxu0 0.0
  %1135 = vmatpush1.msra.mxu0 %v49
  %1136 = vmatprep.subr.mxu0 0.0
  %1137 = vmatpush1.msra.mxu0 %v50
  %1138 = vmatprep.subr.mxu0 0.0
  %1139 = vmatpush1.msra.mxu0 %v51
  %1140 = vmatprep.subr.mxu0 0.0
  %1141 = vmatpush1.msra.mxu0 %v52
  %1142 = vmatprep.subr.mxu0 0.0
  %1143 = vmatpush1.msra.mxu0 %v53
  %1144 = vmatprep.subr.mxu0 0.0
  %1145 = vmatpush1.msra.mxu0 0.0
  %1146 = vmatprep.subr.mxu0 0.0
  %1147 = vmatpush1.msra.mxu0 0.0
  %1148 = vmatprep.subr.mxu0 0.0
  %1149 = vmatpush1.msra.mxu0 0.0
  %1150 = vmatprep.subr.mxu0 0.0
  %1151 = vmatpush1.msra.mxu0 0.0
  %1152 = vmatprep.subr.mxu0 0.0
  %1153 = vmatpush1.msra.mxu0 0.0
  %1154 = vmatprep.subr.mxu0 0.0
  %1155 = vmatpush1.msra.mxu0 0.0
  %1156 = vmatprep.subr.mxu0 0.0
  %1157 = vmatpush1.msra.mxu0 0.0
  %1158 = vmatprep.subr.mxu0 0.0
  %1159 = vmatpush1.msra.mxu0 0.0
  %1160 = vmatprep.subr.mxu0 0.0
  %1161 = vmatpush1.msra.mxu0 0.0
  %1162 = vmatprep.subr.mxu0 0.0
  %1163 = vmatpush1.msra.mxu0 0.0
  %1164 = vmatprep.subr.mxu0 0.0
  %1165 = vmatpush1.msra.mxu0 0.0
  %1166 = vmatprep.subr.mxu0 0.0
  %1167 = vmatpush1.msra.mxu0 0.0
  %1168 = vmatprep.subr.mxu0 0.0
  %1169 = vmatpush1.msra.mxu0 0.0
  %1170 = vmatprep.subr.mxu0 0.0
  %1171 = vmatpush1.msra.mxu0 0.0
  %1172 = vmatprep.subr.mxu0 0.0
  %1173 = vmatpush1.msra.mxu0 0.0
  %1174 = vmatprep.subr.mxu0 0.0
  %1175 = vmatpush1.msra.mxu0 0.0
  %1176 = vmatprep.mubr.f32.mxu0 0.0
  %1177 = vmatmul.mubr.f32.gmra.mrb[0].mxu0 %v1111
  %v1178 = vpop.f32.mrb[0].mxu0
  %v1179 = vadd.f32 0.0, %v1178
  %v1180 = vpop.f32.mrb[0].mxu0
  %1181 = vdwg.mxu0
  %1182 = vrot.lane.b32.xlu0 %v1014, 32
  %v1183 = vpop.permute.xlu0 %1182
  %v1185 = vsel %vm108, %v1179, %v1183
  %v1187 = vsel %vm110, %v1185, 0
  %1189 = vmatprep.subr.mxu0 0.0
  %1190 = vmatpush1.msra.mxu0 %v54
  %1191 = vmatprep.subr.mxu0 0.0
  %1192 = vmatpush1.msra.mxu0 %v55
  %1193 = vmatprep.subr.mxu0 0.0
  %1194 = vmatpush1.msra.mxu0 %v56
  %1195 = vmatprep.subr.mxu0 0.0
  %1196 = vmatpush1.msra.mxu0 %v57
  %1197 = vmatprep.subr.mxu0 0.0
  %1198 = vmatpush1.msra.mxu0 %v58
  %1199 = vmatprep.subr.mxu0 0.0
  %1200 = vmatpush1.msra.mxu0 %v59
  %1201 = vmatprep.subr.mxu0 0.0
  %1202 = vmatpush1.msra.mxu0 %v60
  %1203 = vmatprep.subr.mxu0 0.0
  %1204 = vmatpush1.msra.mxu0 %v61
  %1205 = vmatprep.subr.mxu0 0.0
  %1206 = vmatpush1.msra.mxu0 0.0
  %1207 = vmatprep.subr.mxu0 0.0
  %1208 = vmatpush1.msra.mxu0 0.0
  %1209 = vmatprep.subr.mxu0 0.0
  %1210 = vmatpush1.msra.mxu0 0.0
  %1211 = vmatprep.subr.mxu0 0.0
  %1212 = vmatpush1.msra.mxu0 0.0
  %1213 = vmatprep.subr.mxu0 0.0
  %1214 = vmatpush1.msra.mxu0 0.0
  %1215 = vmatprep.subr.mxu0 0.0
  %1216 = vmatpush1.msra.mxu0 0.0
  %1217 = vmatprep.subr.mxu0 0.0
  %1218 = vmatpush1.msra.mxu0 0.0
  %1219 = vmatprep.subr.mxu0 0.0
  %1220 = vmatpush1.msra.mxu0 0.0
  %1221 = vmatprep.subr.mxu0 0.0
  %1222 = vmatpush1.msra.mxu0 0.0
  %1223 = vmatprep.subr.mxu0 0.0
  %1224 = vmatpush1.msra.mxu0 0.0
  %1225 = vmatprep.subr.mxu0 0.0
  %1226 = vmatpush1.msra.mxu0 0.0
  %1227 = vmatprep.subr.mxu0 0.0
  %1228 = vmatpush1.msra.mxu0 0.0
  %1229 = vmatprep.subr.mxu0 0.0
  %1230 = vmatpush1.msra.mxu0 0.0
  %1231 = vmatprep.subr.mxu0 0.0
  %1232 = vmatpush1.msra.mxu0 0.0
  %1233 = vmatprep.subr.mxu0 0.0
  %1234 = vmatpush1.msra.mxu0 0.0
  %1235 = vmatprep.subr.mxu0 0.0
  %1236 = vmatpush1.msra.mxu0 0.0
  %1237 = vmatprep.subr.mxu0 0.0
  %1238 = vmatpush1.msra.mxu0 0.0
  %1239 = vmatprep.subr.mxu0 0.0
  %1240 = vmatpush1.msra.mxu0 0.0
  %1241 = vmatprep.subr.mxu0 0.0
  %1242 = vmatpush1.msra.mxu0 0.0
  %1243 = vmatprep.subr.mxu0 0.0
  %1244 = vmatpush1.msra.mxu0 0.0
  %1245 = vmatprep.subr.mxu0 0.0
  %1246 = vmatpush1.msra.mxu0 0.0
  %1247 = vmatprep.subr.mxu0 0.0
  %1248 = vmatpush1.msra.mxu0 0.0
  %1249 = vmatprep.subr.mxu0 0.0
  %1250 = vmatpush1.msra.mxu0 0.0
  %1251 = vmatprep.subr.mxu0 0.0
  %1252 = vmatpush1.msra.mxu0 0.0
  %1253 = vmatprep.mubr.f32.mxu0 0.0
  %1254 = vmatmul.mubr.f32.gmra.mrb[0].mxu0 %v1187
  %v1255 = vpop.f32.mrb[0].mxu0
  %v1256 = vadd.f32 %v67, %v1255
  %v1257 = vpop.f32.mrb[0].mxu0
  %1258 = vdwg.mxu0
  %v1259 = vxor.u32 %v1256, 2147483648
  %v1260 = vmul.f32 %v1259, 1.442695
  %v1261 = vpow.pop %v1260
  %v1262 = vadd.f32 %v1261, 1.0
  %v1263 = vrcp.pop %v1262
  %v1264 = vmul.f32 1.0, %v1263
  %v1265 = vtanh.pop %v1256
  %v1266 = vmul.f32 %v1264, %v751
  %1268 = vrot.lane.b32.xlu0 %v1265, 64
  %v1269 = vpop.permute.xlu0 %1268
  %v1271 = vmul.f32 %v1264, %v1269
  %1273 = vrot.lane.b32.xlu0 %v1271, 32
  %v1274 = vpop.permute.xlu0 %1273
  %v1276 = vadd.f32 %v1266, %v1274
  %v1277 = vtanh.pop %v1276
  %1279 = vrot.lane.b32.xlu0 %v1277, 64
  %v1280 = vpop.permute.xlu0 %1279
  %v1282 = vmul.f32 %v1264, %v1280
  %v1283 = vld [vmem:[%s5] sm:$0xff]
  %1285 = vrot.lane.b32.xlu0 %v1283, 96
  %v1286 = vpop.permute.xlu0 %1285
  %v1288 = vmul.f32 %v1282, %v1286
  %1290 = vrot.lane.b32.xlu0 %v1288, 32
  %v1291 = vpop.permute.xlu0 %1290
  %v1293 = vsel %vm108, %v1291, 0.0
  %1294 = vadd.xlane.f32.xlu0 %v1293
  %v1295 = vpop.xlane.xlu0 %1294
  %v1296 = vld [vmem:[%s225] sm:$0xff]
  %1298 = vrot.lane.b32.xlu0 %v1296, 96
  %v1299 = vpop.permute.xlu0 %1298
  %v1301 = vmul.f32 %v1282, %v1299
  %1303 = vrot.lane.b32.xlu0 %v1301, 32
  %v1304 = vpop.permute.xlu0 %1303
  %v1306 = vsel %vm108, %v1304, 0.0
  %1307 = vadd.xlane.f32.xlu0 %v1306
  %v1308 = vpop.xlane.xlu0 %1307
  %v1309 = vld [vmem:[%s239] sm:$0xff]
  %1311 = vrot.lane.b32.xlu0 %v1309, 96
  %v1312 = vpop.permute.xlu0 %1311
  %v1314 = vmul.f32 %v1282, %v1312
  %1316 = vrot.lane.b32.xlu0 %v1314, 32
  %v1317 = vpop.permute.xlu0 %1316
  %v1319 = vsel %vm108, %v1317, 0.0
  %1320 = vadd.xlane.f32.xlu0 %v1319
  %v1321 = vpop.xlane.xlu0 %1320
  %v1322 = vld [vmem:[%s253] sm:$0xff]
  %1324 = vrot.lane.b32.xlu0 %v1322, 96
  %v1325 = vpop.permute.xlu0 %1324
  %v1327 = vmul.f32 %v1282, %v1325
  %1329 = vrot.lane.b32.xlu0 %v1327, 32
  %v1330 = vpop.permute.xlu0 %1329
  %v1332 = vsel %vm108, %v1330, 0.0
  %1333 = vadd.xlane.f32.xlu0 %v1332
  %v1334 = vpop.xlane.xlu0 %1333
  %v1335 = vld [vmem:[%s267] sm:$0xff]
  %1337 = vrot.lane.b32.xlu0 %v1335, 96
  %v1338 = vpop.permute.xlu0 %1337
  %v1340 = vmul.f32 %v1282, %v1338
  %1342 = vrot.lane.b32.xlu0 %v1340, 32
  %v1343 = vpop.permute.xlu0 %1342
  %v1345 = vsel %vm108, %v1343, 0.0
  %1346 = vadd.xlane.f32.xlu0 %v1345
  %v1347 = vpop.xlane.xlu0 %1346
  %v1348 = vld [vmem:[%s281] sm:$0xff]
  %1350 = vrot.lane.b32.xlu0 %v1348, 96
  %v1351 = vpop.permute.xlu0 %1350
  %v1353 = vmul.f32 %v1282, %v1351
  %1355 = vrot.lane.b32.xlu0 %v1353, 32
  %v1356 = vpop.permute.xlu0 %1355
  %v1358 = vsel %vm108, %v1356, 0.0
  %1359 = vadd.xlane.f32.xlu0 %v1358
  %v1360 = vpop.xlane.xlu0 %1359
  %v1361 = vld [vmem:[%s295] sm:$0xff]
  %1363 = vrot.lane.b32.xlu0 %v1361, 96
  %v1364 = vpop.permute.xlu0 %1363
  %v1366 = vmul.f32 %v1282, %v1364
  %1368 = vrot.lane.b32.xlu0 %v1366, 32
  %v1369 = vpop.permute.xlu0 %1368
  %v1371 = vsel %vm108, %v1369, 0.0
  %1372 = vadd.xlane.f32.xlu0 %v1371
  %v1373 = vpop.xlane.xlu0 %1372
  %v1374 = vld [vmem:[%s309] sm:$0xff]
  %1376 = vrot.lane.b32.xlu0 %v1374, 96
  %v1377 = vpop.permute.xlu0 %1376
  %v1379 = vmul.f32 %v1282, %v1377
  %1381 = vrot.lane.b32.xlu0 %v1379, 32
  %v1382 = vpop.permute.xlu0 %1381
  %v1384 = vsel %vm108, %v1382, 0.0
  %1385 = vadd.xlane.f32.xlu0 %v1384
  %v1386 = vpop.xlane.xlu0 %1385
  %v1387 = vsel %vm323, %v1295, %v1308
  %v1388 = vsel %vm325, %v1387, %v1321
  %v1389 = vsel %vm327, %v1388, %v1334
  %v1390 = vsel %vm329, %v1389, %v1347
  %v1391 = vsel %vm331, %v1390, %v1360
  %v1392 = vsel %vm333, %v1391, %v1373
  %v1393 = vsel %vm335, %v1392, %v1386
  %v1394 = vsel %vm337, %v1393, -inf
  %1395 = vmax.xlane.f32.xlu0 %v1394
  %v1396 = vpop.xlane.xlu0 %1395
  %v1397 = vsub.f32 %v1393, %v1396
  %v1398 = vmul.f32 %v1397, 1.442695
  %v1399 = vpow.pop %v1398
  %v1400 = vsel %vm337, %v1399, 0.0
  %1401 = vadd.xlane.f32.xlu0 %v1400
  %v1402 = vpop.xlane.xlu0 %1401
  %v1403 = vrcp.pop %v1402
  %v1404 = vmul.f32 %v1399, %v1403
  %v1405 = vld [vmem:[%s6] sm:$0xff]
  %1407 = vset.pattern.permute.xlu0 0
  %1408 = vperm.xlu0 %1407, %v1404
  %v1409 = vpop.permute.xlu0 %1408
  %v1411 = vmul.f32 %v1409, %v1405
  %v1412 = vld [vmem:[%s356] sm:$0xff]
  %1413 = vset.pattern.permute.xlu0 1
  %1414 = vperm.xlu0 %1413, %v1404
  %v1415 = vpop.permute.xlu0 %1414
  %v1417 = vmul.f32 %v1415, %v1412
  %v1418 = vadd.f32 %v1411, %v1417
  %v1419 = vld [vmem:[%s364] sm:$0xff]
  %1420 = vset.pattern.permute.xlu0 2
  %1421 = vperm.xlu0 %1420, %v1404
  %v1422 = vpop.permute.xlu0 %1421
  %v1424 = vmul.f32 %v1422, %v1419
  %v1425 = vadd.f32 %v1418, %v1424
  %v1426 = vld [vmem:[%s372] sm:$0xff]
  %1427 = vset.pattern.permute.xlu0 3
  %1428 = vperm.xlu0 %1427, %v1404
  %v1429 = vpop.permute.xlu0 %1428
  %v1431 = vmul.f32 %v1429, %v1426
  %v1432 = vadd.f32 %v1425, %v1431
  %v1433 = vld [vmem:[%s380] sm:$0xff]
  %1434 = vset.pattern.permute.xlu0 4
  %1435 = vperm.xlu0 %1434, %v1404
  %v1436 = vpop.permute.xlu0 %1435
  %v1438 = vmul.f32 %v1436, %v1433
  %v1439 = vadd.f32 %v1432, %v1438
  %v1440 = vld [vmem:[%s388] sm:$0xff]
  %1441 = vset.pattern.permute.xlu0 5
  %1442 = vperm.xlu0 %1441, %v1404
  %v1443 = vpop.permute.xlu0 %1442
  %v1445 = vmul.f32 %v1443, %v1440
  %v1446 = vadd.f32 %v1439, %v1445
  %v1447 = vld [vmem:[%s396] sm:$0xff]
  %1448 = vset.pattern.permute.xlu0 6
  %1449 = vperm.xlu0 %1448, %v1404
  %v1450 = vpop.permute.xlu0 %1449
  %v1452 = vmul.f32 %v1450, %v1447
  %v1453 = vadd.f32 %v1446, %v1452
  %v1454 = vld [vmem:[%s404] sm:$0xff]
  %1455 = vset.pattern.permute.xlu0 7
  %1456 = vperm.xlu0 %1455, %v1404
  %v1457 = vpop.permute.xlu0 %1456
  %v1459 = vmul.f32 %v1457, %v1454
  %v1460 = vadd.f32 %v1453, %v1459
  %1462 = vrot.lane.b32.xlu0 %v1282, 64
  %v1463 = vpop.permute.xlu0 %1462
  %v1465 = vsel %vm108, %v1460, %v1463
  %v1467 = vsel %vm110, %v1465, 0
  %1469 = vmatprep.subr.mxu0 0.0
  %1470 = vmatpush1.msra.mxu0 %v69
  %1471 = vmatprep.subr.mxu0 0.0
  %1472 = vmatpush1.msra.mxu0 %v70
  %1473 = vmatprep.subr.mxu0 0.0
  %1474 = vmatpush1.msra.mxu0 %v71
  %1475 = vmatprep.subr.mxu0 0.0
  %1476 = vmatpush1.msra.mxu0 %v72
  %1477 = vmatprep.subr.mxu0 0.0
  %1478 = vmatpush1.msra.mxu0 %v73
  %1479 = vmatprep.subr.mxu0 0.0
  %1480 = vmatpush1.msra.mxu0 %v74
  %1481 = vmatprep.subr.mxu0 0.0
  %1482 = vmatpush1.msra.mxu0 %v75
  %1483 = vmatprep.subr.mxu0 0.0
  %1484 = vmatpush1.msra.mxu0 %v76
  %1485 = vmatprep.subr.mxu0 0.0
  %1486 = vmatpush1.msra.mxu0 0.0
  %1487 = vmatprep.subr.mxu0 0.0
  %1488 = vmatpush1.msra.mxu0 0.0
  %1489 = vmatprep.subr.mxu0 0.0
  %1490 = vmatpush1.msra.mxu0 0.0
  %1491 = vmatprep.subr.mxu0 0.0
  %1492 = vmatpush1.msra.mxu0 0.0
  %1493 = vmatprep.subr.mxu0 0.0
  %1494 = vmatpush1.msra.mxu0 0.0
  %1495 = vmatprep.subr.mxu0 0.0
  %1496 = vmatpush1.msra.mxu0 0.0
  %1497 = vmatprep.subr.mxu0 0.0
  %1498 = vmatpush1.msra.mxu0 0.0
  %1499 = vmatprep.subr.mxu0 0.0
  %1500 = vmatpush1.msra.mxu0 0.0
  %1501 = vmatprep.subr.mxu0 0.0
  %1502 = vmatpush1.msra.mxu0 0.0
  %1503 = vmatprep.subr.mxu0 0.0
  %1504 = vmatpush1.msra.mxu0 0.0
  %1505 = vmatprep.subr.mxu0 0.0
  %1506 = vmatpush1.msra.mxu0 0.0
  %1507 = vmatprep.subr.mxu0 0.0
  %1508 = vmatpush1.msra.mxu0 0.0
  %1509 = vmatprep.subr.mxu0 0.0
  %1510 = vmatpush1.msra.mxu0 0.0
  %1511 = vmatprep.subr.mxu0 0.0
  %1512 = vmatpush1.msra.mxu0 0.0
  %1513 = vmatprep.subr.mxu0 0.0
  %1514 = vmatpush1.msra.mxu0 0.0
  %1515 = vmatprep.subr.mxu0 0.0
  %1516 = vmatpush1.msra.mxu0 0.0
  %1517 = vmatprep.subr.mxu0 0.0
  %1518 = vmatpush1.msra.mxu0 0.0
  %1519 = vmatprep.subr.mxu0 0.0
  %1520 = vmatpush1.msra.mxu0 0.0
  %1521 = vmatprep.subr.mxu0 0.0
  %1522 = vmatpush1.msra.mxu0 0.0
  %1523 = vmatprep.subr.mxu0 0.0
  %1524 = vmatpush1.msra.mxu0 0.0
  %1525 = vmatprep.subr.mxu0 0.0
  %1526 = vmatpush1.msra.mxu0 0.0
  %1527 = vmatprep.subr.mxu0 0.0
  %1528 = vmatpush1.msra.mxu0 0.0
  %1529 = vmatprep.subr.mxu0 0.0
  %1530 = vmatpush1.msra.mxu0 0.0
  %1531 = vmatprep.subr.mxu0 0.0
  %1532 = vmatpush1.msra.mxu0 0.0
  %1533 = vmatprep.mubr.f32.mxu0 0.0
  %1534 = vmatmul.mubr.f32.gmra.mrb[0].mxu0 %v1467
  %v1535 = vpop.f32.mrb[0].mxu0
  %v1536 = vadd.f32 %v82, %v1535
  %v1537 = vpop.f32.mrb[0].mxu0
  %1538 = vdwg.mxu0
  %v1539 = vtanh.pop %v1536
  %v1541 = vsel %vm108, %v1539, 0
  %1543 = vmatprep.subr.mxu0 0.0
  %1544 = vmatpush1.msra.mxu0 %v84
  %1545 = vmatprep.subr.mxu0 0.0
  %1546 = vmatpush1.msra.mxu0 %v85
  %1547 = vmatprep.subr.mxu0 0.0
  %1548 = vmatpush1.msra.mxu0 %v86
  %1549 = vmatprep.subr.mxu0 0.0
  %1550 = vmatpush1.msra.mxu0 %v87
  %1551 = vmatprep.subr.mxu0 0.0
  %1552 = vmatpush1.msra.mxu0 0.0
  %1553 = vmatprep.subr.mxu0 0.0
  %1554 = vmatpush1.msra.mxu0 0.0
  %1555 = vmatprep.subr.mxu0 0.0
  %1556 = vmatpush1.msra.mxu0 0.0
  %1557 = vmatprep.subr.mxu0 0.0
  %1558 = vmatpush1.msra.mxu0 0.0
  %1559 = vmatprep.subr.mxu0 0.0
  %1560 = vmatpush1.msra.mxu0 0.0
  %1561 = vmatprep.subr.mxu0 0.0
  %1562 = vmatpush1.msra.mxu0 0.0
  %1563 = vmatprep.subr.mxu0 0.0
  %1564 = vmatpush1.msra.mxu0 0.0
  %1565 = vmatprep.subr.mxu0 0.0
  %1566 = vmatpush1.msra.mxu0 0.0
  %1567 = vmatprep.subr.mxu0 0.0
  %1568 = vmatpush1.msra.mxu0 0.0
  %1569 = vmatprep.subr.mxu0 0.0
  %1570 = vmatpush1.msra.mxu0 0.0
  %1571 = vmatprep.subr.mxu0 0.0
  %1572 = vmatpush1.msra.mxu0 0.0
  %1573 = vmatprep.subr.mxu0 0.0
  %1574 = vmatpush1.msra.mxu0 0.0
  %1575 = vmatprep.subr.mxu0 0.0
  %1576 = vmatpush1.msra.mxu0 0.0
  %1577 = vmatprep.subr.mxu0 0.0
  %1578 = vmatpush1.msra.mxu0 0.0
  %1579 = vmatprep.subr.mxu0 0.0
  %1580 = vmatpush1.msra.mxu0 0.0
  %1581 = vmatprep.subr.mxu0 0.0
  %1582 = vmatpush1.msra.mxu0 0.0
  %1583 = vmatprep.subr.mxu0 0.0
  %1584 = vmatpush1.msra.mxu0 0.0
  %1585 = vmatprep.subr.mxu0 0.0
  %1586 = vmatpush1.msra.mxu0 0.0
  %1587 = vmatprep.subr.mxu0 0.0
  %1588 = vmatpush1.msra.mxu0 0.0
  %1589 = vmatprep.subr.mxu0 0.0
  %1590 = vmatpush1.msra.mxu0 0.0
  %1591 = vmatprep.subr.mxu0 0.0
  %1592 = vmatpush1.msra.mxu0 0.0
  %1593 = vmatprep.subr.mxu0 0.0
  %1594 = vmatpush1.msra.mxu0 0.0
  %1595 = vmatprep.subr.mxu0 0.0
  %1596 = vmatpush1.msra.mxu0 0.0
  %1597 = vmatprep.subr.mxu0 0.0
  %1598 = vmatpush1.msra.mxu0 0.0
  %1599 = vmatprep.subr.mxu0 0.0
  %1600 = vmatpush1.msra.mxu0 0.0
  %1601 = vmatprep.subr.mxu0 0.0
  %1602 = vmatpush1.msra.mxu0 0.0
  %1603 = vmatprep.subr.mxu0 0.0
  %1604 = vmatpush1.msra.mxu0 0.0
  %1605 = vmatprep.subr.mxu0 0.0
  %1606 = vmatpush1.msra.mxu0 0.0
  %1607 = vmatprep.mubr.f32.mxu0 0.0
  %1608 = vmatmul.mubr.f32.gmra.mrb[0].mxu0 %v1541
  %v1609 = vpop.f32.mrb[0].mxu0
  %v1610 = vadd.f32 %v93, %v1609
  %v1611 = vpop.f32.mrb[0].mxu0
  %1612 = vdwg.mxu0
  %s1613 = scalar_lea.vmem %s11, 16
  %1614 = vst [vmem:[%s1613] sm:$0xff] %v1610
  %v1615 = vsel %vm97, %v1610, -inf
  %1616 = vmax.xlane.f32.xlu0 %v1615
  %v1617 = vpop.xlane.xlu0 %1616
  %vm1618 = vcmp.eq.f32.partialorder %v1615, %v1617
  %v1619 = vsel %vm1618, %v96, 128
  %v1620 = vand.u32 %v1619, 65535
  %v1621 = vshra.s32 %v1619, 16
  %v1622 = vcvt.s32.f32 %v1620
  %v1623 = vcvt.s32.f32 %v1621
  %1624 = vmin.xlane.f32.xlu0 %v1623
  %v1625 = vpop.xlane.xlu0 %1624
  %vm1626 = vcmp.eq.f32.partialorder %v1623, %v1625
  %v1627 = vsel %vm1626, %v1622, inf
  %1628 = vmin.xlane.f32.xlu0 %v1627
  %v1629 = vpop.xlane.xlu0 %1628
  %v1630 = vcvt.f32.s32 %v1629
  %v1631 = vcvt.f32.s32 %v1625
  %v1632 = vshll.u32 %v1631, 16
  %v1633 = vadd.s32 %v1632, %v1630
  %vm1634 = vcmp.eq.s32.totalorder %v96, %v1633
  %v1635 = vsel %vm1634, 1, 0
  %v1636 = vcvt.s32.f32 %v1635
  %1637 = vmatprep.subr.mxu0 0.0
  %1638 = vmatpush1.msra.mxu0 %v38
  %1639 = vmatprep.subr.mxu0 0.0
  %1640 = vmatpush1.msra.mxu0 %v39
  %1641 = vmatprep.subr.mxu0 0.0
  %1642 = vmatpush1.msra.mxu0 %v40
  %1643 = vmatprep.subr.mxu0 0.0
  %1644 = vmatpush1.msra.mxu0 %v41
  %1645 = vmatprep.subr.mxu0 0.0
  %1646 = vmatpush1.msra.mxu0 %v42
  %1647 = vmatprep.subr.mxu0 0.0
  %1648 = vmatpush1.msra.mxu0 %v43
  %1649 = vmatprep.subr.mxu0 0.0
  %1650 = vmatpush1.msra.mxu0 %v44
  %1651 = vmatprep.subr.mxu0 0.0
  %1652 = vmatpush1.msra.mxu0 %v45
  %1653 = vmatprep.subr.mxu0 0.0
  %1654 = vmatpush1.msra.mxu0 %v46
  %1655 = vmatprep.subr.mxu0 0.0
  %1656 = vmatpush1.msra.mxu0 %v47
  %1657 = vmatprep.subr.mxu0 0.0
  %1658 = vmatpush1.msra.mxu0 %v48
  %1659 = vmatprep.subr.mxu0 0.0
  %1660 = vmatpush1.msra.mxu0 %v49
  %1661 = vmatprep.subr.mxu0 0.0
  %1662 = vmatpush1.msra.mxu0 %v50
  %1663 = vmatprep.subr.mxu0 0.0
  %1664 = vmatpush1.msra.mxu0 %v51
  %1665 = vmatprep.subr.mxu0 0.0
  %1666 = vmatpush1.msra.mxu0 %v52
  %1667 = vmatprep.subr.mxu0 0.0
  %1668 = vmatpush1.msra.mxu0 %v53
  %1669 = vmatprep.subr.mxu0 0.0
  %1670 = vmatpush1.msra.mxu0 0.0
  %1671 = vmatprep.subr.mxu0 0.0
  %1672 = vmatpush1.msra.mxu0 0.0
  %1673 = vmatprep.subr.mxu0 0.0
  %1674 = vmatpush1.msra.mxu0 0.0
  %1675 = vmatprep.subr.mxu0 0.0
  %1676 = vmatpush1.msra.mxu0 0.0
  %1677 = vmatprep.subr.mxu0 0.0
  %1678 = vmatpush1.msra.mxu0 0.0
  %1679 = vmatprep.subr.mxu0 0.0
  %1680 = vmatpush1.msra.mxu0 0.0
  %1681 = vmatprep.subr.mxu0 0.0
  %1682 = vmatpush1.msra.mxu0 0.0
  %1683 = vmatprep.subr.mxu0 0.0
  %1684 = vmatpush1.msra.mxu0 0.0
  %1685 = vmatprep.subr.mxu0 0.0
  %1686 = vmatpush1.msra.mxu0 0.0
  %1687 = vmatprep.subr.mxu0 0.0
  %1688 = vmatpush1.msra.mxu0 0.0
  %1689 = vmatprep.subr.mxu0 0.0
  %1690 = vmatpush1.msra.mxu0 0.0
  %1691 = vmatprep.subr.mxu0 0.0
  %1692 = vmatpush1.msra.mxu0 0.0
  %1693 = vmatprep.subr.mxu0 0.0
  %1694 = vmatpush1.msra.mxu0 0.0
  %1695 = vmatprep.subr.mxu0 0.0
  %1696 = vmatpush1.msra.mxu0 0.0
  %1697 = vmatprep.subr.mxu0 0.0
  %1698 = vmatpush1.msra.mxu0 0.0
  %1699 = vmatprep.subr.mxu0 0.0
  %1700 = vmatpush1.msra.mxu0 0.0
  %1701 = vmatprep.mubr.f32.mxu0 0.0
  %1702 = vmatmul.mubr.f32.gmra.mrb[0].mxu0 %v1636
  %v1703 = vpop.f32.mrb[0].mxu0
  %v1704 = vadd.f32 0.0, %v1703
  %v1705 = vpop.f32.mrb[0].mxu0
  %1706 = vdwg.mxu0
  %1707 = vrot.lane.b32.xlu0 %v1539, 32
  %v1708 = vpop.permute.xlu0 %1707
  %v1710 = vsel %vm108, %v1704, %v1708
  %v1712 = vsel %vm110, %v1710, 0
  %1714 = vmatprep.subr.mxu0 0.0
  %1715 = vmatpush1.msra.mxu0 %v54
  %1716 = vmatprep.subr.mxu0 0.0
  %1717 = vmatpush1.msra.mxu0 %v55
  %1718 = vmatprep.subr.mxu0 0.0
  %1719 = vmatpush1.msra.mxu0 %v56
  %1720 = vmatprep.subr.mxu0 0.0
  %1721 = vmatpush1.msra.mxu0 %v57
  %1722 = vmatprep.subr.mxu0 0.0
  %1723 = vmatpush1.msra.mxu0 %v58
  %1724 = vmatprep.subr.mxu0 0.0
  %1725 = vmatpush1.msra.mxu0 %v59
  %1726 = vmatprep.subr.mxu0 0.0
  %1727 = vmatpush1.msra.mxu0 %v60
  %1728 = vmatprep.subr.mxu0 0.0
  %1729 = vmatpush1.msra.mxu0 %v61
  %1730 = vmatprep.subr.mxu0 0.0
  %1731 = vmatpush1.msra.mxu0 0.0
  %1732 = vmatprep.subr.mxu0 0.0
  %1733 = vmatpush1.msra.mxu0 0.0
  %1734 = vmatprep.subr.mxu0 0.0
  %1735 = vmatpush1.msra.mxu0 0.0
  %1736 = vmatprep.subr.mxu0 0.0
  %1737 = vmatpush1.msra.mxu0 0.0
  %1738 = vmatprep.subr.mxu0 0.0
  %1739 = vmatpush1.msra.mxu0 0.0
  %1740 = vmatprep.subr.mxu0 0.0
  %1741 = vmatpush1.msra.mxu0 0.0
  %1742 = vmatprep.subr.mxu0 0.0
  %1743 = vmatpush1.msra.mxu0 0.0
  %1744 = vmatprep.subr.mxu0 0.0
  %1745 = vmatpush1.msra.mxu0 0.0
  %1746 = vmatprep.subr.mxu0 0.0
  %1747 = vmatpush1.msra.mxu0 0.0
  %1748 = vmatprep.subr.mxu0 0.0
  %1749 = vmatpush1.msra.mxu0 0.0
  %1750 = vmatprep.subr.mxu0 0.0
  %1751 = vmatpush1.msra.mxu0 0.0
  %1752 = vmatprep.subr.mxu0 0.0
  %1753 = vmatpush1.msra.mxu0 0.0
  %1754 = vmatprep.subr.mxu0 0.0
  %1755 = vmatpush1.msra.mxu0 0.0
  %1756 = vmatprep.subr.mxu0 0.0
  %1757 = vmatpush1.msra.mxu0 0.0
  %1758 = vmatprep.subr.mxu0 0.0
  %1759 = vmatpush1.msra.mxu0 0.0
  %1760 = vmatprep.subr.mxu0 0.0
  %1761 = vmatpush1.msra.mxu0 0.0
  %1762 = vmatprep.subr.mxu0 0.0
  %1763 = vmatpush1.msra.mxu0 0.0
  %1764 = vmatprep.subr.mxu0 0.0
  %1765 = vmatpush1.msra.mxu0 0.0
  %1766 = vmatprep.subr.mxu0 0.0
  %1767 = vmatpush1.msra.mxu0 0.0
  %1768 = vmatprep.subr.mxu0 0.0
  %1769 = vmatpush1.msra.mxu0 0.0
  %1770 = vmatprep.subr.mxu0 0.0
  %1771 = vmatpush1.msra.mxu0 0.0
  %1772 = vmatprep.subr.mxu0 0.0
  %1773 = vmatpush1.msra.mxu0 0.0
  %1774 = vmatprep.subr.mxu0 0.0
  %1775 = vmatpush1.msra.mxu0 0.0
  %1776 = vmatprep.subr.mxu0 0.0
  %1777 = vmatpush1.msra.mxu0 0.0
  %1778 = vmatprep.mubr.f32.mxu0 0.0
  %1779 = vmatmul.mubr.f32.gmra.mrb[0].mxu0 %v1712
  %v1780 = vpop.f32.mrb[0].mxu0
  %v1781 = vadd.f32 %v67, %v1780
  %v1782 = vpop.f32.mrb[0].mxu0
  %1783 = vdwg.mxu0
  %v1784 = vxor.u32 %v1781, 2147483648
  %v1785 = vmul.f32 %v1784, 1.442695
  %v1786 = vpow.pop %v1785
  %v1787 = vadd.f32 %v1786, 1.0
  %v1788 = vrcp.pop %v1787
  %v1789 = vmul.f32 1.0, %v1788
  %v1790 = vtanh.pop %v1781
  %v1791 = vmul.f32 %v1789, %v1276
  %1793 = vrot.lane.b32.xlu0 %v1790, 64
  %v1794 = vpop.permute.xlu0 %1793
  %v1796 = vmul.f32 %v1789, %v1794
  %1798 = vrot.lane.b32.xlu0 %v1796, 32
  %v1799 = vpop.permute.xlu0 %1798
  %v1801 = vadd.f32 %v1791, %v1799
  %v1802 = vtanh.pop %v1801
  %1804 = vrot.lane.b32.xlu0 %v1802, 64
  %v1805 = vpop.permute.xlu0 %1804
  %v1807 = vmul.f32 %v1789, %v1805
  %v1808 = vld [vmem:[%s5] sm:$0xff]
  %1810 = vrot.lane.b32.xlu0 %v1808, 96
  %v1811 = vpop.permute.xlu0 %1810
  %v1813 = vmul.f32 %v1807, %v1811
  %1815 = vrot.lane.b32.xlu0 %v1813, 32
  %v1816 = vpop.permute.xlu0 %1815
  %v1818 = vsel %vm108, %v1816, 0.0
  %1819 = vadd.xlane.f32.xlu0 %v1818
  %v1820 = vpop.xlane.xlu0 %1819
  %v1821 = vld [vmem:[%s225] sm:$0xff]
  %1823 = vrot.lane.b32.xlu0 %v1821, 96
  %v1824 = vpop.permute.xlu0 %1823
  %v1826 = vmul.f32 %v1807, %v1824
  %1828 = vrot.lane.b32.xlu0 %v1826, 32
  %v1829 = vpop.permute.xlu0 %1828
  %v1831 = vsel %vm108, %v1829, 0.0
  %1832 = vadd.xlane.f32.xlu0 %v1831
  %v1833 = vpop.xlane.xlu0 %1832
  %v1834 = vld [vmem:[%s239] sm:$0xff]
  %1836 = vrot.lane.b32.xlu0 %v1834, 96
  %v1837 = vpop.permute.xlu0 %1836
  %v1839 = vmul.f32 %v1807, %v1837
  %1841 = vrot.lane.b32.xlu0 %v1839, 32
  %v1842 = vpop.permute.xlu0 %1841
  %v1844 = vsel %vm108, %v1842, 0.0
  %1845 = vadd.xlane.f32.xlu0 %v1844
  %v1846 = vpop.xlane.xlu0 %1845
  %v1847 = vld [vmem:[%s253] sm:$0xff]
  %1849 = vrot.lane.b32.xlu0 %v1847, 96
  %v1850 = vpop.permute.xlu0 %1849
  %v1852 = vmul.f32 %v1807, %v1850
  %1854 = vrot.lane.b32.xlu0 %v1852, 32
  %v1855 = vpop.permute.xlu0 %1854
  %v1857 = vsel %vm108, %v1855, 0.0
  %1858 = vadd.xlane.f32.xlu0 %v1857
  %v1859 = vpop.xlane.xlu0 %1858
  %v1860 = vld [vmem:[%s267] sm:$0xff]
  %1862 = vrot.lane.b32.xlu0 %v1860, 96
  %v1863 = vpop.permute.xlu0 %1862
  %v1865 = vmul.f32 %v1807, %v1863
  %1867 = vrot.lane.b32.xlu0 %v1865, 32
  %v1868 = vpop.permute.xlu0 %1867
  %v1870 = vsel %vm108, %v1868, 0.0
  %1871 = vadd.xlane.f32.xlu0 %v1870
  %v1872 = vpop.xlane.xlu0 %1871
  %v1873 = vld [vmem:[%s281] sm:$0xff]
  %1875 = vrot.lane.b32.xlu0 %v1873, 96
  %v1876 = vpop.permute.xlu0 %1875
  %v1878 = vmul.f32 %v1807, %v1876
  %1880 = vrot.lane.b32.xlu0 %v1878, 32
  %v1881 = vpop.permute.xlu0 %1880
  %v1883 = vsel %vm108, %v1881, 0.0
  %1884 = vadd.xlane.f32.xlu0 %v1883
  %v1885 = vpop.xlane.xlu0 %1884
  %v1886 = vld [vmem:[%s295] sm:$0xff]
  %1888 = vrot.lane.b32.xlu0 %v1886, 96
  %v1889 = vpop.permute.xlu0 %1888
  %v1891 = vmul.f32 %v1807, %v1889
  %1893 = vrot.lane.b32.xlu0 %v1891, 32
  %v1894 = vpop.permute.xlu0 %1893
  %v1896 = vsel %vm108, %v1894, 0.0
  %1897 = vadd.xlane.f32.xlu0 %v1896
  %v1898 = vpop.xlane.xlu0 %1897
  %v1899 = vld [vmem:[%s309] sm:$0xff]
  %1901 = vrot.lane.b32.xlu0 %v1899, 96
  %v1902 = vpop.permute.xlu0 %1901
  %v1904 = vmul.f32 %v1807, %v1902
  %1906 = vrot.lane.b32.xlu0 %v1904, 32
  %v1907 = vpop.permute.xlu0 %1906
  %v1909 = vsel %vm108, %v1907, 0.0
  %1910 = vadd.xlane.f32.xlu0 %v1909
  %v1911 = vpop.xlane.xlu0 %1910
  %v1912 = vsel %vm323, %v1820, %v1833
  %v1913 = vsel %vm325, %v1912, %v1846
  %v1914 = vsel %vm327, %v1913, %v1859
  %v1915 = vsel %vm329, %v1914, %v1872
  %v1916 = vsel %vm331, %v1915, %v1885
  %v1917 = vsel %vm333, %v1916, %v1898
  %v1918 = vsel %vm335, %v1917, %v1911
  %v1919 = vsel %vm337, %v1918, -inf
  %1920 = vmax.xlane.f32.xlu0 %v1919
  %v1921 = vpop.xlane.xlu0 %1920
  %v1922 = vsub.f32 %v1918, %v1921
  %v1923 = vmul.f32 %v1922, 1.442695
  %v1924 = vpow.pop %v1923
  %v1925 = vsel %vm337, %v1924, 0.0
  %1926 = vadd.xlane.f32.xlu0 %v1925
  %v1927 = vpop.xlane.xlu0 %1926
  %v1928 = vrcp.pop %v1927
  %v1929 = vmul.f32 %v1924, %v1928
  %v1930 = vld [vmem:[%s6] sm:$0xff]
  %1932 = vset.pattern.permute.xlu0 0
  %1933 = vperm.xlu0 %1932, %v1929
  %v1934 = vpop.permute.xlu0 %1933
  %v1936 = vmul.f32 %v1934, %v1930
  %v1937 = vld [vmem:[%s356] sm:$0xff]
  %1938 = vset.pattern.permute.xlu0 1
  %1939 = vperm.xlu0 %1938, %v1929
  %v1940 = vpop.permute.xlu0 %1939
  %v1942 = vmul.f32 %v1940, %v1937
  %v1943 = vadd.f32 %v1936, %v1942
  %v1944 = vld [vmem:[%s364] sm:$0xff]
  %1945 = vset.pattern.permute.xlu0 2
  %1946 = vperm.xlu0 %1945, %v1929
  %v1947 = vpop.permute.xlu0 %1946
  %v1949 = vmul.f32 %v1947, %v1944
  %v1950 = vadd.f32 %v1943, %v1949
  %v1951 = vld [vmem:[%s372] sm:$0xff]
  %1952 = vset.pattern.permute.xlu0 3
  %1953 = vperm.xlu0 %1952, %v1929
  %v1954 = vpop.permute.xlu0 %1953
  %v1956 = vmul.f32 %v1954, %v1951
  %v1957 = vadd.f32 %v1950, %v1956
  %v1958 = vld [vmem:[%s380] sm:$0xff]
  %1959 = vset.pattern.permute.xlu0 4
  %1960 = vperm.xlu0 %1959, %v1929
  %v1961 = vpop.permute.xlu0 %1960
  %v1963 = vmul.f32 %v1961, %v1958
  %v1964 = vadd.f32 %v1957, %v1963
  %v1965 = vld [vmem:[%s388] sm:$0xff]
  %1966 = vset.pattern.permute.xlu0 5
  %1967 = vperm.xlu0 %1966, %v1929
  %v1968 = vpop.permute.xlu0 %1967
  %v1970 = vmul.f32 %v1968, %v1965
  %v1971 = vadd.f32 %v1964, %v1970
  %v1972 = vld [vmem:[%s396] sm:$0xff]
  %1973 = vset.pattern.permute.xlu0 6
  %1974 = vperm.xlu0 %1973, %v1929
  %v1975 = vpop.permute.xlu0 %1974
  %v1977 = vmul.f32 %v1975, %v1972
  %v1978 = vadd.f32 %v1971, %v1977
  %v1979 = vld [vmem:[%s404] sm:$0xff]
  %1980 = vset.pattern.permute.xlu0 7
  %1981 = vperm.xlu0 %1980, %v1929
  %v1982 = vpop.permute.xlu0 %1981
  %v1984 = vmul.f32 %v1982, %v1979
  %v1985 = vadd.f32 %v1978, %v1984
  %1987 = vrot.lane.b32.xlu0 %v1807, 64
  %v1988 = vpop.permute.xlu0 %1987
  %v1990 = vsel %vm108, %v1985, %v1988
  %v1992 = vsel %vm110, %v1990, 0
  %1994 = vmatprep.subr.mxu0 0.0
  %1995 = vmatpush1.msra.mxu0 %v69
  %1996 = vmatprep.subr.mxu0 0.0
  %1997 = vmatpush1.msra.mxu0 %v70
  %1998 = vmatprep.subr.mxu0 0.0
  %1999 = vmatpush1.msra.mxu0 %v71
  %2000 = vmatprep.subr.mxu0 0.0
  %2001 = vmatpush1.msra.mxu0 %v72
  %2002 = vmatprep.subr.mxu0 0.0
  %2003 = vmatpush1.msra.mxu0 %v73
  %2004 = vmatprep.subr.mxu0 0.0
  %2005 = vmatpush1.msra.mxu0 %v74
  %2006 = vmatprep.subr.mxu0 0.0
  %2007 = vmatpush1.msra.mxu0 %v75
  %2008 = vmatprep.subr.mxu0 0.0
  %2009 = vmatpush1.msra.mxu0 %v76
  %2010 = vmatprep.subr.mxu0 0.0
  %2011 = vmatpush1.msra.mxu0 0.0
  %2012 = vmatprep.subr.mxu0 0.0
  %2013 = vmatpush1.msra.mxu0 0.0
  %2014 = vmatprep.subr.mxu0 0.0
  %2015 = vmatpush1.msra.mxu0 0.0
  %2016 = vmatprep.subr.mxu0 0.0
  %2017 = vmatpush1.msra.mxu0 0.0
  %2018 = vmatprep.subr.mxu0 0.0
  %2019 = vmatpush1.msra.mxu0 0.0
  %2020 = vmatprep.subr.mxu0 0.0
  %2021 = vmatpush1.msra.mxu0 0.0
  %2022 = vmatprep.subr.mxu0 0.0
  %2023 = vmatpush1.msra.mxu0 0.0
  %2024 = vmatprep.subr.mxu0 0.0
  %2025 = vmatpush1.msra.mxu0 0.0
  %2026 = vmatprep.subr.mxu0 0.0
  %2027 = vmatpush1.msra.mxu0 0.0
  %2028 = vmatprep.subr.mxu0 0.0
  %2029 = vmatpush1.msra.mxu0 0.0
  %2030 = vmatprep.subr.mxu0 0.0
  %2031 = vmatpush1.msra.mxu0 0.0
  %2032 = vmatprep.subr.mxu0 0.0
  %2033 = vmatpush1.msra.mxu0 0.0
  %2034 = vmatprep.subr.mxu0 0.0
  %2035 = vmatpush1.msra.mxu0 0.0
  %2036 = vmatprep.subr.mxu0 0.0
  %2037 = vmatpush1.msra.mxu0 0.0
  %2038 = vmatprep.subr.mxu0 0.0
  %2039 = vmatpush1.msra.mxu0 0.0
  %2040 = vmatprep.subr.mxu0 0.0
  %2041 = vmatpush1.msra.mxu0 0.0
  %2042 = vmatprep.subr.mxu0 0.0
  %2043 = vmatpush1.msra.mxu0 0.0
  %2044 = vmatprep.subr.mxu0 0.0
  %2045 = vmatpush1.msra.mxu0 0.0
  %2046 = vmatprep.subr.mxu0 0.0
  %2047 = vmatpush1.msra.mxu0 0.0
  %2048 = vmatprep.subr.mxu0 0.0
  %2049 = vmatpush1.msra.mxu0 0.0
  %2050 = vmatprep.subr.mxu0 0.0
  %2051 = vmatpush1.msra.mxu0 0.0
  %2052 = vmatprep.subr.mxu0 0.0
  %2053 = vmatpush1.msra.mxu0 0.0
  %2054 = vmatprep.subr.mxu0 0.0
  %2055 = vmatpush1.msra.mxu0 0.0
  %2056 = vmatprep.subr.mxu0 0.0
  %2057 = vmatpush1.msra.mxu0 0.0
  %2058 = vmatprep.mubr.f32.mxu0 0.0
  %2059 = vmatmul.mubr.f32.gmra.mrb[0].mxu0 %v1992
  %v2060 = vpop.f32.mrb[0].mxu0
  %v2061 = vadd.f32 %v82, %v2060
  %v2062 = vpop.f32.mrb[0].mxu0
  %2063 = vdwg.mxu0
  %v2064 = vtanh.pop %v2061
  %v2066 = vsel %vm108, %v2064, 0
  %2068 = vmatprep.subr.mxu0 0.0
  %2069 = vmatpush1.msra.mxu0 %v84
  %2070 = vmatprep.subr.mxu0 0.0
  %2071 = vmatpush1.msra.mxu0 %v85
  %2072 = vmatprep.subr.mxu0 0.0
  %2073 = vmatpush1.msra.mxu0 %v86
  %2074 = vmatprep.subr.mxu0 0.0
  %2075 = vmatpush1.msra.mxu0 %v87
  %2076 = vmatprep.subr.mxu0 0.0
  %2077 = vmatpush1.msra.mxu0 0.0
  %2078 = vmatprep.subr.mxu0 0.0
  %2079 = vmatpush1.msra.mxu0 0.0
  %2080 = vmatprep.subr.mxu0 0.0
  %2081 = vmatpush1.msra.mxu0 0.0
  %2082 = vmatprep.subr.mxu0 0.0
  %2083 = vmatpush1.msra.mxu0 0.0
  %2084 = vmatprep.subr.mxu0 0.0
  %2085 = vmatpush1.msra.mxu0 0.0
  %2086 = vmatprep.subr.mxu0 0.0
  %2087 = vmatpush1.msra.mxu0 0.0
  %2088 = vmatprep.subr.mxu0 0.0
  %2089 = vmatpush1.msra.mxu0 0.0
  %2090 = vmatprep.subr.mxu0 0.0
  %2091 = vmatpush1.msra.mxu0 0.0
  %2092 = vmatprep.subr.mxu0 0.0
  %2093 = vmatpush1.msra.mxu0 0.0
  %2094 = vmatprep.subr.mxu0 0.0
  %2095 = vmatpush1.msra.mxu0 0.0
  %2096 = vmatprep.subr.mxu0 0.0
  %2097 = vmatpush1.msra.mxu0 0.0
  %2098 = vmatprep.subr.mxu0 0.0
  %2099 = vmatpush1.msra.mxu0 0.0
  %2100 = vmatprep.subr.mxu0 0.0
  %2101 = vmatpush1.msra.mxu0 0.0
  %2102 = vmatprep.subr.mxu0 0.0
  %2103 = vmatpush1.msra.mxu0 0.0
  %2104 = vmatprep.subr.mxu0 0.0
  %2105 = vmatpush1.msra.mxu0 0.0
  %2106 = vmatprep.subr.mxu0 0.0
  %2107 = vmatpush1.msra.mxu0 0.0
  %2108 = vmatprep.subr.mxu0 0.0
  %2109 = vmatpush1.msra.mxu0 0.0
  %2110 = vmatprep.subr.mxu0 0.0
  %2111 = vmatpush1.msra.mxu0 0.0
  %2112 = vmatprep.subr.mxu0 0.0
  %2113 = vmatpush1.msra.mxu0 0.0
  %2114 = vmatprep.subr.mxu0 0.0
  %2115 = vmatpush1.msra.mxu0 0.0
  %2116 = vmatprep.subr.mxu0 0.0
  %2117 = vmatpush1.msra.mxu0 0.0
  %2118 = vmatprep.subr.mxu0 0.0
  %2119 = vmatpush1.msra.mxu0 0.0
  %2120 = vmatprep.subr.mxu0 0.0
  %2121 = vmatpush1.msra.mxu0 0.0
  %2122 = vmatprep.subr.mxu0 0.0
  %2123 = vmatpush1.msra.mxu0 0.0
  %2124 = vmatprep.subr.mxu0 0.0
  %2125 = vmatpush1.msra.mxu0 0.0
  %2126 = vmatprep.subr.mxu0 0.0
  %2127 = vmatpush1.msra.mxu0 0.0
  %2128 = vmatprep.subr.mxu0 0.0
  %2129 = vmatpush1.msra.mxu0 0.0
  %2130 = vmatprep.subr.mxu0 0.0
  %2131 = vmatpush1.msra.mxu0 0.0
  %2132 = vmatprep.mubr.f32.mxu0 0.0
  %2133 = vmatmul.mubr.f32.gmra.mrb[0].mxu0 %v2066
  %v2134 = vpop.f32.mrb[0].mxu0
  %v2135 = vadd.f32 %v93, %v2134
  %v2136 = vpop.f32.mrb[0].mxu0
  %2137 = vdwg.mxu0
  %s2138 = scalar_lea.vmem %s11, 24
  %2139 = vst [vmem:[%s2138] sm:$0xff] %v2135
  %v2140 = vsel %vm97, %v2135, -inf
  %2141 = vmax.xlane.f32.xlu0 %v2140
  %v2142 = vpop.xlane.xlu0 %2141
  %vm2143 = vcmp.eq.f32.partialorder %v2140, %v2142
  %v2144 = vsel %vm2143, %v96, 128
  %v2145 = vand.u32 %v2144, 65535
  %v2146 = vshra.s32 %v2144, 16
  %v2147 = vcvt.s32.f32 %v2145
  %v2148 = vcvt.s32.f32 %v2146
  %2149 = vmin.xlane.f32.xlu0 %v2148
  %v2150 = vpop.xlane.xlu0 %2149
  %vm2151 = vcmp.eq.f32.partialorder %v2148, %v2150
  %v2152 = vsel %vm2151, %v2147, inf
  %2153 = vmin.xlane.f32.xlu0 %v2152
  %v2154 = vpop.xlane.xlu0 %2153
  %v2155 = vcvt.f32.s32 %v2154
  %v2156 = vcvt.f32.s32 %v2150
  %v2157 = vshll.u32 %v2156, 16
  %v2158 = vadd.s32 %v2157, %v2155
  %vm2159 = vcmp.eq.s32.totalorder %v96, %v2158
  %v2160 = vsel %vm2159, 1, 0
  %v2161 = vcvt.s32.f32 %v2160
  %2162 = vmatprep.subr.mxu0 0.0
  %2163 = vmatpush1.msra.mxu0 %v38
  %2164 = vmatprep.subr.mxu0 0.0
  %2165 = vmatpush1.msra.mxu0 %v39
  %2166 = vmatprep.subr.mxu0 0.0
  %2167 = vmatpush1.msra.mxu0 %v40
  %2168 = vmatprep.subr.mxu0 0.0
  %2169 = vmatpush1.msra.mxu0 %v41
  %2170 = vmatprep.subr.mxu0 0.0
  %2171 = vmatpush1.msra.mxu0 %v42
  %2172 = vmatprep.subr.mxu0 0.0
  %2173 = vmatpush1.msra.mxu0 %v43
  %2174 = vmatprep.subr.mxu0 0.0
  %2175 = vmatpush1.msra.mxu0 %v44
  %2176 = vmatprep.subr.mxu0 0.0
  %2177 = vmatpush1.msra.mxu0 %v45
  %2178 = vmatprep.subr.mxu0 0.0
  %2179 = vmatpush1.msra.mxu0 %v46
  %2180 = vmatprep.subr.mxu0 0.0
  %2181 = vmatpush1.msra.mxu0 %v47
  %2182 = vmatprep.subr.mxu0 0.0
  %2183 = vmatpush1.msra.mxu0 %v48
  %2184 = vmatprep.subr.mxu0 0.0
  %2185 = vmatpush1.msra.mxu0 %v49
  %2186 = vmatprep.subr.mxu0 0.0
  %2187 = vmatpush1.msra.mxu0 %v50
  %2188 = vmatprep.subr.mxu0 0.0
  %2189 = vmatpush1.msra.mxu0 %v51
  %2190 = vmatprep.subr.mxu0 0.0
  %2191 = vmatpush1.msra.mxu0 %v52
  %2192 = vmatprep.subr.mxu0 0.0
  %2193 = vmatpush1.msra.mxu0 %v53
  %2194 = vmatprep.subr.mxu0 0.0
  %2195 = vmatpush1.msra.mxu0 0.0
  %2196 = vmatprep.subr.mxu0 0.0
  %2197 = vmatpush1.msra.mxu0 0.0
  %2198 = vmatprep.subr.mxu0 0.0
  %2199 = vmatpush1.msra.mxu0 0.0
  %2200 = vmatprep.subr.mxu0 0.0
  %2201 = vmatpush1.msra.mxu0 0.0
  %2202 = vmatprep.subr.mxu0 0.0
  %2203 = vmatpush1.msra.mxu0 0.0
  %2204 = vmatprep.subr.mxu0 0.0
  %2205 = vmatpush1.msra.mxu0 0.0
  %2206 = vmatprep.subr.mxu0 0.0
  %2207 = vmatpush1.msra.mxu0 0.0
  %2208 = vmatprep.subr.mxu0 0.0
  %2209 = vmatpush1.msra.mxu0 0.0
  %2210 = vmatprep.subr.mxu0 0.0
  %2211 = vmatpush1.msra.mxu0 0.0
  %2212 = vmatprep.subr.mxu0 0.0
  %2213 = vmatpush1.msra.mxu0 0.0
  %2214 = vmatprep.subr.mxu0 0.0
  %2215 = vmatpush1.msra.mxu0 0.0
  %2216 = vmatprep.subr.mxu0 0.0
  %2217 = vmatpush1.msra.mxu0 0.0
  %2218 = vmatprep.subr.mxu0 0.0
  %2219 = vmatpush1.msra.mxu0 0.0
  %2220 = vmatprep.subr.mxu0 0.0
  %2221 = vmatpush1.msra.mxu0 0.0
  %2222 = vmatprep.subr.mxu0 0.0
  %2223 = vmatpush1.msra.mxu0 0.0
  %2224 = vmatprep.subr.mxu0 0.0
  %2225 = vmatpush1.msra.mxu0 0.0
  %2226 = vmatprep.mubr.f32.mxu0 0.0
  %2227 = vmatmul.mubr.f32.gmra.mrb[0].mxu0 %v2161
  %v2228 = vpop.f32.mrb[0].mxu0
  %v2229 = vadd.f32 0.0, %v2228
  %v2230 = vpop.f32.mrb[0].mxu0
  %2231 = vdwg.mxu0
  %2232 = vrot.lane.b32.xlu0 %v2064, 32
  %v2233 = vpop.permute.xlu0 %2232
  %v2235 = vsel %vm108, %v2229, %v2233
  %v2237 = vsel %vm110, %v2235, 0
  %2239 = vmatprep.subr.mxu0 0.0
  %2240 = vmatpush1.msra.mxu0 %v54
  %2241 = vmatprep.subr.mxu0 0.0
  %2242 = vmatpush1.msra.mxu0 %v55
  %2243 = vmatprep.subr.mxu0 0.0
  %2244 = vmatpush1.msra.mxu0 %v56
  %2245 = vmatprep.subr.mxu0 0.0
  %2246 = vmatpush1.msra.mxu0 %v57
  %2247 = vmatprep.subr.mxu0 0.0
  %2248 = vmatpush1.msra.mxu0 %v58
  %2249 = vmatprep.subr.mxu0 0.0
  %2250 = vmatpush1.msra.mxu0 %v59
  %2251 = vmatprep.subr.mxu0 0.0
  %2252 = vmatpush1.msra.mxu0 %v60
  %2253 = vmatprep.subr.mxu0 0.0
  %2254 = vmatpush1.msra.mxu0 %v61
  %2255 = vmatprep.subr.mxu0 0.0
  %2256 = vmatpush1.msra.mxu0 0.0
  %2257 = vmatprep.subr.mxu0 0.0
  %2258 = vmatpush1.msra.mxu0 0.0
  %2259 = vmatprep.subr.mxu0 0.0
  %2260 = vmatpush1.msra.mxu0 0.0
  %2261 = vmatprep.subr.mxu0 0.0
  %2262 = vmatpush1.msra.mxu0 0.0
  %2263 = vmatprep.subr.mxu0 0.0
  %2264 = vmatpush1.msra.mxu0 0.0
  %2265 = vmatprep.subr.mxu0 0.0
  %2266 = vmatpush1.msra.mxu0 0.0
  %2267 = vmatprep.subr.mxu0 0.0
  %2268 = vmatpush1.msra.mxu0 0.0
  %2269 = vmatprep.subr.mxu0 0.0
  %2270 = vmatpush1.msra.mxu0 0.0
  %2271 = vmatprep.subr.mxu0 0.0
  %2272 = vmatpush1.msra.mxu0 0.0
  %2273 = vmatprep.subr.mxu0 0.0
  %2274 = vmatpush1.msra.mxu0 0.0
  %2275 = vmatprep.subr.mxu0 0.0
  %2276 = vmatpush1.msra.mxu0 0.0
  %2277 = vmatprep.subr.mxu0 0.0
  %2278 = vmatpush1.msra.mxu0 0.0
  %2279 = vmatprep.subr.mxu0 0.0
  %2280 = vmatpush1.msra.mxu0 0.0
  %2281 = vmatprep.subr.mxu0 0.0
  %2282 = vmatpush1.msra.mxu0 0.0
  %2283 = vmatprep.subr.mxu0 0.0
  %2284 = vmatpush1.msra.mxu0 0.0
  %2285 = vmatprep.subr.mxu0 0.0
  %2286 = vmatpush1.msra.mxu0 0.0
  %2287 = vmatprep.subr.mxu0 0.0
  %2288 = vmatpush1.msra.mxu0 0.0
  %2289 = vmatprep.subr.mxu0 0.0
  %2290 = vmatpush1.msra.mxu0 0.0
  %2291 = vmatprep.subr.mxu0 0.0
  %2292 = vmatpush1.msra.mxu0 0.0
  %2293 = vmatprep.subr.mxu0 0.0
  %2294 = vmatpush1.msra.mxu0 0.0
  %2295 = vmatprep.subr.mxu0 0.0
  %2296 = vmatpush1.msra.mxu0 0.0
  %2297 = vmatprep.subr.mxu0 0.0
  %2298 = vmatpush1.msra.mxu0 0.0
  %2299 = vmatprep.subr.mxu0 0.0
  %2300 = vmatpush1.msra.mxu0 0.0
  %2301 = vmatprep.subr.mxu0 0.0
  %2302 = vmatpush1.msra.mxu0 0.0
  %2303 = vmatprep.mubr.f32.mxu0 0.0
  %2304 = vmatmul.mubr.f32.gmra.mrb[0].mxu0 %v2237
  %v2305 = vpop.f32.mrb[0].mxu0
  %v2306 = vadd.f32 %v67, %v2305
  %v2307 = vpop.f32.mrb[0].mxu0
  %2308 = vdwg.mxu0
  %v2309 = vxor.u32 %v2306, 2147483648
  %v2310 = vmul.f32 %v2309, 1.442695
  %v2311 = vpow.pop %v2310
  %v2312 = vadd.f32 %v2311, 1.0
  %v2313 = vrcp.pop %v2312
  %v2314 = vmul.f32 1.0, %v2313
  %v2315 = vtanh.pop %v2306
  %v2316 = vmul.f32 %v2314, %v1801
  %2318 = vrot.lane.b32.xlu0 %v2315, 64
  %v2319 = vpop.permute.xlu0 %2318
  %v2321 = vmul.f32 %v2314, %v2319
  %2323 = vrot.lane.b32.xlu0 %v2321, 32
  %v2324 = vpop.permute.xlu0 %2323
  %v2326 = vadd.f32 %v2316, %v2324
  %v2327 = vtanh.pop %v2326
  %2329 = vrot.lane.b32.xlu0 %v2327, 64
  %v2330 = vpop.permute.xlu0 %2329
  %v2332 = vmul.f32 %v2314, %v2330
  %v2333 = vld [vmem:[%s5] sm:$0xff]
  %2335 = vrot.lane.b32.xlu0 %v2333, 96
  %v2336 = vpop.permute.xlu0 %2335
  %v2338 = vmul.f32 %v2332, %v2336
  %2340 = vrot.lane.b32.xlu0 %v2338, 32
  %v2341 = vpop.permute.xlu0 %2340
  %v2343 = vsel %vm108, %v2341, 0.0
  %2344 = vadd.xlane.f32.xlu0 %v2343
  %v2345 = vpop.xlane.xlu0 %2344
  %v2346 = vld [vmem:[%s225] sm:$0xff]
  %2348 = vrot.lane.b32.xlu0 %v2346, 96
  %v2349 = vpop.permute.xlu0 %2348
  %v2351 = vmul.f32 %v2332, %v2349
  %2353 = vrot.lane.b32.xlu0 %v2351, 32
  %v2354 = vpop.permute.xlu0 %2353
  %v2356 = vsel %vm108, %v2354, 0.0
  %2357 = vadd.xlane.f32.xlu0 %v2356
  %v2358 = vpop.xlane.xlu0 %2357
  %v2359 = vld [vmem:[%s239] sm:$0xff]
  %2361 = vrot.lane.b32.xlu0 %v2359, 96
  %v2362 = vpop.permute.xlu0 %2361
  %v2364 = vmul.f32 %v2332, %v2362
  %2366 = vrot.lane.b32.xlu0 %v2364, 32
  %v2367 = vpop.permute.xlu0 %2366
  %v2369 = vsel %vm108, %v2367, 0.0
  %2370 = vadd.xlane.f32.xlu0 %v2369
  %v2371 = vpop.xlane.xlu0 %2370
  %v2372 = vld [vmem:[%s253] sm:$0xff]
  %2374 = vrot.lane.b32.xlu0 %v2372, 96
  %v2375 = vpop.permute.xlu0 %2374
  %v2377 = vmul.f32 %v2332, %v2375
  %2379 = vrot.lane.b32.xlu0 %v2377, 32
  %v2380 = vpop.permute.xlu0 %2379
  %v2382 = vsel %vm108, %v2380, 0.0
  %2383 = vadd.xlane.f32.xlu0 %v2382
  %v2384 = vpop.xlane.xlu0 %2383
  %v2385 = vld [vmem:[%s267] sm:$0xff]
  %2387 = vrot.lane.b32.xlu0 %v2385, 96
  %v2388 = vpop.permute.xlu0 %2387
  %v2390 = vmul.f32 %v2332, %v2388
  %2392 = vrot.lane.b32.xlu0 %v2390, 32
  %v2393 = vpop.permute.xlu0 %2392
  %v2395 = vsel %vm108, %v2393, 0.0
  %2396 = vadd.xlane.f32.xlu0 %v2395
  %v2397 = vpop.xlane.xlu0 %2396
  %v2398 = vld [vmem:[%s281] sm:$0xff]
  %2400 = vrot.lane.b32.xlu0 %v2398, 96
  %v2401 = vpop.permute.xlu0 %2400
  %v2403 = vmul.f32 %v2332, %v2401
  %2405 = vrot.lane.b32.xlu0 %v2403, 32
  %v2406 = vpop.permute.xlu0 %2405
  %v2408 = vsel %vm108, %v2406, 0.0
  %2409 = vadd.xlane.f32.xlu0 %v2408
  %v2410 = vpop.xlane.xlu0 %2409
  %v2411 = vld [vmem:[%s295] sm:$0xff]
  %2413 = vrot.lane.b32.xlu0 %v2411, 96
  %v2414 = vpop.permute.xlu0 %2413
  %v2416 = vmul.f32 %v2332, %v2414
  %2418 = vrot.lane.b32.xlu0 %v2416, 32
  %v2419 = vpop.permute.xlu0 %2418
  %v2421 = vsel %vm108, %v2419, 0.0
  %2422 = vadd.xlane.f32.xlu0 %v2421
  %v2423 = vpop.xlane.xlu0 %2422
  %v2424 = vld [vmem:[%s309] sm:$0xff]
  %2426 = vrot.lane.b32.xlu0 %v2424, 96
  %v2427 = vpop.permute.xlu0 %2426
  %v2429 = vmul.f32 %v2332, %v2427
  %2431 = vrot.lane.b32.xlu0 %v2429, 32
  %v2432 = vpop.permute.xlu0 %2431
  %v2434 = vsel %vm108, %v2432, 0.0
  %2435 = vadd.xlane.f32.xlu0 %v2434
  %v2436 = vpop.xlane.xlu0 %2435
  %v2437 = vsel %vm323, %v2345, %v2358
  %v2438 = vsel %vm325, %v2437, %v2371
  %v2439 = vsel %vm327, %v2438, %v2384
  %v2440 = vsel %vm329, %v2439, %v2397
  %v2441 = vsel %vm331, %v2440, %v2410
  %v2442 = vsel %vm333, %v2441, %v2423
  %v2443 = vsel %vm335, %v2442, %v2436
  %v2444 = vsel %vm337, %v2443, -inf
  %2445 = vmax.xlane.f32.xlu0 %v2444
  %v2446 = vpop.xlane.xlu0 %2445
  %v2447 = vsub.f32 %v2443, %v2446
  %v2448 = vmul.f32 %v2447, 1.442695
  %v2449 = vpow.pop %v2448
  %v2450 = vsel %vm337, %v2449, 0.0
  %2451 = vadd.xlane.f32.xlu0 %v2450
  %v2452 = vpop.xlane.xlu0 %2451
  %v2453 = vrcp.pop %v2452
  %v2454 = vmul.f32 %v2449, %v2453
  %v2455 = vld [vmem:[%s6] sm:$0xff]
  %2457 = vset.pattern.permute.xlu0 0
  %2458 = vperm.xlu0 %2457, %v2454
  %v2459 = vpop.permute.xlu0 %2458
  %v2461 = vmul.f32 %v2459, %v2455
  %v2462 = vld [vmem:[%s356] sm:$0xff]
  %2463 = vset.pattern.permute.xlu0 1
  %2464 = vperm.xlu0 %2463, %v2454
  %v2465 = vpop.permute.xlu0 %2464
  %v2467 = vmul.f32 %v2465, %v2462
  %v2468 = vadd.f32 %v2461, %v2467
  %v2469 = vld [vmem:[%s364] sm:$0xff]
  %2470 = vset.pattern.permute.xlu0 2
  %2471 = vperm.xlu0 %2470, %v2454
  %v2472 = vpop.permute.xlu0 %2471
  %v2474 = vmul.f32 %v2472, %v2469
  %v2475 = vadd.f32 %v2468, %v2474
  %v2476 = vld [vmem:[%s372] sm:$0xff]
  %2477 = vset.pattern.permute.xlu0 3
  %2478 = vperm.xlu0 %2477, %v2454
  %v2479 = vpop.permute.xlu0 %2478
  %v2481 = vmul.f32 %v2479, %v2476
  %v2482 = vadd.f32 %v2475, %v2481
  %v2483 = vld [vmem:[%s380] sm:$0xff]
  %2484 = vset.pattern.permute.xlu0 4
  %2485 = vperm.xlu0 %2484, %v2454
  %v2486 = vpop.permute.xlu0 %2485
  %v2488 = vmul.f32 %v2486, %v2483
  %v2489 = vadd.f32 %v2482, %v2488
  %v2490 = vld [vmem:[%s388] sm:$0xff]
  %2491 = vset.pattern.permute.xlu0 5
  %2492 = vperm.xlu0 %2491, %v2454
  %v2493 = vpop.permute.xlu0 %2492
  %v2495 = vmul.f32 %v2493, %v2490
  %v2496 = vadd.f32 %v2489, %v2495
  %v2497 = vld [vmem:[%s396] sm:$0xff]
  %2498 = vset.pattern.permute.xlu0 6
  %2499 = vperm.xlu0 %2498, %v2454
  %v2500 = vpop.permute.xlu0 %2499
  %v2502 = vmul.f32 %v2500, %v2497
  %v2503 = vadd.f32 %v2496, %v2502
  %v2504 = vld [vmem:[%s404] sm:$0xff]
  %2505 = vset.pattern.permute.xlu0 7
  %2506 = vperm.xlu0 %2505, %v2454
  %v2507 = vpop.permute.xlu0 %2506
  %v2509 = vmul.f32 %v2507, %v2504
  %v2510 = vadd.f32 %v2503, %v2509
  %2512 = vrot.lane.b32.xlu0 %v2332, 64
  %v2513 = vpop.permute.xlu0 %2512
  %v2515 = vsel %vm108, %v2510, %v2513
  %v2517 = vsel %vm110, %v2515, 0
  %2519 = vmatprep.subr.mxu0 0.0
  %2520 = vmatpush1.msra.mxu0 %v69
  %2521 = vmatprep.subr.mxu0 0.0
  %2522 = vmatpush1.msra.mxu0 %v70
  %2523 = vmatprep.subr.mxu0 0.0
  %2524 = vmatpush1.msra.mxu0 %v71
  %2525 = vmatprep.subr.mxu0 0.0
  %2526 = vmatpush1.msra.mxu0 %v72
  %2527 = vmatprep.subr.mxu0 0.0
  %2528 = vmatpush1.msra.mxu0 %v73
  %2529 = vmatprep.subr.mxu0 0.0
  %2530 = vmatpush1.msra.mxu0 %v74
  %2531 = vmatprep.subr.mxu0 0.0
  %2532 = vmatpush1.msra.mxu0 %v75
  %2533 = vmatprep.subr.mxu0 0.0
  %2534 = vmatpush1.msra.mxu0 %v76
  %2535 = vmatprep.subr.mxu0 0.0
  %2536 = vmatpush1.msra.mxu0 0.0
  %2537 = vmatprep.subr.mxu0 0.0
  %2538 = vmatpush1.msra.mxu0 0.0
  %2539 = vmatprep.subr.mxu0 0.0
  %2540 = vmatpush1.msra.mxu0 0.0
  %2541 = vmatprep.subr.mxu0 0.0
  %2542 = vmatpush1.msra.mxu0 0.0
  %2543 = vmatprep.subr.mxu0 0.0
  %2544 = vmatpush1.msra.mxu0 0.0
  %2545 = vmatprep.subr.mxu0 0.0
  %2546 = vmatpush1.msra.mxu0 0.0
  %2547 = vmatprep.subr.mxu0 0.0
  %2548 = vmatpush1.msra.mxu0 0.0
  %2549 = vmatprep.subr.mxu0 0.0
  %2550 = vmatpush1.msra.mxu0 0.0
  %2551 = vmatprep.subr.mxu0 0.0
  %2552 = vmatpush1.msra.mxu0 0.0
  %2553 = vmatprep.subr.mxu0 0.0
  %2554 = vmatpush1.msra.mxu0 0.0
  %2555 = vmatprep.subr.mxu0 0.0
  %2556 = vmatpush1.msra.mxu0 0.0
  %2557 = vmatprep.subr.mxu0 0.0
  %2558 = vmatpush1.msra.mxu0 0.0
  %2559 = vmatprep.subr.mxu0 0.0
  %2560 = vmatpush1.msra.mxu0 0.0
  %2561 = vmatprep.subr.mxu0 0.0
  %2562 = vmatpush1.msra.mxu0 0.0
  %2563 = vmatprep.subr.mxu0 0.0
  %2564 = vmatpush1.msra.mxu0 0.0
  %2565 = vmatprep.subr.mxu0 0.0
  %2566 = vmatpush1.msra.mxu0 0.0
  %2567 = vmatprep.subr.mxu0 0.0
  %2568 = vmatpush1.msra.mxu0 0.0
  %2569 = vmatprep.subr.mxu0 0.0
  %2570 = vmatpush1.msra.mxu0 0.0
  %2571 = vmatprep.subr.mxu0 0.0
  %2572 = vmatpush1.msra.mxu0 0.0
  %2573 = vmatprep.subr.mxu0 0.0
  %2574 = vmatpush1.msra.mxu0 0.0
  %2575 = vmatprep.subr.mxu0 0.0
  %2576 = vmatpush1.msra.mxu0 0.0
  %2577 = vmatprep.subr.mxu0 0.0
  %2578 = vmatpush1.msra.mxu0 0.0
  %2579 = vmatprep.subr.mxu0 0.0
  %2580 = vmatpush1.msra.mxu0 0.0
  %2581 = vmatprep.subr.mxu0 0.0
  %2582 = vmatpush1.msra.mxu0 0.0
  %2583 = vmatprep.mubr.f32.mxu0 0.0
  %2584 = vmatmul.mubr.f32.gmra.mrb[0].mxu0 %v2517
  %v2585 = vpop.f32.mrb[0].mxu0
  %v2586 = vadd.f32 %v82, %v2585
  %v2587 = vpop.f32.mrb[0].mxu0
  %2588 = vdwg.mxu0
  %v2589 = vtanh.pop %v2586
  %v2591 = vsel %vm108, %v2589, 0
  %2593 = vmatprep.subr.mxu0 0.0
  %2594 = vmatpush1.msra.mxu0 %v84
  %2595 = vmatprep.subr.mxu0 0.0
  %2596 = vmatpush1.msra.mxu0 %v85
  %2597 = vmatprep.subr.mxu0 0.0
  %2598 = vmatpush1.msra.mxu0 %v86
  %2599 = vmatprep.subr.mxu0 0.0
  %2600 = vmatpush1.msra.mxu0 %v87
  %2601 = vmatprep.subr.mxu0 0.0
  %2602 = vmatpush1.msra.mxu0 0.0
  %2603 = vmatprep.subr.mxu0 0.0
  %2604 = vmatpush1.msra.mxu0 0.0
  %2605 = vmatprep.subr.mxu0 0.0
  %2606 = vmatpush1.msra.mxu0 0.0
  %2607 = vmatprep.subr.mxu0 0.0
  %2608 = vmatpush1.msra.mxu0 0.0
  %2609 = vmatprep.subr.mxu0 0.0
  %2610 = vmatpush1.msra.mxu0 0.0
  %2611 = vmatprep.subr.mxu0 0.0
  %2612 = vmatpush1.msra.mxu0 0.0
  %2613 = vmatprep.subr.mxu0 0.0
  %2614 = vmatpush1.msra.mxu0 0.0
  %2615 = vmatprep.subr.mxu0 0.0
  %2616 = vmatpush1.msra.mxu0 0.0
  %2617 = vmatprep.subr.mxu0 0.0
  %2618 = vmatpush1.msra.mxu0 0.0
  %2619 = vmatprep.subr.mxu0 0.0
  %2620 = vmatpush1.msra.mxu0 0.0
  %2621 = vmatprep.subr.mxu0 0.0
  %2622 = vmatpush1.msra.mxu0 0.0
  %2623 = vmatprep.subr.mxu0 0.0
  %2624 = vmatpush1.msra.mxu0 0.0
  %2625 = vmatprep.subr.mxu0 0.0
  %2626 = vmatpush1.msra.mxu0 0.0
  %2627 = vmatprep.subr.mxu0 0.0
  %2628 = vmatpush1.msra.mxu0 0.0
  %2629 = vmatprep.subr.mxu0 0.0
  %2630 = vmatpush1.msra.mxu0 0.0
  %2631 = vmatprep.subr.mxu0 0.0
  %2632 = vmatpush1.msra.mxu0 0.0
  %2633 = vmatprep.subr.mxu0 0.0
  %2634 = vmatpush1.msra.mxu0 0.0
  %2635 = vmatprep.subr.mxu0 0.0
  %2636 = vmatpush1.msra.mxu0 0.0
  %2637 = vmatprep.subr.mxu0 0.0
  %2638 = vmatpush1.msra.mxu0 0.0
  %2639 = vmatprep.subr.mxu0 0.0
  %2640 = vmatpush1.msra.mxu0 0.0
  %2641 = vmatprep.subr.mxu0 0.0
  %2642 = vmatpush1.msra.mxu0 0.0
  %2643 = vmatprep.subr.mxu0 0.0
  %2644 = vmatpush1.msra.mxu0 0.0
  %2645 = vmatprep.subr.mxu0 0.0
  %2646 = vmatpush1.msra.mxu0 0.0
  %2647 = vmatprep.subr.mxu0 0.0
  %2648 = vmatpush1.msra.mxu0 0.0
  %2649 = vmatprep.subr.mxu0 0.0
  %2650 = vmatpush1.msra.mxu0 0.0
  %2651 = vmatprep.subr.mxu0 0.0
  %2652 = vmatpush1.msra.mxu0 0.0
  %2653 = vmatprep.subr.mxu0 0.0
  %2654 = vmatpush1.msra.mxu0 0.0
  %2655 = vmatprep.subr.mxu0 0.0
  %2656 = vmatpush1.msra.mxu0 0.0
  %2657 = vmatprep.mubr.f32.mxu0 0.0
  %2658 = vmatmul.mubr.f32.gmra.mrb[0].mxu0 %v2591
  %v2659 = vpop.f32.mrb[0].mxu0
  %v2660 = vadd.f32 %v93, %v2659
  %v2661 = vpop.f32.mrb[0].mxu0
  %2662 = vdwg.mxu0
  %s2663 = scalar_lea.vmem %s11, 32
  %2664 = vst [vmem:[%s2663] sm:$0xff] %v2660
  // Predicated region
  $region46: #{nmt_forward.3} parent=0 // pred_check
    _
  $region47: #{nmt_forward.3} parent=0 // pred_check_branch
    %2666 = sbr.rel (0) target = $region49
  $region48: #{nmt_forward.3} parent=0 // pred_region
    _
  $region49: #{nmt_forward.3} parent=0 // pred_fallthru
    _
  // Predicated region
  $region50: #{nmt_forward.3} parent=0 // pred_check
    _
  $region51: #{nmt_forward.3} parent=0 // pred_check_branch
    %2668 = sbr.rel (0) target = $region53
  $region52: #{nmt_forward.3} parent=0 // pred_region
    _
  $region53: #{nmt_forward.3} parent=0 // pred_fallthru
    _

// kernel: nmt_forward.2
$region0: #{nmt_forward.2}
  #allocation0 [shape = 'u32[]', space=smem, size = 0x4, offset = 0x4, fixed_abs, tag = 'smem constant byte address 0x4 - core index']
  #allocation1 [shape = 'u32[144,128]{1,0:T(1,128)}', space=vmem, size = 0x12000, scoped, tag = 'internal scratch']
  #allocation2 [shape = 'f32[8,8,64]{2,1,0:T(8,128)}', space=vmem, size = 0x8000, scoped, tag = 'scratch operand']
  %s0 = inlined_call_operand.vmem [shape: f32[8,8,32], index: 0, kind: input, shape index: {}]
  %s1 = inlined_call_operand.vmem [shape: f32[64,128], index: 1, kind: input, shape index: {}]
  %s2 = inlined_call_operand.vmem [shape: f32[1,128], index: 2, kind: input, shape index: {}]
  %s3 = inlined_call_operand.vmem [shape: f32[64,128], index: 3, kind: input, shape index: {}]
  %s4 = inlined_call_operand.vmem [shape: f32[1,128], index: 4, kind: input, shape index: {}]
  %s5 = inlined_call_operand.vmem [shape: f32[96,128], index: 5, kind: input, shape index: {}]
  %s6 = inlined_call_operand.vmem [shape: f32[1,128], index: 6, kind: input, shape index: {}]
  %s7 = inlined_call_operand.vmem [shape: f32[96,128], index: 7, kind: input, shape index: {}]
  %s8 = inlined_call_operand.vmem [shape: f32[1,128], index: 8, kind: input, shape index: {}]
  %s9 = inlined_call_operand.vmem [shape: f32[32,32], index: 9, kind: input, shape index: {}]
  %s10 = inlined_call_operand.vmem [shape: f32[1,32], index: 10, kind: input, shape index: {}]
  %s11 = inlined_call_operand.vmem [shape: f32[8,8,32], index: 11, kind: output, shape index: {0}]
  %s12 = inlined_call_operand.vmem [shape: f32[8,8,32], index: 12, kind: output, shape index: {1}]
  %s13 = inlined_call_operand.vmem [shape: f32[8,32], index: 13, kind: output, shape index: {2}]
  %s14 = inlined_call_operand.vmem [shape: f32[8,32], index: 14, kind: output, shape index: {3}]
  %15 = xla_tuple %s11, %s12, %s13, %s14
  %s16 = sld [smem:[#allocation0]]
  $region78: #{nmt_forward.2} parent=0
    _
  %s18 = ssub.s32 1, %s16
  %s19 = scalar_select 0, %s18, %s16
  // Predicated region
  $region2: #{nmt_forward.2} parent=0 // pred_check
    _
  $region3: #{nmt_forward.2} parent=0 // pred_check_branch
    %21 = sbr.rel (0) target = $region5
  $region4: #{nmt_forward.2} parent=0 // pred_region
    _
  $region5: #{nmt_forward.2} parent=0 // pred_fallthru
    _
  // Predicated region
  $region6: #{nmt_forward.2} parent=0 // pred_check
    _
  $region7: #{nmt_forward.2} parent=0 // pred_check_branch
    %23 = sbr.rel (0) target = $region9
  $region8: #{nmt_forward.2} parent=0 // pred_region
    _
  $region9: #{nmt_forward.2} parent=0 // pred_fallthru
    _
  // Predicated region
  $region10: #{nmt_forward.2} parent=0 // pred_check
    _
  $region11: #{nmt_forward.2} parent=0 // pred_check_branch
    %25 = sbr.rel (0) target = $region13
  $region12: #{nmt_forward.2} parent=0 // pred_region
    _
  $region13: #{nmt_forward.2} parent=0 // pred_fallthru
    _
  // Predicated region
  $region14: #{nmt_forward.2} parent=0 // pred_check
    _
  $region15: #{nmt_forward.2} parent=0 // pred_check_branch
    %27 = sbr.rel (0) target = $region17
  $region16: #{nmt_forward.2} parent=0 // pred_region
    _
  $region17: #{nmt_forward.2} parent=0 // pred_fallthru
    _
  // Predicated region
  $region18: #{nmt_forward.2} parent=0 // pred_check
    _
  $region19: #{nmt_forward.2} parent=0 // pred_check_branch
    %29 = sbr.rel (0) target = $region21
  $region20: #{nmt_forward.2} parent=0 // pred_region
    _
  $region21: #{nmt_forward.2} parent=0 // pred_fallthru
    _
  // Predicated region
  $region22: #{nmt_forward.2} parent=0 // pred_check
    _
  $region23: #{nmt_forward.2} parent=0 // pred_check_branch
    %31 = sbr.rel (0) target = $region25
  $region24: #{nmt_forward.2} parent=0 // pred_region
    _
  $region25: #{nmt_forward.2} parent=0 // pred_fallthru
    _
  // Predicated region
  $region26: #{nmt_forward.2} parent=0 // pred_check
    _
  $region27: #{nmt_forward.2} parent=0 // pred_check_branch
    %33 = sbr.rel (0) target = $region29
  $region28: #{nmt_forward.2} parent=0 // pred_region
    _
  $region29: #{nmt_forward.2} parent=0 // pred_fallthru
    _
  // Predicated region
  $region30: #{nmt_forward.2} parent=0 // pred_check
    _
  $region31: #{nmt_forward.2} parent=0 // pred_check_branch
    %35 = sbr.rel (0) target = $region33
  $region32: #{nmt_forward.2} parent=0 // pred_region
    _
  $region33: #{nmt_forward.2} parent=0 // pred_fallthru
    _
  // Predicated region
  $region34: #{nmt_forward.2} parent=0 // pred_check
    _
  $region35: #{nmt_forward.2} parent=0 // pred_check_branch
    %37 = sbr.rel (0) target = $region37
  $region36: #{nmt_forward.2} parent=0 // pred_region
    _
  $region37: #{nmt_forward.2} parent=0 // pred_fallthru
    _
  // Predicated region
  $region38: #{nmt_forward.2} parent=0 // pred_check
    _
  $region39: #{nmt_forward.2} parent=0 // pred_check_branch
    %39 = sbr.rel (0) target = $region41
  $region40: #{nmt_forward.2} parent=0 // pred_region
    _
  $region41: #{nmt_forward.2} parent=0 // pred_fallthru
    _
  // Predicated region
  $region42: #{nmt_forward.2} parent=0 // pred_check
    _
  $region43: #{nmt_forward.2} parent=0 // pred_check_branch
    %41 = sbr.rel (0) target = $region45
  $region44: #{nmt_forward.2} parent=0 // pred_region
    _
  $region45: #{nmt_forward.2} parent=0 // pred_fallthru
    _
  %v42 = vld [vmem:[%s1] sm:$0xff]
  %v43 = vld [vmem:[%s1 + $0x8] sm:$0xff]
  %v44 = vld [vmem:[%s1 + $0x10] sm:$0xff]
  %v45 = vld [vmem:[%s1 + $0x18] sm:$0xff]
  %v46 = vld [vmem:[%s1 + $0x20] sm:$0xff]
  %v47 = vld [vmem:[%s1 + $0x28] sm:$0xff]
  %v48 = vld [vmem:[%s1 + $0x30] sm:$0xff]
  %v49 = vld [vmem:[%s1 + $0x38] sm:$0xff]
  %v50 = vld [vmem:[%s3] sm:$0xff]
  %v51 = vld [vmem:[%s3 + $0x8] sm:$0xff]
  %v52 = vld [vmem:[%s3 + $0x10] sm:$0xff]
  %v53 = vld [vmem:[%s3 + $0x18] sm:$0xff]
  %v54 = vld [vmem:[%s3 + $0x20] sm:$0xff]
  %v55 = vld [vmem:[%s3 + $0x28] sm:$0xff]
  %v56 = vld [vmem:[%s3 + $0x30] sm:$0xff]
  %v57 = vld [vmem:[%s3 + $0x38] sm:$0xff]
  %v58 = vld [vmem:[%s5] sm:$0xff]
  %v59 = vld [vmem:[%s5 + $0x8] sm:$0xff]
  %v60 = vld [vmem:[%s5 + $0x10] sm:$0xff]
  %v61 = vld [vmem:[%s5 + $0x18] sm:$0xff]
  %v62 = vld [vmem:[%s5 + $0x20] sm:$0xff]
  %v63 = vld [vmem:[%s5 + $0x28] sm:$0xff]
  %v64 = vld [vmem:[%s5 + $0x30] sm:$0xff]
  %v65 = vld [vmem:[%s5 + $0x38] sm:$0xff]
  %v66 = vld [vmem:[%s5 + $0x40] sm:$0xff]
  %v67 = vld [vmem:[%s5 + $0x48] sm:$0xff]
  %v68 = vld [vmem:[%s5 + $0x50] sm:$0xff]
  %v69 = vld [vmem:[%s5 + $0x58] sm:$0xff]
  %v70 = vld [vmem:[%s7] sm:$0xff]
  %v71 = vld [vmem:[%s7 + $0x8] sm:$0xff]
  %v72 = vld [vmem:[%s7 + $0x10] sm:$0xff]
  %v73 = vld [vmem:[%s7 + $0x18] sm:$0xff]
  %v74 = vld [vmem:[%s7 + $0x20] sm:$0xff]
  %v75 = vld [vmem:[%s7 + $0x28] sm:$0xff]
  %v76 = vld [vmem:[%s7 + $0x30] sm:$0xff]
  %v77 = vld [vmem:[%s7 + $0x38] sm:$0xff]
  %v78 = vld [vmem:[%s7 + $0x40] sm:$0xff]
  %v79 = vld [vmem:[%s7 + $0x48] sm:$0xff]
  %v80 = vld [vmem:[%s7 + $0x50] sm:$0xff]
  %v81 = vld [vmem:[%s7 + $0x58] sm:$0xff]
  %v82 = vld [vmem:[%s2] sm:$0x1]
  %v84 = vlaneseq
  %v85 = vshrl.u32 %v84, 7
  %v86 = vsub.s32 0, %v85
  %v87 = vrot.slane %v82, %v86
  %v89 = vld [vmem:[%s4] sm:$0x1]
  %v91 = vlaneseq
  %v92 = vshrl.u32 %v91, 7
  %v93 = vsub.s32 0, %v92
  %v94 = vrot.slane %v89, %v93
  %v96 = vld [vmem:[%s6] sm:$0x1]
  %v98 = vlaneseq
  %v99 = vshrl.u32 %v98, 7
  %v100 = vsub.s32 0, %v99
  %v101 = vrot.slane %v96, %v100
  %v103 = vld [vmem:[%s8] sm:$0x1]
  %v105 = vlaneseq
  %v106 = vshrl.u32 %v105, 7
  %v107 = vsub.s32 0, %v106
  %v108 = vrot.slane %v103, %v107
  %v110 = vld [vmem:[%s0] sm:$0xff]
  %vm111 = vcmask 261120
  %v112 = vsel %vm111, %v110, 0.0
  %vm113 = vcmask 523264
  %v115 = vsel %vm113, %v112, 0
  %117 = vmatprep.subr.mxu0 0.0
  %118 = vmatpush1.msra.mxu0 %v42
  %119 = vmatprep.subr.mxu0 0.0
  %120 = vmatpush1.msra.mxu0 %v43
  %121 = vmatprep.subr.mxu0 0.0
  %122 = vmatpush1.msra.mxu0 %v44
  %123 = vmatprep.subr.mxu0 0.0
  %124 = vmatpush1.msra.mxu0 %v45
  %125 = vmatprep.subr.mxu0 0.0
  %126 = vmatpush1.msra.mxu0 %v46
  %127 = vmatprep.subr.mxu0 0.0
  %128 = vmatpush1.msra.mxu0 %v47
  %129 = vmatprep.subr.mxu0 0.0
  %130 = vmatpush1.msra.mxu0 %v48
  %131 = vmatprep.subr.mxu0 0.0
  %132 = vmatpush1.msra.mxu0 %v49
  %133 = vmatprep.subr.mxu0 0.0
  %134 = vmatpush1.msra.mxu0 0.0
  %135 = vmatprep.subr.mxu0 0.0
  %136 = vmatpush1.msra.mxu0 0.0
  %137 = vmatprep.subr.mxu0 0.0
  %138 = vmatpush1.msra.mxu0 0.0
  %139 = vmatprep.subr.mxu0 0.0
  %140 = vmatpush1.msra.mxu0 0.0
  %141 = vmatprep.subr.mxu0 0.0
  %142 = vmatpush1.msra.mxu0 0.0
  %143 = vmatprep.subr.mxu0 0.0
  %144 = vmatpush1.msra.mxu0 0.0
  %145 = vmatprep.subr.mxu0 0.0
  %146 = vmatpush1.msra.mxu0 0.0
  %147 = vmatprep.subr.mxu0 0.0
  %148 = vmatpush1.msra.mxu0 0.0
  %149 = vmatprep.subr.mxu0 0.0
  %150 = vmatpush1.msra.mxu0 0.0
  %151 = vmatprep.subr.mxu0 0.0
  %152 = vmatpush1.msra.mxu0 0.0
  %153 = vmatprep.subr.mxu0 0.0
  %154 = vmatpush1.msra.mxu0 0.0
  %155 = vmatprep.subr.mxu0 0.0
  %156 = vmatpush1.msra.mxu0 0.0
  %157 = vmatprep.subr.mxu0 0.0
  %158 = vmatpush1.msra.mxu0 0.0
  %159 = vmatprep.subr.mxu0 0.0
  %160 = vmatpush1.msra.mxu0 0.0
  %161 = vmatprep.subr.mxu0 0.0
  %162 = vmatpush1.msra.mxu0 0.0
  %163 = vmatprep.subr.mxu0 0.0
  %164 = vmatpush1.msra.mxu0 0.0
  %165 = vmatprep.subr.mxu0 0.0
  %166 = vmatpush1.msra.mxu0 0.0
  %167 = vmatprep.subr.mxu0 0.0
  %168 = vmatpush1.msra.mxu0 0.0
  %169 = vmatprep.subr.mxu0 0.0
  %170 = vmatpush1.msra.mxu0 0.0
  %171 = vmatprep.subr.mxu0 0.0
  %172 = vmatpush1.msra.mxu0 0.0
  %173 = vmatprep.subr.mxu0 0.0
  %174 = vmatpush1.msra.mxu0 0.0
  %175 = vmatprep.subr.mxu0 0.0
  %176 = vmatpush1.msra.mxu0 0.0
  %177 = vmatprep.subr.mxu0 0.0
  %178 = vmatpush1.msra.mxu0 0.0
  %179 = vmatprep.subr.mxu0 0.0
  %180 = vmatpush1.msra.mxu0 0.0
  %181 = vmatprep.mubr.f32.mxu0 0.0
  %182 = vmatmul.mubr.f32.gmra.mrb[0].mxu0 %v115
  %v183 = vpop.f32.mrb[0].mxu0
  %v184 = vadd.f32 %v87, %v183
  %v185 = vpop.f32.mrb[0].mxu0
  %186 = vdwg.mxu0
  %v187 = vxor.u32 %v184, 2147483648
  %v188 = vmul.f32 %v187, 1.442695
  %v189 = vpow.pop %v188
  %v190 = vadd.f32 %v189, 1.0
  %v191 = vrcp.pop %v190
  %v192 = vmul.f32 1.0, %v191
  %v193 = vtanh.pop %v184
  %v194 = vmul.f32 %v192, 0.0
  %196 = vrot.lane.b32.xlu0 %v193, 64
  %v197 = vpop.permute.xlu0 %196
  %v199 = vmul.f32 %v192, %v197
  %201 = vrot.lane.b32.xlu0 %v199, 32
  %v202 = vpop.permute.xlu0 %201
  %v204 = vadd.f32 %v194, %v202
  %v205 = vtanh.pop %v204
  %207 = vrot.lane.b32.xlu0 %v205, 64
  %v208 = vpop.permute.xlu0 %207
  %v210 = vmul.f32 %v192, %v208
  %212 = vrot.lane.b32.xlu0 %v210, 32
  %v213 = vpop.permute.xlu0 %212
  %215 = vst.msk [vmem:[#allocation2] sm:$0xff] %vm111, %v213
  %s216 = scalar_lea.vmem %s0, 8
  %v217 = vld [vmem:[%s216] sm:$0xff]
  %218 = vrot.lane.b32.xlu0 %v210, 64
  %v219 = vpop.permute.xlu0 %218
  %v221 = vsel %vm111, %v217, %v219
  %v223 = vsel %vm113, %v221, 0
  %225 = vmatprep.subr.mxu0 0.0
  %226 = vmatpush1.msra.mxu0 %v42
  %227 = vmatprep.subr.mxu0 0.0
  %228 = vmatpush1.msra.mxu0 %v43
  %229 = vmatprep.subr.mxu0 0.0
  %230 = vmatpush1.msra.mxu0 %v44
  %231 = vmatprep.subr.mxu0 0.0
  %232 = vmatpush1.msra.mxu0 %v45
  %233 = vmatprep.subr.mxu0 0.0
  %234 = vmatpush1.msra.mxu0 %v46
  %235 = vmatprep.subr.mxu0 0.0
  %236 = vmatpush1.msra.mxu0 %v47
  %237 = vmatprep.subr.mxu0 0.0
  %238 = vmatpush1.msra.mxu0 %v48
  %239 = vmatprep.subr.mxu0 0.0
  %240 = vmatpush1.msra.mxu0 %v49
  %241 = vmatprep.subr.mxu0 0.0
  %242 = vmatpush1.msra.mxu0 0.0
  %243 = vmatprep.subr.mxu0 0.0
  %244 = vmatpush1.msra.mxu0 0.0
  %245 = vmatprep.subr.mxu0 0.0
  %246 = vmatpush1.msra.mxu0 0.0
  %247 = vmatprep.subr.mxu0 0.0
  %248 = vmatpush1.msra.mxu0 0.0
  %249 = vmatprep.subr.mxu0 0.0
  %250 = vmatpush1.msra.mxu0 0.0
  %251 = vmatprep.subr.mxu0 0.0
  %252 = vmatpush1.msra.mxu0 0.0
  %253 = vmatprep.subr.mxu0 0.0
  %254 = vmatpush1.msra.mxu0 0.0
  %255 = vmatprep.subr.mxu0 0.0
  %256 = vmatpush1.msra.mxu0 0.0
  %257 = vmatprep.subr.mxu0 0.0
  %258 = vmatpush1.msra.mxu0 0.0
  %259 = vmatprep.subr.mxu0 0.0
  %260 = vmatpush1.msra.mxu0 0.0
  %261 = vmatprep.subr.mxu0 0.0
  %262 = vmatpush1.msra.mxu0 0.0
  %263 = vmatprep.subr.mxu0 0.0
  %264 = vmatpush1.msra.mxu0 0.0
  %265 = vmatprep.subr.mxu0 0.0
  %266 = vmatpush1.msra.mxu0 0.0
  %267 = vmatprep.subr.mxu0 0.0
  %268 = vmatpush1.msra.mxu0 0.0
  %269 = vmatprep.subr.mxu0 0.0
  %270 = vmatpush1.msra.mxu0 0.0
  %271 = vmatprep.subr.mxu0 0.0
  %272 = vmatpush1.msra.mxu0 0.0
  %273 = vmatprep.subr.mxu0 0.0
  %274 = vmatpush1.msra.mxu0 0.0
  %275 = vmatprep.subr.mxu0 0.0
  %276 = vmatpush1.msra.mxu0 0.0
  %277 = vmatprep.subr.mxu0 0.0
  %278 = vmatpush1.msra.mxu0 0.0
  %279 = vmatprep.subr.mxu0 0.0
  %280 = vmatpush1.msra.mxu0 0.0
  %281 = vmatprep.subr.mxu0 0.0
  %282 = vmatpush1.msra.mxu0 0.0
  %283 = vmatprep.subr.mxu0 0.0
  %284 = vmatpush1.msra.mxu0 0.0
  %285 = vmatprep.subr.mxu0 0.0
  %286 = vmatpush1.msra.mxu0 0.0
  %287 = vmatprep.subr.mxu0 0.0
  %288 = vmatpush1.msra.mxu0 0.0
  %289 = vmatprep.mubr.f32.mxu0 0.0
  %290 = vmatmul.mubr.f32.gmra.mrb[0].mxu0 %v223
  %v291 = vpop.f32.mrb[0].mxu0
  %v292 = vadd.f32 %v87, %v291
  %v293 = vpop.f32.mrb[0].mxu0
  %294 = vdwg.mxu0
  %v295 = vxor.u32 %v292, 2147483648
  %v296 = vmul.f32 %v295, 1.442695
  %v297 = vpow.pop %v296
  %v298 = vadd.f32 %v297, 1.0
  %v299 = vrcp.pop %v298
  %v300 = vmul.f32 1.0, %v299
  %v301 = vtanh.pop %v292
  %v302 = vmul.f32 %v300, %v204
  %304 = vrot.lane.b32.xlu0 %v301, 64
  %v305 = vpop.permute.xlu0 %304
  %v307 = vmul.f32 %v300, %v305
  %309 = vrot.lane.b32.xlu0 %v307, 32
  %v310 = vpop.permute.xlu0 %309
  %v312 = vadd.f32 %v302, %v310
  %v313 = vtanh.pop %v312
  %315 = vrot.lane.b32.xlu0 %v313, 64
  %v316 = vpop.permute.xlu0 %315
  %v318 = vmul.f32 %v300, %v316
  %320 = vrot.lane.b32.xlu0 %v318, 32
  %v321 = vpop.permute.xlu0 %320
  %s323 = scalar_lea.vmem [#allocation2], 8
  %324 = vst.msk [vmem:[%s323] sm:$0xff] %vm111, %v321
  %s325 = scalar_lea.vmem %s0, 16
  %v326 = vld [vmem:[%s325] sm:$0xff]
  %327 = vrot.lane.b32.xlu0 %v318, 64
  %v328 = vpop.permute.xlu0 %327
  %v330 = vsel %vm111, %v326, %v328
  %v332 = vsel %vm113, %v330, 0
  %334 = vmatprep.subr.mxu0 0.0
  %335 = vmatpush1.msra.mxu0 %v42
  %336 = vmatprep.subr.mxu0 0.0
  %337 = vmatpush1.msra.mxu0 %v43
  %338 = vmatprep.subr.mxu0 0.0
  %339 = vmatpush1.msra.mxu0 %v44
  %340 = vmatprep.subr.mxu0 0.0
  %341 = vmatpush1.msra.mxu0 %v45
  %342 = vmatprep.subr.mxu0 0.0
  %343 = vmatpush1.msra.mxu0 %v46
  %344 = vmatprep.subr.mxu0 0.0
  %345 = vmatpush1.msra.mxu0 %v47
  %346 = vmatprep.subr.mxu0 0.0
  %347 = vmatpush1.msra.mxu0 %v48
  %348 = vmatprep.subr.mxu0 0.0
  %349 = vmatpush1.msra.mxu0 %v49
  %350 = vmatprep.subr.mxu0 0.0
  %351 = vmatpush1.msra.mxu0 0.0
  %352 = vmatprep.subr.mxu0 0.0
  %353 = vmatpush1.msra.mxu0 0.0
  %354 = vmatprep.subr.mxu0 0.0
  %355 = vmatpush1.msra.mxu0 0.0
  %356 = vmatprep.subr.mxu0 0.0
  %357 = vmatpush1.msra.mxu0 0.0
  %358 = vmatprep.subr.mxu0 0.0
  %359 = vmatpush1.msra.mxu0 0.0
  %360 = vmatprep.subr.mxu0 0.0
  %361 = vmatpush1.msra.mxu0 0.0
  %362 = vmatprep.subr.mxu0 0.0
  %363 = vmatpush1.msra.mxu0 0.0
  %364 = vmatprep.subr.mxu0 0.0
  %365 = vmatpush1.msra.mxu0 0.0
  %366 = vmatprep.subr.mxu0 0.0
  %367 = vmatpush1.msra.mxu0 0.0
  %368 = vmatprep.subr.mxu0 0.0
  %369 = vmatpush1.msra.mxu0 0.0
  %370 = vmatprep.subr.mxu0 0.0
  %371 = vmatpush1.msra.mxu0 0.0
  %372 = vmatprep.subr.mxu0 0.0
  %373 = vmatpush1.msra.mxu0 0.0
  %374 = vmatprep.subr.mxu0 0.0
  %375 = vmatpush1.msra.mxu0 0.0
  %376 = vmatprep.subr.mxu0 0.0
  %377 = vmatpush1.msra.mxu0 0.0
  %378 = vmatprep.subr.mxu0 0.0
  %379 = vmatpush1.msra.mxu0 0.0
  %380 = vmatprep.subr.mxu0 0.0
  %381 = vmatpush1.msra.mxu0 0.0
  %382 = vmatprep.subr.mxu0 0.0
  %383 = vmatpush1.msra.mxu0 0.0
  %384 = vmatprep.subr.mxu0 0.0
  %385 = vmatpush1.msra.mxu0 0.0
  %386 = vmatprep.subr.mxu0 0.0
  %387 = vmatpush1.msra.mxu0 0.0
  %388 = vmatprep.subr.mxu0 0.0
  %389 = vmatpush1.msra.mxu0 0.0
  %390 = vmatprep.subr.mxu0 0.0
  %391 = vmatpush1.msra.mxu0 0.0
  %392 = vmatprep.subr.mxu0 0.0
  %393 = vmatpush1.msra.mxu0 0.0
  %394 = vmatprep.subr.mxu0 0.0
  %395 = vmatpush1.msra.mxu0 0.0
  %396 = vmatprep.subr.mxu0 0.0
  %397 = vmatpush1.msra.mxu0 0.0
  %398 = vmatprep.mubr.f32.mxu0 0.0
  %399 = vmatmul.mubr.f32.gmra.mrb[0].mxu0 %v332
  %v400 = vpop.f32.mrb[0].mxu0
  %v401 = vadd.f32 %v87, %v400
  %v402 = vpop.f32.mrb[0].mxu0
  %403 = vdwg.mxu0
  %v404 = vxor.u32 %v401, 2147483648
  %v405 = vmul.f32 %v404, 1.442695
  %v406 = vpow.pop %v405
  %v407 = vadd.f32 %v406, 1.0
  %v408 = vrcp.pop %v407
  %v409 = vmul.f32 1.0, %v408
  %v410 = vtanh.pop %v401
  %v411 = vmul.f32 %v409, %v312
  %413 = vrot.lane.b32.xlu0 %v410, 64
  %v414 = vpop.permute.xlu0 %413
  %v416 = vmul.f32 %v409, %v414
  %418 = vrot.lane.b32.xlu0 %v416, 32
  %v419 = vpop.permute.xlu0 %418
  %v421 = vadd.f32 %v411, %v419
  %v422 = vtanh.pop %v421
  %424 = vrot.lane.b32.xlu0 %v422, 64
  %v425 = vpop.permute.xlu0 %424
  %v427 = vmul.f32 %v409, %v425
  %429 = vrot.lane.b32.xlu0 %v427, 32
  %v430 = vpop.permute.xlu0 %429
  %s432 = scalar_lea.vmem [#allocation2], 16
  %433 = vst.msk [vmem:[%s432] sm:$0xff] %vm111, %v430
  %s434 = scalar_lea.vmem %s0, 24
  %v435 = vld [vmem:[%s434] sm:$0xff]
  %436 = vrot.lane.b32.xlu0 %v427, 64
  %v437 = vpop.permute.xlu0 %436
  %v439 = vsel %vm111, %v435, %v437
  %v441 = vsel %vm113, %v439, 0
  %443 = vmatprep.subr.mxu0 0.0
  %444 = vmatpush1.msra.mxu0 %v42
  %445 = vmatprep.subr.mxu0 0.0
  %446 = vmatpush1.msra.mxu0 %v43
  %447 = vmatprep.subr.mxu0 0.0
  %448 = vmatpush1.msra.mxu0 %v44
  %449 = vmatprep.subr.mxu0 0.0
  %450 = vmatpush1.msra.mxu0 %v45
  %451 = vmatprep.subr.mxu0 0.0
  %452 = vmatpush1.msra.mxu0 %v46
  %453 = vmatprep.subr.mxu0 0.0
  %454 = vmatpush1.msra.mxu0 %v47
  %455 = vmatprep.subr.mxu0 0.0
  %456 = vmatpush1.msra.mxu0 %v48
  %457 = vmatprep.subr.mxu0 0.0
  %458 = vmatpush1.msra.mxu0 %v49
  %459 = vmatprep.subr.mxu0 0.0
  %460 = vmatpush1.msra.mxu0 0.0
  %461 = vmatprep.subr.mxu0 0.0
  %462 = vmatpush1.msra.mxu0 0.0
  %463 = vmatprep.subr.mxu0 0.0
  %464 = vmatpush1.msra.mxu0 0.0
  %465 = vmatprep.subr.mxu0 0.0
  %466 = vmatpush1.msra.mxu0 0.0
  %467 = vmatprep.subr.mxu0 0.0
  %468 = vmatpush1.msra.mxu0 0.0
  %469 = vmatprep.subr.mxu0 0.0
  %470 = vmatpush1.msra.mxu0 0.0
  %471 = vmatprep.subr.mxu0 0.0
  %472 = vmatpush1.msra.mxu0 0.0
  %473 = vmatprep.subr.mxu0 0.0
  %474 = vmatpush1.msra.mxu0 0.0
  %475 = vmatprep.subr.mxu0 0.0
  %476 = vmatpush1.msra.mxu0 0.0
  %477 = vmatprep.subr.mxu0 0.0
  %478 = vmatpush1.msra.mxu0 0.0
  %479 = vmatprep.subr.mxu0 0.0
  %480 = vmatpush1.msra.mxu0 0.0
  %481 = vmatprep.subr.mxu0 0.0
  %482 = vmatpush1.msra.mxu0 0.0
  %483 = vmatprep.subr.mxu0 0.0
  %484 = vmatpush1.msra.mxu0 0.0
  %485 = vmatprep.subr.mxu0 0.0
  %486 = vmatpush1.msra.mxu0 0.0
  %487 = vmatprep.subr.mxu0 0.0
  %488 = vmatpush1.msra.mxu0 0.0
  %489 = vmatprep.subr.mxu0 0.0
  %490 = vmatpush1.msra.mxu0 0.0
  %491 = vmatprep.subr.mxu0 0.0
  %492 = vmatpush1.msra.mxu0 0.0
  %493 = vmatprep.subr.mxu0 0.0
  %494 = vmatpush1.msra.mxu0 0.0
  %495 = vmatprep.subr.mxu0 0.0
  %496 = vmatpush1.msra.mxu0 0.0
  %497 = vmatprep.subr.mxu0 0.0
  %498 = vmatpush1.msra.mxu0 0.0
  %499 = vmatprep.subr.mxu0 0.0
  %500 = vmatpush1.msra.mxu0 0.0
  %501 = vmatprep.subr.mxu0 0.0
  %502 = vmatpush1.msra.mxu0 0.0
  %503 = vmatprep.subr.mxu0 0.0
  %504 = vmatpush1.msra.mxu0 0.0
  %505 = vmatprep.subr.mxu0 0.0
  %506 = vmatpush1.msra.mxu0 0.0
  %507 = vmatprep.mubr.f32.mxu0 0.0
  %508 = vmatmul.mubr.f32.gmra.mrb[0].mxu0 %v441
  %v509 = vpop.f32.mrb[0].mxu0
  %v510 = vadd.f32 %v87, %v509
  %v511 = vpop.f32.mrb[0].mxu0
  %512 = vdwg.mxu0
  %v513 = vxor.u32 %v510, 2147483648
  %v514 = vmul.f32 %v513, 1.442695
  %v515 = vpow.pop %v514
  %v516 = vadd.f32 %v515, 1.0
  %v517 = vrcp.pop %v516
  %v518 = vmul.f32 1.0, %v517
  %v519 = vtanh.pop %v510
  %v520 = vmul.f32 %v518, %v421
  %522 = vrot.lane.b32.xlu0 %v519, 64
  %v523 = vpop.permute.xlu0 %522
  %v525 = vmul.f32 %v518, %v523
  %527 = vrot.lane.b32.xlu0 %v525, 32
  %v528 = vpop.permute.xlu0 %527
  %v530 = vadd.f32 %v520, %v528
  %v531 = vtanh.pop %v530
  %533 = vrot.lane.b32.xlu0 %v531, 64
  %v534 = vpop.permute.xlu0 %533
  %v536 = vmul.f32 %v518, %v534
  %538 = vrot.lane.b32.xlu0 %v536, 32
  %v539 = vpop.permute.xlu0 %538
  %s541 = scalar_lea.vmem [#allocation2], 24
  %542 = vst.msk [vmem:[%s541] sm:$0xff] %vm111, %v539
  %s543 = scalar_lea.vmem %s0, 32
  %v544 = vld [vmem:[%s543] sm:$0xff]
  %545 = vrot.lane.b32.xlu0 %v536, 64
  %v546 = vpop.permute.xlu0 %545
  %v548 = vsel %vm111, %v544, %v546
  %v550 = vsel %vm113, %v548, 0
  %552 = vmatprep.subr.mxu0 0.0
  %553 = vmatpush1.msra.mxu0 %v42
  %554 = vmatprep.subr.mxu0 0.0
  %555 = vmatpush1.msra.mxu0 %v43
  %556 = vmatprep.subr.mxu0 0.0
  %557 = vmatpush1.msra.mxu0 %v44
  %558 = vmatprep.subr.mxu0 0.0
  %559 = vmatpush1.msra.mxu0 %v45
  %560 = vmatprep.subr.mxu0 0.0
  %561 = vmatpush1.msra.mxu0 %v46
  %562 = vmatprep.subr.mxu0 0.0
  %563 = vmatpush1.msra.mxu0 %v47
  %564 = vmatprep.subr.mxu0 0.0
  %565 = vmatpush1.msra.mxu0 %v48
  %566 = vmatprep.subr.mxu0 0.0
  %567 = vmatpush1.msra.mxu0 %v49
  %568 = vmatprep.subr.mxu0 0.0
  %569 = vmatpush1.msra.mxu0 0.0
  %570 = vmatprep.subr.mxu0 0.0
  %571 = vmatpush1.msra.mxu0 0.0
  %572 = vmatprep.subr.mxu0 0.0
  %573 = vmatpush1.msra.mxu0 0.0
  %574 = vmatprep.subr.mxu0 0.0
  %575 = vmatpush1.msra.mxu0 0.0
  %576 = vmatprep.subr.mxu0 0.0
  %577 = vmatpush1.msra.mxu0 0.0
  %578 = vmatprep.subr.mxu0 0.0
  %579 = vmatpush1.msra.mxu0 0.0
  %580 = vmatprep.subr.mxu0 0.0
  %581 = vmatpush1.msra.mxu0 0.0
  %582 = vmatprep.subr.mxu0 0.0
  %583 = vmatpush1.msra.mxu0 0.0
  %584 = vmatprep.subr.mxu0 0.0
  %585 = vmatpush1.msra.mxu0 0.0
  %586 = vmatprep.subr.mxu0 0.0
  %587 = vmatpush1.msra.mxu0 0.0
  %588 = vmatprep.subr.mxu0 0.0
  %589 = vmatpush1.msra.mxu0 0.0
  %590 = vmatprep.subr.mxu0 0.0
  %591 = vmatpush1.msra.mxu0 0.0
  %592 = vmatprep.subr.mxu0 0.0
  %593 = vmatpush1.msra.mxu0 0.0
  %594 = vmatprep.subr.mxu0 0.0
  %595 = vmatpush1.msra.mxu0 0.0
  %596 = vmatprep.subr.mxu0 0.0
  %597 = vmatpush1.msra.mxu0 0.0
  %598 = vmatprep.subr.mxu0 0.0
  %599 = vmatpush1.msra.mxu0 0.0
  %600 = vmatprep.subr.mxu0 0.0
  %601 = vmatpush1.msra.mxu0 0.0
  %602 = vmatprep.subr.mxu0 0.0
  %603 = vmatpush1.msra.mxu0 0.0
  %604 = vmatprep.subr.mxu0 0.0
  %605 = vmatpush1.msra.mxu0 0.0
  %606 = vmatprep.subr.mxu0 0.0
  %607 = vmatpush1.msra.mxu0 0.0
  %608 = vmatprep.subr.mxu0 0.0
  %609 = vmatpush1.msra.mxu0 0.0
  %610 = vmatprep.subr.mxu0 0.0
  %611 = vmatpush1.msra.mxu0 0.0
  %612 = vmatprep.subr.mxu0 0.0
  %613 = vmatpush1.msra.mxu0 0.0
  %614 = vmatprep.subr.mxu0 0.0
  %615 = vmatpush1.msra.mxu0 0.0
  %616 = vmatprep.mubr.f32.mxu0 0.0
  %617 = vmatmul.mubr.f32.gmra.mrb[0].mxu0 %v550
  %v618 = vpop.f32.mrb[0].mxu0
  %v619 = vadd.f32 %v87, %v618
  %v620 = vpop.f32.mrb[0].mxu0
  %621 = vdwg.mxu0
  %v622 = vxor.u32 %v619, 2147483648
  %v623 = vmul.f32 %v622, 1.442695
  %v624 = vpow.pop %v623
  %v625 = vadd.f32 %v624, 1.0
  %v626 = vrcp.pop %v625
  %v627 = vmul.f32 1.0, %v626
  %v628 = vtanh.pop %v619
  %v629 = vmul.f32 %v627, %v530
  %631 = vrot.lane.b32.xlu0 %v628, 64
  %v632 = vpop.permute.xlu0 %631
  %v634 = vmul.f32 %v627, %v632
  %636 = vrot.lane.b32.xlu0 %v634, 32
  %v637 = vpop.permute.xlu0 %636
  %v639 = vadd.f32 %v629, %v637
  %v640 = vtanh.pop %v639
  %642 = vrot.lane.b32.xlu0 %v640, 64
  %v643 = vpop.permute.xlu0 %642
  %v645 = vmul.f32 %v627, %v643
  %647 = vrot.lane.b32.xlu0 %v645, 32
  %v648 = vpop.permute.xlu0 %647
  %s650 = scalar_lea.vmem [#allocation2], 32
  %651 = vst.msk [vmem:[%s650] sm:$0xff] %vm111, %v648
  %s652 = scalar_lea.vmem %s0, 40
  %v653 = vld [vmem:[%s652] sm:$0xff]
  %654 = vrot.lane.b32.xlu0 %v645, 64
  %v655 = vpop.permute.xlu0 %654
  %v657 = vsel %vm111, %v653, %v655
  %v659 = vsel %vm113, %v657, 0
  %661 = vmatprep.subr.mxu0 0.0
  %662 = vmatpush1.msra.mxu0 %v42
  %663 = vmatprep.subr.mxu0 0.0
  %664 = vmatpush1.msra.mxu0 %v43
  %665 = vmatprep.subr.mxu0 0.0
  %666 = vmatpush1.msra.mxu0 %v44
  %667 = vmatprep.subr.mxu0 0.0
  %668 = vmatpush1.msra.mxu0 %v45
  %669 = vmatprep.subr.mxu0 0.0
  %670 = vmatpush1.msra.mxu0 %v46
  %671 = vmatprep.subr.mxu0 0.0
  %672 = vmatpush1.msra.mxu0 %v47
  %673 = vmatprep.subr.mxu0 0.0
  %674 = vmatpush1.msra.mxu0 %v48
  %675 = vmatprep.subr.mxu0 0.0
  %676 = vmatpush1.msra.mxu0 %v49
  %677 = vmatprep.subr.mxu0 0.0
  %678 = vmatpush1.msra.mxu0 0.0
  %679 = vmatprep.subr.mxu0 0.0
  %680 = vmatpush1.msra.mxu0 0.0
  %681 = vmatprep.subr.mxu0 0.0
  %682 = vmatpush1.msra.mxu0 0.0
  %683 = vmatprep.subr.mxu0 0.0
  %684 = vmatpush1.msra.mxu0 0.0
  %685 = vmatprep.subr.mxu0 0.0
  %686 = vmatpush1.msra.mxu0 0.0
  %687 = vmatprep.subr.mxu0 0.0
  %688 = vmatpush1.msra.mxu0 0.0
  %689 = vmatprep.subr.mxu0 0.0
  %690 = vmatpush1.msra.mxu0 0.0
  %691 = vmatprep.subr.mxu0 0.0
  %692 = vmatpush1.msra.mxu0 0.0
  %693 = vmatprep.subr.mxu0 0.0
  %694 = vmatpush1.msra.mxu0 0.0
  %695 = vmatprep.subr.mxu0 0.0
  %696 = vmatpush1.msra.mxu0 0.0
  %697 = vmatprep.subr.mxu0 0.0
  %698 = vmatpush1.msra.mxu0 0.0
  %699 = vmatprep.subr.mxu0 0.0
  %700 = vmatpush1.msra.mxu0 0.0
  %701 = vmatprep.subr.mxu0 0.0
  %702 = vmatpush1.msra.mxu0 0.0
  %703 = vmatprep.subr.mxu0 0.0
  %704 = vmatpush1.msra.mxu0 0.0
  %705 = vmatprep.subr.mxu0 0.0
  %706 = vmatpush1.msra.mxu0 0.0
  %707 = vmatprep.subr.mxu0 0.0
  %708 = vmatpush1.msra.mxu0 0.0
  %709 = vmatprep.subr.mxu0 0.0
  %710 = vmatpush1.msra.mxu0 0.0
  %711 = vmatprep.subr.mxu0 0.0
  %712 = vmatpush1.msra.mxu0 0.0
  %713 = vmatprep.subr.mxu0 0.0
  %714 = vmatpush1.msra.mxu0 0.0
  %715 = vmatprep.subr.mxu0 0.0
  %716 = vmatpush1.msra.mxu0 0.0
  %717 = vmatprep.subr.mxu0 0.0
  %718 = vmatpush1.msra.mxu0 0.0
  %719 = vmatprep.subr.mxu0 0.0
  %720 = vmatpush1.msra.mxu0 0.0
  %721 = vmatprep.subr.mxu0 0.0
  %722 = vmatpush1.msra.mxu0 0.0
  %723 = vmatprep.subr.mxu0 0.0
  %724 = vmatpush1.msra.mxu0 0.0
  %725 = vmatprep.mubr.f32.mxu0 0.0
  %726 = vmatmul.mubr.f32.gmra.mrb[0].mxu0 %v659
  %v727 = vpop.f32.mrb[0].mxu0
  %v728 = vadd.f32 %v87, %v727
  %v729 = vpop.f32.mrb[0].mxu0
  %730 = vdwg.mxu0
  %v731 = vxor.u32 %v728, 2147483648
  %v732 = vmul.f32 %v731, 1.442695
  %v733 = vpow.pop %v732
  %v734 = vadd.f32 %v733, 1.0
  %v735 = vrcp.pop %v734
  %v736 = vmul.f32 1.0, %v735
  %v737 = vtanh.pop %v728
  %v738 = vmul.f32 %v736, %v639
  %740 = vrot.lane.b32.xlu0 %v737, 64
  %v741 = vpop.permute.xlu0 %740
  %v743 = vmul.f32 %v736, %v741
  %745 = vrot.lane.b32.xlu0 %v743, 32
  %v746 = vpop.permute.xlu0 %745
  %v748 = vadd.f32 %v738, %v746
  %v749 = vtanh.pop %v748
  %751 = vrot.lane.b32.xlu0 %v749, 64
  %v752 = vpop.permute.xlu0 %751
  %v754 = vmul.f32 %v736, %v752
  %756 = vrot.lane.b32.xlu0 %v754, 32
  %v757 = vpop.permute.xlu0 %756
  %s759 = scalar_lea.vmem [#allocation2], 40
  %760 = vst.msk [vmem:[%s759] sm:$0xff] %vm111, %v757
  %s761 = scalar_lea.vmem %s0, 48
  %v762 = vld [vmem:[%s761] sm:$0xff]
  %763 = vrot.lane.b32.xlu0 %v754, 64
  %v764 = vpop.permute.xlu0 %763
  %v766 = vsel %vm111, %v762, %v764
  %v768 = vsel %vm113, %v766, 0
  %770 = vmatprep.subr.mxu0 0.0
  %771 = vmatpush1.msra.mxu0 %v42
  %772 = vmatprep.subr.mxu0 0.0
  %773 = vmatpush1.msra.mxu0 %v43
  %774 = vmatprep.subr.mxu0 0.0
  %775 = vmatpush1.msra.mxu0 %v44
  %776 = vmatprep.subr.mxu0 0.0
  %777 = vmatpush1.msra.mxu0 %v45
  %778 = vmatprep.subr.mxu0 0.0
  %779 = vmatpush1.msra.mxu0 %v46
  %780 = vmatprep.subr.mxu0 0.0
  %781 = vmatpush1.msra.mxu0 %v47
  %782 = vmatprep.subr.mxu0 0.0
  %783 = vmatpush1.msra.mxu0 %v48
  %784 = vmatprep.subr.mxu0 0.0
  %785 = vmatpush1.msra.mxu0 %v49
  %786 = vmatprep.subr.mxu0 0.0
  %787 = vmatpush1.msra.mxu0 0.0
  %788 = vmatprep.subr.mxu0 0.0
  %789 = vmatpush1.msra.mxu0 0.0
  %790 = vmatprep.subr.mxu0 0.0
  %791 = vmatpush1.msra.mxu0 0.0
  %792 = vmatprep.subr.mxu0 0.0
  %793 = vmatpush1.msra.mxu0 0.0
  %794 = vmatprep.subr.mxu0 0.0
  %795 = vmatpush1.msra.mxu0 0.0
  %796 = vmatprep.subr.mxu0 0.0
  %797 = vmatpush1.msra.mxu0 0.0
  %798 = vmatprep.subr.mxu0 0.0
  %799 = vmatpush1.msra.mxu0 0.0
  %800 = vmatprep.subr.mxu0 0.0
  %801 = vmatpush1.msra.mxu0 0.0
  %802 = vmatprep.subr.mxu0 0.0
  %803 = vmatpush1.msra.mxu0 0.0
  %804 = vmatprep.subr.mxu0 0.0
  %805 = vmatpush1.msra.mxu0 0.0
  %806 = vmatprep.subr.mxu0 0.0
  %807 = vmatpush1.msra.mxu0 0.0
  %808 = vmatprep.subr.mxu0 0.0
  %809 = vmatpush1.msra.mxu0 0.0
  %810 = vmatprep.subr.mxu0 0.0
  %811 = vmatpush1.msra.mxu0 0.0
  %812 = vmatprep.subr.mxu0 0.0
  %813 = vmatpush1.msra.mxu0 0.0
  %814 = vmatprep.subr.mxu0 0.0
  %815 = vmatpush1.msra.mxu0 0.0
  %816 = vmatprep.subr.mxu0 0.0
  %817 = vmatpush1.msra.mxu0 0.0
  %818 = vmatprep.subr.mxu0 0.0
  %819 = vmatpush1.msra.mxu0 0.0
  %820 = vmatprep.subr.mxu0 0.0
  %821 = vmatpush1.msra.mxu0 0.0
  %822 = vmatprep.subr.mxu0 0.0
  %823 = vmatpush1.msra.mxu0 0.0
  %824 = vmatprep.subr.mxu0 0.0
  %825 = vmatpush1.msra.mxu0 0.0
  %826 = vmatprep.subr.mxu0 0.0
  %827 = vmatpush1.msra.mxu0 0.0
  %828 = vmatprep.subr.mxu0 0.0
  %829 = vmatpush1.msra.mxu0 0.0
  %830 = vmatprep.subr.mxu0 0.0
  %831 = vmatpush1.msra.mxu0 0.0
  %832 = vmatprep.subr.mxu0 0.0
  %833 = vmatpush1.msra.mxu0 0.0
  %834 = vmatprep.mubr.f32.mxu0 0.0
  %835 = vmatmul.mubr.f32.gmra.mrb[0].mxu0 %v768
  %v836 = vpop.f32.mrb[0].mxu0
  %v837 = vadd.f32 %v87, %v836
  %v838 = vpop.f32.mrb[0].mxu0
  %839 = vdwg.mxu0
  %v840 = vxor.u32 %v837, 2147483648
  %v841 = vmul.f32 %v840, 1.442695
  %v842 = vpow.pop %v841
  %v843 = vadd.f32 %v842, 1.0
  %v844 = vrcp.pop %v843
  %v845 = vmul.f32 1.0, %v844
  %v846 = vtanh.pop %v837
  %v847 = vmul.f32 %v845, %v748
  %849 = vrot.lane.b32.xlu0 %v846, 64
  %v850 = vpop.permute.xlu0 %849
  %v852 = vmul.f32 %v845, %v850
  %854 = vrot.lane.b32.xlu0 %v852, 32
  %v855 = vpop.permute.xlu0 %854
  %v857 = vadd.f32 %v847, %v855
  %v858 = vtanh.pop %v857
  %860 = vrot.lane.b32.xlu0 %v858, 64
  %v861 = vpop.permute.xlu0 %860
  %v863 = vmul.f32 %v845, %v861
  %865 = vrot.lane.b32.xlu0 %v863, 32
  %v866 = vpop.permute.xlu0 %865
  %s868 = scalar_lea.vmem [#allocation2], 48
  %869 = vst.msk [vmem:[%s868] sm:$0xff] %vm111, %v866
  %s870 = scalar_lea.vmem %s0, 56
  %v871 = vld [vmem:[%s870] sm:$0xff]
  %872 = vrot.lane.b32.xlu0 %v863, 64
  %v873 = vpop.permute.xlu0 %872
  %v875 = vsel %vm111, %v871, %v873
  %v877 = vsel %vm113, %v875, 0
  %879 = vmatprep.subr.mxu0 0.0
  %880 = vmatpush1.msra.mxu0 %v42
  %881 = vmatprep.subr.mxu0 0.0
  %882 = vmatpush1.msra.mxu0 %v43
  %883 = vmatprep.subr.mxu0 0.0
  %884 = vmatpush1.msra.mxu0 %v44
  %885 = vmatprep.subr.mxu0 0.0
  %886 = vmatpush1.msra.mxu0 %v45
  %887 = vmatprep.subr.mxu0 0.0
  %888 = vmatpush1.msra.mxu0 %v46
  %889 = vmatprep.subr.mxu0 0.0
  %890 = vmatpush1.msra.mxu0 %v47
  %891 = vmatprep.subr.mxu0 0.0
  %892 = vmatpush1.msra.mxu0 %v48
  %893 = vmatprep.subr.mxu0 0.0
  %894 = vmatpush1.msra.mxu0 %v49
  %895 = vmatprep.subr.mxu0 0.0
  %896 = vmatpush1.msra.mxu0 0.0
  %897 = vmatprep.subr.mxu0 0.0
  %898 = vmatpush1.msra.mxu0 0.0
  %899 = vmatprep.subr.mxu0 0.0
  %900 = vmatpush1.msra.mxu0 0.0
  %901 = vmatprep.subr.mxu0 0.0
  %902 = vmatpush1.msra.mxu0 0.0
  %903 = vmatprep.subr.mxu0 0.0
  %904 = vmatpush1.msra.mxu0 0.0
  %905 = vmatprep.subr.mxu0 0.0
  %906 = vmatpush1.msra.mxu0 0.0
  %907 = vmatprep.subr.mxu0 0.0
  %908 = vmatpush1.msra.mxu0 0.0
  %909 = vmatprep.subr.mxu0 0.0
  %910 = vmatpush1.msra.mxu0 0.0
  %911 = vmatprep.subr.mxu0 0.0
  %912 = vmatpush1.msra.mxu0 0.0
  %913 = vmatprep.subr.mxu0 0.0
  %914 = vmatpush1.msra.mxu0 0.0
  %915 = vmatprep.subr.mxu0 0.0
  %916 = vmatpush1.msra.mxu0 0.0
  %917 = vmatprep.subr.mxu0 0.0
  %918 = vmatpush1.msra.mxu0 0.0
  %919 = vmatprep.subr.mxu0 0.0
  %920 = vmatpush1.msra.mxu0 0.0
  %921 = vmatprep.subr.mxu0 0.0
  %922 = vmatpush1.msra.mxu0 0.0
  %923 = vmatprep.subr.mxu0 0.0
  %924 = vmatpush1.msra.mxu0 0.0
  %925 = vmatprep.subr.mxu0 0.0
  %926 = vmatpush1.msra.mxu0 0.0
  %927 = vmatprep.subr.mxu0 0.0
  %928 = vmatpush1.msra.mxu0 0.0
  %929 = vmatprep.subr.mxu0 0.0
  %930 = vmatpush1.msra.mxu0 0.0
  %931 = vmatprep.subr.mxu0 0.0
  %932 = vmatpush1.msra.mxu0 0.0
  %933 = vmatprep.subr.mxu0 0.0
  %934 = vmatpush1.msra.mxu0 0.0
  %935 = vmatprep.subr.mxu0 0.0
  %936 = vmatpush1.msra.mxu0 0.0
  %937 = vmatprep.subr.mxu0 0.0
  %938 = vmatpush1.msra.mxu0 0.0
  %939 = vmatprep.subr.mxu0 0.0
  %940 = vmatpush1.msra.mxu0 0.0
  %941 = vmatprep.subr.mxu0 0.0
  %942 = vmatpush1.msra.mxu0 0.0
  %943 = vmatprep.mubr.f32.mxu0 0.0
  %944 = vmatmul.mubr.f32.gmra.mrb[0].mxu0 %v877
  %v945 = vpop.f32.mrb[0].mxu0
  %v946 = vadd.f32 %v87, %v945
  %v947 = vpop.f32.mrb[0].mxu0
  %948 = vdwg.mxu0
  %v949 = vxor.u32 %v946, 2147483648
  %v950 = vmul.f32 %v949, 1.442695
  %v951 = vpow.pop %v950
  %v952 = vadd.f32 %v951, 1.0
  %v953 = vrcp.pop %v952
  %v954 = vmul.f32 1.0, %v953
  %v955 = vtanh.pop %v946
  %v956 = vmul.f32 %v954, %v857
  %958 = vrot.lane.b32.xlu0 %v955, 64
  %v959 = vpop.permute.xlu0 %958
  %v961 = vmul.f32 %v954, %v959
  %963 = vrot.lane.b32.xlu0 %v961, 32
  %v964 = vpop.permute.xlu0 %963
  %v966 = vadd.f32 %v956, %v964
  %v967 = vtanh.pop %v966
  %969 = vrot.lane.b32.xlu0 %v967, 64
  %v970 = vpop.permute.xlu0 %969
  %v972 = vmul.f32 %v954, %v970
  %974 = vrot.lane.b32.xlu0 %v972, 32
  %v975 = vpop.permute.xlu0 %974
  %s977 = scalar_lea.vmem [#allocation2], 56
  %978 = vst.msk [vmem:[%s977] sm:$0xff] %vm111, %v975
  %v979 = vld [vmem:[%s870] sm:$0xff]
  %v980 = vsel %vm111, %v979, 0.0
  %v982 = vsel %vm113, %v980, 0
  %984 = vmatprep.subr.mxu0 0.0
  %985 = vmatpush1.msra.mxu0 %v50
  %986 = vmatprep.subr.mxu0 0.0
  %987 = vmatpush1.msra.mxu0 %v51
  %988 = vmatprep.subr.mxu0 0.0
  %989 = vmatpush1.msra.mxu0 %v52
  %990 = vmatprep.subr.mxu0 0.0
  %991 = vmatpush1.msra.mxu0 %v53
  %992 = vmatprep.subr.mxu0 0.0
  %993 = vmatpush1.msra.mxu0 %v54
  %994 = vmatprep.subr.mxu0 0.0
  %995 = vmatpush1.msra.mxu0 %v55
  %996 = vmatprep.subr.mxu0 0.0
  %997 = vmatpush1.msra.mxu0 %v56
  %998 = vmatprep.subr.mxu0 0.0
  %999 = vmatpush1.msra.mxu0 %v57
  %1000 = vmatprep.subr.mxu0 0.0
  %1001 = vmatpush1.msra.mxu0 0.0
  %1002 = vmatprep.subr.mxu0 0.0
  %1003 = vmatpush1.msra.mxu0 0.0
  %1004 = vmatprep.subr.mxu0 0.0
  %1005 = vmatpush1.msra.mxu0 0.0
  %1006 = vmatprep.subr.mxu0 0.0
  %1007 = vmatpush1.msra.mxu0 0.0
  %1008 = vmatprep.subr.mxu0 0.0
  %1009 = vmatpush1.msra.mxu0 0.0
  %1010 = vmatprep.subr.mxu0 0.0
  %1011 = vmatpush1.msra.mxu0 0.0
  %1012 = vmatprep.subr.mxu0 0.0
  %1013 = vmatpush1.msra.mxu0 0.0
  %1014 = vmatprep.subr.mxu0 0.0
  %1015 = vmatpush1.msra.mxu0 0.0
  %1016 = vmatprep.subr.mxu0 0.0
  %1017 = vmatpush1.msra.mxu0 0.0
  %1018 = vmatprep.subr.mxu0 0.0
  %1019 = vmatpush1.msra.mxu0 0.0
  %1020 = vmatprep.subr.mxu0 0.0
  %1021 = vmatpush1.msra.mxu0 0.0
  %1022 = vmatprep.subr.mxu0 0.0
  %1023 = vmatpush1.msra.mxu0 0.0
  %1024 = vmatprep.subr.mxu0 0.0
  %1025 = vmatpush1.msra.mxu0 0.0
  %1026 = vmatprep.subr.mxu0 0.0
  %1027 = vmatpush1.msra.mxu0 0.0
  %1028 = vmatprep.subr.mxu0 0.0
  %1029 = vmatpush1.msra.mxu0 0.0
  %1030 = vmatprep.subr.mxu0 0.0
  %1031 = vmatpush1.msra.mxu0 0.0
  %1032 = vmatprep.subr.mxu0 0.0
  %1033 = vmatpush1.msra.mxu0 0.0
  %1034 = vmatprep.subr.mxu0 0.0
  %1035 = vmatpush1.msra.mxu0 0.0
  %1036 = vmatprep.subr.mxu0 0.0
  %1037 = vmatpush1.msra.mxu0 0.0
  %1038 = vmatprep.subr.mxu0 0.0
  %1039 = vmatpush1.msra.mxu0 0.0
  %1040 = vmatprep.subr.mxu0 0.0
  %1041 = vmatpush1.msra.mxu0 0.0
  %1042 = vmatprep.subr.mxu0 0.0
  %1043 = vmatpush1.msra.mxu0 0.0
  %1044 = vmatprep.subr.mxu0 0.0
  %1045 = vmatpush1.msra.mxu0 0.0
  %1046 = vmatprep.subr.mxu0 0.0
  %1047 = vmatpush1.msra.mxu0 0.0
  %1048 = vmatprep.mubr.f32.mxu0 0.0
  %1049 = vmatmul.mubr.f32.gmra.mrb[0].mxu0 %v982
  %v1050 = vpop.f32.mrb[0].mxu0
  %v1051 = vadd.f32 %v94, %v1050
  %v1052 = vpop.f32.mrb[0].mxu0
  %1053 = vdwg.mxu0
  %v1054 = vxor.u32 %v1051, 2147483648
  %v1055 = vmul.f32 %v1054, 1.442695
  %v1056 = vpow.pop %v1055
  %v1057 = vadd.f32 %v1056, 1.0
  %v1058 = vrcp.pop %v1057
  %v1059 = vmul.f32 1.0, %v1058
  %v1060 = vtanh.pop %v1051
  %v1061 = vmul.f32 %v1059, 0.0
  %1063 = vrot.lane.b32.xlu0 %v1060, 64
  %v1064 = vpop.permute.xlu0 %1063
  %v1066 = vmul.f32 %v1059, %v1064
  %1068 = vrot.lane.b32.xlu0 %v1066, 32
  %v1069 = vpop.permute.xlu0 %1068
  %v1071 = vadd.f32 %v1061, %v1069
  %v1072 = vtanh.pop %v1071
  %1074 = vrot.lane.b32.xlu0 %v1072, 64
  %v1075 = vpop.permute.xlu0 %1074
  %v1077 = vmul.f32 %v1059, %v1075
  %1079 = vrot.lane.b32.xlu0 %v1077, 64
  %v1080 = vpop.permute.xlu0 %1079
  %vm1082 = vcmask 523520
  %1083 = vst.msk [vmem:[%s977] sm:$0xff] %vm1082, %v1080
  %v1084 = vld [vmem:[%s761] sm:$0xff]
  %v1085 = vsel %vm111, %v1084, %v1080
  %v1087 = vsel %vm113, %v1085, 0
  %1089 = vmatprep.subr.mxu0 0.0
  %1090 = vmatpush1.msra.mxu0 %v50
  %1091 = vmatprep.subr.mxu0 0.0
  %1092 = vmatpush1.msra.mxu0 %v51
  %1093 = vmatprep.subr.mxu0 0.0
  %1094 = vmatpush1.msra.mxu0 %v52
  %1095 = vmatprep.subr.mxu0 0.0
  %1096 = vmatpush1.msra.mxu0 %v53
  %1097 = vmatprep.subr.mxu0 0.0
  %1098 = vmatpush1.msra.mxu0 %v54
  %1099 = vmatprep.subr.mxu0 0.0
  %1100 = vmatpush1.msra.mxu0 %v55
  %1101 = vmatprep.subr.mxu0 0.0
  %1102 = vmatpush1.msra.mxu0 %v56
  %1103 = vmatprep.subr.mxu0 0.0
  %1104 = vmatpush1.msra.mxu0 %v57
  %1105 = vmatprep.subr.mxu0 0.0
  %1106 = vmatpush1.msra.mxu0 0.0
  %1107 = vmatprep.subr.mxu0 0.0
  %1108 = vmatpush1.msra.mxu0 0.0
  %1109 = vmatprep.subr.mxu0 0.0
  %1110 = vmatpush1.msra.mxu0 0.0
  %1111 = vmatprep.subr.mxu0 0.0
  %1112 = vmatpush1.msra.mxu0 0.0
  %1113 = vmatprep.subr.mxu0 0.0
  %1114 = vmatpush1.msra.mxu0 0.0
  %1115 = vmatprep.subr.mxu0 0.0
  %1116 = vmatpush1.msra.mxu0 0.0
  %1117 = vmatprep.subr.mxu0 0.0
  %1118 = vmatpush1.msra.mxu0 0.0
  %1119 = vmatprep.subr.mxu0 0.0
  %1120 = vmatpush1.msra.mxu0 0.0
  %1121 = vmatprep.subr.mxu0 0.0
  %1122 = vmatpush1.msra.mxu0 0.0
  %1123 = vmatprep.subr.mxu0 0.0
  %1124 = vmatpush1.msra.mxu0 0.0
  %1125 = vmatprep.subr.mxu0 0.0
  %1126 = vmatpush1.msra.mxu0 0.0
  %1127 = vmatprep.subr.mxu0 0.0
  %1128 = vmatpush1.msra.mxu0 0.0
  %1129 = vmatprep.subr.mxu0 0.0
  %1130 = vmatpush1.msra.mxu0 0.0
  %1131 = vmatprep.subr.mxu0 0.0
  %1132 = vmatpush1.msra.mxu0 0.0
  %1133 = vmatprep.subr.mxu0 0.0
  %1134 = vmatpush1.msra.mxu0 0.0
  %1135 = vmatprep.subr.mxu0 0.0
  %1136 = vmatpush1.msra.mxu0 0.0
  %1137 = vmatprep.subr.mxu0 0.0
  %1138 = vmatpush1.msra.mxu0 0.0
  %1139 = vmatprep.subr.mxu0 0.0
  %1140 = vmatpush1.msra.mxu0 0.0
  %1141 = vmatprep.subr.mxu0 0.0
  %1142 = vmatpush1.msra.mxu0 0.0
  %1143 = vmatprep.subr.mxu0 0.0
  %1144 = vmatpush1.msra.mxu0 0.0
  %1145 = vmatprep.subr.mxu0 0.0
  %1146 = vmatpush1.msra.mxu0 0.0
  %1147 = vmatprep.subr.mxu0 0.0
  %1148 = vmatpush1.msra.mxu0 0.0
  %1149 = vmatprep.subr.mxu0 0.0
  %1150 = vmatpush1.msra.mxu0 0.0
  %1151 = vmatprep.subr.mxu0 0.0
  %1152 = vmatpush1.msra.mxu0 0.0
  %1153 = vmatprep.mubr.f32.mxu0 0.0
  %1154 = vmatmul.mubr.f32.gmra.mrb[0].mxu0 %v1087
  %v1155 = vpop.f32.mrb[0].mxu0
  %v1156 = vadd.f32 %v94, %v1155
  %v1157 = vpop.f32.mrb[0].mxu0
  %1158 = vdwg.mxu0
  %v1159 = vxor.u32 %v1156, 2147483648
  %v1160 = vmul.f32 %v1159, 1.442695
  %v1161 = vpow.pop %v1160
  %v1162 = vadd.f32 %v1161, 1.0
  %v1163 = vrcp.pop %v1162
  %v1164 = vmul.f32 1.0, %v1163
  %v1165 = vtanh.pop %v1156
  %v1166 = vmul.f32 %v1164, %v1071
  %1168 = vrot.lane.b32.xlu0 %v1165, 64
  %v1169 = vpop.permute.xlu0 %1168
  %v1171 = vmul.f32 %v1164, %v1169
  %1173 = vrot.lane.b32.xlu0 %v1171, 32
  %v1174 = vpop.permute.xlu0 %1173
  %v1176 = vadd.f32 %v1166, %v1174
  %v1177 = vtanh.pop %v1176
  %1179 = vrot.lane.b32.xlu0 %v1177, 64
  %v1180 = vpop.permute.xlu0 %1179
  %v1182 = vmul.f32 %v1164, %v1180
  %1184 = vrot.lane.b32.xlu0 %v1182, 64
  %v1185 = vpop.permute.xlu0 %1184
  %1187 = vst.msk [vmem:[%s868] sm:$0xff] %vm1082, %v1185
  %v1188 = vld [vmem:[%s652] sm:$0xff]
  %v1189 = vsel %vm111, %v1188, %v1185
  %v1191 = vsel %vm113, %v1189, 0
  %1193 = vmatprep.subr.mxu0 0.0
  %1194 = vmatpush1.msra.mxu0 %v50
  %1195 = vmatprep.subr.mxu0 0.0
  %1196 = vmatpush1.msra.mxu0 %v51
  %1197 = vmatprep.subr.mxu0 0.0
  %1198 = vmatpush1.msra.mxu0 %v52
  %1199 = vmatprep.subr.mxu0 0.0
  %1200 = vmatpush1.msra.mxu0 %v53
  %1201 = vmatprep.subr.mxu0 0.0
  %1202 = vmatpush1.msra.mxu0 %v54
  %1203 = vmatprep.subr.mxu0 0.0
  %1204 = vmatpush1.msra.mxu0 %v55
  %1205 = vmatprep.subr.mxu0 0.0
  %1206 = vmatpush1.msra.mxu0 %v56
  %1207 = vmatprep.subr.mxu0 0.0
  %1208 = vmatpush1.msra.mxu0 %v57
  %1209 = vmatprep.subr.mxu0 0.0
  %1210 = vmatpush1.msra.mxu0 0.0
  %1211 = vmatprep.subr.mxu0 0.0
  %1212 = vmatpush1.msra.mxu0 0.0
  %1213 = vmatprep.subr.mxu0 0.0
  %1214 = vmatpush1.msra.mxu0 0.0
  %1215 = vmatprep.subr.mxu0 0.0
  %1216 = vmatpush1.msra.mxu0 0.0
  %1217 = vmatprep.subr.mxu0 0.0
  %1218 = vmatpush1.msra.mxu0 0.0
  %1219 = vmatprep.subr.mxu0 0.0
  %1220 = vmatpush1.msra.mxu0 0.0
  %1221 = vmatprep.subr.mxu0 0.0
  %1222 = vmatpush1.msra.mxu0 0.0
  %1223 = vmatprep.subr.mxu0 0.0
  %1224 = vmatpush1.msra.mxu0 0.0
  %1225 = vmatprep.subr.mxu0 0.0
  %1226 = vmatpush1.msra.mxu0 0.0
  %1227 = vmatprep.subr.mxu0 0.0
  %1228 = vmatpush1.msra.mxu0 0.0
  %1229 = vmatprep.subr.mxu0 0.0
  %1230 = vmatpush1.msra.mxu0 0.0
  %1231 = vmatprep.subr.mxu0 0.0
  %1232 = vmatpush1.msra.mxu0 0.0
  %1233 = vmatprep.subr.mxu0 0.0
  %1234 = vmatpush1.msra.mxu0 0.0
  %1235 = vmatprep.subr.mxu0 0.0
  %1236 = vmatpush1.msra.mxu0 0.0
  %1237 = vmatprep.subr.mxu0 0.0
  %1238 = vmatpush1.msra.mxu0 0.0
  %1239 = vmatprep.subr.mxu0 0.0
  %1240 = vmatpush1.msra.mxu0 0.0
  %1241 = vmatprep.subr.mxu0 0.0
  %1242 = vmatpush1.msra.mxu0 0.0
  %1243 = vmatprep.subr.mxu0 0.0
  %1244 = vmatpush1.msra.mxu0 0.0
  %1245 = vmatprep.subr.mxu0 0.0
  %1246 = vmatpush1.msra.mxu0 0.0
  %1247 = vmatprep.subr.mxu0 0.0
  %1248 = vmatpush1.msra.mxu0 0.0
  %1249 = vmatprep.subr.mxu0 0.0
  %1250 = vmatpush1.msra.mxu0 0.0
  %1251 = vmatprep.subr.mxu0 0.0
  %1252 = vmatpush1.msra.mxu0 0.0
  %1253 = vmatprep.subr.mxu0 0.0
  %1254 = vmatpush1.msra.mxu0 0.0
  %1255 = vmatprep.subr.mxu0 0.0
  %1256 = vmatpush1.msra.mxu0 0.0
  %1257 = vmatprep.mubr.f32.mxu0 0.0
  %1258 = vmatmul.mubr.f32.gmra.mrb[0].mxu0 %v1191
  %v1259 = vpop.f32.mrb[0].mxu0
  %v1260 = vadd.f32 %v94, %v1259
  %v1261 = vpop.f32.mrb[0].mxu0
  %1262 = vdwg.mxu0
  %v1263 = vxor.u32 %v1260, 2147483648
  %v1264 = vmul.f32 %v1263, 1.442695
  %v1265 = vpow.pop %v1264
  %v1266 = vadd.f32 %v1265, 1.0
  %v1267 = vrcp.pop %v1266
  %v1268 = vmul.f32 1.0, %v1267
  %v1269 = vtanh.pop %v1260
  %v1270 = vmul.f32 %v1268, %v1176
  %1272 = vrot.lane.b32.xlu0 %v1269, 64
  %v1273 = vpop.permute.xlu0 %1272
  %v1275 = vmul.f32 %v1268, %v1273
  %1277 = vrot.lane.b32.xlu0 %v1275, 32
  %v1278 = vpop.permute.xlu0 %1277
  %v1280 = vadd.f32 %v1270, %v1278
  %v1281 = vtanh.pop %v1280
  %1283 = vrot.lane.b32.xlu0 %v1281, 64
  %v1284 = vpop.permute.xlu0 %1283
  %v1286 = vmul.f32 %v1268, %v1284
  %1288 = vrot.lane.b32.xlu0 %v1286, 64
  %v1289 = vpop.permute.xlu0 %1288
  %1291 = vst.msk [vmem:[%s759] sm:$0xff] %vm1082, %v1289
  %v1292 = vld [vmem:[%s543] sm:$0xff]
  %v1293 = vsel %vm111, %v1292, %v1289
  %v1295 = vsel %vm113, %v1293, 0
  %1297 = vmatprep.subr.mxu0 0.0
  %1298 = vmatpush1.msra.mxu0 %v50
  %1299 = vmatprep.subr.mxu0 0.0
  %1300 = vmatpush1.msra.mxu0 %v51
  %1301 = vmatprep.subr.mxu0 0.0
  %1302 = vmatpush1.msra.mxu0 %v52
  %1303 = vmatprep.subr.mxu0 0.0
  %1304 = vmatpush1.msra.mxu0 %v53
  %1305 = vmatprep.subr.mxu0 0.0
  %1306 = vmatpush1.msra.mxu0 %v54
  %1307 = vmatprep.subr.mxu0 0.0
  %1308 = vmatpush1.msra.mxu0 %v55
  %1309 = vmatprep.subr.mxu0 0.0
  %1310 = vmatpush1.msra.mxu0 %v56
  %1311 = vmatprep.subr.mxu0 0.0
  %1312 = vmatpush1.msra.mxu0 %v57
  %1313 = vmatprep.subr.mxu0 0.0
  %1314 = vmatpush1.msra.mxu0 0.0
  %1315 = vmatprep.subr.mxu0 0.0
  %1316 = vmatpush1.msra.mxu0 0.0
  %1317 = vmatprep.subr.mxu0 0.0
  %1318 = vmatpush1.msra.mxu0 0.0
  %1319 = vmatprep.subr.mxu0 0.0
  %1320 = vmatpush1.msra.mxu0 0.0
  %1321 = vmatprep.subr.mxu0 0.0
  %1322 = vmatpush1.msra.mxu0 0.0
  %1323 = vmatprep.subr.mxu0 0.0
  %1324 = vmatpush1.msra.mxu0 0.0
  %1325 = vmatprep.subr.mxu0 0.0
  %1326 = vmatpush1.msra.mxu0 0.0
  %1327 = vmatprep.subr.mxu0 0.0
  %1328 = vmatpush1.msra.mxu0 0.0
  %1329 = vmatprep.subr.mxu0 0.0
  %1330 = vmatpush1.msra.mxu0 0.0
  %1331 = vmatprep.subr.mxu0 0.0
  %1332 = vmatpush1.msra.mxu0 0.0
  %1333 = vmatprep.subr.mxu0 0.0
  %1334 = vmatpush1.msra.mxu0 0.0
  %1335 = vmatprep.subr.mxu0 0.0
  %1336 = vmatpush1.msra.mxu0 0.0
  %1337 = vmatprep.subr.mxu0 0.0
  %1338 = vmatpush1.msra.mxu0 0.0
  %1339 = vmatprep.subr.mxu0 0.0
  %1340 = vmatpush1.msra.mxu0 0.0
  %1341 = vmatprep.subr.mxu0 0.0
  %1342 = vmatpush1.msra.mxu0 0.0
  %1343 = vmatprep.subr.mxu0 0.0
  %1344 = vmatpush1.msra.mxu0 0.0
  %1345 = vmatprep.subr.mxu0 0.0
  %1346 = vmatpush1.msra.mxu0 0.0
  %1347 = vmatprep.subr.mxu0 0.0
  %1348 = vmatpush1.msra.mxu0 0.0
  %1349 = vmatprep.subr.mxu0 0.0
  %1350 = vmatpush1.msra.mxu0 0.0
  %1351 = vmatprep.subr.mxu0 0.0
  %1352 = vmatpush1.msra.mxu0 0.0
  %1353 = vmatprep.subr.mxu0 0.0
  %1354 = vmatpush1.msra.mxu0 0.0
  %1355 = vmatprep.subr.mxu0 0.0
  %1356 = vmatpush1.msra.mxu0 0.0
  %1357 = vmatprep.subr.mxu0 0.0
  %1358 = vmatpush1.msra.mxu0 0.0
  %1359 = vmatprep.subr.mxu0 0.0
  %1360 = vmatpush1.msra.mxu0 0.0
  %1361 = vmatprep.mubr.f32.mxu0 0.0
  %1362 = vmatmul.mubr.f32.gmra.mrb[0].mxu0 %v1295
  %v1363 = vpop.f32.mrb[0].mxu0
  %v1364 = vadd.f32 %v94, %v1363
  %v1365 = vpop.f32.mrb[0].mxu0
  %1366 = vdwg.mxu0
  %v1367 = vxor.u32 %v1364, 2147483648
  %v1368 = vmul.f32 %v1367, 1.442695
  %v1369 = vpow.pop %v1368
  %v1370 = vadd.f32 %v1369, 1.0
  %v1371 = vrcp.pop %v1370
  %v1372 = vmul.f32 1.0, %v1371
  %v1373 = vtanh.pop %v1364
  %v1374 = vmul.f32 %v1372, %v1280
  %1376 = vrot.lane.b32.xlu0 %v1373, 64
  %v1377 = vpop.permute.xlu0 %1376
  %v1379 = vmul.f32 %v1372, %v1377
  %1381 = vrot.lane.b32.xlu0 %v1379, 32
  %v1382 = vpop.permute.xlu0 %1381
  %v1384 = vadd.f32 %v1374, %v1382
  %v1385 = vtanh.pop %v1384
  %1387 = vrot.lane.b32.xlu0 %v1385, 64
  %v1388 = vpop.permute.xlu0 %1387
  %v1390 = vmul.f32 %v1372, %v1388
  %1392 = vrot.lane.b32.xlu0 %v1390, 64
  %v1393 = vpop.permute.xlu0 %1392
  %1395 = vst.msk [vmem:[%s650] sm:$0xff] %vm1082, %v1393
  %v1396 = vld [vmem:[%s434] sm:$0xff]
  %v1397 = vsel %vm111, %v1396, %v1393
  %v1399 = vsel %vm113, %v1397, 0
  %1401 = vmatprep.subr.mxu0 0.0
  %1402 = vmatpush1.msra.mxu0 %v50
  %1403 = vmatprep.subr.mxu0 0.0
  %1404 = vmatpush1.msra.mxu0 %v51
  %1405 = vmatprep.subr.mxu0 0.0
  %1406 = vmatpush1.msra.mxu0 %v52
  %1407 = vmatprep.subr.mxu0 0.0
  %1408 = vmatpush1.msra.mxu0 %v53
  %1409 = vmatprep.subr.mxu0 0.0
  %1410 = vmatpush1.msra.mxu0 %v54
  %1411 = vmatprep.subr.mxu0 0.0
  %1412 = vmatpush1.msra.mxu0 %v55
  %1413 = vmatprep.subr.mxu0 0.0
  %1414 = vmatpush1.msra.mxu0 %v56
  %1415 = vmatprep.subr.mxu0 0.0
  %1416 = vmatpush1.msra.mxu0 %v57
  %1417 = vmatprep.subr.mxu0 0.0
  %1418 = vmatpush1.msra.mxu0 0.0
  %1419 = vmatprep.subr.mxu0 0.0
  %1420 = vmatpush1.msra.mxu0 0.0
  %1421 = vmatprep.subr.mxu0 0.0
  %1422 = vmatpush1.msra.mxu0 0.0
  %1423 = vmatprep.subr.mxu0 0.0
  %1424 = vmatpush1.msra.mxu0 0.0
  %1425 = vmatprep.subr.mxu0 0.0
  %1426 = vmatpush1.msra.mxu0 0.0
  %1427 = vmatprep.subr.mxu0 0.0
  %1428 = vmatpush1.msra.mxu0 0.0
  %1429 = vmatprep.subr.mxu0 0.0
  %1430 = vmatpush1.msra.mxu0 0.0
  %1431 = vmatprep.subr.mxu0 0.0
  %1432 = vmatpush1.msra.mxu0 0.0
  %1433 = vmatprep.subr.mxu0 0.0
  %1434 = vmatpush1.msra.mxu0 0.0
  %1435 = vmatprep.subr.mxu0 0.0
  %1436 = vmatpush1.msra.mxu0 0.0
  %1437 = vmatprep.subr.mxu0 0.0
  %1438 = vmatpush1.msra.mxu0 0.0
  %1439 = vmatprep.subr.mxu0 0.0
  %1440 = vmatpush1.msra.mxu0 0.0
  %1441 = vmatprep.subr.mxu0 0.0
  %1442 = vmatpush1.msra.mxu0 0.0
  %1443 = vmatprep.subr.mxu0 0.0
  %1444 = vmatpush1.msra.mxu0 0.0
  %1445 = vmatprep.subr.mxu0 0.0
  %1446 = vmatpush1.msra.mxu0 0.0
  %1447 = vmatprep.subr.mxu0 0.0
  %1448 = vmatpush1.msra.mxu0 0.0
  %1449 = vmatprep.subr.mxu0 0.0
  %1450 = vmatpush1.msra.mxu0 0.0
  %1451 = vmatprep.subr.mxu0 0.0
  %1452 = vmatpush1.msra.mxu0 0.0
  %1453 = vmatprep.subr.mxu0 0.0
  %1454 = vmatpush1.msra.mxu0 0.0
  %1455 = vmatprep.subr.mxu0 0.0
  %1456 = vmatpush1.msra.mxu0 0.0
  %1457 = vmatprep.subr.mxu0 0.0
  %1458 = vmatpush1.msra.mxu0 0.0
  %1459 = vmatprep.subr.mxu0 0.0
  %1460 = vmatpush1.msra.mxu0 0.0
  %1461 = vmatprep.subr.mxu0 0.0
  %1462 = vmatpush1.msra.mxu0 0.0
  %1463 = vmatprep.subr.mxu0 0.0
  %1464 = vmatpush1.msra.mxu0 0.0
  %1465 = vmatprep.mubr.f32.mxu0 0.0
  %1466 = vmatmul.mubr.f32.gmra.mrb[0].mxu0 %v1399
  %v1467 = vpop.f32.mrb[0].mxu0
  %v1468 = vadd.f32 %v94, %v1467
  %v1469 = vpop.f32.mrb[0].mxu0
  %1470 = vdwg.mxu0
  %v1471 = vxor.u32 %v1468, 2147483648
  %v1472 = vmul.f32 %v1471, 1.442695
  %v1473 = vpow.pop %v1472
  %v1474 = vadd.f32 %v1473, 1.0
  %v1475 = vrcp.pop %v1474
  %v1476 = vmul.f32 1.0, %v1475
  %v1477 = vtanh.pop %v1468
  %v1478 = vmul.f32 %v1476, %v1384
  %1480 = vrot.lane.b32.xlu0 %v1477, 64
  %v1481 = vpop.permute.xlu0 %1480
  %v1483 = vmul.f32 %v1476, %v1481
  %1485 = vrot.lane.b32.xlu0 %v1483, 32
  %v1486 = vpop.permute.xlu0 %1485
  %v1488 = vadd.f32 %v1478, %v1486
  %v1489 = vtanh.pop %v1488
  %1491 = vrot.lane.b32.xlu0 %v1489, 64
  %v1492 = vpop.permute.xlu0 %1491
  %v1494 = vmul.f32 %v1476, %v1492
  %1496 = vrot.lane.b32.xlu0 %v1494, 64
  %v1497 = vpop.permute.xlu0 %1496
  %1499 = vst.msk [vmem:[%s541] sm:$0xff] %vm1082, %v1497
  %v1500 = vld [vmem:[%s325] sm:$0xff]
  %v1501 = vsel %vm111, %v1500, %v1497
  %v1503 = vsel %vm113, %v1501, 0
  %1505 = vmatprep.subr.mxu0 0.0
  %1506 = vmatpush1.msra.mxu0 %v50
  %1507 = vmatprep.subr.mxu0 0.0
  %1508 = vmatpush1.msra.mxu0 %v51
  %1509 = vmatprep.subr.mxu0 0.0
  %1510 = vmatpush1.msra.mxu0 %v52
  %1511 = vmatprep.subr.mxu0 0.0
  %1512 = vmatpush1.msra.mxu0 %v53
  %1513 = vmatprep.subr.mxu0 0.0
  %1514 = vmatpush1.msra.mxu0 %v54
  %1515 = vmatprep.subr.mxu0 0.0
  %1516 = vmatpush1.msra.mxu0 %v55
  %1517 = vmatprep.subr.mxu0 0.0
  %1518 = vmatpush1.msra.mxu0 %v56
  %1519 = vmatprep.subr.mxu0 0.0
  %1520 = vmatpush1.msra.mxu0 %v57
  %1521 = vmatprep.subr.mxu0 0.0
  %1522 = vmatpush1.msra.mxu0 0.0
  %1523 = vmatprep.subr.mxu0 0.0
  %1524 = vmatpush1.msra.mxu0 0.0
  %1525 = vmatprep.subr.mxu0 0.0
  %1526 = vmatpush1.msra.mxu0 0.0
  %1527 = vmatprep.subr.mxu0 0.0
  %1528 = vmatpush1.msra.mxu0 0.0
  %1529 = vmatprep.subr.mxu0 0.0
  %1530 = vmatpush1.msra.mxu0 0.0
  %1531 = vmatprep.subr.mxu0 0.0
  %1532 = vmatpush1.msra.mxu0 0.0
  %1533 = vmatprep.subr.mxu0 0.0
  %1534 = vmatpush1.msra.mxu0 0.0
  %1535 = vmatprep.subr.mxu0 0.0
  %1536 = vmatpush1.msra.mxu0 0.0
  %1537 = vmatprep.subr.mxu0 0.0
  %1538 = vmatpush1.msra.mxu0 0.0
  %1539 = vmatprep.subr.mxu0 0.0
  %1540 = vmatpush1.msra.mxu0 0.0
  %1541 = vmatprep.subr.mxu0 0.0
  %1542 = vmatpush1.msra.mxu0 0.0
  %1543 = vmatprep.subr.mxu0 0.0
  %1544 = vmatpush1.msra.mxu0 0.0
  %1545 = vmatprep.subr.mxu0 0.0
  %1546 = vmatpush1.msra.mxu0 0.0
  %1547 = vmatprep.subr.mxu0 0.0
  %1548 = vmatpush1.msra.mxu0 0.0
  %1549 = vmatprep.subr.mxu0 0.0
  %1550 = vmatpush1.msra.mxu0 0.0
  %1551 = vmatprep.subr.mxu0 0.0
  %1552 = vmatpush1.msra.mxu0 0.0
  %1553 = vmatprep.subr.mxu0 0.0
  %1554 = vmatpush1.msra.mxu0 0.0
  %1555 = vmatprep.subr.mxu0 0.0
  %1556 = vmatpush1.msra.mxu0 0.0
  %1557 = vmatprep.subr.mxu0 0.0
  %1558 = vmatpush1.msra.mxu0 0.0
  %1559 = vmatprep.subr.mxu0 0.0
  %1560 = vmatpush1.msra.mxu0 0.0
  %1561 = vmatprep.subr.mxu0 0.0
  %1562 = vmatpush1.msra.mxu0 0.0
  %1563 = vmatprep.subr.mxu0 0.0
  %1564 = vmatpush1.msra.mxu0 0.0
  %1565 = vmatprep.subr.mxu0 0.0
  %1566 = vmatpush1.msra.mxu0 0.0
  %1567 = vmatprep.subr.mxu0 0.0
  %1568 = vmatpush1.msra.mxu0 0.0
  %1569 = vmatprep.mubr.f32.mxu0 0.0
  %1570 = vmatmul.mubr.f32.gmra.mrb[0].mxu0 %v1503
  %v1571 = vpop.f32.mrb[0].mxu0
  %v1572 = vadd.f32 %v94, %v1571
  %v1573 = vpop.f32.mrb[0].mxu0
  %1574 = vdwg.mxu0
  %v1575 = vxor.u32 %v1572, 2147483648
  %v1576 = vmul.f32 %v1575, 1.442695
  %v1577 = vpow.pop %v1576
  %v1578 = vadd.f32 %v1577, 1.0
  %v1579 = vrcp.pop %v1578
  %v1580 = vmul.f32 1.0, %v1579
  %v1581 = vtanh.pop %v1572
  %v1582 = vmul.f32 %v1580, %v1488
  %1584 = vrot.lane.b32.xlu0 %v1581, 64
  %v1585 = vpop.permute.xlu0 %1584
  %v1587 = vmul.f32 %v1580, %v1585
  %1589 = vrot.lane.b32.xlu0 %v1587, 32
  %v1590 = vpop.permute.xlu0 %1589
  %v1592 = vadd.f32 %v1582, %v1590
  %v1593 = vtanh.pop %v1592
  %1595 = vrot.lane.b32.xlu0 %v1593, 64
  %v1596 = vpop.permute.xlu0 %1595
  %v1598 = vmul.f32 %v1580, %v1596
  %1600 = vrot.lane.b32.xlu0 %v1598, 64
  %v1601 = vpop.permute.xlu0 %1600
  %1603 = vst.msk [vmem:[%s432] sm:$0xff] %vm1082, %v1601
  %v1604 = vld [vmem:[%s216] sm:$0xff]
  %v1605 = vsel %vm111, %v1604, %v1601
  %v1607 = vsel %vm113, %v1605, 0
  %1609 = vmatprep.subr.mxu0 0.0
  %1610 = vmatpush1.msra.mxu0 %v50
  %1611 = vmatprep.subr.mxu0 0.0
  %1612 = vmatpush1.msra.mxu0 %v51
  %1613 = vmatprep.subr.mxu0 0.0
  %1614 = vmatpush1.msra.mxu0 %v52
  %1615 = vmatprep.subr.mxu0 0.0
  %1616 = vmatpush1.msra.mxu0 %v53
  %1617 = vmatprep.subr.mxu0 0.0
  %1618 = vmatpush1.msra.mxu0 %v54
  %1619 = vmatprep.subr.mxu0 0.0
  %1620 = vmatpush1.msra.mxu0 %v55
  %1621 = vmatprep.subr.mxu0 0.0
  %1622 = vmatpush1.msra.mxu0 %v56
  %1623 = vmatprep.subr.mxu0 0.0
  %1624 = vmatpush1.msra.mxu0 %v57
  %1625 = vmatprep.subr.mxu0 0.0
  %1626 = vmatpush1.msra.mxu0 0.0
  %1627 = vmatprep.subr.mxu0 0.0
  %1628 = vmatpush1.msra.mxu0 0.0
  %1629 = vmatprep.subr.mxu0 0.0
  %1630 = vmatpush1.msra.mxu0 0.0
  %1631 = vmatprep.subr.mxu0 0.0
  %1632 = vmatpush1.msra.mxu0 0.0
  %1633 = vmatprep.subr.mxu0 0.0
  %1634 = vmatpush1.msra.mxu0 0.0
  %1635 = vmatprep.subr.mxu0 0.0
  %1636 = vmatpush1.msra.mxu0 0.0
  %1637 = vmatprep.subr.mxu0 0.0
  %1638 = vmatpush1.msra.mxu0 0.0
  %1639 = vmatprep.subr.mxu0 0.0
  %1640 = vmatpush1.msra.mxu0 0.0
  %1641 = vmatprep.subr.mxu0 0.0
  %1642 = vmatpush1.msra.mxu0 0.0
  %1643 = vmatprep.subr.mxu0 0.0
  %1644 = vmatpush1.msra.mxu0 0.0
  %1645 = vmatprep.subr.mxu0 0.0
  %1646 = vmatpush1.msra.mxu0 0.0
  %1647 = vmatprep.subr.mxu0 0.0
  %1648 = vmatpush1.msra.mxu0 0.0
  %1649 = vmatprep.subr.mxu0 0.0
  %1650 = vmatpush1.msra.mxu0 0.0
  %1651 = vmatprep.subr.mxu0 0.0
  %1652 = vmatpush1.msra.mxu0 0.0
  %1653 = vmatprep.subr.mxu0 0.0
  %1654 = vmatpush1.msra.mxu0 0.0
  %1655 = vmatprep.subr.mxu0 0.0
  %1656 = vmatpush1.msra.mxu0 0.0
  %1657 = vmatprep.subr.mxu0 0.0
  %1658 = vmatpush1.msra.mxu0 0.0
  %1659 = vmatprep.subr.mxu0 0.0
  %1660 = vmatpush1.msra.mxu0 0.0
  %1661 = vmatprep.subr.mxu0 0.0
  %1662 = vmatpush1.msra.mxu0 0.0
  %1663 = vmatprep.subr.mxu0 0.0
  %1664 = vmatpush1.msra.mxu0 0.0
  %1665 = vmatprep.subr.mxu0 0.0
  %1666 = vmatpush1.msra.mxu0 0.0
  %1667 = vmatprep.subr.mxu0 0.0
  %1668 = vmatpush1.msra.mxu0 0.0
  %1669 = vmatprep.subr.mxu0 0.0
  %1670 = vmatpush1.msra.mxu0 0.0
  %1671 = vmatprep.subr.mxu0 0.0
  %1672 = vmatpush1.msra.mxu0 0.0
  %1673 = vmatprep.mubr.f32.mxu0 0.0
  %1674 = vmatmul.mubr.f32.gmra.mrb[0].mxu0 %v1607
  %v1675 = vpop.f32.mrb[0].mxu0
  %v1676 = vadd.f32 %v94, %v1675
  %v1677 = vpop.f32.mrb[0].mxu0
  %1678 = vdwg.mxu0
  %v1679 = vxor.u32 %v1676, 2147483648
  %v1680 = vmul.f32 %v1679, 1.442695
  %v1681 = vpow.pop %v1680
  %v1682 = vadd.f32 %v1681, 1.0
  %v1683 = vrcp.pop %v1682
  %v1684 = vmul.f32 1.0, %v1683
  %v1685 = vtanh.pop %v1676
  %v1686 = vmul.f32 %v1684, %v1592
  %1688 = vrot.lane.b32.xlu0 %v1685, 64
  %v1689 = vpop.permute.xlu0 %1688
  %v1691 = vmul.f32 %v1684, %v1689
  %1693 = vrot.lane.b32.xlu0 %v1691, 32
  %v1694 = vpop.permute.xlu0 %1693
  %v1696 = vadd.f32 %v1686, %v1694
  %v1697 = vtanh.pop %v1696
  %1699 = vrot.lane.b32.xlu0 %v1697, 64
  %v1700 = vpop.permute.xlu0 %1699
  %v1702 = vmul.f32 %v1684, %v1700
  %1704 = vrot.lane.b32.xlu0 %v1702, 64
  %v1705 = vpop.permute.xlu0 %1704
  %1707 = vst.msk [vmem:[%s323] sm:$0xff] %vm1082, %v1705
  %v1708 = vld [vmem:[%s0] sm:$0xff]
  %v1709 = vsel %vm111, %v1708, %v1705
  %v1711 = vsel %vm113, %v1709, 0
  %1713 = vmatprep.subr.mxu0 0.0
  %1714 = vmatpush1.msra.mxu0 %v50
  %1715 = vmatprep.subr.mxu0 0.0
  %1716 = vmatpush1.msra.mxu0 %v51
  %1717 = vmatprep.subr.mxu0 0.0
  %1718 = vmatpush1.msra.mxu0 %v52
  %1719 = vmatprep.subr.mxu0 0.0
  %1720 = vmatpush1.msra.mxu0 %v53
  %1721 = vmatprep.subr.mxu0 0.0
  %1722 = vmatpush1.msra.mxu0 %v54
  %1723 = vmatprep.subr.mxu0 0.0
  %1724 = vmatpush1.msra.mxu0 %v55
  %1725 = vmatprep.subr.mxu0 0.0
  %1726 = vmatpush1.msra.mxu0 %v56
  %1727 = vmatprep.subr.mxu0 0.0
  %1728 = vmatpush1.msra.mxu0 %v57
  %1729 = vmatprep.subr.mxu0 0.0
  %1730 = vmatpush1.msra.mxu0 0.0
  %1731 = vmatprep.subr.mxu0 0.0
  %1732 = vmatpush1.msra.mxu0 0.0
  %1733 = vmatprep.subr.mxu0 0.0
  %1734 = vmatpush1.msra.mxu0 0.0
  %1735 = vmatprep.subr.mxu0 0.0
  %1736 = vmatpush1.msra.mxu0 0.0
  %1737 = vmatprep.subr.mxu0 0.0
  %1738 = vmatpush1.msra.mxu0 0.0
  %1739 = vmatprep.subr.mxu0 0.0
  %1740 = vmatpush1.msra.mxu0 0.0
  %1741 = vmatprep.subr.mxu0 0.0
  %1742 = vmatpush1.msra.mxu0 0.0
  %1743 = vmatprep.subr.mxu0 0.0
  %1744 = vmatpush1.msra.mxu0 0.0
  %1745 = vmatprep.subr.mxu0 0.0
  %1746 = vmatpush1.msra.mxu0 0.0
  %1747 = vmatprep.subr.mxu0 0.0
  %1748 = vmatpush1.msra.mxu0 0.0
  %1749 = vmatprep.subr.mxu0 0.0
  %1750 = vmatpush1.msra.mxu0 0.0
  %1751 = vmatprep.subr.mxu0 0.0
  %1752 = vmatpush1.msra.mxu0 0.0
  %1753 = vmatprep.subr.mxu0 0.0
  %1754 = vmatpush1.msra.mxu0 0.0
  %1755 = vmatprep.subr.mxu0 0.0
  %1756 = vmatpush1.msra.mxu0 0.0
  %1757 = vmatprep.subr.mxu0 0.0
  %1758 = vmatpush1.msra.mxu0 0.0
  %1759 = vmatprep.subr.mxu0 0.0
  %1760 = vmatpush1.msra.mxu0 0.0
  %1761 = vmatprep.subr.mxu0 0.0
  %1762 = vmatpush1.msra.mxu0 0.0
  %1763 = vmatprep.subr.mxu0 0.0
  %1764 = vmatpush1.msra.mxu0 0.0
  %1765 = vmatprep.subr.mxu0 0.0
  %1766 = vmatpush1.msra.mxu0 0.0
  %1767 = vmatprep.subr.mxu0 0.0
  %1768 = vmatpush1.msra.mxu0 0.0
  %1769 = vmatprep.subr.mxu0 0.0
  %1770 = vmatpush1.msra.mxu0 0.0
  %1771 = vmatprep.subr.mxu0 0.0
  %1772 = vmatpush1.msra.mxu0 0.0
  %1773 = vmatprep.subr.mxu0 0.0
  %1774 = vmatpush1.msra.mxu0 0.0
  %1775 = vmatprep.subr.mxu0 0.0
  %1776 = vmatpush1.msra.mxu0 0.0
  %1777 = vmatprep.mubr.f32.mxu0 0.0
  %1778 = vmatmul.mubr.f32.gmra.mrb[0].mxu0 %v1711
  %v1779 = vpop.f32.mrb[0].mxu0
  %v1780 = vadd.f32 %v94, %v1779
  %v1781 = vpop.f32.mrb[0].mxu0
  %1782 = vdwg.mxu0
  %v1783 = vxor.u32 %v1780, 2147483648
  %v1784 = vmul.f32 %v1783, 1.442695
  %v1785 = vpow.pop %v1784
  %v1786 = vadd.f32 %v1785, 1.0
  %v1787 = vrcp.pop %v1786
  %v1788 = vmul.f32 1.0, %v1787
  %v1789 = vtanh.pop %v1780
  %v1790 = vmul.f32 %v1788, %v1696
  %1792 = vrot.lane.b32.xlu0 %v1789, 64
  %v1793 = vpop.permute.xlu0 %1792
  %v1795 = vmul.f32 %v1788, %v1793
  %1797 = vrot.lane.b32.xlu0 %v1795, 32
  %v1798 = vpop.permute.xlu0 %1797
  %v1800 = vadd.f32 %v1790, %v1798
  %v1801 = vtanh.pop %v1800
  %1803 = vrot.lane.b32.xlu0 %v1801, 64
  %v1804 = vpop.permute.xlu0 %1803
  %v1806 = vmul.f32 %v1788, %v1804
  %1808 = vrot.lane.b32.xlu0 %v1806, 64
  %v1809 = vpop.permute.xlu0 %1808
  %1811 = vst.msk [vmem:[#allocation2] sm:$0xff] %vm1082, %v1809
  %v1812 = vadd.f32 %v972, %v1806
  %1814 = vrot.lane.b32.xlu0 %v1812, 32
  %v1815 = vpop.permute.xlu0 %1814
  %1817 = vst.msk [vmem:[%s13] sm:$0xff] %vm111, %v1815
  %v1818 = vadd.f32 %v966, %v1800
  %1820 = vrot.lane.b32.xlu0 %v1818, 96
  %v1821 = vpop.permute.xlu0 %1820
  %1823 = vst.msk [vmem:[%s14] sm:$0xff] %vm111, %v1821
  %v1824 = vld [vmem:[#allocation2] sm:$0xff]
  %v1825 = vsel %vm113, %v1824, 0.0
  %vm1826 = vcmask 785408
  %v1828 = vsel %vm1826, %v1825, 0
  %1830 = vmatprep.subr.mxu0 0.0
  %1831 = vmatpush1.msra.mxu0 %v58
  %1832 = vmatprep.subr.mxu0 0.0
  %1833 = vmatpush1.msra.mxu0 %v59
  %1834 = vmatprep.subr.mxu0 0.0
  %1835 = vmatpush1.msra.mxu0 %v60
  %1836 = vmatprep.subr.mxu0 0.0
  %1837 = vmatpush1.msra.mxu0 %v61
  %1838 = vmatprep.subr.mxu0 0.0
  %1839 = vmatpush1.msra.mxu0 %v62
  %1840 = vmatprep.subr.mxu0 0.0
  %1841 = vmatpush1.msra.mxu0 %v63
  %1842 = vmatprep.subr.mxu0 0.0
  %1843 = vmatpush1.msra.mxu0 %v64
  %1844 = vmatprep.subr.mxu0 0.0
  %1845 = vmatpush1.msra.mxu0 %v65
  %1846 = vmatprep.subr.mxu0 0.0
  %1847 = vmatpush1.msra.mxu0 %v66
  %1848 = vmatprep.subr.mxu0 0.0
  %1849 = vmatpush1.msra.mxu0 %v67
  %1850 = vmatprep.subr.mxu0 0.0
  %1851 = vmatpush1.msra.mxu0 %v68
  %1852 = vmatprep.subr.mxu0 0.0
  %1853 = vmatpush1.msra.mxu0 %v69
  %1854 = vmatprep.subr.mxu0 0.0
  %1855 = vmatpush1.msra.mxu0 0.0
  %1856 = vmatprep.subr.mxu0 0.0
  %1857 = vmatpush1.msra.mxu0 0.0
  %1858 = vmatprep.subr.mxu0 0.0
  %1859 = vmatpush1.msra.mxu0 0.0
  %1860 = vmatprep.subr.mxu0 0.0
  %1861 = vmatpush1.msra.mxu0 0.0
  %1862 = vmatprep.subr.mxu0 0.0
  %1863 = vmatpush1.msra.mxu0 0.0
  %1864 = vmatprep.subr.mxu0 0.0
  %1865 = vmatpush1.msra.mxu0 0.0
  %1866 = vmatprep.subr.mxu0 0.0
  %1867 = vmatpush1.msra.mxu0 0.0
  %1868 = vmatprep.subr.mxu0 0.0
  %1869 = vmatpush1.msra.mxu0 0.0
  %1870 = vmatprep.subr.mxu0 0.0
  %1871 = vmatpush1.msra.mxu0 0.0
  %1872 = vmatprep.subr.mxu0 0.0
  %1873 = vmatpush1.msra.mxu0 0.0
  %1874 = vmatprep.subr.mxu0 0.0
  %1875 = vmatpush1.msra.mxu0 0.0
  %1876 = vmatprep.subr.mxu0 0.0
  %1877 = vmatpush1.msra.mxu0 0.0
  %1878 = vmatprep.subr.mxu0 0.0
  %1879 = vmatpush1.msra.mxu0 0.0
  %1880 = vmatprep.subr.mxu0 0.0
  %1881 = vmatpush1.msra.mxu0 0.0
  %1882 = vmatprep.subr.mxu0 0.0
  %1883 = vmatpush1.msra.mxu0 0.0
  %1884 = vmatprep.subr.mxu0 0.0
  %1885 = vmatpush1.msra.mxu0 0.0
  %1886 = vmatprep.subr.mxu0 0.0
  %1887 = vmatpush1.msra.mxu0 0.0
  %1888 = vmatprep.subr.mxu0 0.0
  %1889 = vmatpush1.msra.mxu0 0.0
  %1890 = vmatprep.subr.mxu0 0.0
  %1891 = vmatpush1.msra.mxu0 0.0
  %1892 = vmatprep.subr.mxu0 0.0
  %1893 = vmatpush1.msra.mxu0 0.0
  %1894 = vmatprep.mubr.f32.mxu0 0.0
  %1895 = vmatmul.mubr.f32.gmra.mrb[0].mxu0 %v1828
  %v1896 = vpop.f32.mrb[0].mxu0
  %v1897 = vadd.f32 %v101, %v1896
  %v1898 = vpop.f32.mrb[0].mxu0
  %1899 = vdwg.mxu0
  %v1900 = vxor.u32 %v1897, 2147483648
  %v1901 = vmul.f32 %v1900, 1.442695
  %v1902 = vpow.pop %v1901
  %v1903 = vadd.f32 %v1902, 1.0
  %v1904 = vrcp.pop %v1903
  %v1905 = vmul.f32 1.0, %v1904
  %v1906 = vtanh.pop %v1897
  %v1907 = vmul.f32 %v1905, 0.0
  %1909 = vrot.lane.b32.xlu0 %v1906, 64
  %v1910 = vpop.permute.xlu0 %1909
  %v1912 = vmul.f32 %v1905, %v1910
  %1914 = vrot.lane.b32.xlu0 %v1912, 32
  %v1915 = vpop.permute.xlu0 %1914
  %v1917 = vadd.f32 %v1907, %v1915
  %v1918 = vtanh.pop %v1917
  %1920 = vrot.lane.b32.xlu0 %v1918, 64
  %v1921 = vpop.permute.xlu0 %1920
  %v1923 = vmul.f32 %v1905, %v1921
  %1925 = vrot.lane.b32.xlu0 %v1923, 32
  %v1926 = vpop.permute.xlu0 %1925
  %1928 = vst.msk [vmem:[%s11] sm:$0xff] %vm111, %v1926
  %v1929 = vld [vmem:[%s323] sm:$0xff]
  %1930 = vrot.lane.b32.xlu0 %v1923, 96
  %v1931 = vpop.permute.xlu0 %1930
  %v1933 = vsel %vm113, %v1929, %v1931
  %v1935 = vsel %vm1826, %v1933, 0
  %1937 = vmatprep.subr.mxu0 0.0
  %1938 = vmatpush1.msra.mxu0 %v58
  %1939 = vmatprep.subr.mxu0 0.0
  %1940 = vmatpush1.msra.mxu0 %v59
  %1941 = vmatprep.subr.mxu0 0.0
  %1942 = vmatpush1.msra.mxu0 %v60
  %1943 = vmatprep.subr.mxu0 0.0
  %1944 = vmatpush1.msra.mxu0 %v61
  %1945 = vmatprep.subr.mxu0 0.0
  %1946 = vmatpush1.msra.mxu0 %v62
  %1947 = vmatprep.subr.mxu0 0.0
  %1948 = vmatpush1.msra.mxu0 %v63
  %1949 = vmatprep.subr.mxu0 0.0
  %1950 = vmatpush1.msra.mxu0 %v64
  %1951 = vmatprep.subr.mxu0 0.0
  %1952 = vmatpush1.msra.mxu0 %v65
  %1953 = vmatprep.subr.mxu0 0.0
  %1954 = vmatpush1.msra.mxu0 %v66
  %1955 = vmatprep.subr.mxu0 0.0
  %1956 = vmatpush1.msra.mxu0 %v67
  %1957 = vmatprep.subr.mxu0 0.0
  %1958 = vmatpush1.msra.mxu0 %v68
  %1959 = vmatprep.subr.mxu0 0.0
  %1960 = vmatpush1.msra.mxu0 %v69
  %1961 = vmatprep.subr.mxu0 0.0
  %1962 = vmatpush1.msra.mxu0 0.0
  %1963 = vmatprep.subr.mxu0 0.0
  %1964 = vmatpush1.msra.mxu0 0.0
  %1965 = vmatprep.subr.mxu0 0.0
  %1966 = vmatpush1.msra.mxu0 0.0
  %1967 = vmatprep.subr.mxu0 0.0
  %1968 = vmatpush1.msra.mxu0 0.0
  %1969 = vmatprep.subr.mxu0 0.0
  %1970 = vmatpush1.msra.mxu0 0.0
  %1971 = vmatprep.subr.mxu0 0.0
  %1972 = vmatpush1.msra.mxu0 0.0
  %1973 = vmatprep.subr.mxu0 0.0
  %1974 = vmatpush1.msra.mxu0 0.0
  %1975 = vmatprep.subr.mxu0 0.0
  %1976 = vmatpush1.msra.mxu0 0.0
  %1977 = vmatprep.subr.mxu0 0.0
  %1978 = vmatpush1.msra.mxu0 0.0
  %1979 = vmatprep.subr.mxu0 0.0
  %1980 = vmatpush1.msra.mxu0 0.0
  %1981 = vmatprep.subr.mxu0 0.0
  %1982 = vmatpush1.msra.mxu0 0.0
  %1983 = vmatprep.subr.mxu0 0.0
  %1984 = vmatpush1.msra.mxu0 0.0
  %1985 = vmatprep.subr.mxu0 0.0
  %1986 = vmatpush1.msra.mxu0 0.0
  %1987 = vmatprep.subr.mxu0 0.0
  %1988 = vmatpush1.msra.mxu0 0.0
  %1989 = vmatprep.subr.mxu0 0.0
  %1990 = vmatpush1.msra.mxu0 0.0
  %1991 = vmatprep.subr.mxu0 0.0
  %1992 = vmatpush1.msra.mxu0 0.0
  %1993 = vmatprep.subr.mxu0 0.0
  %1994 = vmatpush1.msra.mxu0 0.0
  %1995 = vmatprep.subr.mxu0 0.0
  %1996 = vmatpush1.msra.mxu0 0.0
  %1997 = vmatprep.subr.mxu0 0.0
  %1998 = vmatpush1.msra.mxu0 0.0
  %1999 = vmatprep.subr.mxu0 0.0
  %2000 = vmatpush1.msra.mxu0 0.0
  %2001 = vmatprep.mubr.f32.mxu0 0.0
  %2002 = vmatmul.mubr.f32.gmra.mrb[0].mxu0 %v1935
  %v2003 = vpop.f32.mrb[0].mxu0
  %v2004 = vadd.f32 %v101, %v2003
  %v2005 = vpop.f32.mrb[0].mxu0
  %2006 = vdwg.mxu0
  %v2007 = vxor.u32 %v2004, 2147483648
  %v2008 = vmul.f32 %v2007, 1.442695
  %v2009 = vpow.pop %v2008
  %v2010 = vadd.f32 %v2009, 1.0
  %v2011 = vrcp.pop %v2010
  %v2012 = vmul.f32 1.0, %v2011
  %v2013 = vtanh.pop %v2004
  %v2014 = vmul.f32 %v2012, %v1917
  %2016 = vrot.lane.b32.xlu0 %v2013, 64
  %v2017 = vpop.permute.xlu0 %2016
  %v2019 = vmul.f32 %v2012, %v2017
  %2021 = vrot.lane.b32.xlu0 %v2019, 32
  %v2022 = vpop.permute.xlu0 %2021
  %v2024 = vadd.f32 %v2014, %v2022
  %v2025 = vtanh.pop %v2024
  %2027 = vrot.lane.b32.xlu0 %v2025, 64
  %v2028 = vpop.permute.xlu0 %2027
  %v2030 = vmul.f32 %v2012, %v2028
  %2032 = vrot.lane.b32.xlu0 %v2030, 32
  %v2033 = vpop.permute.xlu0 %2032
  %s2035 = scalar_lea.vmem %s11, 8
  %2036 = vst.msk [vmem:[%s2035] sm:$0xff] %vm111, %v2033
  %v2037 = vld [vmem:[%s432] sm:$0xff]
  %2038 = vrot.lane.b32.xlu0 %v2030, 96
  %v2039 = vpop.permute.xlu0 %2038
  %v2041 = vsel %vm113, %v2037, %v2039
  %v2043 = vsel %vm1826, %v2041, 0
  %2045 = vmatprep.subr.mxu0 0.0
  %2046 = vmatpush1.msra.mxu0 %v58
  %2047 = vmatprep.subr.mxu0 0.0
  %2048 = vmatpush1.msra.mxu0 %v59
  %2049 = vmatprep.subr.mxu0 0.0
  %2050 = vmatpush1.msra.mxu0 %v60
  %2051 = vmatprep.subr.mxu0 0.0
  %2052 = vmatpush1.msra.mxu0 %v61
  %2053 = vmatprep.subr.mxu0 0.0
  %2054 = vmatpush1.msra.mxu0 %v62
  %2055 = vmatprep.subr.mxu0 0.0
  %2056 = vmatpush1.msra.mxu0 %v63
  %2057 = vmatprep.subr.mxu0 0.0
  %2058 = vmatpush1.msra.mxu0 %v64
  %2059 = vmatprep.subr.mxu0 0.0
  %2060 = vmatpush1.msra.mxu0 %v65
  %2061 = vmatprep.subr.mxu0 0.0
  %2062 = vmatpush1.msra.mxu0 %v66
  %2063 = vmatprep.subr.mxu0 0.0
  %2064 = vmatpush1.msra.mxu0 %v67
  %2065 = vmatprep.subr.mxu0 0.0
  %2066 = vmatpush1.msra.mxu0 %v68
  %2067 = vmatprep.subr.mxu0 0.0
  %2068 = vmatpush1.msra.mxu0 %v69
  %2069 = vmatprep.subr.mxu0 0.0
  %2070 = vmatpush1.msra.mxu0 0.0
  %2071 = vmatprep.subr.mxu0 0.0
  %2072 = vmatpush1.msra.mxu0 0.0
  %2073 = vmatprep.subr.mxu0 0.0
  %2074 = vmatpush1.msra.mxu0 0.0
  %2075 = vmatprep.subr.mxu0 0.0
  %2076 = vmatpush1.msra.mxu0 0.0
  %2077 = vmatprep.subr.mxu0 0.0
  %2078 = vmatpush1.msra.mxu0 0.0
  %2079 = vmatprep.subr.mxu0 0.0
  %2080 = vmatpush1.msra.mxu0 0.0
  %2081 = vmatprep.subr.mxu0 0.0
  %2082 = vmatpush1.msra.mxu0 0.0
  %2083 = vmatprep.subr.mxu0 0.0
  %2084 = vmatpush1.msra.mxu0 0.0
  %2085 = vmatprep.subr.mxu0 0.0
  %2086 = vmatpush1.msra.mxu0 0.0
  %2087 = vmatprep.subr.mxu0 0.0
  %2088 = vmatpush1.msra.mxu0 0.0
  %2089 = vmatprep.subr.mxu0 0.0
  %2090 = vmatpush1.msra.mxu0 0.0
  %2091 = vmatprep.subr.mxu0 0.0
  %2092 = vmatpush1.msra.mxu0 0.0
  %2093 = vmatprep.subr.mxu0 0.0
  %2094 = vmatpush1.msra.mxu0 0.0
  %2095 = vmatprep.subr.mxu0 0.0
  %2096 = vmatpush1.msra.mxu0 0.0
  %2097 = vmatprep.subr.mxu0 0.0
  %2098 = vmatpush1.msra.mxu0 0.0
  %2099 = vmatprep.subr.mxu0 0.0
  %2100 = vmatpush1.msra.mxu0 0.0
  %2101 = vmatprep.subr.mxu0 0.0
  %2102 = vmatpush1.msra.mxu0 0.0
  %2103 = vmatprep.subr.mxu0 0.0
  %2104 = vmatpush1.msra.mxu0 0.0
  %2105 = vmatprep.subr.mxu0 0.0
  %2106 = vmatpush1.msra.mxu0 0.0
  %2107 = vmatprep.subr.mxu0 0.0
  %2108 = vmatpush1.msra.mxu0 0.0
  %2109 = vmatprep.mubr.f32.mxu0 0.0
  %2110 = vmatmul.mubr.f32.gmra.mrb[0].mxu0 %v2043
  %v2111 = vpop.f32.mrb[0].mxu0
  %v2112 = vadd.f32 %v101, %v2111
  %v2113 = vpop.f32.mrb[0].mxu0
  %2114 = vdwg.mxu0
  %v2115 = vxor.u32 %v2112, 2147483648
  %v2116 = vmul.f32 %v2115, 1.442695
  %v2117 = vpow.pop %v2116
  %v2118 = vadd.f32 %v2117, 1.0
  %v2119 = vrcp.pop %v2118
  %v2120 = vmul.f32 1.0, %v2119
  %v2121 = vtanh.pop %v2112
  %v2122 = vmul.f32 %v2120, %v2024
  %2124 = vrot.lane.b32.xlu0 %v2121, 64
  %v2125 = vpop.permute.xlu0 %2124
  %v2127 = vmul.f32 %v2120, %v2125
  %2129 = vrot.lane.b32.xlu0 %v2127, 32
  %v2130 = vpop.permute.xlu0 %2129
  %v2132 = vadd.f32 %v2122, %v2130
  %v2133 = vtanh.pop %v2132
  %2135 = vrot.lane.b32.xlu0 %v2133, 64
  %v2136 = vpop.permute.xlu0 %2135
  %v2138 = vmul.f32 %v2120, %v2136
  %2140 = vrot.lane.b32.xlu0 %v2138, 32
  %v2141 = vpop.permute.xlu0 %2140
  %s2143 = scalar_lea.vmem %s11, 16
  %2144 = vst.msk [vmem:[%s2143] sm:$0xff] %vm111, %v2141
  %v2145 = vld [vmem:[%s541] sm:$0xff]
  %2146 = vrot.lane.b32.xlu0 %v2138, 96
  %v2147 = vpop.permute.xlu0 %2146
  %v2149 = vsel %vm113, %v2145, %v2147
  %v2151 = vsel %vm1826, %v2149, 0
  %2153 = vmatprep.subr.mxu0 0.0
  %2154 = vmatpush1.msra.mxu0 %v58
  %2155 = vmatprep.subr.mxu0 0.0
  %2156 = vmatpush1.msra.mxu0 %v59
  %2157 = vmatprep.subr.mxu0 0.0
  %2158 = vmatpush1.msra.mxu0 %v60
  %2159 = vmatprep.subr.mxu0 0.0
  %2160 = vmatpush1.msra.mxu0 %v61
  %2161 = vmatprep.subr.mxu0 0.0
  %2162 = vmatpush1.msra.mxu0 %v62
  %2163 = vmatprep.subr.mxu0 0.0
  %2164 = vmatpush1.msra.mxu0 %v63
  %2165 = vmatprep.subr.mxu0 0.0
  %2166 = vmatpush1.msra.mxu0 %v64
  %2167 = vmatprep.subr.mxu0 0.0
  %2168 = vmatpush1.msra.mxu0 %v65
  %2169 = vmatprep.subr.mxu0 0.0
  %2170 = vmatpush1.msra.mxu0 %v66
  %2171 = vmatprep.subr.mxu0 0.0
  %2172 = vmatpush1.msra.mxu0 %v67
  %2173 = vmatprep.subr.mxu0 0.0
  %2174 = vmatpush1.msra.mxu0 %v68
  %2175 = vmatprep.subr.mxu0 0.0
  %2176 = vmatpush1.msra.mxu0 %v69
  %2177 = vmatprep.subr.mxu0 0.0
  %2178 = vmatpush1.msra.mxu0 0.0
  %2179 = vmatprep.subr.mxu0 0.0
  %2180 = vmatpush1.msra.mxu0 0.0
  %2181 = vmatprep.subr.mxu0 0.0
  %2182 = vmatpush1.msra.mxu0 0.0
  %2183 = vmatprep.subr.mxu0 0.0
  %2184 = vmatpush1.msra.mxu0 0.0
  %2185 = vmatprep.subr.mxu0 0.0
  %2186 = vmatpush1.msra.mxu0 0.0
  %2187 = vmatprep.subr.mxu0 0.0
  %2188 = vmatpush1.msra.mxu0 0.0
  %2189 = vmatprep.subr.mxu0 0.0
  %2190 = vmatpush1.msra.mxu0 0.0
  %2191 = vmatprep.subr.mxu0 0.0
  %2192 = vmatpush1.msra.mxu0 0.0
  %2193 = vmatprep.subr.mxu0 0.0
  %2194 = vmatpush1.msra.mxu0 0.0
  %2195 = vmatprep.subr.mxu0 0.0
  %2196 = vmatpush1.msra.mxu0 0.0
  %2197 = vmatprep.subr.mxu0 0.0
  %2198 = vmatpush1.msra.mxu0 0.0
  %2199 = vmatprep.subr.mxu0 0.0
  %2200 = vmatpush1.msra.mxu0 0.0
  %2201 = vmatprep.subr.mxu0 0.0
  %2202 = vmatpush1.msra.mxu0 0.0
  %2203 = vmatprep.subr.mxu0 0.0
  %2204 = vmatpush1.msra.mxu0 0.0
  %2205 = vmatprep.subr.mxu0 0.0
  %2206 = vmatpush1.msra.mxu0 0.0
  %2207 = vmatprep.subr.mxu0 0.0
  %2208 = vmatpush1.msra.mxu0 0.0
  %2209 = vmatprep.subr.mxu0 0.0
  %2210 = vmatpush1.msra.mxu0 0.0
  %2211 = vmatprep.subr.mxu0 0.0
  %2212 = vmatpush1.msra.mxu0 0.0
  %2213 = vmatprep.subr.mxu0 0.0
  %2214 = vmatpush1.msra.mxu0 0.0
  %2215 = vmatprep.subr.mxu0 0.0
  %2216 = vmatpush1.msra.mxu0 0.0
  %2217 = vmatprep.mubr.f32.mxu0 0.0
  %2218 = vmatmul.mubr.f32.gmra.mrb[0].mxu0 %v2151
  %v2219 = vpop.f32.mrb[0].mxu0
  %v2220 = vadd.f32 %v101, %v2219
  %v2221 = vpop.f32.mrb[0].mxu0
  %2222 = vdwg.mxu0
  %v2223 = vxor.u32 %v2220, 2147483648
  %v2224 = vmul.f32 %v2223, 1.442695
  %v2225 = vpow.pop %v2224
  %v2226 = vadd.f32 %v2225, 1.0
  %v2227 = vrcp.pop %v2226
  %v2228 = vmul.f32 1.0, %v2227
  %v2229 = vtanh.pop %v2220
  %v2230 = vmul.f32 %v2228, %v2132
  %2232 = vrot.lane.b32.xlu0 %v2229, 64
  %v2233 = vpop.permute.xlu0 %2232
  %v2235 = vmul.f32 %v2228, %v2233
  %2237 = vrot.lane.b32.xlu0 %v2235, 32
  %v2238 = vpop.permute.xlu0 %2237
  %v2240 = vadd.f32 %v2230, %v2238
  %v2241 = vtanh.pop %v2240
  %2243 = vrot.lane.b32.xlu0 %v2241, 64
  %v2244 = vpop.permute.xlu0 %2243
  %v2246 = vmul.f32 %v2228, %v2244
  %2248 = vrot.lane.b32.xlu0 %v2246, 32
  %v2249 = vpop.permute.xlu0 %2248
  %s2251 = scalar_lea.vmem %s11, 24
  %2252 = vst.msk [vmem:[%s2251] sm:$0xff] %vm111, %v2249
  %v2253 = vld [vmem:[%s650] sm:$0xff]
  %2254 = vrot.lane.b32.xlu0 %v2246, 96
  %v2255 = vpop.permute.xlu0 %2254
  %v2257 = vsel %vm113, %v2253, %v2255
  %v2259 = vsel %vm1826, %v2257, 0
  %2261 = vmatprep.subr.mxu0 0.0
  %2262 = vmatpush1.msra.mxu0 %v58
  %2263 = vmatprep.subr.mxu0 0.0
  %2264 = vmatpush1.msra.mxu0 %v59
  %2265 = vmatprep.subr.mxu0 0.0
  %2266 = vmatpush1.msra.mxu0 %v60
  %2267 = vmatprep.subr.mxu0 0.0
  %2268 = vmatpush1.msra.mxu0 %v61
  %2269 = vmatprep.subr.mxu0 0.0
  %2270 = vmatpush1.msra.mxu0 %v62
  %2271 = vmatprep.subr.mxu0 0.0
  %2272 = vmatpush1.msra.mxu0 %v63
  %2273 = vmatprep.subr.mxu0 0.0
  %2274 = vmatpush1.msra.mxu0 %v64
  %2275 = vmatprep.subr.mxu0 0.0
  %2276 = vmatpush1.msra.mxu0 %v65
  %2277 = vmatprep.subr.mxu0 0.0
  %2278 = vmatpush1.msra.mxu0 %v66
  %2279 = vmatprep.subr.mxu0 0.0
  %2280 = vmatpush1.msra.mxu0 %v67
  %2281 = vmatprep.subr.mxu0 0.0
  %2282 = vmatpush1.msra.mxu0 %v68
  %2283 = vmatprep.subr.mxu0 0.0
  %2284 = vmatpush1.msra.mxu0 %v69
  %2285 = vmatprep.subr.mxu0 0.0
  %2286 = vmatpush1.msra.mxu0 0.0
  %2287 = vmatprep.subr.mxu0 0.0
  %2288 = vmatpush1.msra.mxu0 0.0
  %2289 = vmatprep.subr.mxu0 0.0
  %2290 = vmatpush1.msra.mxu0 0.0
  %2291 = vmatprep.subr.mxu0 0.0
  %2292 = vmatpush1.msra.mxu0 0.0
  %2293 = vmatprep.subr.mxu0 0.0
  %2294 = vmatpush1.msra.mxu0 0.0
  %2295 = vmatprep.subr.mxu0 0.0
  %2296 = vmatpush1.msra.mxu0 0.0
  %2297 = vmatprep.subr.mxu0 0.0
  %2298 = vmatpush1.msra.mxu0 0.0
  %2299 = vmatprep.subr.mxu0 0.0
  %2300 = vmatpush1.msra.mxu0 0.0
  %2301 = vmatprep.subr.mxu0 0.0
  %2302 = vmatpush1.msra.mxu0 0.0
  %2303 = vmatprep.subr.mxu0 0.0
  %2304 = vmatpush1.msra.mxu0 0.0
  %2305 = vmatprep.subr.mxu0 0.0
  %2306 = vmatpush1.msra.mxu0 0.0
  %2307 = vmatprep.subr.mxu0 0.0
  %2308 = vmatpush1.msra.mxu0 0.0
  %2309 = vmatprep.subr.mxu0 0.0
  %2310 = vmatpush1.msra.mxu0 0.0
  %2311 = vmatprep.subr.mxu0 0.0
  %2312 = vmatpush1.msra.mxu0 0.0
  %2313 = vmatprep.subr.mxu0 0.0
  %2314 = vmatpush1.msra.mxu0 0.0
  %2315 = vmatprep.subr.mxu0 0.0
  %2316 = vmatpush1.msra.mxu0 0.0
  %2317 = vmatprep.subr.mxu0 0.0
  %2318 = vmatpush1.msra.mxu0 0.0
  %2319 = vmatprep.subr.mxu0 0.0
  %2320 = vmatpush1.msra.mxu0 0.0
  %2321 = vmatprep.subr.mxu0 0.0
  %2322 = vmatpush1.msra.mxu0 0.0
  %2323 = vmatprep.subr.mxu0 0.0
  %2324 = vmatpush1.msra.mxu0 0.0
  %2325 = vmatprep.mubr.f32.mxu0 0.0
  %2326 = vmatmul.mubr.f32.gmra.mrb[0].mxu0 %v2259
  %v2327 = vpop.f32.mrb[0].mxu0
  %v2328 = vadd.f32 %v101, %v2327
  %v2329 = vpop.f32.mrb[0].mxu0
  %2330 = vdwg.mxu0
  %v2331 = vxor.u32 %v2328, 2147483648
  %v2332 = vmul.f32 %v2331, 1.442695
  %v2333 = vpow.pop %v2332
  %v2334 = vadd.f32 %v2333, 1.0
  %v2335 = vrcp.pop %v2334
  %v2336 = vmul.f32 1.0, %v2335
  %v2337 = vtanh.pop %v2328
  %v2338 = vmul.f32 %v2336, %v2240
  %2340 = vrot.lane.b32.xlu0 %v2337, 64
  %v2341 = vpop.permute.xlu0 %2340
  %v2343 = vmul.f32 %v2336, %v2341
  %2345 = vrot.lane.b32.xlu0 %v2343, 32
  %v2346 = vpop.permute.xlu0 %2345
  %v2348 = vadd.f32 %v2338, %v2346
  %v2349 = vtanh.pop %v2348
  %2351 = vrot.lane.b32.xlu0 %v2349, 64
  %v2352 = vpop.permute.xlu0 %2351
  %v2354 = vmul.f32 %v2336, %v2352
  %2356 = vrot.lane.b32.xlu0 %v2354, 32
  %v2357 = vpop.permute.xlu0 %2356
  %s2359 = scalar_lea.vmem %s11, 32
  %2360 = vst.msk [vmem:[%s2359] sm:$0xff] %vm111, %v2357
  %v2361 = vld [vmem:[%s759] sm:$0xff]
  %2362 = vrot.lane.b32.xlu0 %v2354, 96
  %v2363 = vpop.permute.xlu0 %2362
  %v2365 = vsel %vm113, %v2361, %v2363
  %v2367 = vsel %vm1826, %v2365, 0
  %2369 = vmatprep.subr.mxu0 0.0
  %2370 = vmatpush1.msra.mxu0 %v58
  %2371 = vmatprep.subr.mxu0 0.0
  %2372 = vmatpush1.msra.mxu0 %v59
  %2373 = vmatprep.subr.mxu0 0.0
  %2374 = vmatpush1.msra.mxu0 %v60
  %2375 = vmatprep.subr.mxu0 0.0
  %2376 = vmatpush1.msra.mxu0 %v61
  %2377 = vmatprep.subr.mxu0 0.0
  %2378 = vmatpush1.msra.mxu0 %v62
  %2379 = vmatprep.subr.mxu0 0.0
  %2380 = vmatpush1.msra.mxu0 %v63
  %2381 = vmatprep.subr.mxu0 0.0
  %2382 = vmatpush1.msra.mxu0 %v64
  %2383 = vmatprep.subr.mxu0 0.0
  %2384 = vmatpush1.msra.mxu0 %v65
  %2385 = vmatprep.subr.mxu0 0.0
  %2386 = vmatpush1.msra.mxu0 %v66
  %2387 = vmatprep.subr.mxu0 0.0
  %2388 = vmatpush1.msra.mxu0 %v67
  %2389 = vmatprep.subr.mxu0 0.0
  %2390 = vmatpush1.msra.mxu0 %v68
  %2391 = vmatprep.subr.mxu0 0.0
  %2392 = vmatpush1.msra.mxu0 %v69
  %2393 = vmatprep.subr.mxu0 0.0
  %2394 = vmatpush1.msra.mxu0 0.0
  %2395 = vmatprep.subr.mxu0 0.0
  %2396 = vmatpush1.msra.mxu0 0.0
  %2397 = vmatprep.subr.mxu0 0.0
  %2398 = vmatpush1.msra.mxu0 0.0
  %2399 = vmatprep.subr.mxu0 0.0
  %2400 = vmatpush1.msra.mxu0 0.0
  %2401 = vmatprep.subr.mxu0 0.0
  %2402 = vmatpush1.msra.mxu0 0.0
  %2403 = vmatprep.subr.mxu0 0.0
  %2404 = vmatpush1.msra.mxu0 0.0
  %2405 = vmatprep.subr.mxu0 0.0
  %2406 = vmatpush1.msra.mxu0 0.0
  %2407 = vmatprep.subr.mxu0 0.0
  %2408 = vmatpush1.msra.mxu0 0.0
  %2409 = vmatprep.subr.mxu0 0.0
  %2410 = vmatpush1.msra.mxu0 0.0
  %2411 = vmatprep.subr.mxu0 0.0
  %2412 = vmatpush1.msra.mxu0 0.0
  %2413 = vmatprep.subr.mxu0 0.0
  %2414 = vmatpush1.msra.mxu0 0.0
  %2415 = vmatprep.subr.mxu0 0.0
  %2416 = vmatpush1.msra.mxu0 0.0
  %2417 = vmatprep.subr.mxu0 0.0
  %2418 = vmatpush1.msra.mxu0 0.0
  %2419 = vmatprep.subr.mxu0 0.0
  %2420 = vmatpush1.msra.mxu0 0.0
  %2421 = vmatprep.subr.mxu0 0.0
  %2422 = vmatpush1.msra.mxu0 0.0
  %2423 = vmatprep.subr.mxu0 0.0
  %2424 = vmatpush1.msra.mxu0 0.0
  %2425 = vmatprep.subr.mxu0 0.0
  %2426 = vmatpush1.msra.mxu0 0.0
  %2427 = vmatprep.subr.mxu0 0.0
  %2428 = vmatpush1.msra.mxu0 0.0
  %2429 = vmatprep.subr.mxu0 0.0
  %2430 = vmatpush1.msra.mxu0 0.0
  %2431 = vmatprep.subr.mxu0 0.0
  %2432 = vmatpush1.msra.mxu0 0.0
  %2433 = vmatprep.mubr.f32.mxu0 0.0
  %2434 = vmatmul.mubr.f32.gmra.mrb[0].mxu0 %v2367
  %v2435 = vpop.f32.mrb[0].mxu0
  %v2436 = vadd.f32 %v101, %v2435
  %v2437 = vpop.f32.mrb[0].mxu0
  %2438 = vdwg.mxu0
  %v2439 = vxor.u32 %v2436, 2147483648
  %v2440 = vmul.f32 %v2439, 1.442695
  %v2441 = vpow.pop %v2440
  %v2442 = vadd.f32 %v2441, 1.0
  %v2443 = vrcp.pop %v2442
  %v2444 = vmul.f32 1.0, %v2443
  %v2445 = vtanh.pop %v2436
  %v2446 = vmul.f32 %v2444, %v2348
  %2448 = vrot.lane.b32.xlu0 %v2445, 64
  %v2449 = vpop.permute.xlu0 %2448
  %v2451 = vmul.f32 %v2444, %v2449
  %2453 = vrot.lane.b32.xlu0 %v2451, 32
  %v2454 = vpop.permute.xlu0 %2453
  %v2456 = vadd.f32 %v2446, %v2454
  %v2457 = vtanh.pop %v2456
  %2459 = vrot.lane.b32.xlu0 %v2457, 64
  %v2460 = vpop.permute.xlu0 %2459
  %v2462 = vmul.f32 %v2444, %v2460
  %2464 = vrot.lane.b32.xlu0 %v2462, 32
  %v2465 = vpop.permute.xlu0 %2464
  %s2467 = scalar_lea.vmem %s11, 40
  %2468 = vst.msk [vmem:[%s2467] sm:$0xff] %vm111, %v2465
  %v2469 = vld [vmem:[%s868] sm:$0xff]
  %2470 = vrot.lane.b32.xlu0 %v2462, 96
  %v2471 = vpop.permute.xlu0 %2470
  %v2473 = vsel %vm113, %v2469, %v2471
  %v2475 = vsel %vm1826, %v2473, 0
  %2477 = vmatprep.subr.mxu0 0.0
  %2478 = vmatpush1.msra.mxu0 %v58
  %2479 = vmatprep.subr.mxu0 0.0
  %2480 = vmatpush1.msra.mxu0 %v59
  %2481 = vmatprep.subr.mxu0 0.0
  %2482 = vmatpush1.msra.mxu0 %v60
  %2483 = vmatprep.subr.mxu0 0.0
  %2484 = vmatpush1.msra.mxu0 %v61
  %2485 = vmatprep.subr.mxu0 0.0
  %2486 = vmatpush1.msra.mxu0 %v62
  %2487 = vmatprep.subr.mxu0 0.0
  %2488 = vmatpush1.msra.mxu0 %v63
  %2489 = vmatprep.subr.mxu0 0.0
  %2490 = vmatpush1.msra.mxu0 %v64
  %2491 = vmatprep.subr.mxu0 0.0
  %2492 = vmatpush1.msra.mxu0 %v65
  %2493 = vmatprep.subr.mxu0 0.0
  %2494 = vmatpush1.msra.mxu0 %v66
  %2495 = vmatprep.subr.mxu0 0.0
  %2496 = vmatpush1.msra.mxu0 %v67
  %2497 = vmatprep.subr.mxu0 0.0
  %2498 = vmatpush1.msra.mxu0 %v68
  %2499 = vmatprep.subr.mxu0 0.0
  %2500 = vmatpush1.msra.mxu0 %v69
  %2501 = vmatprep.subr.mxu0 0.0
  %2502 = vmatpush1.msra.mxu0 0.0
  %2503 = vmatprep.subr.mxu0 0.0
  %2504 = vmatpush1.msra.mxu0 0.0
  %2505 = vmatprep.subr.mxu0 0.0
  %2506 = vmatpush1.msra.mxu0 0.0
  %2507 = vmatprep.subr.mxu0 0.0
  %2508 = vmatpush1.msra.mxu0 0.0
  %2509 = vmatprep.subr.mxu0 0.0
  %2510 = vmatpush1.msra.mxu0 0.0
  %2511 = vmatprep.subr.mxu0 0.0
  %2512 = vmatpush1.msra.mxu0 0.0
  %2513 = vmatprep.subr.mxu0 0.0
  %2514 = vmatpush1.msra.mxu0 0.0
  %2515 = vmatprep.subr.mxu0 0.0
  %2516 = vmatpush1.msra.mxu0 0.0
  %2517 = vmatprep.subr.mxu0 0.0
  %2518 = vmatpush1.msra.mxu0 0.0
  %2519 = vmatprep.subr.mxu0 0.0
  %2520 = vmatpush1.msra.mxu0 0.0
  %2521 = vmatprep.subr.mxu0 0.0
  %2522 = vmatpush1.msra.mxu0 0.0
  %2523 = vmatprep.subr.mxu0 0.0
  %2524 = vmatpush1.msra.mxu0 0.0
  %2525 = vmatprep.subr.mxu0 0.0
  %2526 = vmatpush1.msra.mxu0 0.0
  %2527 = vmatprep.subr.mxu0 0.0
  %2528 = vmatpush1.msra.mxu0 0.0
  %2529 = vmatprep.subr.mxu0 0.0
  %2530 = vmatpush1.msra.mxu0 0.0
  %2531 = vmatprep.subr.mxu0 0.0
  %2532 = vmatpush1.msra.mxu0 0.0
  %2533 = vmatprep.subr.mxu0 0.0
  %2534 = vmatpush1.msra.mxu0 0.0
  %2535 = vmatprep.subr.mxu0 0.0
  %2536 = vmatpush1.msra.mxu0 0.0
  %2537 = vmatprep.subr.mxu0 0.0
  %2538 = vmatpush1.msra.mxu0 0.0
  %2539 = vmatprep.subr.mxu0 0.0
  %2540 = vmatpush1.msra.mxu0 0.0
  %2541 = vmatprep.mubr.f32.mxu0 0.0
  %2542 = vmatmul.mubr.f32.gmra.mrb[0].mxu0 %v2475
  %v2543 = vpop.f32.mrb[0].mxu0
  %v2544 = vadd.f32 %v101, %v2543
  %v2545 = vpop.f32.mrb[0].mxu0
  %2546 = vdwg.mxu0
  %v2547 = vxor.u32 %v2544, 2147483648
  %v2548 = vmul.f32 %v2547, 1.442695
  %v2549 = vpow.pop %v2548
  %v2550 = vadd.f32 %v2549, 1.0
  %v2551 = vrcp.pop %v2550
  %v2552 = vmul.f32 1.0, %v2551
  %v2553 = vtanh.pop %v2544
  %v2554 = vmul.f32 %v2552, %v2456
  %2556 = vrot.lane.b32.xlu0 %v2553, 64
  %v2557 = vpop.permute.xlu0 %2556
  %v2559 = vmul.f32 %v2552, %v2557
  %2561 = vrot.lane.b32.xlu0 %v2559, 32
  %v2562 = vpop.permute.xlu0 %2561
  %v2564 = vadd.f32 %v2554, %v2562
  %v2565 = vtanh.pop %v2564
  %2567 = vrot.lane.b32.xlu0 %v2565, 64
  %v2568 = vpop.permute.xlu0 %2567
  %v2570 = vmul.f32 %v2552, %v2568
  %2572 = vrot.lane.b32.xlu0 %v2570, 32
  %v2573 = vpop.permute.xlu0 %2572
  %s2575 = scalar_lea.vmem %s11, 48
  %2576 = vst.msk [vmem:[%s2575] sm:$0xff] %vm111, %v2573
  %v2577 = vld [vmem:[%s977] sm:$0xff]
  %2578 = vrot.lane.b32.xlu0 %v2570, 96
  %v2579 = vpop.permute.xlu0 %2578
  %v2581 = vsel %vm113, %v2577, %v2579
  %v2583 = vsel %vm1826, %v2581, 0
  %2585 = vmatprep.subr.mxu0 0.0
  %2586 = vmatpush1.msra.mxu0 %v58
  %2587 = vmatprep.subr.mxu0 0.0
  %2588 = vmatpush1.msra.mxu0 %v59
  %2589 = vmatprep.subr.mxu0 0.0
  %2590 = vmatpush1.msra.mxu0 %v60
  %2591 = vmatprep.subr.mxu0 0.0
  %2592 = vmatpush1.msra.mxu0 %v61
  %2593 = vmatprep.subr.mxu0 0.0
  %2594 = vmatpush1.msra.mxu0 %v62
  %2595 = vmatprep.subr.mxu0 0.0
  %2596 = vmatpush1.msra.mxu0 %v63
  %2597 = vmatprep.subr.mxu0 0.0
  %2598 = vmatpush1.msra.mxu0 %v64
  %2599 = vmatprep.subr.mxu0 0.0
  %2600 = vmatpush1.msra.mxu0 %v65
  %2601 = vmatprep.subr.mxu0 0.0
  %2602 = vmatpush1.msra.mxu0 %v66
  %2603 = vmatprep.subr.mxu0 0.0
  %2604 = vmatpush1.msra.mxu0 %v67
  %2605 = vmatprep.subr.mxu0 0.0
  %2606 = vmatpush1.msra.mxu0 %v68
  %2607 = vmatprep.subr.mxu0 0.0
  %2608 = vmatpush1.msra.mxu0 %v69
  %2609 = vmatprep.subr.mxu0 0.0
  %2610 = vmatpush1.msra.mxu0 0.0
  %2611 = vmatprep.subr.mxu0 0.0
  %2612 = vmatpush1.msra.mxu0 0.0
  %2613 = vmatprep.subr.mxu0 0.0
  %2614 = vmatpush1.msra.mxu0 0.0
  %2615 = vmatprep.subr.mxu0 0.0
  %2616 = vmatpush1.msra.mxu0 0.0
  %2617 = vmatprep.subr.mxu0 0.0
  %2618 = vmatpush1.msra.mxu0 0.0
  %2619 = vmatprep.subr.mxu0 0.0
  %2620 = vmatpush1.msra.mxu0 0.0
  %2621 = vmatprep.subr.mxu0 0.0
  %2622 = vmatpush1.msra.mxu0 0.0
  %2623 = vmatprep.subr.mxu0 0.0
  %2624 = vmatpush1.msra.mxu0 0.0
  %2625 = vmatprep.subr.mxu0 0.0
  %2626 = vmatpush1.msra.mxu0 0.0
  %2627 = vmatprep.subr.mxu0 0.0
  %2628 = vmatpush1.msra.mxu0 0.0
  %2629 = vmatprep.subr.mxu0 0.0
  %2630 = vmatpush1.msra.mxu0 0.0
  %2631 = vmatprep.subr.mxu0 0.0
  %2632 = vmatpush1.msra.mxu0 0.0
  %2633 = vmatprep.subr.mxu0 0.0
  %2634 = vmatpush1.msra.mxu0 0.0
  %2635 = vmatprep.subr.mxu0 0.0
  %2636 = vmatpush1.msra.mxu0 0.0
  %2637 = vmatprep.subr.mxu0 0.0
  %2638 = vmatpush1.msra.mxu0 0.0
  %2639 = vmatprep.subr.mxu0 0.0
  %2640 = vmatpush1.msra.mxu0 0.0
  %2641 = vmatprep.subr.mxu0 0.0
  %2642 = vmatpush1.msra.mxu0 0.0
  %2643 = vmatprep.subr.mxu0 0.0
  %2644 = vmatpush1.msra.mxu0 0.0
  %2645 = vmatprep.subr.mxu0 0.0
  %2646 = vmatpush1.msra.mxu0 0.0
  %2647 = vmatprep.subr.mxu0 0.0
  %2648 = vmatpush1.msra.mxu0 0.0
  %2649 = vmatprep.mubr.f32.mxu0 0.0
  %2650 = vmatmul.mubr.f32.gmra.mrb[0].mxu0 %v2583
  %v2651 = vpop.f32.mrb[0].mxu0
  %v2652 = vadd.f32 %v101, %v2651
  %v2653 = vpop.f32.mrb[0].mxu0
  %2654 = vdwg.mxu0
  %v2655 = vxor.u32 %v2652, 2147483648
  %v2656 = vmul.f32 %v2655, 1.442695
  %v2657 = vpow.pop %v2656
  %v2658 = vadd.f32 %v2657, 1.0
  %v2659 = vrcp.pop %v2658
  %v2660 = vmul.f32 1.0, %v2659
  %v2661 = vtanh.pop %v2652
  %v2662 = vmul.f32 %v2660, %v2564
  %2664 = vrot.lane.b32.xlu0 %v2661, 64
  %v2665 = vpop.permute.xlu0 %2664
  %v2667 = vmul.f32 %v2660, %v2665
  %2669 = vrot.lane.b32.xlu0 %v2667, 32
  %v2670 = vpop.permute.xlu0 %2669
  %v2672 = vadd.f32 %v2662, %v2670
  %v2673 = vtanh.pop %v2672
  %2675 = vrot.lane.b32.xlu0 %v2673, 64
  %v2676 = vpop.permute.xlu0 %2675
  %v2678 = vmul.f32 %v2660, %v2676
  %2680 = vrot.lane.b32.xlu0 %v2678, 32
  %v2681 = vpop.permute.xlu0 %2680
  %s2683 = scalar_lea.vmem %s11, 56
  %2684 = vst.msk [vmem:[%s2683] sm:$0xff] %vm111, %v2681
  %v2685 = vld [vmem:[%s977] sm:$0xff]
  %v2686 = vsel %vm113, %v2685, 0.0
  %v2688 = vsel %vm1826, %v2686, 0
  %2690 = vmatprep.subr.mxu0 0.0
  %2691 = vmatpush1.msra.mxu0 %v70
  %2692 = vmatprep.subr.mxu0 0.0
  %2693 = vmatpush1.msra.mxu0 %v71
  %2694 = vmatprep.subr.mxu0 0.0
  %2695 = vmatpush1.msra.mxu0 %v72
  %2696 = vmatprep.subr.mxu0 0.0
  %2697 = vmatpush1.msra.mxu0 %v73
  %2698 = vmatprep.subr.mxu0 0.0
  %2699 = vmatpush1.msra.mxu0 %v74
  %2700 = vmatprep.subr.mxu0 0.0
  %2701 = vmatpush1.msra.mxu0 %v75
  %2702 = vmatprep.subr.mxu0 0.0
  %2703 = vmatpush1.msra.mxu0 %v76
  %2704 = vmatprep.subr.mxu0 0.0
  %2705 = vmatpush1.msra.mxu0 %v77
  %2706 = vmatprep.subr.mxu0 0.0
  %2707 = vmatpush1.msra.mxu0 %v78
  %2708 = vmatprep.subr.mxu0 0.0
  %2709 = vmatpush1.msra.mxu0 %v79
  %2710 = vmatprep.subr.mxu0 0.0
  %2711 = vmatpush1.msra.mxu0 %v80
  %2712 = vmatprep.subr.mxu0 0.0
  %2713 = vmatpush1.msra.mxu0 %v81
  %2714 = vmatprep.subr.mxu0 0.0
  %2715 = vmatpush1.msra.mxu0 0.0
  %2716 = vmatprep.subr.mxu0 0.0
  %2717 = vmatpush1.msra.mxu0 0.0
  %2718 = vmatprep.subr.mxu0 0.0
  %2719 = vmatpush1.msra.mxu0 0.0
  %2720 = vmatprep.subr.mxu0 0.0
  %2721 = vmatpush1.msra.mxu0 0.0
  %2722 = vmatprep.subr.mxu0 0.0
  %2723 = vmatpush1.msra.mxu0 0.0
  %2724 = vmatprep.subr.mxu0 0.0
  %2725 = vmatpush1.msra.mxu0 0.0
  %2726 = vmatprep.subr.mxu0 0.0
  %2727 = vmatpush1.msra.mxu0 0.0
  %2728 = vmatprep.subr.mxu0 0.0
  %2729 = vmatpush1.msra.mxu0 0.0
  %2730 = vmatprep.subr.mxu0 0.0
  %2731 = vmatpush1.msra.mxu0 0.0
  %2732 = vmatprep.subr.mxu0 0.0
  %2733 = vmatpush1.msra.mxu0 0.0
  %2734 = vmatprep.subr.mxu0 0.0
  %2735 = vmatpush1.msra.mxu0 0.0
  %2736 = vmatprep.subr.mxu0 0.0
  %2737 = vmatpush1.msra.mxu0 0.0
  %2738 = vmatprep.subr.mxu0 0.0
  %2739 = vmatpush1.msra.mxu0 0.0
  %2740 = vmatprep.subr.mxu0 0.0
  %2741 = vmatpush1.msra.mxu0 0.0
  %2742 = vmatprep.subr.mxu0 0.0
  %2743 = vmatpush1.msra.mxu0 0.0
  %2744 = vmatprep.subr.mxu0 0.0
  %2745 = vmatpush1.msra.mxu0 0.0
  %2746 = vmatprep.subr.mxu0 0.0
  %2747 = vmatpush1.msra.mxu0 0.0
  %2748 = vmatprep.subr.mxu0 0.0
  %2749 = vmatpush1.msra.mxu0 0.0
  %2750 = vmatprep.subr.mxu0 0.0
  %2751 = vmatpush1.msra.mxu0 0.0
  %2752 = vmatprep.subr.mxu0 0.0
  %2753 = vmatpush1.msra.mxu0 0.0
  %2754 = vmatprep.mubr.f32.mxu0 0.0
  %2755 = vmatmul.mubr.f32.gmra.mrb[0].mxu0 %v2688
  %v2756 = vpop.f32.mrb[0].mxu0
  %v2757 = vadd.f32 %v108, %v2756
  %v2758 = vpop.f32.mrb[0].mxu0
  %2759 = vdwg.mxu0
  %v2760 = vxor.u32 %v2757, 2147483648
  %v2761 = vmul.f32 %v2760, 1.442695
  %v2762 = vpow.pop %v2761
  %v2763 = vadd.f32 %v2762, 1.0
  %v2764 = vrcp.pop %v2763
  %v2765 = vmul.f32 1.0, %v2764
  %v2766 = vtanh.pop %v2757
  %v2767 = vmul.f32 %v2765, 0.0
  %2769 = vrot.lane.b32.xlu0 %v2766, 64
  %v2770 = vpop.permute.xlu0 %2769
  %v2772 = vmul.f32 %v2765, %v2770
  %2774 = vrot.lane.b32.xlu0 %v2772, 32
  %v2775 = vpop.permute.xlu0 %2774
  %v2777 = vadd.f32 %v2767, %v2775
  %v2778 = vtanh.pop %v2777
  %2780 = vrot.lane.b32.xlu0 %v2778, 64
  %v2781 = vpop.permute.xlu0 %2780
  %v2783 = vmul.f32 %v2765, %v2781
  %v2784 = vld [vmem:[%s2683] sm:$0xff]
  %2786 = vrot.lane.b32.xlu0 %v2783, 32
  %v2787 = vpop.permute.xlu0 %2786
  %v2789 = vadd.f32 %v2784, %v2787
  %2790 = vst.msk [vmem:[%s2683] sm:$0xff] %vm111, %v2789
  %v2791 = vld [vmem:[%s868] sm:$0xff]
  %2792 = vrot.lane.b32.xlu0 %v2783, 96
  %v2793 = vpop.permute.xlu0 %2792
  %v2795 = vsel %vm113, %v2791, %v2793
  %v2797 = vsel %vm1826, %v2795, 0
  %2799 = vmatprep.subr.mxu0 0.0
  %2800 = vmatpush1.msra.mxu0 %v70
  %2801 = vmatprep.subr.mxu0 0.0
  %2802 = vmatpush1.msra.mxu0 %v71
  %2803 = vmatprep.subr.mxu0 0.0
  %2804 = vmatpush1.msra.mxu0 %v72
  %2805 = vmatprep.subr.mxu0 0.0
  %2806 = vmatpush1.msra.mxu0 %v73
  %2807 = vmatprep.subr.mxu0 0.0
  %2808 = vmatpush1.msra.mxu0 %v74
  %2809 = vmatprep.subr.mxu0 0.0
  %2810 = vmatpush1.msra.mxu0 %v75
  %2811 = vmatprep.subr.mxu0 0.0
  %2812 = vmatpush1.msra.mxu0 %v76
  %2813 = vmatprep.subr.mxu0 0.0
  %2814 = vmatpush1.msra.mxu0 %v77
  %2815 = vmatprep.subr.mxu0 0.0
  %2816 = vmatpush1.msra.mxu0 %v78
  %2817 = vmatprep.subr.mxu0 0.0
  %2818 = vmatpush1.msra.mxu0 %v79
  %2819 = vmatprep.subr.mxu0 0.0
  %2820 = vmatpush1.msra.mxu0 %v80
  %2821 = vmatprep.subr.mxu0 0.0
  %2822 = vmatpush1.msra.mxu0 %v81
  %2823 = vmatprep.subr.mxu0 0.0
  %2824 = vmatpush1.msra.mxu0 0.0
  %2825 = vmatprep.subr.mxu0 0.0
  %2826 = vmatpush1.msra.mxu0 0.0
  %2827 = vmatprep.subr.mxu0 0.0
  %2828 = vmatpush1.msra.mxu0 0.0
  %2829 = vmatprep.subr.mxu0 0.0
  %2830 = vmatpush1.msra.mxu0 0.0
  %2831 = vmatprep.subr.mxu0 0.0
  %2832 = vmatpush1.msra.mxu0 0.0
  %2833 = vmatprep.subr.mxu0 0.0
  %2834 = vmatpush1.msra.mxu0 0.0
  %2835 = vmatprep.subr.mxu0 0.0
  %2836 = vmatpush1.msra.mxu0 0.0
  %2837 = vmatprep.subr.mxu0 0.0
  %2838 = vmatpush1.msra.mxu0 0.0
  %2839 = vmatprep.subr.mxu0 0.0
  %2840 = vmatpush1.msra.mxu0 0.0
  %2841 = vmatprep.subr.mxu0 0.0
  %2842 = vmatpush1.msra.mxu0 0.0
  %2843 = vmatprep.subr.mxu0 0.0
  %2844 = vmatpush1.msra.mxu0 0.0
  %2845 = vmatprep.subr.mxu0 0.0
  %2846 = vmatpush1.msra.mxu0 0.0
  %2847 = vmatprep.subr.mxu0 0.0
  %2848 = vmatpush1.msra.mxu0 0.0
  %2849 = vmatprep.subr.mxu0 0.0
  %2850 = vmatpush1.msra.mxu0 0.0
  %2851 = vmatprep.subr.mxu0 0.0
  %2852 = vmatpush1.msra.mxu0 0.0
  %2853 = vmatprep.subr.mxu0 0.0
  %2854 = vmatpush1.msra.mxu0 0.0
  %2855 = vmatprep.subr.mxu0 0.0
  %2856 = vmatpush1.msra.mxu0 0.0
  %2857 = vmatprep.subr.mxu0 0.0
  %2858 = vmatpush1.msra.mxu0 0.0
  %2859 = vmatprep.subr.mxu0 0.0
  %2860 = vmatpush1.msra.mxu0 0.0
  %2861 = vmatprep.subr.mxu0 0.0
  %2862 = vmatpush1.msra.mxu0 0.0
  %2863 = vmatprep.mubr.f32.mxu0 0.0
  %2864 = vmatmul.mubr.f32.gmra.mrb[0].mxu0 %v2797
  %v2865 = vpop.f32.mrb[0].mxu0
  %v2866 = vadd.f32 %v108, %v2865
  %v2867 = vpop.f32.mrb[0].mxu0
  %2868 = vdwg.mxu0
  %v2869 = vxor.u32 %v2866, 2147483648
  %v2870 = vmul.f32 %v2869, 1.442695
  %v2871 = vpow.pop %v2870
  %v2872 = vadd.f32 %v2871, 1.0
  %v2873 = vrcp.pop %v2872
  %v2874 = vmul.f32 1.0, %v2873
  %v2875 = vtanh.pop %v2866
  %v2876 = vmul.f32 %v2874, %v2777
  %2878 = vrot.lane.b32.xlu0 %v2875, 64
  %v2879 = vpop.permute.xlu0 %2878
  %v2881 = vmul.f32 %v2874, %v2879
  %2883 = vrot.lane.b32.xlu0 %v2881, 32
  %v2884 = vpop.permute.xlu0 %2883
  %v2886 = vadd.f32 %v2876, %v2884
  %v2887 = vtanh.pop %v2886
  %2889 = vrot.lane.b32.xlu0 %v2887, 64
  %v2890 = vpop.permute.xlu0 %2889
  %v2892 = vmul.f32 %v2874, %v2890
  %v2893 = vld [vmem:[%s2575] sm:$0xff]
  %2895 = vrot.lane.b32.xlu0 %v2892, 32
  %v2896 = vpop.permute.xlu0 %2895
  %v2898 = vadd.f32 %v2893, %v2896
  %2899 = vst.msk [vmem:[%s2575] sm:$0xff] %vm111, %v2898
  %v2900 = vld [vmem:[%s759] sm:$0xff]
  %2901 = vrot.lane.b32.xlu0 %v2892, 96
  %v2902 = vpop.permute.xlu0 %2901
  %v2904 = vsel %vm113, %v2900, %v2902
  %v2906 = vsel %vm1826, %v2904, 0
  %2908 = vmatprep.subr.mxu0 0.0
  %2909 = vmatpush1.msra.mxu0 %v70
  %2910 = vmatprep.subr.mxu0 0.0
  %2911 = vmatpush1.msra.mxu0 %v71
  %2912 = vmatprep.subr.mxu0 0.0
  %2913 = vmatpush1.msra.mxu0 %v72
  %2914 = vmatprep.subr.mxu0 0.0
  %2915 = vmatpush1.msra.mxu0 %v73
  %2916 = vmatprep.subr.mxu0 0.0
  %2917 = vmatpush1.msra.mxu0 %v74
  %2918 = vmatprep.subr.mxu0 0.0
  %2919 = vmatpush1.msra.mxu0 %v75
  %2920 = vmatprep.subr.mxu0 0.0
  %2921 = vmatpush1.msra.mxu0 %v76
  %2922 = vmatprep.subr.mxu0 0.0
  %2923 = vmatpush1.msra.mxu0 %v77
  %2924 = vmatprep.subr.mxu0 0.0
  %2925 = vmatpush1.msra.mxu0 %v78
  %2926 = vmatprep.subr.mxu0 0.0
  %2927 = vmatpush1.msra.mxu0 %v79
  %2928 = vmatprep.subr.mxu0 0.0
  %2929 = vmatpush1.msra.mxu0 %v80
  %2930 = vmatprep.subr.mxu0 0.0
  %2931 = vmatpush1.msra.mxu0 %v81
  %2932 = vmatprep.subr.mxu0 0.0
  %2933 = vmatpush1.msra.mxu0 0.0
  %2934 = vmatprep.subr.mxu0 0.0
  %2935 = vmatpush1.msra.mxu0 0.0
  %2936 = vmatprep.subr.mxu0 0.0
  %2937 = vmatpush1.msra.mxu0 0.0
  %2938 = vmatprep.subr.mxu0 0.0
  %2939 = vmatpush1.msra.mxu0 0.0
  %2940 = vmatprep.subr.mxu0 0.0
  %2941 = vmatpush1.msra.mxu0 0.0
  %2942 = vmatprep.subr.mxu0 0.0
  %2943 = vmatpush1.msra.mxu0 0.0
  %2944 = vmatprep.subr.mxu0 0.0
  %2945 = vmatpush1.msra.mxu0 0.0
  %2946 = vmatprep.subr.mxu0 0.0
  %2947 = vmatpush1.msra.mxu0 0.0
  %2948 = vmatprep.subr.mxu0 0.0
  %2949 = vmatpush1.msra.mxu0 0.0
  %2950 = vmatprep.subr.mxu0 0.0
  %2951 = vmatpush1.msra.mxu0 0.0
  %2952 = vmatprep.subr.mxu0 0.0
  %2953 = vmatpush1.msra.mxu0 0.0
  %2954 = vmatprep.subr.mxu0 0.0
  %2955 = vmatpush1.msra.mxu0 0.0
  %2956 = vmatprep.subr.mxu0 0.0
  %2957 = vmatpush1.msra.mxu0 0.0
  %2958 = vmatprep.subr.mxu0 0.0
  %2959 = vmatpush1.msra.mxu0 0.0
  %2960 = vmatprep.subr.mxu0 0.0
  %2961 = vmatpush1.msra.mxu0 0.0
  %2962 = vmatprep.subr.mxu0 0.0
  %2963 = vmatpush1.msra.mxu0 0.0
  %2964 = vmatprep.subr.mxu0 0.0
  %2965 = vmatpush1.msra.mxu0 0.0
  %2966 = vmatprep.subr.mxu0 0.0
  %2967 = vmatpush1.msra.mxu0 0.0
  %2968 = vmatprep.subr.mxu0 0.0
  %2969 = vmatpush1.msra.mxu0 0.0
  %2970 = vmatprep.subr.mxu0 0.0
  %2971 = vmatpush1.msra.mxu0 0.0
  %2972 = vmatprep.mubr.f32.mxu0 0.0
  %2973 = vmatmul.mubr.f32.gmra.mrb[0].mxu0 %v2906
  %v2974 = vpop.f32.mrb[0].mxu0
  %v2975 = vadd.f32 %v108, %v2974
  %v2976 = vpop.f32.mrb[0].mxu0
  %2977 = vdwg.mxu0
  %v2978 = vxor.u32 %v2975, 2147483648
  %v2979 = vmul.f32 %v2978, 1.442695
  %v2980 = vpow.pop %v2979
  %v2981 = vadd.f32 %v2980, 1.0
  %v2982 = vrcp.pop %v2981
  %v2983 = vmul.f32 1.0, %v2982
  %v2984 = vtanh.pop %v2975
  %v2985 = vmul.f32 %v2983, %v2886
  %2987 = vrot.lane.b32.xlu0 %v2984, 64
  %v2988 = vpop.permute.xlu0 %2987
  %v2990 = vmul.f32 %v2983, %v2988
  %2992 = vrot.lane.b32.xlu0 %v2990, 32
  %v2993 = vpop.permute.xlu0 %2992
  %v2995 = vadd.f32 %v2985, %v2993
  %v2996 = vtanh.pop %v2995
  %2998 = vrot.lane.b32.xlu0 %v2996, 64
  %v2999 = vpop.permute.xlu0 %2998
  %v3001 = vmul.f32 %v2983, %v2999
  %v3002 = vld [vmem:[%s2467] sm:$0xff]
  %3004 = vrot.lane.b32.xlu0 %v3001, 32
  %v3005 = vpop.permute.xlu0 %3004
  %v3007 = vadd.f32 %v3002, %v3005
  %3008 = vst.msk [vmem:[%s2467] sm:$0xff] %vm111, %v3007
  %v3009 = vld [vmem:[%s650] sm:$0xff]
  %3010 = vrot.lane.b32.xlu0 %v3001, 96
  %v3011 = vpop.permute.xlu0 %3010
  %v3013 = vsel %vm113, %v3009, %v3011
  %v3015 = vsel %vm1826, %v3013, 0
  %3017 = vmatprep.subr.mxu0 0.0
  %3018 = vmatpush1.msra.mxu0 %v70
  %3019 = vmatprep.subr.mxu0 0.0
  %3020 = vmatpush1.msra.mxu0 %v71
  %3021 = vmatprep.subr.mxu0 0.0
  %3022 = vmatpush1.msra.mxu0 %v72
  %3023 = vmatprep.subr.mxu0 0.0
  %3024 = vmatpush1.msra.mxu0 %v73
  %3025 = vmatprep.subr.mxu0 0.0
  %3026 = vmatpush1.msra.mxu0 %v74
  %3027 = vmatprep.subr.mxu0 0.0
  %3028 = vmatpush1.msra.mxu0 %v75
  %3029 = vmatprep.subr.mxu0 0.0
  %3030 = vmatpush1.msra.mxu0 %v76
  %3031 = vmatprep.subr.mxu0 0.0
  %3032 = vmatpush1.msra.mxu0 %v77
  %3033 = vmatprep.subr.mxu0 0.0
  %3034 = vmatpush1.msra.mxu0 %v78
  %3035 = vmatprep.subr.mxu0 0.0
  %3036 = vmatpush1.msra.mxu0 %v79
  %3037 = vmatprep.subr.mxu0 0.0
  %3038 = vmatpush1.msra.mxu0 %v80
  %3039 = vmatprep.subr.mxu0 0.0
  %3040 = vmatpush1.msra.mxu0 %v81
  %3041 = vmatprep.subr.mxu0 0.0
  %3042 = vmatpush1.msra.mxu0 0.0
  %3043 = vmatprep.subr.mxu0 0.0
  %3044 = vmatpush1.msra.mxu0 0.0
  %3045 = vmatprep.subr.mxu0 0.0
  %3046 = vmatpush1.msra.mxu0 0.0
  %3047 = vmatprep.subr.mxu0 0.0
  %3048 = vmatpush1.msra.mxu0 0.0
  %3049 = vmatprep.subr.mxu0 0.0
  %3050 = vmatpush1.msra.mxu0 0.0
  %3051 = vmatprep.subr.mxu0 0.0
  %3052 = vmatpush1.msra.mxu0 0.0
  %3053 = vmatprep.subr.mxu0 0.0
  %3054 = vmatpush1.msra.mxu0 0.0
  %3055 = vmatprep.subr.mxu0 0.0
  %3056 = vmatpush1.msra.mxu0 0.0
  %3057 = vmatprep.subr.mxu0 0.0
  %3058 = vmatpush1.msra.mxu0 0.0
  %3059 = vmatprep.subr.mxu0 0.0
  %3060 = vmatpush1.msra.mxu0 0.0
  %3061 = vmatprep.subr.mxu0 0.0
  %3062 = vmatpush1.msra.mxu0 0.0
  %3063 = vmatprep.subr.mxu0 0.0
  %3064 = vmatpush1.msra.mxu0 0.0
  %3065 = vmatprep.subr.mxu0 0.0
  %3066 = vmatpush1.msra.mxu0 0.0
  %3067 = vmatprep.subr.mxu0 0.0
  %3068 = vmatpush1.msra.mxu0 0.0
  %3069 = vmatprep.subr.mxu0 0.0
  %3070 = vmatpush1.msra.mxu0 0.0
  %3071 = vmatprep.subr.mxu0 0.0
  %3072 = vmatpush1.msra.mxu0 0.0
  %3073 = vmatprep.subr.mxu0 0.0
  %3074 = vmatpush1.msra.mxu0 0.0
  %3075 = vmatprep.subr.mxu0 0.0
  %3076 = vmatpush1.msra.mxu0 0.0
  %3077 = vmatprep.subr.mxu0 0.0
  %3078 = vmatpush1.msra.mxu0 0.0
  %3079 = vmatprep.subr.mxu0 0.0
  %3080 = vmatpush1.msra.mxu0 0.0
  %3081 = vmatprep.mubr.f32.mxu0 0.0
  %3082 = vmatmul.mubr.f32.gmra.mrb[0].mxu0 %v3015
  %v3083 = vpop.f32.mrb[0].mxu0
  %v3084 = vadd.f32 %v108, %v3083
  %v3085 = vpop.f32.mrb[0].mxu0
  %3086 = vdwg.mxu0
  %v3087 = vxor.u32 %v3084, 2147483648
  %v3088 = vmul.f32 %v3087, 1.442695
  %v3089 = vpow.pop %v3088
  %v3090 = vadd.f32 %v3089, 1.0
  %v3091 = vrcp.pop %v3090
  %v3092 = vmul.f32 1.0, %v3091
  %v3093 = vtanh.pop %v3084
  %v3094 = vmul.f32 %v3092, %v2995
  %3096 = vrot.lane.b32.xlu0 %v3093, 64
  %v3097 = vpop.permute.xlu0 %3096
  %v3099 = vmul.f32 %v3092, %v3097
  %3101 = vrot.lane.b32.xlu0 %v3099, 32
  %v3102 = vpop.permute.xlu0 %3101
  %v3104 = vadd.f32 %v3094, %v3102
  %v3105 = vtanh.pop %v3104
  %3107 = vrot.lane.b32.xlu0 %v3105, 64
  %v3108 = vpop.permute.xlu0 %3107
  %v3110 = vmul.f32 %v3092, %v3108
  %v3111 = vld [vmem:[%s2359] sm:$0xff]
  %3113 = vrot.lane.b32.xlu0 %v3110, 32
  %v3114 = vpop.permute.xlu0 %3113
  %v3116 = vadd.f32 %v3111, %v3114
  %3117 = vst.msk [vmem:[%s2359] sm:$0xff] %vm111, %v3116
  %v3118 = vld [vmem:[%s541] sm:$0xff]
  %3119 = vrot.lane.b32.xlu0 %v3110, 96
  %v3120 = vpop.permute.xlu0 %3119
  %v3122 = vsel %vm113, %v3118, %v3120
  %v3124 = vsel %vm1826, %v3122, 0
  %3126 = vmatprep.subr.mxu0 0.0
  %3127 = vmatpush1.msra.mxu0 %v70
  %3128 = vmatprep.subr.mxu0 0.0
  %3129 = vmatpush1.msra.mxu0 %v71
  %3130 = vmatprep.subr.mxu0 0.0
  %3131 = vmatpush1.msra.mxu0 %v72
  %3132 = vmatprep.subr.mxu0 0.0
  %3133 = vmatpush1.msra.mxu0 %v73
  %3134 = vmatprep.subr.mxu0 0.0
  %3135 = vmatpush1.msra.mxu0 %v74
  %3136 = vmatprep.subr.mxu0 0.0
  %3137 = vmatpush1.msra.mxu0 %v75
  %3138 = vmatprep.subr.mxu0 0.0
  %3139 = vmatpush1.msra.mxu0 %v76
  %3140 = vmatprep.subr.mxu0 0.0
  %3141 = vmatpush1.msra.mxu0 %v77
  %3142 = vmatprep.subr.mxu0 0.0
  %3143 = vmatpush1.msra.mxu0 %v78
  %3144 = vmatprep.subr.mxu0 0.0
  %3145 = vmatpush1.msra.mxu0 %v79
  %3146 = vmatprep.subr.mxu0 0.0
  %3147 = vmatpush1.msra.mxu0 %v80
  %3148 = vmatprep.subr.mxu0 0.0
  %3149 = vmatpush1.msra.mxu0 %v81
  %3150 = vmatprep.subr.mxu0 0.0
  %3151 = vmatpush1.msra.mxu0 0.0
  %3152 = vmatprep.subr.mxu0 0.0
  %3153 = vmatpush1.msra.mxu0 0.0
  %3154 = vmatprep.subr.mxu0 0.0
  %3155 = vmatpush1.msra.mxu0 0.0
  %3156 = vmatprep.subr.mxu0 0.0
  %3157 = vmatpush1.msra.mxu0 0.0
  %3158 = vmatprep.subr.mxu0 0.0
  %3159 = vmatpush1.msra.mxu0 0.0
  %3160 = vmatprep.subr.mxu0 0.0
  %3161 = vmatpush1.msra.mxu0 0.0
  %3162 = vmatprep.subr.mxu0 0.0
  %3163 = vmatpush1.msra.mxu0 0.0
  %3164 = vmatprep.subr.mxu0 0.0
  %3165 = vmatpush1.msra.mxu0 0.0
  %3166 = vmatprep.subr.mxu0 0.0
  %3167 = vmatpush1.msra.mxu0 0.0
  %3168 = vmatprep.subr.mxu0 0.0
  %3169 = vmatpush1.msra.mxu0 0.0
  %3170 = vmatprep.subr.mxu0 0.0
  %3171 = vmatpush1.msra.mxu0 0.0
  %3172 = vmatprep.subr.mxu0 0.0
  %3173 = vmatpush1.msra.mxu0 0.0
  %3174 = vmatprep.subr.mxu0 0.0
  %3175 = vmatpush1.msra.mxu0 0.0
  %3176 = vmatprep.subr.mxu0 0.0
  %3177 = vmatpush1.msra.mxu0 0.0
  %3178 = vmatprep.subr.mxu0 0.0
  %3179 = vmatpush1.msra.mxu0 0.0
  %3180 = vmatprep.subr.mxu0 0.0
  %3181 = vmatpush1.msra.mxu0 0.0
  %3182 = vmatprep.subr.mxu0 0.0
  %3183 = vmatpush1.msra.mxu0 0.0
  %3184 = vmatprep.subr.mxu0 0.0
  %3185 = vmatpush1.msra.mxu0 0.0
  %3186 = vmatprep.subr.mxu0 0.0
  %3187 = vmatpush1.msra.mxu0 0.0
  %3188 = vmatprep.subr.mxu0 0.0
  %3189 = vmatpush1.msra.mxu0 0.0
  %3190 = vmatprep.mubr.f32.mxu0 0.0
  %3191 = vmatmul.mubr.f32.gmra.mrb[0].mxu0 %v3124
  %v3192 = vpop.f32.mrb[0].mxu0
  %v3193 = vadd.f32 %v108, %v3192
  %v3194 = vpop.f32.mrb[0].mxu0
  %3195 = vdwg.mxu0
  %v3196 = vxor.u32 %v3193, 2147483648
  %v3197 = vmul.f32 %v3196, 1.442695
  %v3198 = vpow.pop %v3197
  %v3199 = vadd.f32 %v3198, 1.0
  %v3200 = vrcp.pop %v3199
  %v3201 = vmul.f32 1.0, %v3200
  %v3202 = vtanh.pop %v3193
  %v3203 = vmul.f32 %v3201, %v3104
  %3205 = vrot.lane.b32.xlu0 %v3202, 64
  %v3206 = vpop.permute.xlu0 %3205
  %v3208 = vmul.f32 %v3201, %v3206
  %3210 = vrot.lane.b32.xlu0 %v3208, 32
  %v3211 = vpop.permute.xlu0 %3210
  %v3213 = vadd.f32 %v3203, %v3211
  %v3214 = vtanh.pop %v3213
  %3216 = vrot.lane.b32.xlu0 %v3214, 64
  %v3217 = vpop.permute.xlu0 %3216
  %v3219 = vmul.f32 %v3201, %v3217
  %v3220 = vld [vmem:[%s2251] sm:$0xff]
  %3222 = vrot.lane.b32.xlu0 %v3219, 32
  %v3223 = vpop.permute.xlu0 %3222
  %v3225 = vadd.f32 %v3220, %v3223
  %3226 = vst.msk [vmem:[%s2251] sm:$0xff] %vm111, %v3225
  %v3227 = vld [vmem:[%s432] sm:$0xff]
  %3228 = vrot.lane.b32.xlu0 %v3219, 96
  %v3229 = vpop.permute.xlu0 %3228
  %v3231 = vsel %vm113, %v3227, %v3229
  %v3233 = vsel %vm1826, %v3231, 0
  %3235 = vmatprep.subr.mxu0 0.0
  %3236 = vmatpush1.msra.mxu0 %v70
  %3237 = vmatprep.subr.mxu0 0.0
  %3238 = vmatpush1.msra.mxu0 %v71
  %3239 = vmatprep.subr.mxu0 0.0
  %3240 = vmatpush1.msra.mxu0 %v72
  %3241 = vmatprep.subr.mxu0 0.0
  %3242 = vmatpush1.msra.mxu0 %v73
  %3243 = vmatprep.subr.mxu0 0.0
  %3244 = vmatpush1.msra.mxu0 %v74
  %3245 = vmatprep.subr.mxu0 0.0
  %3246 = vmatpush1.msra.mxu0 %v75
  %3247 = vmatprep.subr.mxu0 0.0
  %3248 = vmatpush1.msra.mxu0 %v76
  %3249 = vmatprep.subr.mxu0 0.0
  %3250 = vmatpush1.msra.mxu0 %v77
  %3251 = vmatprep.subr.mxu0 0.0
  %3252 = vmatpush1.msra.mxu0 %v78
  %3253 = vmatprep.subr.mxu0 0.0
  %3254 = vmatpush1.msra.mxu0 %v79
  %3255 = vmatprep.subr.mxu0 0.0
  %3256 = vmatpush1.msra.mxu0 %v80
  %3257 = vmatprep.subr.mxu0 0.0
  %3258 = vmatpush1.msra.mxu0 %v81
  %3259 = vmatprep.subr.mxu0 0.0
  %3260 = vmatpush1.msra.mxu0 0.0
  %3261 = vmatprep.subr.mxu0 0.0
  %3262 = vmatpush1.msra.mxu0 0.0
  %3263 = vmatprep.subr.mxu0 0.0
  %3264 = vmatpush1.msra.mxu0 0.0
  %3265 = vmatprep.subr.mxu0 0.0
  %3266 = vmatpush1.msra.mxu0 0.0
  %3267 = vmatprep.subr.mxu0 0.0
  %3268 = vmatpush1.msra.mxu0 0.0
  %3269 = vmatprep.subr.mxu0 0.0
  %3270 = vmatpush1.msra.mxu0 0.0
  %3271 = vmatprep.subr.mxu0 0.0
  %3272 = vmatpush1.msra.mxu0 0.0
  %3273 = vmatprep.subr.mxu0 0.0
  %3274 = vmatpush1.msra.mxu0 0.0
  %3275 = vmatprep.subr.mxu0 0.0
  %3276 = vmatpush1.msra.mxu0 0.0
  %3277 = vmatprep.subr.mxu0 0.0
  %3278 = vmatpush1.msra.mxu0 0.0
  %3279 = vmatprep.subr.mxu0 0.0
  %3280 = vmatpush1.msra.mxu0 0.0
  %3281 = vmatprep.subr.mxu0 0.0
  %3282 = vmatpush1.msra.mxu0 0.0
  %3283 = vmatprep.subr.mxu0 0.0
  %3284 = vmatpush1.msra.mxu0 0.0
  %3285 = vmatprep.subr.mxu0 0.0
  %3286 = vmatpush1.msra.mxu0 0.0
  %3287 = vmatprep.subr.mxu0 0.0
  %3288 = vmatpush1.msra.mxu0 0.0
  %3289 = vmatprep.subr.mxu0 0.0
  %3290 = vmatpush1.msra.mxu0 0.0
  %3291 = vmatprep.subr.mxu0 0.0
  %3292 = vmatpush1.msra.mxu0 0.0
  %3293 = vmatprep.subr.mxu0 0.0
  %3294 = vmatpush1.msra.mxu0 0.0
  %3295 = vmatprep.subr.mxu0 0.0
  %3296 = vmatpush1.msra.mxu0 0.0
  %3297 = vmatprep.subr.mxu0 0.0
  %3298 = vmatpush1.msra.mxu0 0.0
  %3299 = vmatprep.mubr.f32.mxu0 0.0
  %3300 = vmatmul.mubr.f32.gmra.mrb[0].mxu0 %v3233
  %v3301 = vpop.f32.mrb[0].mxu0
  %v3302 = vadd.f32 %v108, %v3301
  %v3303 = vpop.f32.mrb[0].mxu0
  %3304 = vdwg.mxu0
  %v3305 = vxor.u32 %v3302, 2147483648
  %v3306 = vmul.f32 %v3305, 1.442695
  %v3307 = vpow.pop %v3306
  %v3308 = vadd.f32 %v3307, 1.0
  %v3309 = vrcp.pop %v3308
  %v3310 = vmul.f32 1.0, %v3309
  %v3311 = vtanh.pop %v3302
  %v3312 = vmul.f32 %v3310, %v3213
  %3314 = vrot.lane.b32.xlu0 %v3311, 64
  %v3315 = vpop.permute.xlu0 %3314
  %v3317 = vmul.f32 %v3310, %v3315
  %3319 = vrot.lane.b32.xlu0 %v3317, 32
  %v3320 = vpop.permute.xlu0 %3319
  %v3322 = vadd.f32 %v3312, %v3320
  %v3323 = vtanh.pop %v3322
  %3325 = vrot.lane.b32.xlu0 %v3323, 64
  %v3326 = vpop.permute.xlu0 %3325
  %v3328 = vmul.f32 %v3310, %v3326
  %v3329 = vld [vmem:[%s2143] sm:$0xff]
  %3331 = vrot.lane.b32.xlu0 %v3328, 32
  %v3332 = vpop.permute.xlu0 %3331
  %v3334 = vadd.f32 %v3329, %v3332
  %3335 = vst.msk [vmem:[%s2143] sm:$0xff] %vm111, %v3334
  %v3336 = vld [vmem:[%s323] sm:$0xff]
  %3337 = vrot.lane.b32.xlu0 %v3328, 96
  %v3338 = vpop.permute.xlu0 %3337
  %v3340 = vsel %vm113, %v3336, %v3338
  %v3342 = vsel %vm1826, %v3340, 0
  %3344 = vmatprep.subr.mxu0 0.0
  %3345 = vmatpush1.msra.mxu0 %v70
  %3346 = vmatprep.subr.mxu0 0.0
  %3347 = vmatpush1.msra.mxu0 %v71
  %3348 = vmatprep.subr.mxu0 0.0
  %3349 = vmatpush1.msra.mxu0 %v72
  %3350 = vmatprep.subr.mxu0 0.0
  %3351 = vmatpush1.msra.mxu0 %v73
  %3352 = vmatprep.subr.mxu0 0.0
  %3353 = vmatpush1.msra.mxu0 %v74
  %3354 = vmatprep.subr.mxu0 0.0
  %3355 = vmatpush1.msra.mxu0 %v75
  %3356 = vmatprep.subr.mxu0 0.0
  %3357 = vmatpush1.msra.mxu0 %v76
  %3358 = vmatprep.subr.mxu0 0.0
  %3359 = vmatpush1.msra.mxu0 %v77
  %3360 = vmatprep.subr.mxu0 0.0
  %3361 = vmatpush1.msra.mxu0 %v78
  %3362 = vmatprep.subr.mxu0 0.0
  %3363 = vmatpush1.msra.mxu0 %v79
  %3364 = vmatprep.subr.mxu0 0.0
  %3365 = vmatpush1.msra.mxu0 %v80
  %3366 = vmatprep.subr.mxu0 0.0
  %3367 = vmatpush1.msra.mxu0 %v81
  %3368 = vmatprep.subr.mxu0 0.0
  %3369 = vmatpush1.msra.mxu0 0.0
  %3370 = vmatprep.subr.mxu0 0.0
  %3371 = vmatpush1.msra.mxu0 0.0
  %3372 = vmatprep.subr.mxu0 0.0
  %3373 = vmatpush1.msra.mxu0 0.0
  %3374 = vmatprep.subr.mxu0 0.0
  %3375 = vmatpush1.msra.mxu0 0.0
  %3376 = vmatprep.subr.mxu0 0.0
  %3377 = vmatpush1.msra.mxu0 0.0
  %3378 = vmatprep.subr.mxu0 0.0
  %3379 = vmatpush1.msra.mxu0 0.0
  %3380 = vmatprep.subr.mxu0 0.0
  %3381 = vmatpush1.msra.mxu0 0.0
  %3382 = vmatprep.subr.mxu0 0.0
  %3383 = vmatpush1.msra.mxu0 0.0
  %3384 = vmatprep.subr.mxu0 0.0
  %3385 = vmatpush1.msra.mxu0 0.0
  %3386 = vmatprep.subr.mxu0 0.0
  %3387 = vmatpush1.msra.mxu0 0.0
  %3388 = vmatprep.subr.mxu0 0.0
  %3389 = vmatpush1.msra.mxu0 0.0
  %3390 = vmatprep.subr.mxu0 0.0
  %3391 = vmatpush1.msra.mxu0 0.0
  %3392 = vmatprep.subr.mxu0 0.0
  %3393 = vmatpush1.msra.mxu0 0.0
  %3394 = vmatprep.subr.mxu0 0.0
  %3395 = vmatpush1.msra.mxu0 0.0
  %3396 = vmatprep.subr.mxu0 0.0
  %3397 = vmatpush1.msra.mxu0 0.0
  %3398 = vmatprep.subr.mxu0 0.0
  %3399 = vmatpush1.msra.mxu0 0.0
  %3400 = vmatprep.subr.mxu0 0.0
  %3401 = vmatpush1.msra.mxu0 0.0
  %3402 = vmatprep.subr.mxu0 0.0
  %3403 = vmatpush1.msra.mxu0 0.0
  %3404 = vmatprep.subr.mxu0 0.0
  %3405 = vmatpush1.msra.mxu0 0.0
  %3406 = vmatprep.subr.mxu0 0.0
  %3407 = vmatpush1.msra.mxu0 0.0
  %3408 = vmatprep.mubr.f32.mxu0 0.0
  %3409 = vmatmul.mubr.f32.gmra.mrb[0].mxu0 %v3342
  %v3410 = vpop.f32.mrb[0].mxu0
  %v3411 = vadd.f32 %v108, %v3410
  %v3412 = vpop.f32.mrb[0].mxu0
  %3413 = vdwg.mxu0
  %v3414 = vxor.u32 %v3411, 2147483648
  %v3415 = vmul.f32 %v3414, 1.442695
  %v3416 = vpow.pop %v3415
  %v3417 = vadd.f32 %v3416, 1.0
  %v3418 = vrcp.pop %v3417
  %v3419 = vmul.f32 1.0, %v3418
  %v3420 = vtanh.pop %v3411
  %v3421 = vmul.f32 %v3419, %v3322
  %3423 = vrot.lane.b32.xlu0 %v3420, 64
  %v3424 = vpop.permute.xlu0 %3423
  %v3426 = vmul.f32 %v3419, %v3424
  %3428 = vrot.lane.b32.xlu0 %v3426, 32
  %v3429 = vpop.permute.xlu0 %3428
  %v3431 = vadd.f32 %v3421, %v3429
  %v3432 = vtanh.pop %v3431
  %3434 = vrot.lane.b32.xlu0 %v3432, 64
  %v3435 = vpop.permute.xlu0 %3434
  %v3437 = vmul.f32 %v3419, %v3435
  %v3438 = vld [vmem:[%s2035] sm:$0xff]
  %3440 = vrot.lane.b32.xlu0 %v3437, 32
  %v3441 = vpop.permute.xlu0 %3440
  %v3443 = vadd.f32 %v3438, %v3441
  %3444 = vst.msk [vmem:[%s2035] sm:$0xff] %vm111, %v3443
  %v3445 = vld [vmem:[#allocation2] sm:$0xff]
  %3446 = vrot.lane.b32.xlu0 %v3437, 96
  %v3447 = vpop.permute.xlu0 %3446
  %v3449 = vsel %vm113, %v3445, %v3447
  %v3451 = vsel %vm1826, %v3449, 0
  %3453 = vmatprep.subr.mxu0 0.0
  %3454 = vmatpush1.msra.mxu0 %v70
  %3455 = vmatprep.subr.mxu0 0.0
  %3456 = vmatpush1.msra.mxu0 %v71
  %3457 = vmatprep.subr.mxu0 0.0
  %3458 = vmatpush1.msra.mxu0 %v72
  %3459 = vmatprep.subr.mxu0 0.0
  %3460 = vmatpush1.msra.mxu0 %v73
  %3461 = vmatprep.subr.mxu0 0.0
  %3462 = vmatpush1.msra.mxu0 %v74
  %3463 = vmatprep.subr.mxu0 0.0
  %3464 = vmatpush1.msra.mxu0 %v75
  %3465 = vmatprep.subr.mxu0 0.0
  %3466 = vmatpush1.msra.mxu0 %v76
  %3467 = vmatprep.subr.mxu0 0.0
  %3468 = vmatpush1.msra.mxu0 %v77
  %3469 = vmatprep.subr.mxu0 0.0
  %3470 = vmatpush1.msra.mxu0 %v78
  %3471 = vmatprep.subr.mxu0 0.0
  %3472 = vmatpush1.msra.mxu0 %v79
  %3473 = vmatprep.subr.mxu0 0.0
  %3474 = vmatpush1.msra.mxu0 %v80
  %3475 = vmatprep.subr.mxu0 0.0
  %3476 = vmatpush1.msra.mxu0 %v81
  %3477 = vmatprep.subr.mxu0 0.0
  %3478 = vmatpush1.msra.mxu0 0.0
  %3479 = vmatprep.subr.mxu0 0.0
  %3480 = vmatpush1.msra.mxu0 0.0
  %3481 = vmatprep.subr.mxu0 0.0
  %3482 = vmatpush1.msra.mxu0 0.0
  %3483 = vmatprep.subr.mxu0 0.0
  %3484 = vmatpush1.msra.mxu0 0.0
  %3485 = vmatprep.subr.mxu0 0.0
  %3486 = vmatpush1.msra.mxu0 0.0
  %3487 = vmatprep.subr.mxu0 0.0
  %3488 = vmatpush1.msra.mxu0 0.0
  %3489 = vmatprep.subr.mxu0 0.0
  %3490 = vmatpush1.msra.mxu0 0.0
  %3491 = vmatprep.subr.mxu0 0.0
  %3492 = vmatpush1.msra.mxu0 0.0
  %3493 = vmatprep.subr.mxu0 0.0
  %3494 = vmatpush1.msra.mxu0 0.0
  %3495 = vmatprep.subr.mxu0 0.0
  %3496 = vmatpush1.msra.mxu0 0.0
  %3497 = vmatprep.subr.mxu0 0.0
  %3498 = vmatpush1.msra.mxu0 0.0
  %3499 = vmatprep.subr.mxu0 0.0
  %3500 = vmatpush1.msra.mxu0 0.0
  %3501 = vmatprep.subr.mxu0 0.0
  %3502 = vmatpush1.msra.mxu0 0.0
  %3503 = vmatprep.subr.mxu0 0.0
  %3504 = vmatpush1.msra.mxu0 0.0
  %3505 = vmatprep.subr.mxu0 0.0
  %3506 = vmatpush1.msra.mxu0 0.0
  %3507 = vmatprep.subr.mxu0 0.0
  %3508 = vmatpush1.msra.mxu0 0.0
  %3509 = vmatprep.subr.mxu0 0.0
  %3510 = vmatpush1.msra.mxu0 0.0
  %3511 = vmatprep.subr.mxu0 0.0
  %3512 = vmatpush1.msra.mxu0 0.0
  %3513 = vmatprep.subr.mxu0 0.0
  %3514 = vmatpush1.msra.mxu0 0.0
  %3515 = vmatprep.subr.mxu0 0.0
  %3516 = vmatpush1.msra.mxu0 0.0
  %3517 = vmatprep.mubr.f32.mxu0 0.0
  %3518 = vmatmul.mubr.f32.gmra.mrb[0].mxu0 %v3451
  %v3519 = vpop.f32.mrb[0].mxu0
  %v3520 = vadd.f32 %v108, %v3519
  %v3521 = vpop.f32.mrb[0].mxu0
  %3522 = vdwg.mxu0
  %v3523 = vxor.u32 %v3520, 2147483648
  %v3524 = vmul.f32 %v3523, 1.442695
  %v3525 = vpow.pop %v3524
  %v3526 = vadd.f32 %v3525, 1.0
  %v3527 = vrcp.pop %v3526
  %v3528 = vmul.f32 1.0, %v3527
  %v3529 = vtanh.pop %v3520
  %v3530 = vmul.f32 %v3528, %v3431
  %3532 = vrot.lane.b32.xlu0 %v3529, 64
  %v3533 = vpop.permute.xlu0 %3532
  %v3535 = vmul.f32 %v3528, %v3533
  %3537 = vrot.lane.b32.xlu0 %v3535, 32
  %v3538 = vpop.permute.xlu0 %3537
  %v3540 = vadd.f32 %v3530, %v3538
  %v3541 = vtanh.pop %v3540
  %3543 = vrot.lane.b32.xlu0 %v3541, 64
  %v3544 = vpop.permute.xlu0 %3543
  %v3546 = vmul.f32 %v3528, %v3544
  %v3547 = vld [vmem:[%s11] sm:$0xff]
  %3549 = vrot.lane.b32.xlu0 %v3546, 32
  %v3550 = vpop.permute.xlu0 %3549
  %v3552 = vadd.f32 %v3547, %v3550
  %3553 = vst.msk [vmem:[%s11] sm:$0xff] %vm111, %v3552
  %v3554 = vld [vmem:[%s11] sm:$0xff]
  %v3555 = vld [vmem:[%s11 + $0x8] sm:$0xff]
  %v3556 = vld [vmem:[%s11 + $0x10] sm:$0xff]
  %v3557 = vld [vmem:[%s11 + $0x18] sm:$0xff]
  %v3558 = vld [vmem:[%s11 + $0x20] sm:$0xff]
  %v3559 = vld [vmem:[%s11 + $0x28] sm:$0xff]
  %v3560 = vld [vmem:[%s11 + $0x30] sm:$0xff]
  %v3561 = vld [vmem:[%s11 + $0x38] sm:$0xff]
  %v3562 = vld [vmem:[%s9] sm:$0xff]
  %v3563 = vld [vmem:[%s9 + $0x8] sm:$0xff]
  %v3564 = vld [vmem:[%s9 + $0x10] sm:$0xff]
  %v3565 = vld [vmem:[%s9 + $0x18] sm:$0xff]
  %v3566 = vld [vmem:[%s10] sm:$0x1]
  %v3568 = vlaneseq
  %v3569 = vshrl.u32 %v3568, 7
  %v3570 = vsub.s32 0, %v3569
  %v3571 = vrot.slane %v3566, %v3570
  %v3574 = vsel %vm111, %v3554, 0
  %v3577 = vsel %vm111, %v3555, 0
  %v3580 = vsel %vm111, %v3556, 0
  %v3583 = vsel %vm111, %v3557, 0
  %v3586 = vsel %vm111, %v3558, 0
  %v3589 = vsel %vm111, %v3559, 0
  %v3592 = vsel %vm111, %v3560, 0
  %v3595 = vsel %vm111, %v3561, 0
  %3597 = vmatprep.subr.mxu0 0.0
  %3598 = vmatpush1.msra.mxu0 %v3562
  %3599 = vmatprep.subr.mxu0 0.0
  %3600 = vmatpush1.msra.mxu0 %v3563
  %3601 = vmatprep.subr.mxu0 0.0
  %3602 = vmatpush1.msra.mxu0 %v3564
  %3603 = vmatprep.subr.mxu0 0.0
  %3604 = vmatpush1.msra.mxu0 %v3565
  %3605 = vmatprep.subr.mxu0 0.0
  %3606 = vmatpush1.msra.mxu0 0.0
  %3607 = vmatprep.subr.mxu0 0.0
  %3608 = vmatpush1.msra.mxu0 0.0
  %3609 = vmatprep.subr.mxu0 0.0
  %3610 = vmatpush1.msra.mxu0 0.0
  %3611 = vmatprep.subr.mxu0 0.0
  %3612 = vmatpush1.msra.mxu0 0.0
  %3613 = vmatprep.subr.mxu0 0.0
  %3614 = vmatpush1.msra.mxu0 0.0
  %3615 = vmatprep.subr.mxu0 0.0
  %3616 = vmatpush1.msra.mxu0 0.0
  %3617 = vmatprep.subr.mxu0 0.0
  %3618 = vmatpush1.msra.mxu0 0.0
  %3619 = vmatprep.subr.mxu0 0.0
  %3620 = vmatpush1.msra.mxu0 0.0
  %3621 = vmatprep.subr.mxu0 0.0
  %3622 = vmatpush1.msra.mxu0 0.0
  %3623 = vmatprep.subr.mxu0 0.0
  %3624 = vmatpush1.msra.mxu0 0.0
  %3625 = vmatprep.subr.mxu0 0.0
  %3626 = vmatpush1.msra.mxu0 0.0
  %3627 = vmatprep.subr.mxu0 0.0
  %3628 = vmatpush1.msra.mxu0 0.0
  %3629 = vmatprep.subr.mxu0 0.0
  %3630 = vmatpush1.msra.mxu0 0.0
  %3631 = vmatprep.subr.mxu0 0.0
  %3632 = vmatpush1.msra.mxu0 0.0
  %3633 = vmatprep.subr.mxu0 0.0
  %3634 = vmatpush1.msra.mxu0 0.0
  %3635 = vmatprep.subr.mxu0 0.0
  %3636 = vmatpush1.msra.mxu0 0.0
  %3637 = vmatprep.subr.mxu0 0.0
  %3638 = vmatpush1.msra.mxu0 0.0
  %3639 = vmatprep.subr.mxu0 0.0
  %3640 = vmatpush1.msra.mxu0 0.0
  %3641 = vmatprep.subr.mxu0 0.0
  %3642 = vmatpush1.msra.mxu0 0.0
  %3643 = vmatprep.subr.mxu0 0.0
  %3644 = vmatpush1.msra.mxu0 0.0
  %3645 = vmatprep.subr.mxu0 0.0
  %3646 = vmatpush1.msra.mxu0 0.0
  %3647 = vmatprep.subr.mxu0 0.0
  %3648 = vmatpush1.msra.mxu0 0.0
  %3649 = vmatprep.subr.mxu0 0.0
  %3650 = vmatpush1.msra.mxu0 0.0
  %3651 = vmatprep.subr.mxu0 0.0
  %3652 = vmatpush1.msra.mxu0 0.0
  %3653 = vmatprep.subr.mxu0 0.0
  %3654 = vmatpush1.msra.mxu0 0.0
  %3655 = vmatprep.subr.mxu0 0.0
  %3656 = vmatpush1.msra.mxu0 0.0
  %3657 = vmatprep.subr.mxu0 0.0
  %3658 = vmatpush1.msra.mxu0 0.0
  %3659 = vmatprep.subr.mxu0 0.0
  %3660 = vmatpush1.msra.mxu0 0.0
  %3661 = vmatprep.mubr.f32.mxu0 0.0
  %3662 = vmatmul.mubr.f32.gmra.mrb[0].mxu0 %v3574
  %v3663 = vpop.f32.mrb[0].mxu0
  %v3664 = vadd.f32 %v3571, %v3663
  %v3665 = vpop.f32.mrb[0].mxu0
  %3666 = vmatprep.mubr.f32.mxu0 0.0
  %3667 = vmatmul.mubr.f32.gmra.mrb[0].mxu0 %v3577
  %v3668 = vpop.f32.mrb[0].mxu0
  %v3669 = vadd.f32 %v3571, %v3668
  %v3670 = vpop.f32.mrb[0].mxu0
  %3671 = vmatprep.mubr.f32.mxu0 0.0
  %3672 = vmatmul.mubr.f32.gmra.mrb[0].mxu0 %v3580
  %v3673 = vpop.f32.mrb[0].mxu0
  %v3674 = vadd.f32 %v3571, %v3673
  %v3675 = vpop.f32.mrb[0].mxu0
  %3676 = vmatprep.mubr.f32.mxu0 0.0
  %3677 = vmatmul.mubr.f32.gmra.mrb[0].mxu0 %v3583
  %v3678 = vpop.f32.mrb[0].mxu0
  %v3679 = vadd.f32 %v3571, %v3678
  %v3680 = vpop.f32.mrb[0].mxu0
  %3681 = vmatprep.mubr.f32.mxu0 0.0
  %3682 = vmatmul.mubr.f32.gmra.mrb[0].mxu0 %v3586
  %v3683 = vpop.f32.mrb[0].mxu0
  %v3684 = vadd.f32 %v3571, %v3683
  %v3685 = vpop.f32.mrb[0].mxu0
  %3686 = vmatprep.mubr.f32.mxu0 0.0
  %3687 = vmatmul.mubr.f32.gmra.mrb[0].mxu0 %v3589
  %v3688 = vpop.f32.mrb[0].mxu0
  %v3689 = vadd.f32 %v3571, %v3688
  %v3690 = vpop.f32.mrb[0].mxu0
  %3691 = vmatprep.mubr.f32.mxu0 0.0
  %3692 = vmatmul.mubr.f32.gmra.mrb[0].mxu0 %v3592
  %v3693 = vpop.f32.mrb[0].mxu0
  %v3694 = vadd.f32 %v3571, %v3693
  %v3695 = vpop.f32.mrb[0].mxu0
  %3696 = vmatprep.mubr.f32.mxu0 0.0
  %3697 = vmatmul.mubr.f32.gmra.mrb[0].mxu0 %v3595
  %v3698 = vpop.f32.mrb[0].mxu0
  %v3699 = vadd.f32 %v3571, %v3698
  %v3700 = vpop.f32.mrb[0].mxu0
  %3701 = vdwg.mxu0
  %3702 = vst.msk [vmem:[%s12] sm:$0xff] %vm111, %v3664
  %3703 = vst.msk [vmem:[%s12 + $0x8] sm:$0xff] %vm111, %v3669
  %3704 = vst.msk [vmem:[%s12 + $0x10] sm:$0xff] %vm111, %v3674
  %3705 = vst.msk [vmem:[%s12 + $0x18] sm:$0xff] %vm111, %v3679
  %3706 = vst.msk [vmem:[%s12 + $0x20] sm:$0xff] %vm111, %v3684
  %3707 = vst.msk [vmem:[%s12 + $0x28] sm:$0xff] %vm111, %v3689
  %3708 = vst.msk [vmem:[%s12 + $0x30] sm:$0xff] %vm111, %v3694
  %3709 = vst.msk [vmem:[%s12 + $0x38] sm:$0xff] %vm111, %v3699
  // Predicated region
  $region46: #{nmt_forward.2} parent=0 // pred_check
    _
  $region47: #{nmt_forward.2} parent=0 // pred_check_branch
    %3711 = sbr.rel (0) target = $region49
  $region48: #{nmt_forward.2} parent=0 // pred_region
    _
  $region49: #{nmt_forward.2} parent=0 // pred_fallthru
    _
  // Predicated region
  $region50: #{nmt_forward.2} parent=0 // pred_check
    _
  $region51: #{nmt_forward.2} parent=0 // pred_check_branch
    %3713 = sbr.rel (0) target = $region53
  $region52: #{nmt_forward.2} parent=0 // pred_region
    _
  $region53: #{nmt_forward.2} parent=0 // pred_fallthru
    _
  // Predicated region
  $region54: #{nmt_forward.2} parent=0 // pred_check
    _
  $region55: #{nmt_forward.2} parent=0 // pred_check_branch
    %3715 = sbr.rel (0) target = $region57
  $region56: #{nmt_forward.2} parent=0 // pred_region
    _
  $region57: #{nmt_forward.2} parent=0 // pred_fallthru
    _
  // Predicated region
  $region58: #{nmt_forward.2} parent=0 // pred_check
    _
  $region59: #{nmt_forward.2} parent=0 // pred_check_branch
    %3717 = sbr.rel (0) target = $region61
  $region60: #{nmt_forward.2} parent=0 // pred_region
    _
  $region61: #{nmt_forward.2} parent=0 // pred_fallthru
    _
  // Predicated region
  $region62: #{nmt_forward.2} parent=0 // pred_check
    _
  $region63: #{nmt_forward.2} parent=0 // pred_check_branch
    %3719 = sbr.rel (0) target = $region65
  $region64: #{nmt_forward.2} parent=0 // pred_region
    _
  $region65: #{nmt_forward.2} parent=0 // pred_fallthru
    _
  // Predicated region
  $region66: #{nmt_forward.2} parent=0 // pred_check
    _
  $region67: #{nmt_forward.2} parent=0 // pred_check_branch
    %3721 = sbr.rel (0) target = $region69
  $region68: #{nmt_forward.2} parent=0 // pred_region
    _
  $region69: #{nmt_forward.2} parent=0 // pred_fallthru
    _
  // Predicated region
  $region70: #{nmt_forward.2} parent=0 // pred_check
    _
  $region71: #{nmt_forward.2} parent=0 // pred_check_branch
    %3723 = sbr.rel (0) target = $region73
  $region72: #{nmt_forward.2} parent=0 // pred_region
    _
  $region73: #{nmt_forward.2} parent=0 // pred_fallthru
    _
  // Predicated region
  $region74: #{nmt_forward.2} parent=0 // pred_check
    _
  $region75: #{nmt_forward.2} parent=0 // pred_check_branch
    %3725 = sbr.rel (0) target = $region77
  $region76: #{nmt_forward.2} parent=0 // pred_region
    _
  $region77: #{nmt_forward.2} parent=0 // pred_fallthru
    _

</llo_original>
